<compile_context>
chip_gen: v6e
topology: v6e:2x2x1
jax: 0.10.0
libtpu: 0.0.40
codegen_flags: <defaults>
</compile_context>

<pallas_src>
import functools
import math

import jax
import jax.numpy as jnp
from jax.experimental import pallas as pl
from jax.experimental.pallas import tpu as pltpu


# ---------------------------------------------------------------------------
# Pallas kernel: single-pass (x @ W + b) over one N stripe, optional tanh.
# grid = (N_tiles,). Full-K reduction in one MXU pass, f32 accumulation.
# ---------------------------------------------------------------------------
def _linear_kernel(x_ref, w_ref, b_ref, o_ref, *, apply_tanh):
    acc = jnp.dot(x_ref[...], w_ref[...], preferred_element_type=jnp.float32)
    y = acc + b_ref[...]          # f32 bias add (epilogue kept in f32)
    if apply_tanh:
        y = jnp.tanh(y)
    o_ref[...] = y.astype(o_ref.dtype)


def _round_up(v, m):
    return (v + m - 1) // m * m


def pallas_linear(x_p, w_p, b_p, *, apply_tanh, tn, out_dtype):
    """y = x_p @ w_p + b_p (optionally tanh) on pre-padded operands.

    x_p: (Bp, Kp)  bf16   (Bp % 8 == 0)
    w_p: (Kp, Np)  bf16   (Np % tn == 0, tn % 128 == 0)
    b_p: (1,  Np)  f32
    """
    Bp, Kp = x_p.shape
    Kw, Np = w_p.shape
    assert Kp == Kw and Np % tn == 0 and tn % 128 == 0 and Bp % 8 == 0

    grid = (Np // tn,)

    return pl.pallas_call(
        functools.partial(_linear_kernel, apply_tanh=apply_tanh),
        out_shape=jax.ShapeDtypeStruct((Bp, Np), out_dtype),
        grid_spec=pltpu.PrefetchScalarGridSpec(
            num_scalar_prefetch=0,
            grid=grid,
            in_specs=[
                pl.BlockSpec((Bp, Kp), lambda j: (0, 0)),   # x: pinned, full K
                pl.BlockSpec((Kp, tn), lambda j: (0, j)),   # weight stripe
                pl.BlockSpec((1, tn), lambda j: (0, j)),    # bias stripe
            ],
            out_specs=pl.BlockSpec((Bp, tn), lambda j: (0, j)),
        ),
        compiler_params=pltpu.CompilerParams(
            dimension_semantics=("parallel",),
            vmem_limit_bytes=32 * 1024 * 1024,
        ),
    )(x_p, w_p, b_p)


# ---------------------------------------------------------------------------
# NetLinear parameters: PyTorch-style uniform init, padded + bf16-cast ONCE.
# Padded widths chain so layer i's padded output == layer i+1's padded input
# (padded columns are exactly zero, so no re-slicing between layers).
# ---------------------------------------------------------------------------
_TN_BIG = 512     # N-tile for the 2000-wide layers (4 stripes -> megacore ok)
_TN_LAST = 128    # N-tile for the final 2000 -> 10 layer (single stripe)


def init_netlinear_params(key, input_size=32, in_channels=1):
    dims = [
        (input_size ** 2 * in_channels, 2000),  # fc1
        (2000, 2000),                            # fc2
        (2000, 2000),                            # fc3
        (2000, 10),                              # fc4
    ]
    tns = [_TN_BIG, _TN_BIG, _TN_BIG, _TN_LAST]

    # Chain of padded feature widths.
    kp = _round_up(dims[0][0], 128)
    params = []
    for (fan_in, fan_out), tn in zip(dims, tns):
        key, kw, kb = jax.random.split(key, 3)
        bound = 1.0 / math.sqrt(fan_in)
        w = jax.random.uniform(kw, (fan_in, fan_out), jnp.float32, -bound, bound)
        b = jax.random.uniform(kb, (fan_out,), jnp.float32, -bound, bound)

        np_ = _round_up(fan_out, tn)
        w_p = (jnp.zeros((kp, np_), jnp.float32).at[:fan_in, :fan_out].set(w)
               ).astype(jnp.bfloat16)
        b_p = jnp.zeros((1, np_), jnp.float32).at[0, :fan_out].set(b)
        params.append((w_p, b_p))
        kp = np_  # next layer's padded input width
    return params


@jax.jit
def netlinear_forward(x_nchw, params):
    B = x_nchw.shape[0]
    x = x_nchw.reshape(B, -1)                    # nn.Flatten (row-major)
    (w1, b1), (w2, b2), (w3, b3), (w4, b4) = params

    Bp = _round_up(B, 8)
    Kp1 = w1.shape[0]
    x_p = (jnp.zeros((Bp, Kp1), jnp.bfloat16)
           .at[:B, :x.shape[1]].set(x.astype(jnp.bfloat16)))

    h = pallas_linear(x_p, w1, b1, apply_tanh=True, tn=_TN_BIG,
                      out_dtype=jnp.bfloat16)
    h = pallas_linear(h, w2, b2, apply_tanh=True, tn=_TN_BIG,
                      out_dtype=jnp.bfloat16)
    h = pallas_linear(h, w3, b3, apply_tanh=True, tn=_TN_BIG,
                      out_dtype=jnp.bfloat16)
    y = pallas_linear(h, w4, b4, apply_tanh=False, tn=_TN_LAST,
                      out_dtype=jnp.float32)
    return y[:B, :10]


# Pure-JAX reference with identical numerics (same padded bf16 weights,
# same bf16 activation cast points, f32 accumulation).
def netlinear_reference(x_nchw, params):
    B = x_nchw.shape[0]
    x = x_nchw.reshape(B, -1)
    (w1, b1), (w2, b2), (w3, b3), (w4, b4) = params
    Kp1 = w1.shape[0]
    h = (jnp.zeros((B, Kp1), jnp.bfloat16)
         .at[:, :x.shape[1]].set(x.astype(jnp.bfloat16)))

    def lin(h, w, b, act):
        y = jnp.dot(h, w, preferred_element_type=jnp.float32) + b
        if act:
            y = jnp.tanh(y).astype(jnp.bfloat16)
        return y

    h = lin(h, w1, b1, True)
    h = lin(h, w2, b2, True)
    h = lin(h, w3, b3, True)
    y = lin(h, w4, b4, False)
    return y[:, :10]


if __name__ == "__main__":
    key = jax.random.PRNGKey(0)
    key, kx = jax.random.split(key)

    input_size, in_channels, batch = 32, 1, 2
    x = jax.random.normal(kx, (batch, in_channels, input_size, input_size),
                          jnp.float32)

    params = init_netlinear_params(key, input_size, in_channels)

    out = netlinear_forward(x, params)
    out = jax.block_until_ready(out)

    ref = netlinear_reference(x, params)
    assert out.shape == (batch, 10), out.shape
    assert jnp.allclose(out, ref, atol=5e-3, rtol=5e-3), "mismatch vs reference"

    print("KERNEL_OK")
</pallas_src>

<mosaic_0001>
module attributes {stable_mosaic.version = 11 : i64} {
  func.func @_linear_kernel(%arg0: i32, %arg1: memref<8x1024xbf16, #tpu.memory_space<vmem>>, %arg2: memref<1024x512xbf16, #tpu.memory_space<vmem>>, %arg3: memref<1x512xf32, #tpu.memory_space<vmem>>, %arg4: memref<8x512xbf16, #tpu.memory_space<vmem>>) attributes {dimension_semantics = [#tpu.dimension_semantics<parallel>], iteration_bounds = array<i64: 4>, scalar_prefetch = 0 : i64, scratch_operands = 0 : i64, tpu.core_type = #tpu.core_type<tc>, window_params = [{pipeline_mode = #tpu.pipeline_mode<synchronous>, transform_indices = @transform_0, window_bounds = array<i64: 8, 1024>}, {transform_indices = @transform_1, window_bounds = array<i64: 1024, 512>}, {transform_indices = @transform_2, window_bounds = array<i64: 1, 512>}, {transform_indices = @transform_3, window_bounds = array<i64: 8, 512>}]} {
    %c0 = arith.constant 0 : index
    %c0_0 = arith.constant 0 : index
    %0 = vector.load %arg1[%c0, %c0_0] : memref<8x1024xbf16, #tpu.memory_space<vmem>>, vector<8x1024xbf16>
    %c0_1 = arith.constant 0 : index
    %c0_2 = arith.constant 0 : index
    %1 = vector.load %arg2[%c0_1, %c0_2] : memref<1024x512xbf16, #tpu.memory_space<vmem>>, vector<1024x512xbf16>
    %cst = arith.constant dense<0.000000e+00> : vector<8x512xf32>
    %2 = tpu.matmul %0, %1, %cst {dimension_numbers = #tpu.dot_dimension_numbers<[1], [0], [0], [1], [0, 0, 1, 1], [], []>} : vector<8x1024xbf16>, vector<1024x512xbf16>, vector<8x512xf32> -> vector<8x512xf32>
    %c0_3 = arith.constant 0 : index
    %c0_4 = arith.constant 0 : index
    %3 = vector.load %arg3[%c0_3, %c0_4] : memref<1x512xf32, #tpu.memory_space<vmem>>, vector<1x512xf32>
    %4 = vector.broadcast %3 : vector<1x512xf32> to vector<8x512xf32>
    %5 = arith.addf %2, %4 : vector<8x512xf32>
    %6 = math.tanh %5 : vector<8x512xf32>
    %7 = arith.truncf %6 : vector<8x512xf32> to vector<8x512xbf16>
    %c0_5 = arith.constant 0 : index
    %c0_6 = arith.constant 0 : index
    %8 = vector.load %arg4[%c0_5, %c0_6] : memref<8x512xbf16, #tpu.memory_space<vmem>>, vector<8x512xbf16>
    tpu.vector_store %arg4[%c0_5, %c0_6], %7 {strides = array<i32>} : memref<8x512xbf16, #tpu.memory_space<vmem>>, vector<8x512xbf16>,
    return
  }
  func.func @transform_0(%arg0: i32) -> (i32, i32) {
    %c0_i32 = arith.constant 0 : i32
    %c0_i32_0 = arith.constant 0 : i32
    %c0_i32_1 = arith.constant 0 : i32
    return %c0_i32, %c0_i32_0 : i32, i32
  }
  func.func @transform_1(%arg0: i32) -> (i32, i32) {
    %c0_i32 = arith.constant 0 : i32
    %c0_i32_0 = arith.constant 0 : i32
    return %c0_i32, %arg0 : i32, i32
  }
  func.func @transform_2(%arg0: i32) -> (i32, i32) {
    %c0_i32 = arith.constant 0 : i32
    %c0_i32_0 = arith.constant 0 : i32
    return %c0_i32, %arg0 : i32, i32
  }
  func.func @transform_3(%arg0: i32) -> (i32, i32) {
    %c0_i32 = arith.constant 0 : i32
    %c0_i32_0 = arith.constant 0 : i32
    return %c0_i32, %arg0 : i32, i32
  }
}

module attributes {stable_mosaic.version = 11 : i64} {
  func.func @_linear_kernel(%arg0: i32, %arg1: memref<8x2048xbf16, #tpu.memory_space<vmem>>, %arg2: memref<2048x128xbf16, #tpu.memory_space<vmem>>, %arg3: memref<1x128xf32, #tpu.memory_space<vmem>>, %arg4: memref<8x128xf32, #tpu.memory_space<vmem>>) attributes {dimension_semantics = [#tpu.dimension_semantics<parallel>], iteration_bounds = array<i64: 1>, scalar_prefetch = 0 : i64, scratch_operands = 0 : i64, tpu.core_type = #tpu.core_type<tc>, window_params = [{pipeline_mode = #tpu.pipeline_mode<synchronous>, transform_indices = @transform_0, window_bounds = array<i64: 8, 2048>}, {transform_indices = @transform_1, window_bounds = array<i64: 2048, 128>}, {transform_indices = @transform_2, window_bounds = array<i64: 1, 128>}, {transform_indices = @transform_3, window_bounds = array<i64: 8, 128>}]} {
    %c0 = arith.constant 0 : index
    %c0_0 = arith.constant 0 : index
    %0 = vector.load %arg1[%c0, %c0_0] : memref<8x2048xbf16, #tpu.memory_space<vmem>>, vector<8x2048xbf16>
    %c0_1 = arith.constant 0 : index
    %c0_2 = arith.constant 0 : index
    %1 = vector.load %arg2[%c0_1, %c0_2] : memref<2048x128xbf16, #tpu.memory_space<vmem>>, vector<2048x128xbf16>
    %cst = arith.constant dense<0.000000e+00> : vector<8x128xf32>
    %2 = tpu.matmul %0, %1, %cst {dimension_numbers = #tpu.dot_dimension_numbers<[1], [0], [0], [1], [0, 0, 1, 1], [], []>} : vector<8x2048xbf16>, vector<2048x128xbf16>, vector<8x128xf32> -> vector<8x128xf32>
    %c0_3 = arith.constant 0 : index
    %c0_4 = arith.constant 0 : index
    %3 = vector.load %arg3[%c0_3, %c0_4] : memref<1x128xf32, #tpu.memory_space<vmem>>, vector<1x128xf32>
    %4 = vector.broadcast %3 : vector<1x128xf32> to vector<8x128xf32>
    %5 = arith.addf %2, %4 : vector<8x128xf32>
    %c0_5 = arith.constant 0 : index
    %c0_6 = arith.constant 0 : index
    %6 = vector.load %arg4[%c0_5, %c0_6] : memref<8x128xf32, #tpu.memory_space<vmem>>, vector<8x128xf32>
    tpu.vector_store %arg4[%c0_5, %c0_6], %5 {strides = array<i32>} : memref<8x128xf32, #tpu.memory_space<vmem>>, vector<8x128xf32>,
    return
  }
  func.func @transform_0(%arg0: i32) -> (i32, i32) {
    %c0_i32 = arith.constant 0 : i32
    %c0_i32_0 = arith.constant 0 : i32
    %c0_i32_1 = arith.constant 0 : i32
    return %c0_i32, %c0_i32_0 : i32, i32
  }
  func.func @transform_1(%arg0: i32) -> (i32, i32) {
    %c0_i32 = arith.constant 0 : i32
    %c0_i32_0 = arith.constant 0 : i32
    return %c0_i32, %arg0 : i32, i32
  }
  func.func @transform_2(%arg0: i32) -> (i32, i32) {
    %c0_i32 = arith.constant 0 : i32
    %c0_i32_0 = arith.constant 0 : i32
    return %c0_i32, %arg0 : i32, i32
  }
  func.func @transform_3(%arg0: i32) -> (i32, i32) {
    %c0_i32 = arith.constant 0 : i32
    %c0_i32_0 = arith.constant 0 : i32
    return %c0_i32, %arg0 : i32, i32
  }
}

module attributes {stable_mosaic.version = 11 : i64} {
  func.func @_linear_kernel(%arg0: i32, %arg1: memref<8x2048xbf16, #tpu.memory_space<vmem>>, %arg2: memref<2048x512xbf16, #tpu.memory_space<vmem>>, %arg3: memref<1x512xf32, #tpu.memory_space<vmem>>, %arg4: memref<8x512xbf16, #tpu.memory_space<vmem>>) attributes {dimension_semantics = [#tpu.dimension_semantics<parallel>], iteration_bounds = array<i64: 4>, scalar_prefetch = 0 : i64, scratch_operands = 0 : i64, tpu.core_type = #tpu.core_type<tc>, window_params = [{pipeline_mode = #tpu.pipeline_mode<synchronous>, transform_indices = @transform_0, window_bounds = array<i64: 8, 2048>}, {transform_indices = @transform_1, window_bounds = array<i64: 2048, 512>}, {transform_indices = @transform_2, window_bounds = array<i64: 1, 512>}, {transform_indices = @transform_3, window_bounds = array<i64: 8, 512>}]} {
    %c0 = arith.constant 0 : index
    %c0_0 = arith.constant 0 : index
    %0 = vector.load %arg1[%c0, %c0_0] : memref<8x2048xbf16, #tpu.memory_space<vmem>>, vector<8x2048xbf16>
    %c0_1 = arith.constant 0 : index
    %c0_2 = arith.constant 0 : index
    %1 = vector.load %arg2[%c0_1, %c0_2] : memref<2048x512xbf16, #tpu.memory_space<vmem>>, vector<2048x512xbf16>
    %cst = arith.constant dense<0.000000e+00> : vector<8x512xf32>
    %2 = tpu.matmul %0, %1, %cst {dimension_numbers = #tpu.dot_dimension_numbers<[1], [0], [0], [1], [0, 0, 1, 1], [], []>} : vector<8x2048xbf16>, vector<2048x512xbf16>, vector<8x512xf32> -> vector<8x512xf32>
    %c0_3 = arith.constant 0 : index
    %c0_4 = arith.constant 0 : index
    %3 = vector.load %arg3[%c0_3, %c0_4] : memref<1x512xf32, #tpu.memory_space<vmem>>, vector<1x512xf32>
    %4 = vector.broadcast %3 : vector<1x512xf32> to vector<8x512xf32>
    %5 = arith.addf %2, %4 : vector<8x512xf32>
    %6 = math.tanh %5 : vector<8x512xf32>
    %7 = arith.truncf %6 : vector<8x512xf32> to vector<8x512xbf16>
    %c0_5 = arith.constant 0 : index
    %c0_6 = arith.constant 0 : index
    %8 = vector.load %arg4[%c0_5, %c0_6] : memref<8x512xbf16, #tpu.memory_space<vmem>>, vector<8x512xbf16>
    tpu.vector_store %arg4[%c0_5, %c0_6], %7 {strides = array<i32>} : memref<8x512xbf16, #tpu.memory_space<vmem>>, vector<8x512xbf16>,
    return
  }
  func.func @transform_0(%arg0: i32) -> (i32, i32) {
    %c0_i32 = arith.constant 0 : i32
    %c0_i32_0 = arith.constant 0 : i32
    %c0_i32_1 = arith.constant 0 : i32
    return %c0_i32, %c0_i32_0 : i32, i32
  }
  func.func @transform_1(%arg0: i32) -> (i32, i32) {
    %c0_i32 = arith.constant 0 : i32
    %c0_i32_0 = arith.constant 0 : i32
    return %c0_i32, %arg0 : i32, i32
  }
  func.func @transform_2(%arg0: i32) -> (i32, i32) {
    %c0_i32 = arith.constant 0 : i32
    %c0_i32_0 = arith.constant 0 : i32
    return %c0_i32, %arg0 : i32, i32
  }
  func.func @transform_3(%arg0: i32) -> (i32, i32) {
    %c0_i32 = arith.constant 0 : i32
    %c0_i32_0 = arith.constant 0 : i32
    return %c0_i32, %arg0 : i32, i32
  }
}

module attributes {stable_mosaic.version = 11 : i64} {
  func.func @_linear_kernel(%arg0: i32, %arg1: memref<8x2048xbf16, #tpu.memory_space<vmem>>, %arg2: memref<2048x512xbf16, #tpu.memory_space<vmem>>, %arg3: memref<1x512xf32, #tpu.memory_space<vmem>>, %arg4: memref<8x512xbf16, #tpu.memory_space<vmem>>) attributes {dimension_semantics = [#tpu.dimension_semantics<parallel>], iteration_bounds = array<i64: 4>, scalar_prefetch = 0 : i64, scratch_operands = 0 : i64, tpu.core_type = #tpu.core_type<tc>, window_params = [{pipeline_mode = #tpu.pipeline_mode<synchronous>, transform_indices = @transform_0, window_bounds = array<i64: 8, 2048>}, {transform_indices = @transform_1, window_bounds = array<i64: 2048, 512>}, {transform_indices = @transform_2, window_bounds = array<i64: 1, 512>}, {transform_indices = @transform_3, window_bounds = array<i64: 8, 512>}]} {
    %c0 = arith.constant 0 : index
    %c0_0 = arith.constant 0 : index
    %0 = vector.load %arg1[%c0, %c0_0] : memref<8x2048xbf16, #tpu.memory_space<vmem>>, vector<8x2048xbf16>
    %c0_1 = arith.constant 0 : index
    %c0_2 = arith.constant 0 : index
    %1 = vector.load %arg2[%c0_1, %c0_2] : memref<2048x512xbf16, #tpu.memory_space<vmem>>, vector<2048x512xbf16>
    %cst = arith.constant dense<0.000000e+00> : vector<8x512xf32>
    %2 = tpu.matmul %0, %1, %cst {dimension_numbers = #tpu.dot_dimension_numbers<[1], [0], [0], [1], [0, 0, 1, 1], [], []>} : vector<8x2048xbf16>, vector<2048x512xbf16>, vector<8x512xf32> -> vector<8x512xf32>
    %c0_3 = arith.constant 0 : index
    %c0_4 = arith.constant 0 : index
    %3 = vector.load %arg3[%c0_3, %c0_4] : memref<1x512xf32, #tpu.memory_space<vmem>>, vector<1x512xf32>
    %4 = vector.broadcast %3 : vector<1x512xf32> to vector<8x512xf32>
    %5 = arith.addf %2, %4 : vector<8x512xf32>
    %6 = math.tanh %5 : vector<8x512xf32>
    %7 = arith.truncf %6 : vector<8x512xf32> to vector<8x512xbf16>
    %c0_5 = arith.constant 0 : index
    %c0_6 = arith.constant 0 : index
    %8 = vector.load %arg4[%c0_5, %c0_6] : memref<8x512xbf16, #tpu.memory_space<vmem>>, vector<8x512xbf16>
    tpu.vector_store %arg4[%c0_5, %c0_6], %7 {strides = array<i32>} : memref<8x512xbf16, #tpu.memory_space<vmem>>, vector<8x512xbf16>,
    return
  }
  func.func @transform_0(%arg0: i32) -> (i32, i32) {
    %c0_i32 = arith.constant 0 : i32
    %c0_i32_0 = arith.constant 0 : i32
    %c0_i32_1 = arith.constant 0 : i32
    return %c0_i32, %c0_i32_0 : i32, i32
  }
  func.func @transform_1(%arg0: i32) -> (i32, i32) {
    %c0_i32 = arith.constant 0 : i32
    %c0_i32_0 = arith.constant 0 : i32
    return %c0_i32, %arg0 : i32, i32
  }
  func.func @transform_2(%arg0: i32) -> (i32, i32) {
    %c0_i32 = arith.constant 0 : i32
    %c0_i32_0 = arith.constant 0 : i32
    return %c0_i32, %arg0 : i32, i32
  }
  func.func @transform_3(%arg0: i32) -> (i32, i32) {
    %c0_i32 = arith.constant 0 : i32
    %c0_i32_0 = arith.constant 0 : i32
    return %c0_i32, %arg0 : i32, i32
  }
}

</mosaic_0001>

<llo_original>
// kernel: netlinear_forward.4
$region0: #{netlinear_forward.4}
  #allocation0 [shape = 'u32[]', space=smem, size = 0x4, offset = 0x4, fixed_abs, tag = 'smem constant byte address 0x4 - core index']
  #allocation1 [shape = 'u32[144,128]{1,0:T(1,128)}', space=vmem, size = 0x12000, scoped, tag = 'internal scratch']
  %s0 = inlined_call_operand.vmem [shape: bf16[8,1024], index: 0, kind: input, shape index: {}]
  %s1 = inlined_call_operand.hbm [shape: bf16[1024,2048], index: 1, kind: input, shape index: {}]
  %s2 = inlined_call_operand.hbm [shape: f32[1,2048], index: 2, kind: input, shape index: {}]
  %s3 = inlined_call_operand.vmem [shape: bf16[8,2048], index: 3, kind: output, shape index: {}]
  %s4 = sld [smem:[#allocation0]]
  $region53: #{netlinear_forward.4} parent=0
    _
  %s6 = ssub.s32 1, %s4
  %s7 = scalar_select 0, %s6, %s4
  $region1: #{netlinear_forward.4} parent=0
    #allocation2 [shape = 'u8[2097152]{0}', space=vmem, size = 0x200000, scoped, tag = 'input window, operand 1']
    #allocation3 [shape = 's32[2]{0}', space=sflag, size = 0x8, scoped, tag = 'scoped memory for netlinear_forward.4']
    #allocation4 [shape = 'u8[4096]{0}', space=vmem, size = 0x1000, scoped, tag = 'input window, operand 2']
    #allocation5 [shape = 's32[2]{0}', space=sflag, size = 0x8, scoped, tag = 'scoped memory for netlinear_forward.4']
    %8 = vsyncpa [#allocation3], 0
    %s9 = scalar_lea.sflag [#allocation3], 1
    %10 = vsyncpa %s9, 0
    %11 = vsyncpa [#allocation5], 0
    %s12 = scalar_lea.sflag [#allocation5], 1
    %13 = vsyncpa %s12, 0
    loop: start=0, step=1, limit=6
    $region2: #{netlinear_forward.4} parent=1 // loop_pre_header
      _
    $region3: #{netlinear_forward.4} parent=1 // loop_header
      %s15 = sphi 0, %s19
      %p16 = scmp.ge.s32.totalorder %s15, 6
      %s23 = sphi 0, %s23
      %s25 = sphi 0, %s23
      %s26 = sphi 0, %s25
      %s40 = sphi 0, %s26
      %s46 = sphi 0, %s48
      %s49 = sphi 0, %s46
      %s50 = sphi 0, %s49
      %s66 = sphi 0, %s50
      %s72 = sphi 0, %s74
      %s75 = sphi 0, %s72
      %s76 = sphi 0, %s75
      %s92 = sphi 0, %s76
      %s98 = sphi 0, %s100
      %s101 = sphi 0, %s98
      %s102 = sphi 0, %s101
      %s118 = sphi 0, %s102
    $region4: #{netlinear_forward.4} parent=1 // loop_header_branch
      %18 = sbr.rel (%p16) target = $region8
    $region5: #{netlinear_forward.4} parent=1 // loop_body
      %s20 = ssub.s32 %s15, 1
      %s21 = ssub.s32 %s15, 2
      %s22 = sadd.s32 %s15, 1
      %s24 = sadd.s32 %s23, 1
      %p27 = scmp.eq.s32.totalorder %s15, 3
      %p28 = scmp.ne.s32.totalorder %s23, %s25
      %p29 = scmp.eq.s32.totalorder %s15, 0
      %p30 = por %p28, %p29
      %p31 = scmp.ne.s32.totalorder %s23, %s25
      %p32 = scmp.eq.s32.totalorder %s20, 3
      %p33 = por %p31, %p32
      %p34 = scmp.ne.s32.totalorder %s25, %s26
      %p35 = scmp.eq.s32.totalorder %s20, 0
      %p36 = por %p34, %p35
      %p37 = scmp.ne.s32.totalorder %s25, %s26
      %p38 = scmp.eq.s32.totalorder %s21, 3
      %p39 = por %p37, %p38
      %p41 = scmp.ne.s32.totalorder %s26, %s40
      %p42 = scmp.eq.s32.totalorder %s21, 0
      %p43 = por %p41, %p42
      %s44 = ssub.s32 %s15, %s22
      %p45 = scmp.eq.s32.totalorder %s44, 0
      %s47 = sadd.s32 %s46, 1
      %s48 = scalar_select %p45, %s46, %s47
      %p51 = pneg %p45
      %p52 = scmp.eq.s32.totalorder %s15, 3
      %p53 = por %p51, %p52
      %p54 = scmp.ne.s32.totalorder %s46, %s49
      %p55 = scmp.eq.s32.totalorder %s15, 0
      %p56 = por %p54, %p55
      %p57 = scmp.ne.s32.totalorder %s46, %s49
      %p58 = scmp.eq.s32.totalorder %s20, 3
      %p59 = por %p57, %p58
      %p60 = scmp.ne.s32.totalorder %s49, %s50
      %p61 = scmp.eq.s32.totalorder %s20, 0
      %p62 = por %p60, %p61
      %p63 = scmp.ne.s32.totalorder %s49, %s50
      %p64 = scmp.eq.s32.totalorder %s21, 3
      %p65 = por %p63, %p64
      %p67 = scmp.ne.s32.totalorder %s50, %s66
      %p68 = scmp.eq.s32.totalorder %s21, 0
      %p69 = por %p67, %p68
      %s70 = ssub.s32 %s15, %s22
      %p71 = scmp.eq.s32.totalorder %s70, 0
      %s73 = sadd.s32 %s72, 1
      %s74 = scalar_select %p71, %s72, %s73
      %p77 = pneg %p71
      %p78 = scmp.eq.s32.totalorder %s15, 3
      %p79 = por %p77, %p78
      %p80 = scmp.ne.s32.totalorder %s72, %s75
      %p81 = scmp.eq.s32.totalorder %s15, 0
      %p82 = por %p80, %p81
      %p83 = scmp.ne.s32.totalorder %s72, %s75
      %p84 = scmp.eq.s32.totalorder %s20, 3
      %p85 = por %p83, %p84
      %p86 = scmp.ne.s32.totalorder %s75, %s76
      %p87 = scmp.eq.s32.totalorder %s20, 0
      %p88 = por %p86, %p87
      %p89 = scmp.ne.s32.totalorder %s75, %s76
      %p90 = scmp.eq.s32.totalorder %s21, 3
      %p91 = por %p89, %p90
      %p93 = scmp.ne.s32.totalorder %s76, %s92
      %p94 = scmp.eq.s32.totalorder %s21, 0
      %p95 = por %p93, %p94
      %s96 = ssub.s32 %s15, %s22
      %p97 = scmp.eq.s32.totalorder %s96, 0
      %s99 = sadd.s32 %s98, 1
      %s100 = scalar_select %p97, %s98, %s99
      %p103 = pneg %p97
      %p104 = scmp.eq.s32.totalorder %s15, 3
      %p105 = por %p103, %p104
      %p106 = scmp.ne.s32.totalorder %s98, %s101
      %p107 = scmp.eq.s32.totalorder %s15, 0
      %p108 = por %p106, %p107
      %p109 = scmp.ne.s32.totalorder %s98, %s101
      %p110 = scmp.eq.s32.totalorder %s20, 3
      %p111 = por %p109, %p110
      %p112 = scmp.ne.s32.totalorder %s101, %s102
      %p113 = scmp.eq.s32.totalorder %s20, 0
      %p114 = por %p112, %p113
      %p115 = scmp.ne.s32.totalorder %s101, %s102
      %p116 = scmp.eq.s32.totalorder %s21, 3
      %p117 = por %p115, %p116
      %p119 = scmp.ne.s32.totalorder %s102, %s118
      %p120 = scmp.eq.s32.totalorder %s21, 0
      %p121 = por %p119, %p120
      %p122 = scmp.le.s32.totalorder 1, %s15
      %p123 = scmp.lt.s32.totalorder %s15, 5
      %p124 = pnand %p122, %p123
      %p125 = pneg %p124
      // Predicated region
      $region9: #{netlinear_forward.4} parent=5 // pred_check
        _
      $region10: #{netlinear_forward.4} parent=5 // pred_check_branch
        %127 = sbr.rel (%p124) target = $region12
      $region11: #{netlinear_forward.4} parent=5 // pred_region
        %s128 = ssub.s32 %s15, 1
        // Predicated region
        $region13: #{netlinear_forward.4} parent=11 // pred_check
          %p129 = pneg %p36
        $region14: #{netlinear_forward.4} parent=11 // pred_check_branch
          %131 = sbr.rel (%p129) target = $region16
        $region15: #{netlinear_forward.4} parent=11 // pred_region
          _
        $region16: #{netlinear_forward.4} parent=11 // pred_fallthru
          _
      $region12: #{netlinear_forward.4} parent=5 // pred_fallthru
        _
      %p132 = scmp.lt.s32.totalorder %s15, 4
      // Predicated region
      $region17: #{netlinear_forward.4} parent=5 // pred_check
        %p133 = pneg %p132
      $region18: #{netlinear_forward.4} parent=5 // pred_check_branch
        %135 = sbr.rel (%p133) target = $region20
      $region19: #{netlinear_forward.4} parent=5 // pred_region
        // Predicated region
        $region21: #{netlinear_forward.4} parent=19 // pred_check
          %p136 = pneg %p56
        $region22: #{netlinear_forward.4} parent=19 // pred_check_branch
          %138 = sbr.rel (%p136) target = $region24
        $region23: #{netlinear_forward.4} parent=19 // pred_region
          %s139 = sand.u32 %s46, 1
          %s140 = scalar_lea.sflag [#allocation3], %s139
          %s141 = sand.u32 %s46, 1
          %s142 = smul.addr %s141, 2048
          %s143 = scalar_lea.vmem [#allocation2], %s142
          %s144 = smul.u32 4, %s15
          %s146 = ssub.s32 32768, 32768
          %147 = vsyncadd %s140, %s146
          %s148 = smul.addr %s144, 64
          %s149 = scalar_lea.hbm %s1, %s148
          %s150 = sshll.u32 %s143, 4
          %s151 = int_to_ptr.vmem [resolvable:$true] %s150
          %156 = dma.hbm_to_vmem [thread:$0]  %s149, 32768, %s151, %s140, 1024, 256, 16
        $region24: #{netlinear_forward.4} parent=19 // pred_fallthru
          _
        // Predicated region
        $region25: #{netlinear_forward.4} parent=19 // pred_check
          %p157 = pneg %p82
        $region26: #{netlinear_forward.4} parent=19 // pred_check_branch
          %159 = sbr.rel (%p157) target = $region28
        $region27: #{netlinear_forward.4} parent=19 // pred_region
          %s160 = sand.u32 %s72, 1
          %s161 = scalar_lea.sflag [#allocation5], %s160
          %s162 = sand.u32 %s72, 1
          %s163 = smul.addr %s162, 4
          %s164 = scalar_lea.vmem [#allocation4], %s163
          %s165 = smul.u32 4, %s15
          %s167 = ssub.s32 64, 64
          %168 = vsyncadd %s161, %s167
          %s169 = smul.addr %s165, 16
          %s170 = scalar_lea.hbm %s2, %s169
          %s172 = sshll.u32 %s164, 4
          %s173 = int_to_ptr.vmem [resolvable:$true] %s172
          %175 = dma.hbm_to_vmem [thread:$0]  %s170, 64, %s173, %s161
        $region28: #{netlinear_forward.4} parent=19 // pred_fallthru
          _
      $region20: #{netlinear_forward.4} parent=5 // pred_fallthru
        _
      %p176 = scmp.le.s32.totalorder 1, %s15
      %p177 = scmp.lt.s32.totalorder %s15, 5
      %p178 = pnand %p176, %p177
      %p179 = pneg %p178
      // Predicated region
      $region29: #{netlinear_forward.4} parent=5 // pred_check
        _
      $region30: #{netlinear_forward.4} parent=5 // pred_check_branch
        %181 = sbr.rel (%p178) target = $region32
      $region31: #{netlinear_forward.4} parent=5 // pred_region
        %s182 = ssub.s32 %s15, 1
        %s183 = sand.u32 %s49, 1
        %s184 = scalar_lea.sflag [#allocation3], %s183
        %s185 = sand.u32 %s49, 1
        %s186 = smul.addr %s185, 2048
        %s187 = scalar_lea.vmem [#allocation2], %s186
        // Predicated region
        $region33: #{netlinear_forward.4} parent=31 // pred_check
          %p188 = pneg %p62
        $region34: #{netlinear_forward.4} parent=31 // pred_check_branch
          %190 = sbr.rel (%p188) target = $region36
        $region35: #{netlinear_forward.4} parent=31 // pred_region
          %191 = dma.done %s184, 32768
        $region36: #{netlinear_forward.4} parent=31 // pred_fallthru
          _
        %s192 = sand.u32 %s75, 1
        %s193 = scalar_lea.sflag [#allocation5], %s192
        %s194 = sand.u32 %s75, 1
        %s195 = smul.addr %s194, 4
        %s196 = scalar_lea.vmem [#allocation4], %s195
        // Predicated region
        $region37: #{netlinear_forward.4} parent=31 // pred_check
          %p197 = pneg %p88
        $region38: #{netlinear_forward.4} parent=31 // pred_check_branch
          %199 = sbr.rel (%p197) target = $region40
        $region39: #{netlinear_forward.4} parent=31 // pred_region
          %200 = dma.done %s193, 64
        $region40: #{netlinear_forward.4} parent=31 // pred_fallthru
          _
        %p201 = pneg %p36
        %p202 = pneg %p33
        %s203 = sand.u32 %s49, 1
        %s204 = scalar_lea.sflag [#allocation3], %s203
        %s205 = sand.u32 %s49, 1
        %s206 = smul.addr %s205, 2048
        %s207 = scalar_lea.vmem [#allocation2], %s206
        %p208 = pneg %p62
        %p209 = pneg %p59
        %s210 = sand.u32 %s75, 1
        %s211 = scalar_lea.sflag [#allocation5], %s210
        %s212 = sand.u32 %s75, 1
        %s213 = smul.addr %s212, 4
        %s214 = scalar_lea.vmem [#allocation4], %s213
        %p215 = pneg %p88
        %p216 = pneg %p85
        %p217 = pneg %p114
        %p218 = pneg %p111
        %s219 = smul.u32 4, %s20
        %p220 = scmp.lt.s32.totalorder %s219, 15
        %s221 = scalar_select %p220, %s219, 15
        %s222 = smul.addr %s221, 4
        %s223 = scalar_lea.vmem %s3, %s222
        %s224 = smul.u32 4, %s20
        %s225 = smul.u32 4, %s20
        %s226 = smul.u32 4, %s20
        %p227 = scmp.lt.s32.totalorder %s226, 15
        %s228 = scalar_select %p227, %s226, 15
        %s229 = smul.addr %s228, 4
        %s230 = scalar_lea.vmem %s3, %s229
        %s231 = smul.u32 4, %s20
        %v232 = vld [vmem:[%s0] sm:$0xff]
        %v233 = vld [vmem:[%s0 + $0x8] sm:$0xff]
        %v234 = vld [vmem:[%s0 + $0x10] sm:$0xff]
        %v235 = vld [vmem:[%s0 + $0x18] sm:$0xff]
        %v236 = vld [vmem:[%s187] sm:$0xff]
        %v237 = vld [vmem:[%s187 + $0x8] sm:$0xff]
        %v238 = vld [vmem:[%s187 + $0x10] sm:$0xff]
        %v239 = vld [vmem:[%s187 + $0x18] sm:$0xff]
        %v240 = vld [vmem:[%s187 + $0x20] sm:$0xff]
        %v241 = vld [vmem:[%s187 + $0x28] sm:$0xff]
        %v242 = vld [vmem:[%s187 + $0x30] sm:$0xff]
        %v243 = vld [vmem:[%s187 + $0x38] sm:$0xff]
        %v244 = vld [vmem:[%s187 + $0x40] sm:$0xff]
        %v245 = vld [vmem:[%s187 + $0x48] sm:$0xff]
        %v246 = vld [vmem:[%s187 + $0x50] sm:$0xff]
        %v247 = vld [vmem:[%s187 + $0x58] sm:$0xff]
        %v248 = vld [vmem:[%s187 + $0x60] sm:$0xff]
        %v249 = vld [vmem:[%s187 + $0x68] sm:$0xff]
        %v250 = vld [vmem:[%s187 + $0x70] sm:$0xff]
        %v251 = vld [vmem:[%s187 + $0x78] sm:$0xff]
        %v252 = vld [vmem:[%s187 + $0x80] sm:$0xff]
        %v253 = vld [vmem:[%s187 + $0x88] sm:$0xff]
        %v254 = vld [vmem:[%s187 + $0x90] sm:$0xff]
        %v255 = vld [vmem:[%s187 + $0x98] sm:$0xff]
        %v256 = vld [vmem:[%s187 + $0xa0] sm:$0xff]
        %v257 = vld [vmem:[%s187 + $0xa8] sm:$0xff]
        %v258 = vld [vmem:[%s187 + $0xb0] sm:$0xff]
        %v259 = vld [vmem:[%s187 + $0xb8] sm:$0xff]
        %v260 = vld [vmem:[%s187 + $0xc0] sm:$0xff]
        %v261 = vld [vmem:[%s187 + $0xc8] sm:$0xff]
        %v262 = vld [vmem:[%s187 + $0xd0] sm:$0xff]
        %v263 = vld [vmem:[%s187 + $0xd8] sm:$0xff]
        %v264 = vld [vmem:[%s187 + $0xe0] sm:$0xff]
        %v265 = vld [vmem:[%s187 + $0xe8] sm:$0xff]
        %v266 = vld [vmem:[%s187 + $0xf0] sm:$0xff]
        %v267 = vld [vmem:[%s187 + $0xf8] sm:$0xff]
        %v268 = vld [vmem:[%s187 + $0x100] sm:$0xff]
        %v269 = vld [vmem:[%s187 + $0x108] sm:$0xff]
        %v270 = vld [vmem:[%s187 + $0x110] sm:$0xff]
        %v271 = vld [vmem:[%s187 + $0x118] sm:$0xff]
        %v272 = vld [vmem:[%s187 + $0x120] sm:$0xff]
        %v273 = vld [vmem:[%s187 + $0x128] sm:$0xff]
        %v274 = vld [vmem:[%s187 + $0x130] sm:$0xff]
        %v275 = vld [vmem:[%s187 + $0x138] sm:$0xff]
        %v276 = vld [vmem:[%s187 + $0x140] sm:$0xff]
        %v277 = vld [vmem:[%s187 + $0x148] sm:$0xff]
        %v278 = vld [vmem:[%s187 + $0x150] sm:$0xff]
        %v279 = vld [vmem:[%s187 + $0x158] sm:$0xff]
        %v280 = vld [vmem:[%s187 + $0x160] sm:$0xff]
        %v281 = vld [vmem:[%s187 + $0x168] sm:$0xff]
        %v282 = vld [vmem:[%s187 + $0x170] sm:$0xff]
        %v283 = vld [vmem:[%s187 + $0x178] sm:$0xff]
        %v284 = vld [vmem:[%s187 + $0x180] sm:$0xff]
        %v285 = vld [vmem:[%s187 + $0x188] sm:$0xff]
        %v286 = vld [vmem:[%s187 + $0x190] sm:$0xff]
        %v287 = vld [vmem:[%s187 + $0x198] sm:$0xff]
        %v288 = vld [vmem:[%s187 + $0x1a0] sm:$0xff]
        %v289 = vld [vmem:[%s187 + $0x1a8] sm:$0xff]
        %v290 = vld [vmem:[%s187 + $0x1b0] sm:$0xff]
        %v291 = vld [vmem:[%s187 + $0x1b8] sm:$0xff]
        %v292 = vld [vmem:[%s187 + $0x1c0] sm:$0xff]
        %v293 = vld [vmem:[%s187 + $0x1c8] sm:$0xff]
        %v294 = vld [vmem:[%s187 + $0x1d0] sm:$0xff]
        %v295 = vld [vmem:[%s187 + $0x1d8] sm:$0xff]
        %v296 = vld [vmem:[%s187 + $0x1e0] sm:$0xff]
        %v297 = vld [vmem:[%s187 + $0x1e8] sm:$0xff]
        %v298 = vld [vmem:[%s187 + $0x1f0] sm:$0xff]
        %v299 = vld [vmem:[%s187 + $0x1f8] sm:$0xff]
        %v300 = vld [vmem:[%s187 + $0x200] sm:$0xff]
        %v301 = vld [vmem:[%s187 + $0x208] sm:$0xff]
        %v302 = vld [vmem:[%s187 + $0x210] sm:$0xff]
        %v303 = vld [vmem:[%s187 + $0x218] sm:$0xff]
        %v304 = vld [vmem:[%s187 + $0x220] sm:$0xff]
        %v305 = vld [vmem:[%s187 + $0x228] sm:$0xff]
        %v306 = vld [vmem:[%s187 + $0x230] sm:$0xff]
        %v307 = vld [vmem:[%s187 + $0x238] sm:$0xff]
        %v308 = vld [vmem:[%s187 + $0x240] sm:$0xff]
        %v309 = vld [vmem:[%s187 + $0x248] sm:$0xff]
        %v310 = vld [vmem:[%s187 + $0x250] sm:$0xff]
        %v311 = vld [vmem:[%s187 + $0x258] sm:$0xff]
        %v312 = vld [vmem:[%s187 + $0x260] sm:$0xff]
        %v313 = vld [vmem:[%s187 + $0x268] sm:$0xff]
        %v314 = vld [vmem:[%s187 + $0x270] sm:$0xff]
        %v315 = vld [vmem:[%s187 + $0x278] sm:$0xff]
        %v316 = vld [vmem:[%s187 + $0x280] sm:$0xff]
        %v317 = vld [vmem:[%s187 + $0x288] sm:$0xff]
        %v318 = vld [vmem:[%s187 + $0x290] sm:$0xff]
        %v319 = vld [vmem:[%s187 + $0x298] sm:$0xff]
        %v320 = vld [vmem:[%s187 + $0x2a0] sm:$0xff]
        %v321 = vld [vmem:[%s187 + $0x2a8] sm:$0xff]
        %v322 = vld [vmem:[%s187 + $0x2b0] sm:$0xff]
        %v323 = vld [vmem:[%s187 + $0x2b8] sm:$0xff]
        %v324 = vld [vmem:[%s187 + $0x2c0] sm:$0xff]
        %v325 = vld [vmem:[%s187 + $0x2c8] sm:$0xff]
        %v326 = vld [vmem:[%s187 + $0x2d0] sm:$0xff]
        %v327 = vld [vmem:[%s187 + $0x2d8] sm:$0xff]
        %v328 = vld [vmem:[%s187 + $0x2e0] sm:$0xff]
        %v329 = vld [vmem:[%s187 + $0x2e8] sm:$0xff]
        %v330 = vld [vmem:[%s187 + $0x2f0] sm:$0xff]
        %v331 = vld [vmem:[%s187 + $0x2f8] sm:$0xff]
        %v332 = vld [vmem:[%s187 + $0x300] sm:$0xff]
        %v333 = vld [vmem:[%s187 + $0x308] sm:$0xff]
        %v334 = vld [vmem:[%s187 + $0x310] sm:$0xff]
        %v335 = vld [vmem:[%s187 + $0x318] sm:$0xff]
        %v336 = vld [vmem:[%s187 + $0x320] sm:$0xff]
        %v337 = vld [vmem:[%s187 + $0x328] sm:$0xff]
        %v338 = vld [vmem:[%s187 + $0x330] sm:$0xff]
        %v339 = vld [vmem:[%s187 + $0x338] sm:$0xff]
        %v340 = vld [vmem:[%s187 + $0x340] sm:$0xff]
        %v341 = vld [vmem:[%s187 + $0x348] sm:$0xff]
        %v342 = vld [vmem:[%s187 + $0x350] sm:$0xff]
        %v343 = vld [vmem:[%s187 + $0x358] sm:$0xff]
        %v344 = vld [vmem:[%s187 + $0x360] sm:$0xff]
        %v345 = vld [vmem:[%s187 + $0x368] sm:$0xff]
        %v346 = vld [vmem:[%s187 + $0x370] sm:$0xff]
        %v347 = vld [vmem:[%s187 + $0x378] sm:$0xff]
        %v348 = vld [vmem:[%s187 + $0x380] sm:$0xff]
        %v349 = vld [vmem:[%s187 + $0x388] sm:$0xff]
        %v350 = vld [vmem:[%s187 + $0x390] sm:$0xff]
        %v351 = vld [vmem:[%s187 + $0x398] sm:$0xff]
        %v352 = vld [vmem:[%s187 + $0x3a0] sm:$0xff]
        %v353 = vld [vmem:[%s187 + $0x3a8] sm:$0xff]
        %v354 = vld [vmem:[%s187 + $0x3b0] sm:$0xff]
        %v355 = vld [vmem:[%s187 + $0x3b8] sm:$0xff]
        %v356 = vld [vmem:[%s187 + $0x3c0] sm:$0xff]
        %v357 = vld [vmem:[%s187 + $0x3c8] sm:$0xff]
        %v358 = vld [vmem:[%s187 + $0x3d0] sm:$0xff]
        %v359 = vld [vmem:[%s187 + $0x3d8] sm:$0xff]
        %v360 = vld [vmem:[%s187 + $0x3e0] sm:$0xff]
        %v361 = vld [vmem:[%s187 + $0x3e8] sm:$0xff]
        %v362 = vld [vmem:[%s187 + $0x3f0] sm:$0xff]
        %v363 = vld [vmem:[%s187 + $0x3f8] sm:$0xff]
        %v364 = vld [vmem:[%s187 + $0x400] sm:$0xff]
        %v365 = vld [vmem:[%s187 + $0x408] sm:$0xff]
        %v366 = vld [vmem:[%s187 + $0x410] sm:$0xff]
        %v367 = vld [vmem:[%s187 + $0x418] sm:$0xff]
        %v368 = vld [vmem:[%s187 + $0x420] sm:$0xff]
        %v369 = vld [vmem:[%s187 + $0x428] sm:$0xff]
        %v370 = vld [vmem:[%s187 + $0x430] sm:$0xff]
        %v371 = vld [vmem:[%s187 + $0x438] sm:$0xff]
        %v372 = vld [vmem:[%s187 + $0x440] sm:$0xff]
        %v373 = vld [vmem:[%s187 + $0x448] sm:$0xff]
        %v374 = vld [vmem:[%s187 + $0x450] sm:$0xff]
        %v375 = vld [vmem:[%s187 + $0x458] sm:$0xff]
        %v376 = vld [vmem:[%s187 + $0x460] sm:$0xff]
        %v377 = vld [vmem:[%s187 + $0x468] sm:$0xff]
        %v378 = vld [vmem:[%s187 + $0x470] sm:$0xff]
        %v379 = vld [vmem:[%s187 + $0x478] sm:$0xff]
        %v380 = vld [vmem:[%s187 + $0x480] sm:$0xff]
        %v381 = vld [vmem:[%s187 + $0x488] sm:$0xff]
        %v382 = vld [vmem:[%s187 + $0x490] sm:$0xff]
        %v383 = vld [vmem:[%s187 + $0x498] sm:$0xff]
        %v384 = vld [vmem:[%s187 + $0x4a0] sm:$0xff]
        %v385 = vld [vmem:[%s187 + $0x4a8] sm:$0xff]
        %v386 = vld [vmem:[%s187 + $0x4b0] sm:$0xff]
        %v387 = vld [vmem:[%s187 + $0x4b8] sm:$0xff]
        %v388 = vld [vmem:[%s187 + $0x4c0] sm:$0xff]
        %v389 = vld [vmem:[%s187 + $0x4c8] sm:$0xff]
        %v390 = vld [vmem:[%s187 + $0x4d0] sm:$0xff]
        %v391 = vld [vmem:[%s187 + $0x4d8] sm:$0xff]
        %v392 = vld [vmem:[%s187 + $0x4e0] sm:$0xff]
        %v393 = vld [vmem:[%s187 + $0x4e8] sm:$0xff]
        %v394 = vld [vmem:[%s187 + $0x4f0] sm:$0xff]
        %v395 = vld [vmem:[%s187 + $0x4f8] sm:$0xff]
        %v396 = vld [vmem:[%s187 + $0x500] sm:$0xff]
        %v397 = vld [vmem:[%s187 + $0x508] sm:$0xff]
        %v398 = vld [vmem:[%s187 + $0x510] sm:$0xff]
        %v399 = vld [vmem:[%s187 + $0x518] sm:$0xff]
        %v400 = vld [vmem:[%s187 + $0x520] sm:$0xff]
        %v401 = vld [vmem:[%s187 + $0x528] sm:$0xff]
        %v402 = vld [vmem:[%s187 + $0x530] sm:$0xff]
        %v403 = vld [vmem:[%s187 + $0x538] sm:$0xff]
        %v404 = vld [vmem:[%s187 + $0x540] sm:$0xff]
        %v405 = vld [vmem:[%s187 + $0x548] sm:$0xff]
        %v406 = vld [vmem:[%s187 + $0x550] sm:$0xff]
        %v407 = vld [vmem:[%s187 + $0x558] sm:$0xff]
        %v408 = vld [vmem:[%s187 + $0x560] sm:$0xff]
        %v409 = vld [vmem:[%s187 + $0x568] sm:$0xff]
        %v410 = vld [vmem:[%s187 + $0x570] sm:$0xff]
        %v411 = vld [vmem:[%s187 + $0x578] sm:$0xff]
        %v412 = vld [vmem:[%s187 + $0x580] sm:$0xff]
        %v413 = vld [vmem:[%s187 + $0x588] sm:$0xff]
        %v414 = vld [vmem:[%s187 + $0x590] sm:$0xff]
        %v415 = vld [vmem:[%s187 + $0x598] sm:$0xff]
        %v416 = vld [vmem:[%s187 + $0x5a0] sm:$0xff]
        %v417 = vld [vmem:[%s187 + $0x5a8] sm:$0xff]
        %v418 = vld [vmem:[%s187 + $0x5b0] sm:$0xff]
        %v419 = vld [vmem:[%s187 + $0x5b8] sm:$0xff]
        %v420 = vld [vmem:[%s187 + $0x5c0] sm:$0xff]
        %v421 = vld [vmem:[%s187 + $0x5c8] sm:$0xff]
        %v422 = vld [vmem:[%s187 + $0x5d0] sm:$0xff]
        %v423 = vld [vmem:[%s187 + $0x5d8] sm:$0xff]
        %v424 = vld [vmem:[%s187 + $0x5e0] sm:$0xff]
        %v425 = vld [vmem:[%s187 + $0x5e8] sm:$0xff]
        %v426 = vld [vmem:[%s187 + $0x5f0] sm:$0xff]
        %v427 = vld [vmem:[%s187 + $0x5f8] sm:$0xff]
        %v428 = vld [vmem:[%s187 + $0x600] sm:$0xff]
        %v429 = vld [vmem:[%s187 + $0x608] sm:$0xff]
        %v430 = vld [vmem:[%s187 + $0x610] sm:$0xff]
        %v431 = vld [vmem:[%s187 + $0x618] sm:$0xff]
        %v432 = vld [vmem:[%s187 + $0x620] sm:$0xff]
        %v433 = vld [vmem:[%s187 + $0x628] sm:$0xff]
        %v434 = vld [vmem:[%s187 + $0x630] sm:$0xff]
        %v435 = vld [vmem:[%s187 + $0x638] sm:$0xff]
        %v436 = vld [vmem:[%s187 + $0x640] sm:$0xff]
        %v437 = vld [vmem:[%s187 + $0x648] sm:$0xff]
        %v438 = vld [vmem:[%s187 + $0x650] sm:$0xff]
        %v439 = vld [vmem:[%s187 + $0x658] sm:$0xff]
        %v440 = vld [vmem:[%s187 + $0x660] sm:$0xff]
        %v441 = vld [vmem:[%s187 + $0x668] sm:$0xff]
        %v442 = vld [vmem:[%s187 + $0x670] sm:$0xff]
        %v443 = vld [vmem:[%s187 + $0x678] sm:$0xff]
        %v444 = vld [vmem:[%s187 + $0x680] sm:$0xff]
        %v445 = vld [vmem:[%s187 + $0x688] sm:$0xff]
        %v446 = vld [vmem:[%s187 + $0x690] sm:$0xff]
        %v447 = vld [vmem:[%s187 + $0x698] sm:$0xff]
        %v448 = vld [vmem:[%s187 + $0x6a0] sm:$0xff]
        %v449 = vld [vmem:[%s187 + $0x6a8] sm:$0xff]
        %v450 = vld [vmem:[%s187 + $0x6b0] sm:$0xff]
        %v451 = vld [vmem:[%s187 + $0x6b8] sm:$0xff]
        %v452 = vld [vmem:[%s187 + $0x6c0] sm:$0xff]
        %v453 = vld [vmem:[%s187 + $0x6c8] sm:$0xff]
        %v454 = vld [vmem:[%s187 + $0x6d0] sm:$0xff]
        %v455 = vld [vmem:[%s187 + $0x6d8] sm:$0xff]
        %v456 = vld [vmem:[%s187 + $0x6e0] sm:$0xff]
        %v457 = vld [vmem:[%s187 + $0x6e8] sm:$0xff]
        %v458 = vld [vmem:[%s187 + $0x6f0] sm:$0xff]
        %v459 = vld [vmem:[%s187 + $0x6f8] sm:$0xff]
        %v460 = vld [vmem:[%s187 + $0x700] sm:$0xff]
        %v461 = vld [vmem:[%s187 + $0x708] sm:$0xff]
        %v462 = vld [vmem:[%s187 + $0x710] sm:$0xff]
        %v463 = vld [vmem:[%s187 + $0x718] sm:$0xff]
        %v464 = vld [vmem:[%s187 + $0x720] sm:$0xff]
        %v465 = vld [vmem:[%s187 + $0x728] sm:$0xff]
        %v466 = vld [vmem:[%s187 + $0x730] sm:$0xff]
        %v467 = vld [vmem:[%s187 + $0x738] sm:$0xff]
        %v468 = vld [vmem:[%s187 + $0x740] sm:$0xff]
        %v469 = vld [vmem:[%s187 + $0x748] sm:$0xff]
        %v470 = vld [vmem:[%s187 + $0x750] sm:$0xff]
        %v471 = vld [vmem:[%s187 + $0x758] sm:$0xff]
        %v472 = vld [vmem:[%s187 + $0x760] sm:$0xff]
        %v473 = vld [vmem:[%s187 + $0x768] sm:$0xff]
        %v474 = vld [vmem:[%s187 + $0x770] sm:$0xff]
        %v475 = vld [vmem:[%s187 + $0x778] sm:$0xff]
        %v476 = vld [vmem:[%s187 + $0x780] sm:$0xff]
        %v477 = vld [vmem:[%s187 + $0x788] sm:$0xff]
        %v478 = vld [vmem:[%s187 + $0x790] sm:$0xff]
        %v479 = vld [vmem:[%s187 + $0x798] sm:$0xff]
        %v480 = vld [vmem:[%s187 + $0x7a0] sm:$0xff]
        %v481 = vld [vmem:[%s187 + $0x7a8] sm:$0xff]
        %v482 = vld [vmem:[%s187 + $0x7b0] sm:$0xff]
        %v483 = vld [vmem:[%s187 + $0x7b8] sm:$0xff]
        %v484 = vld [vmem:[%s187 + $0x7c0] sm:$0xff]
        %v485 = vld [vmem:[%s187 + $0x7c8] sm:$0xff]
        %v486 = vld [vmem:[%s187 + $0x7d0] sm:$0xff]
        %v487 = vld [vmem:[%s187 + $0x7d8] sm:$0xff]
        %v488 = vld [vmem:[%s187 + $0x7e0] sm:$0xff]
        %v489 = vld [vmem:[%s187 + $0x7e8] sm:$0xff]
        %v490 = vld [vmem:[%s187 + $0x7f0] sm:$0xff]
        %v491 = vld [vmem:[%s187 + $0x7f8] sm:$0xff]
        %v492 = vld [vmem:[%s196] sm:$0xf]
        %v494 = vlaneseq
        %v495 = vshrl.u32 %v494, 7
        %v496 = vsub.s32 0, %v495
        %v497 = vrot.slane %v492, %v496
        %v498 = vlaneseq
        %v499 = vshrl.u32 %v498, 7
        %v500 = vsub.s32 1, %v499
        %v501 = vrot.slane %v492, %v500
        %v502 = vlaneseq
        %v503 = vshrl.u32 %v502, 7
        %v504 = vsub.s32 2, %v503
        %v505 = vrot.slane %v492, %v504
        %v506 = vlaneseq
        %v507 = vshrl.u32 %v506, 7
        %v508 = vsub.s32 3, %v507
        %v509 = vrot.slane %v492, %v508
        %v518 = vunpack.c.l.b16 %v232
        %v519 = vunpack.c.h.b16 %v232
        %v520 = vunpack.c.l.b16 %v233
        %v521 = vunpack.c.h.b16 %v233
        %v522 = vunpack.c.l.b16 %v234
        %v523 = vunpack.c.h.b16 %v234
        %v524 = vunpack.c.l.b16 %v235
        %v525 = vunpack.c.h.b16 %v235
        %v526 = vpack.c.b16 %v518, %v518
        %v527 = vpack.c.b16 %v519, %v519
        %v528 = vpack.c.b16 %v520, %v520
        %v529 = vpack.c.b16 %v521, %v521
        %v530 = vpack.c.b16 %v522, %v522
        %v531 = vpack.c.b16 %v523, %v523
        %v532 = vpack.c.b16 %v524, %v524
        %v533 = vpack.c.b16 %v525, %v525
        %v798 = vunpack.c.l.b16 %v236
        %v799 = vunpack.c.h.b16 %v236
        %v800 = vunpack.c.l.b16 %v237
        %v801 = vunpack.c.h.b16 %v237
        %v802 = vunpack.c.l.b16 %v238
        %v803 = vunpack.c.h.b16 %v238
        %v804 = vunpack.c.l.b16 %v239
        %v805 = vunpack.c.h.b16 %v239
        %v806 = vunpack.c.l.b16 %v240
        %v807 = vunpack.c.h.b16 %v240
        %v808 = vunpack.c.l.b16 %v241
        %v809 = vunpack.c.h.b16 %v241
        %v810 = vunpack.c.l.b16 %v242
        %v811 = vunpack.c.h.b16 %v242
        %v812 = vunpack.c.l.b16 %v243
        %v813 = vunpack.c.h.b16 %v243
        %v814 = vunpack.c.l.b16 %v244
        %v815 = vunpack.c.h.b16 %v244
        %v816 = vunpack.c.l.b16 %v245
        %v817 = vunpack.c.h.b16 %v245
        %v818 = vunpack.c.l.b16 %v246
        %v819 = vunpack.c.h.b16 %v246
        %v820 = vunpack.c.l.b16 %v247
        %v821 = vunpack.c.h.b16 %v247
        %v822 = vunpack.c.l.b16 %v248
        %v823 = vunpack.c.h.b16 %v248
        %v824 = vunpack.c.l.b16 %v249
        %v825 = vunpack.c.h.b16 %v249
        %v826 = vunpack.c.l.b16 %v250
        %v827 = vunpack.c.h.b16 %v250
        %v828 = vunpack.c.l.b16 %v251
        %v829 = vunpack.c.h.b16 %v251
        %v830 = vunpack.c.l.b16 %v252
        %v831 = vunpack.c.h.b16 %v252
        %v832 = vunpack.c.l.b16 %v253
        %v833 = vunpack.c.h.b16 %v253
        %v834 = vunpack.c.l.b16 %v254
        %v835 = vunpack.c.h.b16 %v254
        %v836 = vunpack.c.l.b16 %v255
        %v837 = vunpack.c.h.b16 %v255
        %v838 = vunpack.c.l.b16 %v256
        %v839 = vunpack.c.h.b16 %v256
        %v840 = vunpack.c.l.b16 %v257
        %v841 = vunpack.c.h.b16 %v257
        %v842 = vunpack.c.l.b16 %v258
        %v843 = vunpack.c.h.b16 %v258
        %v844 = vunpack.c.l.b16 %v259
        %v845 = vunpack.c.h.b16 %v259
        %v846 = vunpack.c.l.b16 %v260
        %v847 = vunpack.c.h.b16 %v260
        %v848 = vunpack.c.l.b16 %v261
        %v849 = vunpack.c.h.b16 %v261
        %v850 = vunpack.c.l.b16 %v262
        %v851 = vunpack.c.h.b16 %v262
        %v852 = vunpack.c.l.b16 %v263
        %v853 = vunpack.c.h.b16 %v263
        %v854 = vunpack.c.l.b16 %v264
        %v855 = vunpack.c.h.b16 %v264
        %v856 = vunpack.c.l.b16 %v265
        %v857 = vunpack.c.h.b16 %v265
        %v858 = vunpack.c.l.b16 %v266
        %v859 = vunpack.c.h.b16 %v266
        %v860 = vunpack.c.l.b16 %v267
        %v861 = vunpack.c.h.b16 %v267
        %v862 = vunpack.c.l.b16 %v268
        %v863 = vunpack.c.h.b16 %v268
        %v864 = vunpack.c.l.b16 %v269
        %v865 = vunpack.c.h.b16 %v269
        %v866 = vunpack.c.l.b16 %v270
        %v867 = vunpack.c.h.b16 %v270
        %v868 = vunpack.c.l.b16 %v271
        %v869 = vunpack.c.h.b16 %v271
        %v870 = vunpack.c.l.b16 %v272
        %v871 = vunpack.c.h.b16 %v272
        %v872 = vunpack.c.l.b16 %v273
        %v873 = vunpack.c.h.b16 %v273
        %v874 = vunpack.c.l.b16 %v274
        %v875 = vunpack.c.h.b16 %v274
        %v876 = vunpack.c.l.b16 %v275
        %v877 = vunpack.c.h.b16 %v275
        %v878 = vunpack.c.l.b16 %v276
        %v879 = vunpack.c.h.b16 %v276
        %v880 = vunpack.c.l.b16 %v277
        %v881 = vunpack.c.h.b16 %v277
        %v882 = vunpack.c.l.b16 %v278
        %v883 = vunpack.c.h.b16 %v278
        %v884 = vunpack.c.l.b16 %v279
        %v885 = vunpack.c.h.b16 %v279
        %v886 = vunpack.c.l.b16 %v280
        %v887 = vunpack.c.h.b16 %v280
        %v888 = vunpack.c.l.b16 %v281
        %v889 = vunpack.c.h.b16 %v281
        %v890 = vunpack.c.l.b16 %v282
        %v891 = vunpack.c.h.b16 %v282
        %v892 = vunpack.c.l.b16 %v283
        %v893 = vunpack.c.h.b16 %v283
        %v894 = vunpack.c.l.b16 %v284
        %v895 = vunpack.c.h.b16 %v284
        %v896 = vunpack.c.l.b16 %v285
        %v897 = vunpack.c.h.b16 %v285
        %v898 = vunpack.c.l.b16 %v286
        %v899 = vunpack.c.h.b16 %v286
        %v900 = vunpack.c.l.b16 %v287
        %v901 = vunpack.c.h.b16 %v287
        %v902 = vunpack.c.l.b16 %v288
        %v903 = vunpack.c.h.b16 %v288
        %v904 = vunpack.c.l.b16 %v289
        %v905 = vunpack.c.h.b16 %v289
        %v906 = vunpack.c.l.b16 %v290
        %v907 = vunpack.c.h.b16 %v290
        %v908 = vunpack.c.l.b16 %v291
        %v909 = vunpack.c.h.b16 %v291
        %v910 = vunpack.c.l.b16 %v292
        %v911 = vunpack.c.h.b16 %v292
        %v912 = vunpack.c.l.b16 %v293
        %v913 = vunpack.c.h.b16 %v293
        %v914 = vunpack.c.l.b16 %v294
        %v915 = vunpack.c.h.b16 %v294
        %v916 = vunpack.c.l.b16 %v295
        %v917 = vunpack.c.h.b16 %v295
        %v918 = vunpack.c.l.b16 %v296
        %v919 = vunpack.c.h.b16 %v296
        %v920 = vunpack.c.l.b16 %v297
        %v921 = vunpack.c.h.b16 %v297
        %v922 = vunpack.c.l.b16 %v298
        %v923 = vunpack.c.h.b16 %v298
        %v924 = vunpack.c.l.b16 %v299
        %v925 = vunpack.c.h.b16 %v299
        %v926 = vunpack.c.l.b16 %v300
        %v927 = vunpack.c.h.b16 %v300
        %v928 = vunpack.c.l.b16 %v301
        %v929 = vunpack.c.h.b16 %v301
        %v930 = vunpack.c.l.b16 %v302
        %v931 = vunpack.c.h.b16 %v302
        %v932 = vunpack.c.l.b16 %v303
        %v933 = vunpack.c.h.b16 %v303
        %v934 = vunpack.c.l.b16 %v304
        %v935 = vunpack.c.h.b16 %v304
        %v936 = vunpack.c.l.b16 %v305
        %v937 = vunpack.c.h.b16 %v305
        %v938 = vunpack.c.l.b16 %v306
        %v939 = vunpack.c.h.b16 %v306
        %v940 = vunpack.c.l.b16 %v307
        %v941 = vunpack.c.h.b16 %v307
        %v942 = vunpack.c.l.b16 %v308
        %v943 = vunpack.c.h.b16 %v308
        %v944 = vunpack.c.l.b16 %v309
        %v945 = vunpack.c.h.b16 %v309
        %v946 = vunpack.c.l.b16 %v310
        %v947 = vunpack.c.h.b16 %v310
        %v948 = vunpack.c.l.b16 %v311
        %v949 = vunpack.c.h.b16 %v311
        %v950 = vunpack.c.l.b16 %v312
        %v951 = vunpack.c.h.b16 %v312
        %v952 = vunpack.c.l.b16 %v313
        %v953 = vunpack.c.h.b16 %v313
        %v954 = vunpack.c.l.b16 %v314
        %v955 = vunpack.c.h.b16 %v314
        %v956 = vunpack.c.l.b16 %v315
        %v957 = vunpack.c.h.b16 %v315
        %v958 = vunpack.c.l.b16 %v316
        %v959 = vunpack.c.h.b16 %v316
        %v960 = vunpack.c.l.b16 %v317
        %v961 = vunpack.c.h.b16 %v317
        %v962 = vunpack.c.l.b16 %v318
        %v963 = vunpack.c.h.b16 %v318
        %v964 = vunpack.c.l.b16 %v319
        %v965 = vunpack.c.h.b16 %v319
        %v966 = vunpack.c.l.b16 %v320
        %v967 = vunpack.c.h.b16 %v320
        %v968 = vunpack.c.l.b16 %v321
        %v969 = vunpack.c.h.b16 %v321
        %v970 = vunpack.c.l.b16 %v322
        %v971 = vunpack.c.h.b16 %v322
        %v972 = vunpack.c.l.b16 %v323
        %v973 = vunpack.c.h.b16 %v323
        %v974 = vunpack.c.l.b16 %v324
        %v975 = vunpack.c.h.b16 %v324
        %v976 = vunpack.c.l.b16 %v325
        %v977 = vunpack.c.h.b16 %v325
        %v978 = vunpack.c.l.b16 %v326
        %v979 = vunpack.c.h.b16 %v326
        %v980 = vunpack.c.l.b16 %v327
        %v981 = vunpack.c.h.b16 %v327
        %v982 = vunpack.c.l.b16 %v328
        %v983 = vunpack.c.h.b16 %v328
        %v984 = vunpack.c.l.b16 %v329
        %v985 = vunpack.c.h.b16 %v329
        %v986 = vunpack.c.l.b16 %v330
        %v987 = vunpack.c.h.b16 %v330
        %v988 = vunpack.c.l.b16 %v331
        %v989 = vunpack.c.h.b16 %v331
        %v990 = vunpack.c.l.b16 %v332
        %v991 = vunpack.c.h.b16 %v332
        %v992 = vunpack.c.l.b16 %v333
        %v993 = vunpack.c.h.b16 %v333
        %v994 = vunpack.c.l.b16 %v334
        %v995 = vunpack.c.h.b16 %v334
        %v996 = vunpack.c.l.b16 %v335
        %v997 = vunpack.c.h.b16 %v335
        %v998 = vunpack.c.l.b16 %v336
        %v999 = vunpack.c.h.b16 %v336
        %v1000 = vunpack.c.l.b16 %v337
        %v1001 = vunpack.c.h.b16 %v337
        %v1002 = vunpack.c.l.b16 %v338
        %v1003 = vunpack.c.h.b16 %v338
        %v1004 = vunpack.c.l.b16 %v339
        %v1005 = vunpack.c.h.b16 %v339
        %v1006 = vunpack.c.l.b16 %v340
        %v1007 = vunpack.c.h.b16 %v340
        %v1008 = vunpack.c.l.b16 %v341
        %v1009 = vunpack.c.h.b16 %v341
        %v1010 = vunpack.c.l.b16 %v342
        %v1011 = vunpack.c.h.b16 %v342
        %v1012 = vunpack.c.l.b16 %v343
        %v1013 = vunpack.c.h.b16 %v343
        %v1014 = vunpack.c.l.b16 %v344
        %v1015 = vunpack.c.h.b16 %v344
        %v1016 = vunpack.c.l.b16 %v345
        %v1017 = vunpack.c.h.b16 %v345
        %v1018 = vunpack.c.l.b16 %v346
        %v1019 = vunpack.c.h.b16 %v346
        %v1020 = vunpack.c.l.b16 %v347
        %v1021 = vunpack.c.h.b16 %v347
        %v1022 = vunpack.c.l.b16 %v348
        %v1023 = vunpack.c.h.b16 %v348
        %v1024 = vunpack.c.l.b16 %v349
        %v1025 = vunpack.c.h.b16 %v349
        %v1026 = vunpack.c.l.b16 %v350
        %v1027 = vunpack.c.h.b16 %v350
        %v1028 = vunpack.c.l.b16 %v351
        %v1029 = vunpack.c.h.b16 %v351
        %v1030 = vunpack.c.l.b16 %v352
        %v1031 = vunpack.c.h.b16 %v352
        %v1032 = vunpack.c.l.b16 %v353
        %v1033 = vunpack.c.h.b16 %v353
        %v1034 = vunpack.c.l.b16 %v354
        %v1035 = vunpack.c.h.b16 %v354
        %v1036 = vunpack.c.l.b16 %v355
        %v1037 = vunpack.c.h.b16 %v355
        %v1038 = vunpack.c.l.b16 %v356
        %v1039 = vunpack.c.h.b16 %v356
        %v1040 = vunpack.c.l.b16 %v357
        %v1041 = vunpack.c.h.b16 %v357
        %v1042 = vunpack.c.l.b16 %v358
        %v1043 = vunpack.c.h.b16 %v358
        %v1044 = vunpack.c.l.b16 %v359
        %v1045 = vunpack.c.h.b16 %v359
        %v1046 = vunpack.c.l.b16 %v360
        %v1047 = vunpack.c.h.b16 %v360
        %v1048 = vunpack.c.l.b16 %v361
        %v1049 = vunpack.c.h.b16 %v361
        %v1050 = vunpack.c.l.b16 %v362
        %v1051 = vunpack.c.h.b16 %v362
        %v1052 = vunpack.c.l.b16 %v363
        %v1053 = vunpack.c.h.b16 %v363
        %v1054 = vunpack.c.l.b16 %v364
        %v1055 = vunpack.c.h.b16 %v364
        %v1056 = vunpack.c.l.b16 %v365
        %v1057 = vunpack.c.h.b16 %v365
        %v1058 = vunpack.c.l.b16 %v366
        %v1059 = vunpack.c.h.b16 %v366
        %v1060 = vunpack.c.l.b16 %v367
        %v1061 = vunpack.c.h.b16 %v367
        %v1062 = vunpack.c.l.b16 %v368
        %v1063 = vunpack.c.h.b16 %v368
        %v1064 = vunpack.c.l.b16 %v369
        %v1065 = vunpack.c.h.b16 %v369
        %v1066 = vunpack.c.l.b16 %v370
        %v1067 = vunpack.c.h.b16 %v370
        %v1068 = vunpack.c.l.b16 %v371
        %v1069 = vunpack.c.h.b16 %v371
        %v1070 = vunpack.c.l.b16 %v372
        %v1071 = vunpack.c.h.b16 %v372
        %v1072 = vunpack.c.l.b16 %v373
        %v1073 = vunpack.c.h.b16 %v373
        %v1074 = vunpack.c.l.b16 %v374
        %v1075 = vunpack.c.h.b16 %v374
        %v1076 = vunpack.c.l.b16 %v375
        %v1077 = vunpack.c.h.b16 %v375
        %v1078 = vunpack.c.l.b16 %v376
        %v1079 = vunpack.c.h.b16 %v376
        %v1080 = vunpack.c.l.b16 %v377
        %v1081 = vunpack.c.h.b16 %v377
        %v1082 = vunpack.c.l.b16 %v378
        %v1083 = vunpack.c.h.b16 %v378
        %v1084 = vunpack.c.l.b16 %v379
        %v1085 = vunpack.c.h.b16 %v379
        %v1086 = vunpack.c.l.b16 %v380
        %v1087 = vunpack.c.h.b16 %v380
        %v1088 = vunpack.c.l.b16 %v381
        %v1089 = vunpack.c.h.b16 %v381
        %v1090 = vunpack.c.l.b16 %v382
        %v1091 = vunpack.c.h.b16 %v382
        %v1092 = vunpack.c.l.b16 %v383
        %v1093 = vunpack.c.h.b16 %v383
        %v1094 = vunpack.c.l.b16 %v384
        %v1095 = vunpack.c.h.b16 %v384
        %v1096 = vunpack.c.l.b16 %v385
        %v1097 = vunpack.c.h.b16 %v385
        %v1098 = vunpack.c.l.b16 %v386
        %v1099 = vunpack.c.h.b16 %v386
        %v1100 = vunpack.c.l.b16 %v387
        %v1101 = vunpack.c.h.b16 %v387
        %v1102 = vunpack.c.l.b16 %v388
        %v1103 = vunpack.c.h.b16 %v388
        %v1104 = vunpack.c.l.b16 %v389
        %v1105 = vunpack.c.h.b16 %v389
        %v1106 = vunpack.c.l.b16 %v390
        %v1107 = vunpack.c.h.b16 %v390
        %v1108 = vunpack.c.l.b16 %v391
        %v1109 = vunpack.c.h.b16 %v391
        %v1110 = vunpack.c.l.b16 %v392
        %v1111 = vunpack.c.h.b16 %v392
        %v1112 = vunpack.c.l.b16 %v393
        %v1113 = vunpack.c.h.b16 %v393
        %v1114 = vunpack.c.l.b16 %v394
        %v1115 = vunpack.c.h.b16 %v394
        %v1116 = vunpack.c.l.b16 %v395
        %v1117 = vunpack.c.h.b16 %v395
        %v1118 = vunpack.c.l.b16 %v396
        %v1119 = vunpack.c.h.b16 %v396
        %v1120 = vunpack.c.l.b16 %v397
        %v1121 = vunpack.c.h.b16 %v397
        %v1122 = vunpack.c.l.b16 %v398
        %v1123 = vunpack.c.h.b16 %v398
        %v1124 = vunpack.c.l.b16 %v399
        %v1125 = vunpack.c.h.b16 %v399
        %v1126 = vunpack.c.l.b16 %v400
        %v1127 = vunpack.c.h.b16 %v400
        %v1128 = vunpack.c.l.b16 %v401
        %v1129 = vunpack.c.h.b16 %v401
        %v1130 = vunpack.c.l.b16 %v402
        %v1131 = vunpack.c.h.b16 %v402
        %v1132 = vunpack.c.l.b16 %v403
        %v1133 = vunpack.c.h.b16 %v403
        %v1134 = vunpack.c.l.b16 %v404
        %v1135 = vunpack.c.h.b16 %v404
        %v1136 = vunpack.c.l.b16 %v405
        %v1137 = vunpack.c.h.b16 %v405
        %v1138 = vunpack.c.l.b16 %v406
        %v1139 = vunpack.c.h.b16 %v406
        %v1140 = vunpack.c.l.b16 %v407
        %v1141 = vunpack.c.h.b16 %v407
        %v1142 = vunpack.c.l.b16 %v408
        %v1143 = vunpack.c.h.b16 %v408
        %v1144 = vunpack.c.l.b16 %v409
        %v1145 = vunpack.c.h.b16 %v409
        %v1146 = vunpack.c.l.b16 %v410
        %v1147 = vunpack.c.h.b16 %v410
        %v1148 = vunpack.c.l.b16 %v411
        %v1149 = vunpack.c.h.b16 %v411
        %v1150 = vunpack.c.l.b16 %v412
        %v1151 = vunpack.c.h.b16 %v412
        %v1152 = vunpack.c.l.b16 %v413
        %v1153 = vunpack.c.h.b16 %v413
        %v1154 = vunpack.c.l.b16 %v414
        %v1155 = vunpack.c.h.b16 %v414
        %v1156 = vunpack.c.l.b16 %v415
        %v1157 = vunpack.c.h.b16 %v415
        %v1158 = vunpack.c.l.b16 %v416
        %v1159 = vunpack.c.h.b16 %v416
        %v1160 = vunpack.c.l.b16 %v417
        %v1161 = vunpack.c.h.b16 %v417
        %v1162 = vunpack.c.l.b16 %v418
        %v1163 = vunpack.c.h.b16 %v418
        %v1164 = vunpack.c.l.b16 %v419
        %v1165 = vunpack.c.h.b16 %v419
        %v1166 = vunpack.c.l.b16 %v420
        %v1167 = vunpack.c.h.b16 %v420
        %v1168 = vunpack.c.l.b16 %v421
        %v1169 = vunpack.c.h.b16 %v421
        %v1170 = vunpack.c.l.b16 %v422
        %v1171 = vunpack.c.h.b16 %v422
        %v1172 = vunpack.c.l.b16 %v423
        %v1173 = vunpack.c.h.b16 %v423
        %v1174 = vunpack.c.l.b16 %v424
        %v1175 = vunpack.c.h.b16 %v424
        %v1176 = vunpack.c.l.b16 %v425
        %v1177 = vunpack.c.h.b16 %v425
        %v1178 = vunpack.c.l.b16 %v426
        %v1179 = vunpack.c.h.b16 %v426
        %v1180 = vunpack.c.l.b16 %v427
        %v1181 = vunpack.c.h.b16 %v427
        %v1182 = vunpack.c.l.b16 %v428
        %v1183 = vunpack.c.h.b16 %v428
        %v1184 = vunpack.c.l.b16 %v429
        %v1185 = vunpack.c.h.b16 %v429
        %v1186 = vunpack.c.l.b16 %v430
        %v1187 = vunpack.c.h.b16 %v430
        %v1188 = vunpack.c.l.b16 %v431
        %v1189 = vunpack.c.h.b16 %v431
        %v1190 = vunpack.c.l.b16 %v432
        %v1191 = vunpack.c.h.b16 %v432
        %v1192 = vunpack.c.l.b16 %v433
        %v1193 = vunpack.c.h.b16 %v433
        %v1194 = vunpack.c.l.b16 %v434
        %v1195 = vunpack.c.h.b16 %v434
        %v1196 = vunpack.c.l.b16 %v435
        %v1197 = vunpack.c.h.b16 %v435
        %v1198 = vunpack.c.l.b16 %v436
        %v1199 = vunpack.c.h.b16 %v436
        %v1200 = vunpack.c.l.b16 %v437
        %v1201 = vunpack.c.h.b16 %v437
        %v1202 = vunpack.c.l.b16 %v438
        %v1203 = vunpack.c.h.b16 %v438
        %v1204 = vunpack.c.l.b16 %v439
        %v1205 = vunpack.c.h.b16 %v439
        %v1206 = vunpack.c.l.b16 %v440
        %v1207 = vunpack.c.h.b16 %v440
        %v1208 = vunpack.c.l.b16 %v441
        %v1209 = vunpack.c.h.b16 %v441
        %v1210 = vunpack.c.l.b16 %v442
        %v1211 = vunpack.c.h.b16 %v442
        %v1212 = vunpack.c.l.b16 %v443
        %v1213 = vunpack.c.h.b16 %v443
        %v1214 = vunpack.c.l.b16 %v444
        %v1215 = vunpack.c.h.b16 %v444
        %v1216 = vunpack.c.l.b16 %v445
        %v1217 = vunpack.c.h.b16 %v445
        %v1218 = vunpack.c.l.b16 %v446
        %v1219 = vunpack.c.h.b16 %v446
        %v1220 = vunpack.c.l.b16 %v447
        %v1221 = vunpack.c.h.b16 %v447
        %v1222 = vunpack.c.l.b16 %v448
        %v1223 = vunpack.c.h.b16 %v448
        %v1224 = vunpack.c.l.b16 %v449
        %v1225 = vunpack.c.h.b16 %v449
        %v1226 = vunpack.c.l.b16 %v450
        %v1227 = vunpack.c.h.b16 %v450
        %v1228 = vunpack.c.l.b16 %v451
        %v1229 = vunpack.c.h.b16 %v451
        %v1230 = vunpack.c.l.b16 %v452
        %v1231 = vunpack.c.h.b16 %v452
        %v1232 = vunpack.c.l.b16 %v453
        %v1233 = vunpack.c.h.b16 %v453
        %v1234 = vunpack.c.l.b16 %v454
        %v1235 = vunpack.c.h.b16 %v454
        %v1236 = vunpack.c.l.b16 %v455
        %v1237 = vunpack.c.h.b16 %v455
        %v1238 = vunpack.c.l.b16 %v456
        %v1239 = vunpack.c.h.b16 %v456
        %v1240 = vunpack.c.l.b16 %v457
        %v1241 = vunpack.c.h.b16 %v457
        %v1242 = vunpack.c.l.b16 %v458
        %v1243 = vunpack.c.h.b16 %v458
        %v1244 = vunpack.c.l.b16 %v459
        %v1245 = vunpack.c.h.b16 %v459
        %v1246 = vunpack.c.l.b16 %v460
        %v1247 = vunpack.c.h.b16 %v460
        %v1248 = vunpack.c.l.b16 %v461
        %v1249 = vunpack.c.h.b16 %v461
        %v1250 = vunpack.c.l.b16 %v462
        %v1251 = vunpack.c.h.b16 %v462
        %v1252 = vunpack.c.l.b16 %v463
        %v1253 = vunpack.c.h.b16 %v463
        %v1254 = vunpack.c.l.b16 %v464
        %v1255 = vunpack.c.h.b16 %v464
        %v1256 = vunpack.c.l.b16 %v465
        %v1257 = vunpack.c.h.b16 %v465
        %v1258 = vunpack.c.l.b16 %v466
        %v1259 = vunpack.c.h.b16 %v466
        %v1260 = vunpack.c.l.b16 %v467
        %v1261 = vunpack.c.h.b16 %v467
        %v1262 = vunpack.c.l.b16 %v468
        %v1263 = vunpack.c.h.b16 %v468
        %v1264 = vunpack.c.l.b16 %v469
        %v1265 = vunpack.c.h.b16 %v469
        %v1266 = vunpack.c.l.b16 %v470
        %v1267 = vunpack.c.h.b16 %v470
        %v1268 = vunpack.c.l.b16 %v471
        %v1269 = vunpack.c.h.b16 %v471
        %v1270 = vunpack.c.l.b16 %v472
        %v1271 = vunpack.c.h.b16 %v472
        %v1272 = vunpack.c.l.b16 %v473
        %v1273 = vunpack.c.h.b16 %v473
        %v1274 = vunpack.c.l.b16 %v474
        %v1275 = vunpack.c.h.b16 %v474
        %v1276 = vunpack.c.l.b16 %v475
        %v1277 = vunpack.c.h.b16 %v475
        %v1278 = vunpack.c.l.b16 %v476
        %v1279 = vunpack.c.h.b16 %v476
        %v1280 = vunpack.c.l.b16 %v477
        %v1281 = vunpack.c.h.b16 %v477
        %v1282 = vunpack.c.l.b16 %v478
        %v1283 = vunpack.c.h.b16 %v478
        %v1284 = vunpack.c.l.b16 %v479
        %v1285 = vunpack.c.h.b16 %v479
        %v1286 = vunpack.c.l.b16 %v480
        %v1287 = vunpack.c.h.b16 %v480
        %v1288 = vunpack.c.l.b16 %v481
        %v1289 = vunpack.c.h.b16 %v481
        %v1290 = vunpack.c.l.b16 %v482
        %v1291 = vunpack.c.h.b16 %v482
        %v1292 = vunpack.c.l.b16 %v483
        %v1293 = vunpack.c.h.b16 %v483
        %v1294 = vunpack.c.l.b16 %v484
        %v1295 = vunpack.c.h.b16 %v484
        %v1296 = vunpack.c.l.b16 %v485
        %v1297 = vunpack.c.h.b16 %v485
        %v1298 = vunpack.c.l.b16 %v486
        %v1299 = vunpack.c.h.b16 %v486
        %v1300 = vunpack.c.l.b16 %v487
        %v1301 = vunpack.c.h.b16 %v487
        %v1302 = vunpack.c.l.b16 %v488
        %v1303 = vunpack.c.h.b16 %v488
        %v1304 = vunpack.c.l.b16 %v489
        %v1305 = vunpack.c.h.b16 %v489
        %v1306 = vunpack.c.l.b16 %v490
        %v1307 = vunpack.c.h.b16 %v490
        %v1308 = vunpack.c.l.b16 %v491
        %v1309 = vunpack.c.h.b16 %v491
        %v1310 = vpack.c.b16 %v802, %v798
        %v1311 = vpack.c.b16 %v803, %v799
        %v1312 = vpack.c.b16 %v804, %v800
        %v1313 = vpack.c.b16 %v805, %v801
        %v1314 = vpack.c.b16 %v810, %v806
        %v1315 = vpack.c.b16 %v811, %v807
        %v1316 = vpack.c.b16 %v812, %v808
        %v1317 = vpack.c.b16 %v813, %v809
        %v1318 = vpack.c.b16 %v818, %v814
        %v1319 = vpack.c.b16 %v819, %v815
        %v1320 = vpack.c.b16 %v820, %v816
        %v1321 = vpack.c.b16 %v821, %v817
        %v1322 = vpack.c.b16 %v826, %v822
        %v1323 = vpack.c.b16 %v827, %v823
        %v1324 = vpack.c.b16 %v828, %v824
        %v1325 = vpack.c.b16 %v829, %v825
        %v1326 = vpack.c.b16 %v834, %v830
        %v1327 = vpack.c.b16 %v835, %v831
        %v1328 = vpack.c.b16 %v836, %v832
        %v1329 = vpack.c.b16 %v837, %v833
        %v1330 = vpack.c.b16 %v842, %v838
        %v1331 = vpack.c.b16 %v843, %v839
        %v1332 = vpack.c.b16 %v844, %v840
        %v1333 = vpack.c.b16 %v845, %v841
        %v1334 = vpack.c.b16 %v850, %v846
        %v1335 = vpack.c.b16 %v851, %v847
        %v1336 = vpack.c.b16 %v852, %v848
        %v1337 = vpack.c.b16 %v853, %v849
        %v1338 = vpack.c.b16 %v858, %v854
        %v1339 = vpack.c.b16 %v859, %v855
        %v1340 = vpack.c.b16 %v860, %v856
        %v1341 = vpack.c.b16 %v861, %v857
        %v1342 = vpack.c.b16 %v866, %v862
        %v1343 = vpack.c.b16 %v867, %v863
        %v1344 = vpack.c.b16 %v868, %v864
        %v1345 = vpack.c.b16 %v869, %v865
        %v1346 = vpack.c.b16 %v874, %v870
        %v1347 = vpack.c.b16 %v875, %v871
        %v1348 = vpack.c.b16 %v876, %v872
        %v1349 = vpack.c.b16 %v877, %v873
        %v1350 = vpack.c.b16 %v882, %v878
        %v1351 = vpack.c.b16 %v883, %v879
        %v1352 = vpack.c.b16 %v884, %v880
        %v1353 = vpack.c.b16 %v885, %v881
        %v1354 = vpack.c.b16 %v890, %v886
        %v1355 = vpack.c.b16 %v891, %v887
        %v1356 = vpack.c.b16 %v892, %v888
        %v1357 = vpack.c.b16 %v893, %v889
        %v1358 = vpack.c.b16 %v898, %v894
        %v1359 = vpack.c.b16 %v899, %v895
        %v1360 = vpack.c.b16 %v900, %v896
        %v1361 = vpack.c.b16 %v901, %v897
        %v1362 = vpack.c.b16 %v906, %v902
        %v1363 = vpack.c.b16 %v907, %v903
        %v1364 = vpack.c.b16 %v908, %v904
        %v1365 = vpack.c.b16 %v909, %v905
        %v1366 = vpack.c.b16 %v914, %v910
        %v1367 = vpack.c.b16 %v915, %v911
        %v1368 = vpack.c.b16 %v916, %v912
        %v1369 = vpack.c.b16 %v917, %v913
        %v1370 = vpack.c.b16 %v922, %v918
        %v1371 = vpack.c.b16 %v923, %v919
        %v1372 = vpack.c.b16 %v924, %v920
        %v1373 = vpack.c.b16 %v925, %v921
        %v1374 = vpack.c.b16 %v930, %v926
        %v1375 = vpack.c.b16 %v931, %v927
        %v1376 = vpack.c.b16 %v932, %v928
        %v1377 = vpack.c.b16 %v933, %v929
        %v1378 = vpack.c.b16 %v938, %v934
        %v1379 = vpack.c.b16 %v939, %v935
        %v1380 = vpack.c.b16 %v940, %v936
        %v1381 = vpack.c.b16 %v941, %v937
        %v1382 = vpack.c.b16 %v946, %v942
        %v1383 = vpack.c.b16 %v947, %v943
        %v1384 = vpack.c.b16 %v948, %v944
        %v1385 = vpack.c.b16 %v949, %v945
        %v1386 = vpack.c.b16 %v954, %v950
        %v1387 = vpack.c.b16 %v955, %v951
        %v1388 = vpack.c.b16 %v956, %v952
        %v1389 = vpack.c.b16 %v957, %v953
        %v1390 = vpack.c.b16 %v962, %v958
        %v1391 = vpack.c.b16 %v963, %v959
        %v1392 = vpack.c.b16 %v964, %v960
        %v1393 = vpack.c.b16 %v965, %v961
        %v1394 = vpack.c.b16 %v970, %v966
        %v1395 = vpack.c.b16 %v971, %v967
        %v1396 = vpack.c.b16 %v972, %v968
        %v1397 = vpack.c.b16 %v973, %v969
        %v1398 = vpack.c.b16 %v978, %v974
        %v1399 = vpack.c.b16 %v979, %v975
        %v1400 = vpack.c.b16 %v980, %v976
        %v1401 = vpack.c.b16 %v981, %v977
        %v1402 = vpack.c.b16 %v986, %v982
        %v1403 = vpack.c.b16 %v987, %v983
        %v1404 = vpack.c.b16 %v988, %v984
        %v1405 = vpack.c.b16 %v989, %v985
        %v1406 = vpack.c.b16 %v994, %v990
        %v1407 = vpack.c.b16 %v995, %v991
        %v1408 = vpack.c.b16 %v996, %v992
        %v1409 = vpack.c.b16 %v997, %v993
        %v1410 = vpack.c.b16 %v1002, %v998
        %v1411 = vpack.c.b16 %v1003, %v999
        %v1412 = vpack.c.b16 %v1004, %v1000
        %v1413 = vpack.c.b16 %v1005, %v1001
        %v1414 = vpack.c.b16 %v1010, %v1006
        %v1415 = vpack.c.b16 %v1011, %v1007
        %v1416 = vpack.c.b16 %v1012, %v1008
        %v1417 = vpack.c.b16 %v1013, %v1009
        %v1418 = vpack.c.b16 %v1018, %v1014
        %v1419 = vpack.c.b16 %v1019, %v1015
        %v1420 = vpack.c.b16 %v1020, %v1016
        %v1421 = vpack.c.b16 %v1021, %v1017
        %v1422 = vpack.c.b16 %v1026, %v1022
        %v1423 = vpack.c.b16 %v1027, %v1023
        %v1424 = vpack.c.b16 %v1028, %v1024
        %v1425 = vpack.c.b16 %v1029, %v1025
        %v1426 = vpack.c.b16 %v1034, %v1030
        %v1427 = vpack.c.b16 %v1035, %v1031
        %v1428 = vpack.c.b16 %v1036, %v1032
        %v1429 = vpack.c.b16 %v1037, %v1033
        %v1430 = vpack.c.b16 %v1042, %v1038
        %v1431 = vpack.c.b16 %v1043, %v1039
        %v1432 = vpack.c.b16 %v1044, %v1040
        %v1433 = vpack.c.b16 %v1045, %v1041
        %v1434 = vpack.c.b16 %v1050, %v1046
        %v1435 = vpack.c.b16 %v1051, %v1047
        %v1436 = vpack.c.b16 %v1052, %v1048
        %v1437 = vpack.c.b16 %v1053, %v1049
        %v1438 = vpack.c.b16 %v1058, %v1054
        %v1439 = vpack.c.b16 %v1059, %v1055
        %v1440 = vpack.c.b16 %v1060, %v1056
        %v1441 = vpack.c.b16 %v1061, %v1057
        %v1442 = vpack.c.b16 %v1066, %v1062
        %v1443 = vpack.c.b16 %v1067, %v1063
        %v1444 = vpack.c.b16 %v1068, %v1064
        %v1445 = vpack.c.b16 %v1069, %v1065
        %v1446 = vpack.c.b16 %v1074, %v1070
        %v1447 = vpack.c.b16 %v1075, %v1071
        %v1448 = vpack.c.b16 %v1076, %v1072
        %v1449 = vpack.c.b16 %v1077, %v1073
        %v1450 = vpack.c.b16 %v1082, %v1078
        %v1451 = vpack.c.b16 %v1083, %v1079
        %v1452 = vpack.c.b16 %v1084, %v1080
        %v1453 = vpack.c.b16 %v1085, %v1081
        %v1454 = vpack.c.b16 %v1090, %v1086
        %v1455 = vpack.c.b16 %v1091, %v1087
        %v1456 = vpack.c.b16 %v1092, %v1088
        %v1457 = vpack.c.b16 %v1093, %v1089
        %v1458 = vpack.c.b16 %v1098, %v1094
        %v1459 = vpack.c.b16 %v1099, %v1095
        %v1460 = vpack.c.b16 %v1100, %v1096
        %v1461 = vpack.c.b16 %v1101, %v1097
        %v1462 = vpack.c.b16 %v1106, %v1102
        %v1463 = vpack.c.b16 %v1107, %v1103
        %v1464 = vpack.c.b16 %v1108, %v1104
        %v1465 = vpack.c.b16 %v1109, %v1105
        %v1466 = vpack.c.b16 %v1114, %v1110
        %v1467 = vpack.c.b16 %v1115, %v1111
        %v1468 = vpack.c.b16 %v1116, %v1112
        %v1469 = vpack.c.b16 %v1117, %v1113
        %v1470 = vpack.c.b16 %v1122, %v1118
        %v1471 = vpack.c.b16 %v1123, %v1119
        %v1472 = vpack.c.b16 %v1124, %v1120
        %v1473 = vpack.c.b16 %v1125, %v1121
        %v1474 = vpack.c.b16 %v1130, %v1126
        %v1475 = vpack.c.b16 %v1131, %v1127
        %v1476 = vpack.c.b16 %v1132, %v1128
        %v1477 = vpack.c.b16 %v1133, %v1129
        %v1478 = vpack.c.b16 %v1138, %v1134
        %v1479 = vpack.c.b16 %v1139, %v1135
        %v1480 = vpack.c.b16 %v1140, %v1136
        %v1481 = vpack.c.b16 %v1141, %v1137
        %v1482 = vpack.c.b16 %v1146, %v1142
        %v1483 = vpack.c.b16 %v1147, %v1143
        %v1484 = vpack.c.b16 %v1148, %v1144
        %v1485 = vpack.c.b16 %v1149, %v1145
        %v1486 = vpack.c.b16 %v1154, %v1150
        %v1487 = vpack.c.b16 %v1155, %v1151
        %v1488 = vpack.c.b16 %v1156, %v1152
        %v1489 = vpack.c.b16 %v1157, %v1153
        %v1490 = vpack.c.b16 %v1162, %v1158
        %v1491 = vpack.c.b16 %v1163, %v1159
        %v1492 = vpack.c.b16 %v1164, %v1160
        %v1493 = vpack.c.b16 %v1165, %v1161
        %v1494 = vpack.c.b16 %v1170, %v1166
        %v1495 = vpack.c.b16 %v1171, %v1167
        %v1496 = vpack.c.b16 %v1172, %v1168
        %v1497 = vpack.c.b16 %v1173, %v1169
        %v1498 = vpack.c.b16 %v1178, %v1174
        %v1499 = vpack.c.b16 %v1179, %v1175
        %v1500 = vpack.c.b16 %v1180, %v1176
        %v1501 = vpack.c.b16 %v1181, %v1177
        %v1502 = vpack.c.b16 %v1186, %v1182
        %v1503 = vpack.c.b16 %v1187, %v1183
        %v1504 = vpack.c.b16 %v1188, %v1184
        %v1505 = vpack.c.b16 %v1189, %v1185
        %v1506 = vpack.c.b16 %v1194, %v1190
        %v1507 = vpack.c.b16 %v1195, %v1191
        %v1508 = vpack.c.b16 %v1196, %v1192
        %v1509 = vpack.c.b16 %v1197, %v1193
        %v1510 = vpack.c.b16 %v1202, %v1198
        %v1511 = vpack.c.b16 %v1203, %v1199
        %v1512 = vpack.c.b16 %v1204, %v1200
        %v1513 = vpack.c.b16 %v1205, %v1201
        %v1514 = vpack.c.b16 %v1210, %v1206
        %v1515 = vpack.c.b16 %v1211, %v1207
        %v1516 = vpack.c.b16 %v1212, %v1208
        %v1517 = vpack.c.b16 %v1213, %v1209
        %v1518 = vpack.c.b16 %v1218, %v1214
        %v1519 = vpack.c.b16 %v1219, %v1215
        %v1520 = vpack.c.b16 %v1220, %v1216
        %v1521 = vpack.c.b16 %v1221, %v1217
        %v1522 = vpack.c.b16 %v1226, %v1222
        %v1523 = vpack.c.b16 %v1227, %v1223
        %v1524 = vpack.c.b16 %v1228, %v1224
        %v1525 = vpack.c.b16 %v1229, %v1225
        %v1526 = vpack.c.b16 %v1234, %v1230
        %v1527 = vpack.c.b16 %v1235, %v1231
        %v1528 = vpack.c.b16 %v1236, %v1232
        %v1529 = vpack.c.b16 %v1237, %v1233
        %v1530 = vpack.c.b16 %v1242, %v1238
        %v1531 = vpack.c.b16 %v1243, %v1239
        %v1532 = vpack.c.b16 %v1244, %v1240
        %v1533 = vpack.c.b16 %v1245, %v1241
        %v1534 = vpack.c.b16 %v1250, %v1246
        %v1535 = vpack.c.b16 %v1251, %v1247
        %v1536 = vpack.c.b16 %v1252, %v1248
        %v1537 = vpack.c.b16 %v1253, %v1249
        %v1538 = vpack.c.b16 %v1258, %v1254
        %v1539 = vpack.c.b16 %v1259, %v1255
        %v1540 = vpack.c.b16 %v1260, %v1256
        %v1541 = vpack.c.b16 %v1261, %v1257
        %v1542 = vpack.c.b16 %v1266, %v1262
        %v1543 = vpack.c.b16 %v1267, %v1263
        %v1544 = vpack.c.b16 %v1268, %v1264
        %v1545 = vpack.c.b16 %v1269, %v1265
        %v1546 = vpack.c.b16 %v1274, %v1270
        %v1547 = vpack.c.b16 %v1275, %v1271
        %v1548 = vpack.c.b16 %v1276, %v1272
        %v1549 = vpack.c.b16 %v1277, %v1273
        %v1550 = vpack.c.b16 %v1282, %v1278
        %v1551 = vpack.c.b16 %v1283, %v1279
        %v1552 = vpack.c.b16 %v1284, %v1280
        %v1553 = vpack.c.b16 %v1285, %v1281
        %v1554 = vpack.c.b16 %v1290, %v1286
        %v1555 = vpack.c.b16 %v1291, %v1287
        %v1556 = vpack.c.b16 %v1292, %v1288
        %v1557 = vpack.c.b16 %v1293, %v1289
        %v1558 = vpack.c.b16 %v1298, %v1294
        %v1559 = vpack.c.b16 %v1299, %v1295
        %v1560 = vpack.c.b16 %v1300, %v1296
        %v1561 = vpack.c.b16 %v1301, %v1297
        %v1562 = vpack.c.b16 %v1306, %v1302
        %v1563 = vpack.c.b16 %v1307, %v1303
        %v1564 = vpack.c.b16 %v1308, %v1304
        %v1565 = vpack.c.b16 %v1309, %v1305
        %1822 = vmatprep.subr.bf16.mxu0 %v1339
        %1823 = vmatpush1.bf16.msra.mxu0 %v1338
        %1824 = vmatprep.subr.bf16.mxu0 %v1335
        %1825 = vmatpush1.bf16.msra.mxu0 %v1334
        %1826 = vmatprep.subr.bf16.mxu0 %v1331
        %1827 = vmatpush1.bf16.msra.mxu0 %v1330
        %1828 = vmatprep.subr.bf16.mxu0 %v1327
        %1829 = vmatpush1.bf16.msra.mxu0 %v1326
        %1830 = vmatprep.subr.bf16.mxu0 %v1323
        %1831 = vmatpush1.bf16.msra.mxu0 %v1322
        %1832 = vmatprep.subr.bf16.mxu0 %v1319
        %1833 = vmatpush1.bf16.msra.mxu0 %v1318
        %1834 = vmatprep.subr.bf16.mxu0 %v1315
        %1835 = vmatpush1.bf16.msra.mxu0 %v1314
        %1836 = vmatprep.subr.bf16.mxu0 %v1311
        %1837 = vmatpush1.bf16.msra.mxu0 %v1310
        %1838 = vmatprep.subr.bf16.mxu0 %v1371
        %1839 = vmatpush2.bf16.msra.mxu0 %v1370
        %1840 = vmatprep.subr.bf16.mxu0 %v1367
        %1841 = vmatpush2.bf16.msra.mxu0 %v1366
        %1842 = vmatprep.subr.bf16.mxu0 %v1363
        %1843 = vmatpush2.bf16.msra.mxu0 %v1362
        %1844 = vmatprep.subr.bf16.mxu0 %v1359
        %1845 = vmatpush2.bf16.msra.mxu0 %v1358
        %1846 = vmatprep.subr.bf16.mxu0 %v1355
        %1847 = vmatpush2.bf16.msra.mxu0 %v1354
        %1848 = vmatprep.subr.bf16.mxu0 %v1351
        %1849 = vmatpush2.bf16.msra.mxu0 %v1350
        %1850 = vmatprep.subr.bf16.mxu0 %v1347
        %1851 = vmatpush2.bf16.msra.mxu0 %v1346
        %1852 = vmatprep.subr.bf16.mxu0 %v1343
        %1853 = vmatpush2.bf16.msra.mxu0 %v1342
        %1854 = vmatprep.mubr.bf16.mxu0 %v527
        %1855 = vmatmul.mubr.bf16.gmra.mxu0 %v526
        %v1856 = vpop.f32.mrf.mxu0
        %v1857 = vadd.f32 %v497, %v1856
        %v1858 = vpop.f32.mrf.mxu0
        %v1859 = vadd.f32 %v501, %v1858
        %v1860 = vpop.f32.mrf.mxu0
        %v1861 = vpop.f32.mrf.mxu0
        %1862 = vdwg.mxu0
        %1863 = vmatprep.subr.bf16.mxu0 %v1403
        %1864 = vmatpush1.bf16.msra.mxu0 %v1402
        %1865 = vmatprep.subr.bf16.mxu0 %v1399
        %1866 = vmatpush1.bf16.msra.mxu0 %v1398
        %1867 = vmatprep.subr.bf16.mxu0 %v1395
        %1868 = vmatpush1.bf16.msra.mxu0 %v1394
        %1869 = vmatprep.subr.bf16.mxu0 %v1391
        %1870 = vmatpush1.bf16.msra.mxu0 %v1390
        %1871 = vmatprep.subr.bf16.mxu0 %v1387
        %1872 = vmatpush1.bf16.msra.mxu0 %v1386
        %1873 = vmatprep.subr.bf16.mxu0 %v1383
        %1874 = vmatpush1.bf16.msra.mxu0 %v1382
        %1875 = vmatprep.subr.bf16.mxu0 %v1379
        %1876 = vmatpush1.bf16.msra.mxu0 %v1378
        %1877 = vmatprep.subr.bf16.mxu0 %v1375
        %1878 = vmatpush1.bf16.msra.mxu0 %v1374
        %1879 = vmatprep.subr.bf16.mxu0 %v1435
        %1880 = vmatpush2.bf16.msra.mxu0 %v1434
        %1881 = vmatprep.subr.bf16.mxu0 %v1431
        %1882 = vmatpush2.bf16.msra.mxu0 %v1430
        %1883 = vmatprep.subr.bf16.mxu0 %v1427
        %1884 = vmatpush2.bf16.msra.mxu0 %v1426
        %1885 = vmatprep.subr.bf16.mxu0 %v1423
        %1886 = vmatpush2.bf16.msra.mxu0 %v1422
        %1887 = vmatprep.subr.bf16.mxu0 %v1419
        %1888 = vmatpush2.bf16.msra.mxu0 %v1418
        %1889 = vmatprep.subr.bf16.mxu0 %v1415
        %1890 = vmatpush2.bf16.msra.mxu0 %v1414
        %1891 = vmatprep.subr.bf16.mxu0 %v1411
        %1892 = vmatpush2.bf16.msra.mxu0 %v1410
        %1893 = vmatprep.subr.bf16.mxu0 %v1407
        %1894 = vmatpush2.bf16.msra.mxu0 %v1406
        %1895 = vmatprep.mubr.bf16.mxu0 %v529
        %1896 = vmatmul.mubr.bf16.gmra.mxu0 %v528
        %v1897 = vpop.f32.mrf.mxu0
        %v1898 = vadd.f32 %v1857, %v1897
        %v1899 = vpop.f32.mrf.mxu0
        %v1900 = vadd.f32 %v1859, %v1899
        %v1901 = vpop.f32.mrf.mxu0
        %v1902 = vpop.f32.mrf.mxu0
        %1903 = vdwg.mxu0
        %1904 = vmatprep.subr.bf16.mxu0 %v1467
        %1905 = vmatpush1.bf16.msra.mxu0 %v1466
        %1906 = vmatprep.subr.bf16.mxu0 %v1463
        %1907 = vmatpush1.bf16.msra.mxu0 %v1462
        %1908 = vmatprep.subr.bf16.mxu0 %v1459
        %1909 = vmatpush1.bf16.msra.mxu0 %v1458
        %1910 = vmatprep.subr.bf16.mxu0 %v1455
        %1911 = vmatpush1.bf16.msra.mxu0 %v1454
        %1912 = vmatprep.subr.bf16.mxu0 %v1451
        %1913 = vmatpush1.bf16.msra.mxu0 %v1450
        %1914 = vmatprep.subr.bf16.mxu0 %v1447
        %1915 = vmatpush1.bf16.msra.mxu0 %v1446
        %1916 = vmatprep.subr.bf16.mxu0 %v1443
        %1917 = vmatpush1.bf16.msra.mxu0 %v1442
        %1918 = vmatprep.subr.bf16.mxu0 %v1439
        %1919 = vmatpush1.bf16.msra.mxu0 %v1438
        %1920 = vmatprep.subr.bf16.mxu0 %v1499
        %1921 = vmatpush2.bf16.msra.mxu0 %v1498
        %1922 = vmatprep.subr.bf16.mxu0 %v1495
        %1923 = vmatpush2.bf16.msra.mxu0 %v1494
        %1924 = vmatprep.subr.bf16.mxu0 %v1491
        %1925 = vmatpush2.bf16.msra.mxu0 %v1490
        %1926 = vmatprep.subr.bf16.mxu0 %v1487
        %1927 = vmatpush2.bf16.msra.mxu0 %v1486
        %1928 = vmatprep.subr.bf16.mxu0 %v1483
        %1929 = vmatpush2.bf16.msra.mxu0 %v1482
        %1930 = vmatprep.subr.bf16.mxu0 %v1479
        %1931 = vmatpush2.bf16.msra.mxu0 %v1478
        %1932 = vmatprep.subr.bf16.mxu0 %v1475
        %1933 = vmatpush2.bf16.msra.mxu0 %v1474
        %1934 = vmatprep.subr.bf16.mxu0 %v1471
        %1935 = vmatpush2.bf16.msra.mxu0 %v1470
        %1936 = vmatprep.mubr.bf16.mxu0 %v531
        %1937 = vmatmul.mubr.bf16.gmra.mxu0 %v530
        %v1938 = vpop.f32.mrf.mxu0
        %v1939 = vadd.f32 %v1898, %v1938
        %v1940 = vpop.f32.mrf.mxu0
        %v1941 = vadd.f32 %v1900, %v1940
        %v1942 = vpop.f32.mrf.mxu0
        %v1943 = vpop.f32.mrf.mxu0
        %1944 = vdwg.mxu0
        %1945 = vmatprep.subr.bf16.mxu0 %v1531
        %1946 = vmatpush1.bf16.msra.mxu0 %v1530
        %1947 = vmatprep.subr.bf16.mxu0 %v1527
        %1948 = vmatpush1.bf16.msra.mxu0 %v1526
        %1949 = vmatprep.subr.bf16.mxu0 %v1523
        %1950 = vmatpush1.bf16.msra.mxu0 %v1522
        %1951 = vmatprep.subr.bf16.mxu0 %v1519
        %1952 = vmatpush1.bf16.msra.mxu0 %v1518
        %1953 = vmatprep.subr.bf16.mxu0 %v1515
        %1954 = vmatpush1.bf16.msra.mxu0 %v1514
        %1955 = vmatprep.subr.bf16.mxu0 %v1511
        %1956 = vmatpush1.bf16.msra.mxu0 %v1510
        %1957 = vmatprep.subr.bf16.mxu0 %v1507
        %1958 = vmatpush1.bf16.msra.mxu0 %v1506
        %1959 = vmatprep.subr.bf16.mxu0 %v1503
        %1960 = vmatpush1.bf16.msra.mxu0 %v1502
        %1961 = vmatprep.subr.bf16.mxu0 %v1563
        %1962 = vmatpush2.bf16.msra.mxu0 %v1562
        %1963 = vmatprep.subr.bf16.mxu0 %v1559
        %1964 = vmatpush2.bf16.msra.mxu0 %v1558
        %1965 = vmatprep.subr.bf16.mxu0 %v1555
        %1966 = vmatpush2.bf16.msra.mxu0 %v1554
        %1967 = vmatprep.subr.bf16.mxu0 %v1551
        %1968 = vmatpush2.bf16.msra.mxu0 %v1550
        %1969 = vmatprep.subr.bf16.mxu0 %v1547
        %1970 = vmatpush2.bf16.msra.mxu0 %v1546
        %1971 = vmatprep.subr.bf16.mxu0 %v1543
        %1972 = vmatpush2.bf16.msra.mxu0 %v1542
        %1973 = vmatprep.subr.bf16.mxu0 %v1539
        %1974 = vmatpush2.bf16.msra.mxu0 %v1538
        %1975 = vmatprep.subr.bf16.mxu0 %v1535
        %1976 = vmatpush2.bf16.msra.mxu0 %v1534
        %1977 = vmatprep.mubr.bf16.mxu0 %v533
        %1978 = vmatmul.mubr.bf16.gmra.mxu0 %v532
        %v1979 = vpop.f32.mrf.mxu0
        %v1980 = vadd.f32 %v1939, %v1979
        %v1981 = vpop.f32.mrf.mxu0
        %v1982 = vadd.f32 %v1941, %v1981
        %v1983 = vpop.f32.mrf.mxu0
        %v1984 = vpop.f32.mrf.mxu0
        %1985 = vdwg.mxu0
        %1986 = vmatprep.subr.bf16.mxu0 %v1341
        %1987 = vmatpush1.bf16.msra.mxu0 %v1340
        %1988 = vmatprep.subr.bf16.mxu0 %v1337
        %1989 = vmatpush1.bf16.msra.mxu0 %v1336
        %1990 = vmatprep.subr.bf16.mxu0 %v1333
        %1991 = vmatpush1.bf16.msra.mxu0 %v1332
        %1992 = vmatprep.subr.bf16.mxu0 %v1329
        %1993 = vmatpush1.bf16.msra.mxu0 %v1328
        %1994 = vmatprep.subr.bf16.mxu0 %v1325
        %1995 = vmatpush1.bf16.msra.mxu0 %v1324
        %1996 = vmatprep.subr.bf16.mxu0 %v1321
        %1997 = vmatpush1.bf16.msra.mxu0 %v1320
        %1998 = vmatprep.subr.bf16.mxu0 %v1317
        %1999 = vmatpush1.bf16.msra.mxu0 %v1316
        %2000 = vmatprep.subr.bf16.mxu0 %v1313
        %2001 = vmatpush1.bf16.msra.mxu0 %v1312
        %2002 = vmatprep.subr.bf16.mxu0 %v1373
        %2003 = vmatpush2.bf16.msra.mxu0 %v1372
        %2004 = vmatprep.subr.bf16.mxu0 %v1369
        %2005 = vmatpush2.bf16.msra.mxu0 %v1368
        %2006 = vmatprep.subr.bf16.mxu0 %v1365
        %2007 = vmatpush2.bf16.msra.mxu0 %v1364
        %2008 = vmatprep.subr.bf16.mxu0 %v1361
        %2009 = vmatpush2.bf16.msra.mxu0 %v1360
        %2010 = vmatprep.subr.bf16.mxu0 %v1357
        %2011 = vmatpush2.bf16.msra.mxu0 %v1356
        %2012 = vmatprep.subr.bf16.mxu0 %v1353
        %2013 = vmatpush2.bf16.msra.mxu0 %v1352
        %2014 = vmatprep.subr.bf16.mxu0 %v1349
        %2015 = vmatpush2.bf16.msra.mxu0 %v1348
        %2016 = vmatprep.subr.bf16.mxu0 %v1345
        %2017 = vmatpush2.bf16.msra.mxu0 %v1344
        %2018 = vmatprep.mubr.bf16.mxu0 %v527
        %2019 = vmatmul.mubr.bf16.gmra.mxu0 %v526
        %v2020 = vpop.f32.mrf.mxu0
        %v2021 = vadd.f32 %v505, %v2020
        %v2022 = vpop.f32.mrf.mxu0
        %v2023 = vadd.f32 %v509, %v2022
        %v2024 = vpop.f32.mrf.mxu0
        %v2025 = vpop.f32.mrf.mxu0
        %2026 = vdwg.mxu0
        %2027 = vmatprep.subr.bf16.mxu0 %v1405
        %2028 = vmatpush1.bf16.msra.mxu0 %v1404
        %2029 = vmatprep.subr.bf16.mxu0 %v1401
        %2030 = vmatpush1.bf16.msra.mxu0 %v1400
        %2031 = vmatprep.subr.bf16.mxu0 %v1397
        %2032 = vmatpush1.bf16.msra.mxu0 %v1396
        %2033 = vmatprep.subr.bf16.mxu0 %v1393
        %2034 = vmatpush1.bf16.msra.mxu0 %v1392
        %2035 = vmatprep.subr.bf16.mxu0 %v1389
        %2036 = vmatpush1.bf16.msra.mxu0 %v1388
        %2037 = vmatprep.subr.bf16.mxu0 %v1385
        %2038 = vmatpush1.bf16.msra.mxu0 %v1384
        %2039 = vmatprep.subr.bf16.mxu0 %v1381
        %2040 = vmatpush1.bf16.msra.mxu0 %v1380
        %2041 = vmatprep.subr.bf16.mxu0 %v1377
        %2042 = vmatpush1.bf16.msra.mxu0 %v1376
        %2043 = vmatprep.subr.bf16.mxu0 %v1437
        %2044 = vmatpush2.bf16.msra.mxu0 %v1436
        %2045 = vmatprep.subr.bf16.mxu0 %v1433
        %2046 = vmatpush2.bf16.msra.mxu0 %v1432
        %2047 = vmatprep.subr.bf16.mxu0 %v1429
        %2048 = vmatpush2.bf16.msra.mxu0 %v1428
        %2049 = vmatprep.subr.bf16.mxu0 %v1425
        %2050 = vmatpush2.bf16.msra.mxu0 %v1424
        %2051 = vmatprep.subr.bf16.mxu0 %v1421
        %2052 = vmatpush2.bf16.msra.mxu0 %v1420
        %2053 = vmatprep.subr.bf16.mxu0 %v1417
        %2054 = vmatpush2.bf16.msra.mxu0 %v1416
        %2055 = vmatprep.subr.bf16.mxu0 %v1413
        %2056 = vmatpush2.bf16.msra.mxu0 %v1412
        %2057 = vmatprep.subr.bf16.mxu0 %v1409
        %2058 = vmatpush2.bf16.msra.mxu0 %v1408
        %2059 = vmatprep.mubr.bf16.mxu0 %v529
        %2060 = vmatmul.mubr.bf16.gmra.mxu0 %v528
        %v2061 = vpop.f32.mrf.mxu0
        %v2062 = vadd.f32 %v2021, %v2061
        %v2063 = vpop.f32.mrf.mxu0
        %v2064 = vadd.f32 %v2023, %v2063
        %v2065 = vpop.f32.mrf.mxu0
        %v2066 = vpop.f32.mrf.mxu0
        %2067 = vdwg.mxu0
        %2068 = vmatprep.subr.bf16.mxu0 %v1469
        %2069 = vmatpush1.bf16.msra.mxu0 %v1468
        %2070 = vmatprep.subr.bf16.mxu0 %v1465
        %2071 = vmatpush1.bf16.msra.mxu0 %v1464
        %2072 = vmatprep.subr.bf16.mxu0 %v1461
        %2073 = vmatpush1.bf16.msra.mxu0 %v1460
        %2074 = vmatprep.subr.bf16.mxu0 %v1457
        %2075 = vmatpush1.bf16.msra.mxu0 %v1456
        %2076 = vmatprep.subr.bf16.mxu0 %v1453
        %2077 = vmatpush1.bf16.msra.mxu0 %v1452
        %2078 = vmatprep.subr.bf16.mxu0 %v1449
        %2079 = vmatpush1.bf16.msra.mxu0 %v1448
        %2080 = vmatprep.subr.bf16.mxu0 %v1445
        %2081 = vmatpush1.bf16.msra.mxu0 %v1444
        %2082 = vmatprep.subr.bf16.mxu0 %v1441
        %2083 = vmatpush1.bf16.msra.mxu0 %v1440
        %2084 = vmatprep.subr.bf16.mxu0 %v1501
        %2085 = vmatpush2.bf16.msra.mxu0 %v1500
        %2086 = vmatprep.subr.bf16.mxu0 %v1497
        %2087 = vmatpush2.bf16.msra.mxu0 %v1496
        %2088 = vmatprep.subr.bf16.mxu0 %v1493
        %2089 = vmatpush2.bf16.msra.mxu0 %v1492
        %2090 = vmatprep.subr.bf16.mxu0 %v1489
        %2091 = vmatpush2.bf16.msra.mxu0 %v1488
        %2092 = vmatprep.subr.bf16.mxu0 %v1485
        %2093 = vmatpush2.bf16.msra.mxu0 %v1484
        %2094 = vmatprep.subr.bf16.mxu0 %v1481
        %2095 = vmatpush2.bf16.msra.mxu0 %v1480
        %2096 = vmatprep.subr.bf16.mxu0 %v1477
        %2097 = vmatpush2.bf16.msra.mxu0 %v1476
        %2098 = vmatprep.subr.bf16.mxu0 %v1473
        %2099 = vmatpush2.bf16.msra.mxu0 %v1472
        %2100 = vmatprep.mubr.bf16.mxu0 %v531
        %2101 = vmatmul.mubr.bf16.gmra.mxu0 %v530
        %v2102 = vpop.f32.mrf.mxu0
        %v2103 = vadd.f32 %v2062, %v2102
        %v2104 = vpop.f32.mrf.mxu0
        %v2105 = vadd.f32 %v2064, %v2104
        %v2106 = vpop.f32.mrf.mxu0
        %v2107 = vpop.f32.mrf.mxu0
        %2108 = vdwg.mxu0
        %2109 = vmatprep.subr.bf16.mxu0 %v1533
        %2110 = vmatpush1.bf16.msra.mxu0 %v1532
        %2111 = vmatprep.subr.bf16.mxu0 %v1529
        %2112 = vmatpush1.bf16.msra.mxu0 %v1528
        %2113 = vmatprep.subr.bf16.mxu0 %v1525
        %2114 = vmatpush1.bf16.msra.mxu0 %v1524
        %2115 = vmatprep.subr.bf16.mxu0 %v1521
        %2116 = vmatpush1.bf16.msra.mxu0 %v1520
        %2117 = vmatprep.subr.bf16.mxu0 %v1517
        %2118 = vmatpush1.bf16.msra.mxu0 %v1516
        %2119 = vmatprep.subr.bf16.mxu0 %v1513
        %2120 = vmatpush1.bf16.msra.mxu0 %v1512
        %2121 = vmatprep.subr.bf16.mxu0 %v1509
        %2122 = vmatpush1.bf16.msra.mxu0 %v1508
        %2123 = vmatprep.subr.bf16.mxu0 %v1505
        %2124 = vmatpush1.bf16.msra.mxu0 %v1504
        %2125 = vmatprep.subr.bf16.mxu0 %v1565
        %2126 = vmatpush2.bf16.msra.mxu0 %v1564
        %2127 = vmatprep.subr.bf16.mxu0 %v1561
        %2128 = vmatpush2.bf16.msra.mxu0 %v1560
        %2129 = vmatprep.subr.bf16.mxu0 %v1557
        %2130 = vmatpush2.bf16.msra.mxu0 %v1556
        %2131 = vmatprep.subr.bf16.mxu0 %v1553
        %2132 = vmatpush2.bf16.msra.mxu0 %v1552
        %2133 = vmatprep.subr.bf16.mxu0 %v1549
        %2134 = vmatpush2.bf16.msra.mxu0 %v1548
        %2135 = vmatprep.subr.bf16.mxu0 %v1545
        %2136 = vmatpush2.bf16.msra.mxu0 %v1544
        %2137 = vmatprep.subr.bf16.mxu0 %v1541
        %2138 = vmatpush2.bf16.msra.mxu0 %v1540
        %2139 = vmatprep.subr.bf16.mxu0 %v1537
        %2140 = vmatpush2.bf16.msra.mxu0 %v1536
        %2141 = vmatprep.mubr.bf16.mxu0 %v533
        %2142 = vmatmul.mubr.bf16.gmra.mxu0 %v532
        %v2143 = vpop.f32.mrf.mxu0
        %v2144 = vadd.f32 %v2103, %v2143
        %v2145 = vpop.f32.mrf.mxu0
        %v2146 = vadd.f32 %v2105, %v2145
        %v2147 = vpop.f32.mrf.mxu0
        %v2148 = vpop.f32.mrf.mxu0
        %2149 = vdwg.mxu0
        %v2150 = vtanh.pop %v1980
        %v2151 = vtanh.pop %v1982
        %v2152 = vtanh.pop %v2144
        %v2153 = vtanh.pop %v2146
        %v2154 = vpack.c.bf16 %v2150, %v2150
        %v2155 = vpack.c.bf16 %v2151, %v2151
        %v2156 = vpack.c.bf16 %v2152, %v2152
        %v2157 = vpack.c.bf16 %v2153, %v2153
        %v2162 = vunpack.c.l.b16 %v2154
        %v2163 = vunpack.c.l.b16 %v2155
        %v2164 = vunpack.c.l.b16 %v2156
        %v2165 = vunpack.c.l.b16 %v2157
        %v2166 = vpack.c.b16 %v2163, %v2162
        %v2167 = vpack.c.b16 %v2165, %v2164
        %2170 = vst [vmem:[%s230] sm:$0xff] %v2166
        %2171 = vst [vmem:[%s230 + $0x8] sm:$0xff] %v2167
        %s2172 = smul.u32 4, %s20
        %p2173 = scmp.lt.s32.totalorder %s2172, 15
        %s2174 = scalar_select %p2173, %s2172, 15
        %s2175 = smul.addr %s2174, 4
        %s2176 = scalar_lea.vmem %s3, %s2175
        // Predicated region
        $region41: #{netlinear_forward.4} parent=31 // pred_check
          %p2177 = pneg %p111
        $region42: #{netlinear_forward.4} parent=31 // pred_check_branch
          %2179 = sbr.rel (%p2177) target = $region44
        $region43: #{netlinear_forward.4} parent=31 // pred_region
          %s2180 = smul.u32 4, %s20
        $region44: #{netlinear_forward.4} parent=31 // pred_fallthru
          _
      $region32: #{netlinear_forward.4} parent=5 // pred_fallthru
        _
      %p2181 = scmp.le.s32.totalorder 2, %s15
      // Predicated region
      $region45: #{netlinear_forward.4} parent=5 // pred_check
        %p2182 = pneg %p2181
      $region46: #{netlinear_forward.4} parent=5 // pred_check_branch
        %2184 = sbr.rel (%p2182) target = $region48
      $region47: #{netlinear_forward.4} parent=5 // pred_region
        %s2185 = ssub.s32 %s15, 2
        // Predicated region
        $region49: #{netlinear_forward.4} parent=47 // pred_check
          %p2186 = pneg %p117
        $region50: #{netlinear_forward.4} parent=47 // pred_check_branch
          %2188 = sbr.rel (%p2186) target = $region52
        $region51: #{netlinear_forward.4} parent=47 // pred_region
          %s2189 = smul.u32 4, %s21
          %p2190 = scmp.lt.s32.totalorder %s2189, 15
          %s2191 = scalar_select %p2190, %s2189, 15
          %s2192 = smul.addr %s2191, 4
          %s2193 = scalar_lea.vmem %s3, %s2192
        $region52: #{netlinear_forward.4} parent=47 // pred_fallthru
          _
      $region48: #{netlinear_forward.4} parent=5 // pred_fallthru
        _
    $region6: #{netlinear_forward.4} parent=1 // loop_footer
      %s19 = sadd.s32 1, %s15
    $region7: #{netlinear_forward.4} parent=1 // loop_footer_branch
      %14 = sbr.rel target = $region3
    $region8: #{netlinear_forward.4} parent=1 // loop_exit
      _
    %2194 = vsyncpa [#allocation3], 1
    %s2195 = scalar_lea.sflag [#allocation3], 1
    %2196 = vsyncpa %s2195, 1
    %2197 = vsyncpa [#allocation5], 1
    %s2198 = scalar_lea.sflag [#allocation5], 1
    %2199 = vsyncpa %s2198, 1

// kernel: netlinear_forward.7
$region0: #{netlinear_forward.7}
  #allocation0 [shape = 'u32[]', space=smem, size = 0x4, offset = 0x4, fixed_abs, tag = 'smem constant byte address 0x4 - core index']
  #allocation1 [shape = 'u32[144,128]{1,0:T(1,128)}', space=vmem, size = 0x12000, scoped, tag = 'internal scratch']
  %s0 = inlined_call_operand.vmem [shape: bf16[8,2048], index: 0, kind: input, shape index: {}]
  %s1 = inlined_call_operand.vmem [shape: bf16[2048,128], index: 1, kind: input, shape index: {}]
  %s2 = inlined_call_operand.vmem [shape: f32[1,128], index: 2, kind: input, shape index: {}]
  %s3 = inlined_call_operand.vmem [shape: f32[8,128], index: 3, kind: output, shape index: {}]
  %s4 = sld [smem:[#allocation0]]
  $region22: #{netlinear_forward.7} parent=0
    _
  %s6 = ssub.s32 1, %s4
  %s7 = scalar_select 0, %s6, %s4
  // Predicated region
  $region2: #{netlinear_forward.7} parent=0 // pred_check
    _
  $region3: #{netlinear_forward.7} parent=0 // pred_check_branch
    %9 = sbr.rel (0) target = $region5
  $region4: #{netlinear_forward.7} parent=0 // pred_region
    _
  $region5: #{netlinear_forward.7} parent=0 // pred_fallthru
    _
  // Predicated region
  $region6: #{netlinear_forward.7} parent=0 // pred_check
    _
  $region7: #{netlinear_forward.7} parent=0 // pred_check_branch
    %11 = sbr.rel (0) target = $region9
  $region8: #{netlinear_forward.7} parent=0 // pred_region
    _
  $region9: #{netlinear_forward.7} parent=0 // pred_fallthru
    _
  // Predicated region
  $region10: #{netlinear_forward.7} parent=0 // pred_check
    _
  $region11: #{netlinear_forward.7} parent=0 // pred_check_branch
    %13 = sbr.rel (0) target = $region13
  $region12: #{netlinear_forward.7} parent=0 // pred_region
    _
  $region13: #{netlinear_forward.7} parent=0 // pred_fallthru
    _
  %v15 = vld [vmem:[%s0] sm:$0xff]
  %v16 = vld [vmem:[%s0 + $0x8] sm:$0xff]
  %v17 = vld [vmem:[%s0 + $0x10] sm:$0xff]
  %v18 = vld [vmem:[%s0 + $0x18] sm:$0xff]
  %v19 = vld [vmem:[%s0 + $0x20] sm:$0xff]
  %v20 = vld [vmem:[%s0 + $0x28] sm:$0xff]
  %v21 = vld [vmem:[%s0 + $0x30] sm:$0xff]
  %v22 = vld [vmem:[%s0 + $0x38] sm:$0xff]
  %v23 = vld [vmem:[%s1] sm:$0xf]
  %v24 = vld [vmem:[%s1 + $0x4] sm:$0xf]
  %v25 = vld [vmem:[%s1 + $0x8] sm:$0xf]
  %v26 = vld [vmem:[%s1 + $0xc] sm:$0xf]
  %v27 = vld [vmem:[%s1 + $0x10] sm:$0xf]
  %v28 = vld [vmem:[%s1 + $0x14] sm:$0xf]
  %v29 = vld [vmem:[%s1 + $0x18] sm:$0xf]
  %v30 = vld [vmem:[%s1 + $0x1c] sm:$0xf]
  %v31 = vld [vmem:[%s1 + $0x20] sm:$0xf]
  %v32 = vld [vmem:[%s1 + $0x24] sm:$0xf]
  %v33 = vld [vmem:[%s1 + $0x28] sm:$0xf]
  %v34 = vld [vmem:[%s1 + $0x2c] sm:$0xf]
  %v35 = vld [vmem:[%s1 + $0x30] sm:$0xf]
  %v36 = vld [vmem:[%s1 + $0x34] sm:$0xf]
  %v37 = vld [vmem:[%s1 + $0x38] sm:$0xf]
  %v38 = vld [vmem:[%s1 + $0x3c] sm:$0xf]
  %v39 = vld [vmem:[%s1 + $0x40] sm:$0xf]
  %v40 = vld [vmem:[%s1 + $0x44] sm:$0xf]
  %v41 = vld [vmem:[%s1 + $0x48] sm:$0xf]
  %v42 = vld [vmem:[%s1 + $0x4c] sm:$0xf]
  %v43 = vld [vmem:[%s1 + $0x50] sm:$0xf]
  %v44 = vld [vmem:[%s1 + $0x54] sm:$0xf]
  %v45 = vld [vmem:[%s1 + $0x58] sm:$0xf]
  %v46 = vld [vmem:[%s1 + $0x5c] sm:$0xf]
  %v47 = vld [vmem:[%s1 + $0x60] sm:$0xf]
  %v48 = vld [vmem:[%s1 + $0x64] sm:$0xf]
  %v49 = vld [vmem:[%s1 + $0x68] sm:$0xf]
  %v50 = vld [vmem:[%s1 + $0x6c] sm:$0xf]
  %v51 = vld [vmem:[%s1 + $0x70] sm:$0xf]
  %v52 = vld [vmem:[%s1 + $0x74] sm:$0xf]
  %v53 = vld [vmem:[%s1 + $0x78] sm:$0xf]
  %v54 = vld [vmem:[%s1 + $0x7c] sm:$0xf]
  %v55 = vld [vmem:[%s1 + $0x80] sm:$0xf]
  %v56 = vld [vmem:[%s1 + $0x84] sm:$0xf]
  %v57 = vld [vmem:[%s1 + $0x88] sm:$0xf]
  %v58 = vld [vmem:[%s1 + $0x8c] sm:$0xf]
  %v59 = vld [vmem:[%s1 + $0x90] sm:$0xf]
  %v60 = vld [vmem:[%s1 + $0x94] sm:$0xf]
  %v61 = vld [vmem:[%s1 + $0x98] sm:$0xf]
  %v62 = vld [vmem:[%s1 + $0x9c] sm:$0xf]
  %v63 = vld [vmem:[%s1 + $0xa0] sm:$0xf]
  %v64 = vld [vmem:[%s1 + $0xa4] sm:$0xf]
  %v65 = vld [vmem:[%s1 + $0xa8] sm:$0xf]
  %v66 = vld [vmem:[%s1 + $0xac] sm:$0xf]
  %v67 = vld [vmem:[%s1 + $0xb0] sm:$0xf]
  %v68 = vld [vmem:[%s1 + $0xb4] sm:$0xf]
  %v69 = vld [vmem:[%s1 + $0xb8] sm:$0xf]
  %v70 = vld [vmem:[%s1 + $0xbc] sm:$0xf]
  %v71 = vld [vmem:[%s1 + $0xc0] sm:$0xf]
  %v72 = vld [vmem:[%s1 + $0xc4] sm:$0xf]
  %v73 = vld [vmem:[%s1 + $0xc8] sm:$0xf]
  %v74 = vld [vmem:[%s1 + $0xcc] sm:$0xf]
  %v75 = vld [vmem:[%s1 + $0xd0] sm:$0xf]
  %v76 = vld [vmem:[%s1 + $0xd4] sm:$0xf]
  %v77 = vld [vmem:[%s1 + $0xd8] sm:$0xf]
  %v78 = vld [vmem:[%s1 + $0xdc] sm:$0xf]
  %v79 = vld [vmem:[%s1 + $0xe0] sm:$0xf]
  %v80 = vld [vmem:[%s1 + $0xe4] sm:$0xf]
  %v81 = vld [vmem:[%s1 + $0xe8] sm:$0xf]
  %v82 = vld [vmem:[%s1 + $0xec] sm:$0xf]
  %v83 = vld [vmem:[%s1 + $0xf0] sm:$0xf]
  %v84 = vld [vmem:[%s1 + $0xf4] sm:$0xf]
  %v85 = vld [vmem:[%s1 + $0xf8] sm:$0xf]
  %v86 = vld [vmem:[%s1 + $0xfc] sm:$0xf]
  %v87 = vld [vmem:[%s1 + $0x100] sm:$0xf]
  %v88 = vld [vmem:[%s1 + $0x104] sm:$0xf]
  %v89 = vld [vmem:[%s1 + $0x108] sm:$0xf]
  %v90 = vld [vmem:[%s1 + $0x10c] sm:$0xf]
  %v91 = vld [vmem:[%s1 + $0x110] sm:$0xf]
  %v92 = vld [vmem:[%s1 + $0x114] sm:$0xf]
  %v93 = vld [vmem:[%s1 + $0x118] sm:$0xf]
  %v94 = vld [vmem:[%s1 + $0x11c] sm:$0xf]
  %v95 = vld [vmem:[%s1 + $0x120] sm:$0xf]
  %v96 = vld [vmem:[%s1 + $0x124] sm:$0xf]
  %v97 = vld [vmem:[%s1 + $0x128] sm:$0xf]
  %v98 = vld [vmem:[%s1 + $0x12c] sm:$0xf]
  %v99 = vld [vmem:[%s1 + $0x130] sm:$0xf]
  %v100 = vld [vmem:[%s1 + $0x134] sm:$0xf]
  %v101 = vld [vmem:[%s1 + $0x138] sm:$0xf]
  %v102 = vld [vmem:[%s1 + $0x13c] sm:$0xf]
  %v103 = vld [vmem:[%s1 + $0x140] sm:$0xf]
  %v104 = vld [vmem:[%s1 + $0x144] sm:$0xf]
  %v105 = vld [vmem:[%s1 + $0x148] sm:$0xf]
  %v106 = vld [vmem:[%s1 + $0x14c] sm:$0xf]
  %v107 = vld [vmem:[%s1 + $0x150] sm:$0xf]
  %v108 = vld [vmem:[%s1 + $0x154] sm:$0xf]
  %v109 = vld [vmem:[%s1 + $0x158] sm:$0xf]
  %v110 = vld [vmem:[%s1 + $0x15c] sm:$0xf]
  %v111 = vld [vmem:[%s1 + $0x160] sm:$0xf]
  %v112 = vld [vmem:[%s1 + $0x164] sm:$0xf]
  %v113 = vld [vmem:[%s1 + $0x168] sm:$0xf]
  %v114 = vld [vmem:[%s1 + $0x16c] sm:$0xf]
  %v115 = vld [vmem:[%s1 + $0x170] sm:$0xf]
  %v116 = vld [vmem:[%s1 + $0x174] sm:$0xf]
  %v117 = vld [vmem:[%s1 + $0x178] sm:$0xf]
  %v118 = vld [vmem:[%s1 + $0x17c] sm:$0xf]
  %v119 = vld [vmem:[%s1 + $0x180] sm:$0xf]
  %v120 = vld [vmem:[%s1 + $0x184] sm:$0xf]
  %v121 = vld [vmem:[%s1 + $0x188] sm:$0xf]
  %v122 = vld [vmem:[%s1 + $0x18c] sm:$0xf]
  %v123 = vld [vmem:[%s1 + $0x190] sm:$0xf]
  %v124 = vld [vmem:[%s1 + $0x194] sm:$0xf]
  %v125 = vld [vmem:[%s1 + $0x198] sm:$0xf]
  %v126 = vld [vmem:[%s1 + $0x19c] sm:$0xf]
  %v127 = vld [vmem:[%s1 + $0x1a0] sm:$0xf]
  %v128 = vld [vmem:[%s1 + $0x1a4] sm:$0xf]
  %v129 = vld [vmem:[%s1 + $0x1a8] sm:$0xf]
  %v130 = vld [vmem:[%s1 + $0x1ac] sm:$0xf]
  %v131 = vld [vmem:[%s1 + $0x1b0] sm:$0xf]
  %v132 = vld [vmem:[%s1 + $0x1b4] sm:$0xf]
  %v133 = vld [vmem:[%s1 + $0x1b8] sm:$0xf]
  %v134 = vld [vmem:[%s1 + $0x1bc] sm:$0xf]
  %v135 = vld [vmem:[%s1 + $0x1c0] sm:$0xf]
  %v136 = vld [vmem:[%s1 + $0x1c4] sm:$0xf]
  %v137 = vld [vmem:[%s1 + $0x1c8] sm:$0xf]
  %v138 = vld [vmem:[%s1 + $0x1cc] sm:$0xf]
  %v139 = vld [vmem:[%s1 + $0x1d0] sm:$0xf]
  %v140 = vld [vmem:[%s1 + $0x1d4] sm:$0xf]
  %v141 = vld [vmem:[%s1 + $0x1d8] sm:$0xf]
  %v142 = vld [vmem:[%s1 + $0x1dc] sm:$0xf]
  %v143 = vld [vmem:[%s1 + $0x1e0] sm:$0xf]
  %v144 = vld [vmem:[%s1 + $0x1e4] sm:$0xf]
  %v145 = vld [vmem:[%s1 + $0x1e8] sm:$0xf]
  %v146 = vld [vmem:[%s1 + $0x1ec] sm:$0xf]
  %v147 = vld [vmem:[%s1 + $0x1f0] sm:$0xf]
  %v148 = vld [vmem:[%s1 + $0x1f4] sm:$0xf]
  %v149 = vld [vmem:[%s1 + $0x1f8] sm:$0xf]
  %v150 = vld [vmem:[%s1 + $0x1fc] sm:$0xf]
  %v151 = vld [vmem:[%s1 + $0x200] sm:$0xf]
  %v152 = vld [vmem:[%s1 + $0x204] sm:$0xf]
  %v153 = vld [vmem:[%s1 + $0x208] sm:$0xf]
  %v154 = vld [vmem:[%s1 + $0x20c] sm:$0xf]
  %v155 = vld [vmem:[%s1 + $0x210] sm:$0xf]
  %v156 = vld [vmem:[%s1 + $0x214] sm:$0xf]
  %v157 = vld [vmem:[%s1 + $0x218] sm:$0xf]
  %v158 = vld [vmem:[%s1 + $0x21c] sm:$0xf]
  %v159 = vld [vmem:[%s1 + $0x220] sm:$0xf]
  %v160 = vld [vmem:[%s1 + $0x224] sm:$0xf]
  %v161 = vld [vmem:[%s1 + $0x228] sm:$0xf]
  %v162 = vld [vmem:[%s1 + $0x22c] sm:$0xf]
  %v163 = vld [vmem:[%s1 + $0x230] sm:$0xf]
  %v164 = vld [vmem:[%s1 + $0x234] sm:$0xf]
  %v165 = vld [vmem:[%s1 + $0x238] sm:$0xf]
  %v166 = vld [vmem:[%s1 + $0x23c] sm:$0xf]
  %v167 = vld [vmem:[%s1 + $0x240] sm:$0xf]
  %v168 = vld [vmem:[%s1 + $0x244] sm:$0xf]
  %v169 = vld [vmem:[%s1 + $0x248] sm:$0xf]
  %v170 = vld [vmem:[%s1 + $0x24c] sm:$0xf]
  %v171 = vld [vmem:[%s1 + $0x250] sm:$0xf]
  %v172 = vld [vmem:[%s1 + $0x254] sm:$0xf]
  %v173 = vld [vmem:[%s1 + $0x258] sm:$0xf]
  %v174 = vld [vmem:[%s1 + $0x25c] sm:$0xf]
  %v175 = vld [vmem:[%s1 + $0x260] sm:$0xf]
  %v176 = vld [vmem:[%s1 + $0x264] sm:$0xf]
  %v177 = vld [vmem:[%s1 + $0x268] sm:$0xf]
  %v178 = vld [vmem:[%s1 + $0x26c] sm:$0xf]
  %v179 = vld [vmem:[%s1 + $0x270] sm:$0xf]
  %v180 = vld [vmem:[%s1 + $0x274] sm:$0xf]
  %v181 = vld [vmem:[%s1 + $0x278] sm:$0xf]
  %v182 = vld [vmem:[%s1 + $0x27c] sm:$0xf]
  %v183 = vld [vmem:[%s1 + $0x280] sm:$0xf]
  %v184 = vld [vmem:[%s1 + $0x284] sm:$0xf]
  %v185 = vld [vmem:[%s1 + $0x288] sm:$0xf]
  %v186 = vld [vmem:[%s1 + $0x28c] sm:$0xf]
  %v187 = vld [vmem:[%s1 + $0x290] sm:$0xf]
  %v188 = vld [vmem:[%s1 + $0x294] sm:$0xf]
  %v189 = vld [vmem:[%s1 + $0x298] sm:$0xf]
  %v190 = vld [vmem:[%s1 + $0x29c] sm:$0xf]
  %v191 = vld [vmem:[%s1 + $0x2a0] sm:$0xf]
  %v192 = vld [vmem:[%s1 + $0x2a4] sm:$0xf]
  %v193 = vld [vmem:[%s1 + $0x2a8] sm:$0xf]
  %v194 = vld [vmem:[%s1 + $0x2ac] sm:$0xf]
  %v195 = vld [vmem:[%s1 + $0x2b0] sm:$0xf]
  %v196 = vld [vmem:[%s1 + $0x2b4] sm:$0xf]
  %v197 = vld [vmem:[%s1 + $0x2b8] sm:$0xf]
  %v198 = vld [vmem:[%s1 + $0x2bc] sm:$0xf]
  %v199 = vld [vmem:[%s1 + $0x2c0] sm:$0xf]
  %v200 = vld [vmem:[%s1 + $0x2c4] sm:$0xf]
  %v201 = vld [vmem:[%s1 + $0x2c8] sm:$0xf]
  %v202 = vld [vmem:[%s1 + $0x2cc] sm:$0xf]
  %v203 = vld [vmem:[%s1 + $0x2d0] sm:$0xf]
  %v204 = vld [vmem:[%s1 + $0x2d4] sm:$0xf]
  %v205 = vld [vmem:[%s1 + $0x2d8] sm:$0xf]
  %v206 = vld [vmem:[%s1 + $0x2dc] sm:$0xf]
  %v207 = vld [vmem:[%s1 + $0x2e0] sm:$0xf]
  %v208 = vld [vmem:[%s1 + $0x2e4] sm:$0xf]
  %v209 = vld [vmem:[%s1 + $0x2e8] sm:$0xf]
  %v210 = vld [vmem:[%s1 + $0x2ec] sm:$0xf]
  %v211 = vld [vmem:[%s1 + $0x2f0] sm:$0xf]
  %v212 = vld [vmem:[%s1 + $0x2f4] sm:$0xf]
  %v213 = vld [vmem:[%s1 + $0x2f8] sm:$0xf]
  %v214 = vld [vmem:[%s1 + $0x2fc] sm:$0xf]
  %v215 = vld [vmem:[%s1 + $0x300] sm:$0xf]
  %v216 = vld [vmem:[%s1 + $0x304] sm:$0xf]
  %v217 = vld [vmem:[%s1 + $0x308] sm:$0xf]
  %v218 = vld [vmem:[%s1 + $0x30c] sm:$0xf]
  %v219 = vld [vmem:[%s1 + $0x310] sm:$0xf]
  %v220 = vld [vmem:[%s1 + $0x314] sm:$0xf]
  %v221 = vld [vmem:[%s1 + $0x318] sm:$0xf]
  %v222 = vld [vmem:[%s1 + $0x31c] sm:$0xf]
  %v223 = vld [vmem:[%s1 + $0x320] sm:$0xf]
  %v224 = vld [vmem:[%s1 + $0x324] sm:$0xf]
  %v225 = vld [vmem:[%s1 + $0x328] sm:$0xf]
  %v226 = vld [vmem:[%s1 + $0x32c] sm:$0xf]
  %v227 = vld [vmem:[%s1 + $0x330] sm:$0xf]
  %v228 = vld [vmem:[%s1 + $0x334] sm:$0xf]
  %v229 = vld [vmem:[%s1 + $0x338] sm:$0xf]
  %v230 = vld [vmem:[%s1 + $0x33c] sm:$0xf]
  %v231 = vld [vmem:[%s1 + $0x340] sm:$0xf]
  %v232 = vld [vmem:[%s1 + $0x344] sm:$0xf]
  %v233 = vld [vmem:[%s1 + $0x348] sm:$0xf]
  %v234 = vld [vmem:[%s1 + $0x34c] sm:$0xf]
  %v235 = vld [vmem:[%s1 + $0x350] sm:$0xf]
  %v236 = vld [vmem:[%s1 + $0x354] sm:$0xf]
  %v237 = vld [vmem:[%s1 + $0x358] sm:$0xf]
  %v238 = vld [vmem:[%s1 + $0x35c] sm:$0xf]
  %v239 = vld [vmem:[%s1 + $0x360] sm:$0xf]
  %v240 = vld [vmem:[%s1 + $0x364] sm:$0xf]
  %v241 = vld [vmem:[%s1 + $0x368] sm:$0xf]
  %v242 = vld [vmem:[%s1 + $0x36c] sm:$0xf]
  %v243 = vld [vmem:[%s1 + $0x370] sm:$0xf]
  %v244 = vld [vmem:[%s1 + $0x374] sm:$0xf]
  %v245 = vld [vmem:[%s1 + $0x378] sm:$0xf]
  %v246 = vld [vmem:[%s1 + $0x37c] sm:$0xf]
  %v247 = vld [vmem:[%s1 + $0x380] sm:$0xf]
  %v248 = vld [vmem:[%s1 + $0x384] sm:$0xf]
  %v249 = vld [vmem:[%s1 + $0x388] sm:$0xf]
  %v250 = vld [vmem:[%s1 + $0x38c] sm:$0xf]
  %v251 = vld [vmem:[%s1 + $0x390] sm:$0xf]
  %v252 = vld [vmem:[%s1 + $0x394] sm:$0xf]
  %v253 = vld [vmem:[%s1 + $0x398] sm:$0xf]
  %v254 = vld [vmem:[%s1 + $0x39c] sm:$0xf]
  %v255 = vld [vmem:[%s1 + $0x3a0] sm:$0xf]
  %v256 = vld [vmem:[%s1 + $0x3a4] sm:$0xf]
  %v257 = vld [vmem:[%s1 + $0x3a8] sm:$0xf]
  %v258 = vld [vmem:[%s1 + $0x3ac] sm:$0xf]
  %v259 = vld [vmem:[%s1 + $0x3b0] sm:$0xf]
  %v260 = vld [vmem:[%s1 + $0x3b4] sm:$0xf]
  %v261 = vld [vmem:[%s1 + $0x3b8] sm:$0xf]
  %v262 = vld [vmem:[%s1 + $0x3bc] sm:$0xf]
  %v263 = vld [vmem:[%s1 + $0x3c0] sm:$0xf]
  %v264 = vld [vmem:[%s1 + $0x3c4] sm:$0xf]
  %v265 = vld [vmem:[%s1 + $0x3c8] sm:$0xf]
  %v266 = vld [vmem:[%s1 + $0x3cc] sm:$0xf]
  %v267 = vld [vmem:[%s1 + $0x3d0] sm:$0xf]
  %v268 = vld [vmem:[%s1 + $0x3d4] sm:$0xf]
  %v269 = vld [vmem:[%s1 + $0x3d8] sm:$0xf]
  %v270 = vld [vmem:[%s1 + $0x3dc] sm:$0xf]
  %v271 = vld [vmem:[%s1 + $0x3e0] sm:$0xf]
  %v272 = vld [vmem:[%s1 + $0x3e4] sm:$0xf]
  %v273 = vld [vmem:[%s1 + $0x3e8] sm:$0xf]
  %v274 = vld [vmem:[%s1 + $0x3ec] sm:$0xf]
  %v275 = vld [vmem:[%s1 + $0x3f0] sm:$0xf]
  %v276 = vld [vmem:[%s1 + $0x3f4] sm:$0xf]
  %v277 = vld [vmem:[%s1 + $0x3f8] sm:$0xf]
  %v278 = vld [vmem:[%s1 + $0x3fc] sm:$0xf]
  %v279 = vld [vmem:[%s2] sm:$0x1]
  %v281 = vlaneseq
  %v282 = vshrl.u32 %v281, 7
  %v283 = vsub.s32 0, %v282
  %v284 = vrot.slane %v279, %v283
  %v294 = vunpack.c.l.b16 %v15
  %v295 = vunpack.c.h.b16 %v15
  %v296 = vunpack.c.l.b16 %v16
  %v297 = vunpack.c.h.b16 %v16
  %v298 = vunpack.c.l.b16 %v17
  %v299 = vunpack.c.h.b16 %v17
  %v300 = vunpack.c.l.b16 %v18
  %v301 = vunpack.c.h.b16 %v18
  %v302 = vunpack.c.l.b16 %v19
  %v303 = vunpack.c.h.b16 %v19
  %v304 = vunpack.c.l.b16 %v20
  %v305 = vunpack.c.h.b16 %v20
  %v306 = vunpack.c.l.b16 %v21
  %v307 = vunpack.c.h.b16 %v21
  %v308 = vunpack.c.l.b16 %v22
  %v309 = vunpack.c.h.b16 %v22
  %v310 = vpack.c.b16 %v294, %v294
  %v311 = vpack.c.b16 %v295, %v295
  %v312 = vpack.c.b16 %v296, %v296
  %v313 = vpack.c.b16 %v297, %v297
  %v314 = vpack.c.b16 %v298, %v298
  %v315 = vpack.c.b16 %v299, %v299
  %v316 = vpack.c.b16 %v300, %v300
  %v317 = vpack.c.b16 %v301, %v301
  %v318 = vpack.c.b16 %v302, %v302
  %v319 = vpack.c.b16 %v303, %v303
  %v320 = vpack.c.b16 %v304, %v304
  %v321 = vpack.c.b16 %v305, %v305
  %v322 = vpack.c.b16 %v306, %v306
  %v323 = vpack.c.b16 %v307, %v307
  %v324 = vpack.c.b16 %v308, %v308
  %v325 = vpack.c.b16 %v309, %v309
  %v598 = vunpack.c.l.b16 %v23
  %v599 = vunpack.c.l.b16 %v24
  %v600 = vunpack.c.l.b16 %v25
  %v601 = vunpack.c.l.b16 %v26
  %v602 = vunpack.c.l.b16 %v27
  %v603 = vunpack.c.l.b16 %v28
  %v604 = vunpack.c.l.b16 %v29
  %v605 = vunpack.c.l.b16 %v30
  %v606 = vunpack.c.l.b16 %v31
  %v607 = vunpack.c.l.b16 %v32
  %v608 = vunpack.c.l.b16 %v33
  %v609 = vunpack.c.l.b16 %v34
  %v610 = vunpack.c.l.b16 %v35
  %v611 = vunpack.c.l.b16 %v36
  %v612 = vunpack.c.l.b16 %v37
  %v613 = vunpack.c.l.b16 %v38
  %v614 = vunpack.c.l.b16 %v39
  %v615 = vunpack.c.l.b16 %v40
  %v616 = vunpack.c.l.b16 %v41
  %v617 = vunpack.c.l.b16 %v42
  %v618 = vunpack.c.l.b16 %v43
  %v619 = vunpack.c.l.b16 %v44
  %v620 = vunpack.c.l.b16 %v45
  %v621 = vunpack.c.l.b16 %v46
  %v622 = vunpack.c.l.b16 %v47
  %v623 = vunpack.c.l.b16 %v48
  %v624 = vunpack.c.l.b16 %v49
  %v625 = vunpack.c.l.b16 %v50
  %v626 = vunpack.c.l.b16 %v51
  %v627 = vunpack.c.l.b16 %v52
  %v628 = vunpack.c.l.b16 %v53
  %v629 = vunpack.c.l.b16 %v54
  %v630 = vunpack.c.l.b16 %v55
  %v631 = vunpack.c.l.b16 %v56
  %v632 = vunpack.c.l.b16 %v57
  %v633 = vunpack.c.l.b16 %v58
  %v634 = vunpack.c.l.b16 %v59
  %v635 = vunpack.c.l.b16 %v60
  %v636 = vunpack.c.l.b16 %v61
  %v637 = vunpack.c.l.b16 %v62
  %v638 = vunpack.c.l.b16 %v63
  %v639 = vunpack.c.l.b16 %v64
  %v640 = vunpack.c.l.b16 %v65
  %v641 = vunpack.c.l.b16 %v66
  %v642 = vunpack.c.l.b16 %v67
  %v643 = vunpack.c.l.b16 %v68
  %v644 = vunpack.c.l.b16 %v69
  %v645 = vunpack.c.l.b16 %v70
  %v646 = vunpack.c.l.b16 %v71
  %v647 = vunpack.c.l.b16 %v72
  %v648 = vunpack.c.l.b16 %v73
  %v649 = vunpack.c.l.b16 %v74
  %v650 = vunpack.c.l.b16 %v75
  %v651 = vunpack.c.l.b16 %v76
  %v652 = vunpack.c.l.b16 %v77
  %v653 = vunpack.c.l.b16 %v78
  %v654 = vunpack.c.l.b16 %v79
  %v655 = vunpack.c.l.b16 %v80
  %v656 = vunpack.c.l.b16 %v81
  %v657 = vunpack.c.l.b16 %v82
  %v658 = vunpack.c.l.b16 %v83
  %v659 = vunpack.c.l.b16 %v84
  %v660 = vunpack.c.l.b16 %v85
  %v661 = vunpack.c.l.b16 %v86
  %v662 = vunpack.c.l.b16 %v87
  %v663 = vunpack.c.l.b16 %v88
  %v664 = vunpack.c.l.b16 %v89
  %v665 = vunpack.c.l.b16 %v90
  %v666 = vunpack.c.l.b16 %v91
  %v667 = vunpack.c.l.b16 %v92
  %v668 = vunpack.c.l.b16 %v93
  %v669 = vunpack.c.l.b16 %v94
  %v670 = vunpack.c.l.b16 %v95
  %v671 = vunpack.c.l.b16 %v96
  %v672 = vunpack.c.l.b16 %v97
  %v673 = vunpack.c.l.b16 %v98
  %v674 = vunpack.c.l.b16 %v99
  %v675 = vunpack.c.l.b16 %v100
  %v676 = vunpack.c.l.b16 %v101
  %v677 = vunpack.c.l.b16 %v102
  %v678 = vunpack.c.l.b16 %v103
  %v679 = vunpack.c.l.b16 %v104
  %v680 = vunpack.c.l.b16 %v105
  %v681 = vunpack.c.l.b16 %v106
  %v682 = vunpack.c.l.b16 %v107
  %v683 = vunpack.c.l.b16 %v108
  %v684 = vunpack.c.l.b16 %v109
  %v685 = vunpack.c.l.b16 %v110
  %v686 = vunpack.c.l.b16 %v111
  %v687 = vunpack.c.l.b16 %v112
  %v688 = vunpack.c.l.b16 %v113
  %v689 = vunpack.c.l.b16 %v114
  %v690 = vunpack.c.l.b16 %v115
  %v691 = vunpack.c.l.b16 %v116
  %v692 = vunpack.c.l.b16 %v117
  %v693 = vunpack.c.l.b16 %v118
  %v694 = vunpack.c.l.b16 %v119
  %v695 = vunpack.c.l.b16 %v120
  %v696 = vunpack.c.l.b16 %v121
  %v697 = vunpack.c.l.b16 %v122
  %v698 = vunpack.c.l.b16 %v123
  %v699 = vunpack.c.l.b16 %v124
  %v700 = vunpack.c.l.b16 %v125
  %v701 = vunpack.c.l.b16 %v126
  %v702 = vunpack.c.l.b16 %v127
  %v703 = vunpack.c.l.b16 %v128
  %v704 = vunpack.c.l.b16 %v129
  %v705 = vunpack.c.l.b16 %v130
  %v706 = vunpack.c.l.b16 %v131
  %v707 = vunpack.c.l.b16 %v132
  %v708 = vunpack.c.l.b16 %v133
  %v709 = vunpack.c.l.b16 %v134
  %v710 = vunpack.c.l.b16 %v135
  %v711 = vunpack.c.l.b16 %v136
  %v712 = vunpack.c.l.b16 %v137
  %v713 = vunpack.c.l.b16 %v138
  %v714 = vunpack.c.l.b16 %v139
  %v715 = vunpack.c.l.b16 %v140
  %v716 = vunpack.c.l.b16 %v141
  %v717 = vunpack.c.l.b16 %v142
  %v718 = vunpack.c.l.b16 %v143
  %v719 = vunpack.c.l.b16 %v144
  %v720 = vunpack.c.l.b16 %v145
  %v721 = vunpack.c.l.b16 %v146
  %v722 = vunpack.c.l.b16 %v147
  %v723 = vunpack.c.l.b16 %v148
  %v724 = vunpack.c.l.b16 %v149
  %v725 = vunpack.c.l.b16 %v150
  %v726 = vunpack.c.l.b16 %v151
  %v727 = vunpack.c.l.b16 %v152
  %v728 = vunpack.c.l.b16 %v153
  %v729 = vunpack.c.l.b16 %v154
  %v730 = vunpack.c.l.b16 %v155
  %v731 = vunpack.c.l.b16 %v156
  %v732 = vunpack.c.l.b16 %v157
  %v733 = vunpack.c.l.b16 %v158
  %v734 = vunpack.c.l.b16 %v159
  %v735 = vunpack.c.l.b16 %v160
  %v736 = vunpack.c.l.b16 %v161
  %v737 = vunpack.c.l.b16 %v162
  %v738 = vunpack.c.l.b16 %v163
  %v739 = vunpack.c.l.b16 %v164
  %v740 = vunpack.c.l.b16 %v165
  %v741 = vunpack.c.l.b16 %v166
  %v742 = vunpack.c.l.b16 %v167
  %v743 = vunpack.c.l.b16 %v168
  %v744 = vunpack.c.l.b16 %v169
  %v745 = vunpack.c.l.b16 %v170
  %v746 = vunpack.c.l.b16 %v171
  %v747 = vunpack.c.l.b16 %v172
  %v748 = vunpack.c.l.b16 %v173
  %v749 = vunpack.c.l.b16 %v174
  %v750 = vunpack.c.l.b16 %v175
  %v751 = vunpack.c.l.b16 %v176
  %v752 = vunpack.c.l.b16 %v177
  %v753 = vunpack.c.l.b16 %v178
  %v754 = vunpack.c.l.b16 %v179
  %v755 = vunpack.c.l.b16 %v180
  %v756 = vunpack.c.l.b16 %v181
  %v757 = vunpack.c.l.b16 %v182
  %v758 = vunpack.c.l.b16 %v183
  %v759 = vunpack.c.l.b16 %v184
  %v760 = vunpack.c.l.b16 %v185
  %v761 = vunpack.c.l.b16 %v186
  %v762 = vunpack.c.l.b16 %v187
  %v763 = vunpack.c.l.b16 %v188
  %v764 = vunpack.c.l.b16 %v189
  %v765 = vunpack.c.l.b16 %v190
  %v766 = vunpack.c.l.b16 %v191
  %v767 = vunpack.c.l.b16 %v192
  %v768 = vunpack.c.l.b16 %v193
  %v769 = vunpack.c.l.b16 %v194
  %v770 = vunpack.c.l.b16 %v195
  %v771 = vunpack.c.l.b16 %v196
  %v772 = vunpack.c.l.b16 %v197
  %v773 = vunpack.c.l.b16 %v198
  %v774 = vunpack.c.l.b16 %v199
  %v775 = vunpack.c.l.b16 %v200
  %v776 = vunpack.c.l.b16 %v201
  %v777 = vunpack.c.l.b16 %v202
  %v778 = vunpack.c.l.b16 %v203
  %v779 = vunpack.c.l.b16 %v204
  %v780 = vunpack.c.l.b16 %v205
  %v781 = vunpack.c.l.b16 %v206
  %v782 = vunpack.c.l.b16 %v207
  %v783 = vunpack.c.l.b16 %v208
  %v784 = vunpack.c.l.b16 %v209
  %v785 = vunpack.c.l.b16 %v210
  %v786 = vunpack.c.l.b16 %v211
  %v787 = vunpack.c.l.b16 %v212
  %v788 = vunpack.c.l.b16 %v213
  %v789 = vunpack.c.l.b16 %v214
  %v790 = vunpack.c.l.b16 %v215
  %v791 = vunpack.c.l.b16 %v216
  %v792 = vunpack.c.l.b16 %v217
  %v793 = vunpack.c.l.b16 %v218
  %v794 = vunpack.c.l.b16 %v219
  %v795 = vunpack.c.l.b16 %v220
  %v796 = vunpack.c.l.b16 %v221
  %v797 = vunpack.c.l.b16 %v222
  %v798 = vunpack.c.l.b16 %v223
  %v799 = vunpack.c.l.b16 %v224
  %v800 = vunpack.c.l.b16 %v225
  %v801 = vunpack.c.l.b16 %v226
  %v802 = vunpack.c.l.b16 %v227
  %v803 = vunpack.c.l.b16 %v228
  %v804 = vunpack.c.l.b16 %v229
  %v805 = vunpack.c.l.b16 %v230
  %v806 = vunpack.c.l.b16 %v231
  %v807 = vunpack.c.l.b16 %v232
  %v808 = vunpack.c.l.b16 %v233
  %v809 = vunpack.c.l.b16 %v234
  %v810 = vunpack.c.l.b16 %v235
  %v811 = vunpack.c.l.b16 %v236
  %v812 = vunpack.c.l.b16 %v237
  %v813 = vunpack.c.l.b16 %v238
  %v814 = vunpack.c.l.b16 %v239
  %v815 = vunpack.c.l.b16 %v240
  %v816 = vunpack.c.l.b16 %v241
  %v817 = vunpack.c.l.b16 %v242
  %v818 = vunpack.c.l.b16 %v243
  %v819 = vunpack.c.l.b16 %v244
  %v820 = vunpack.c.l.b16 %v245
  %v821 = vunpack.c.l.b16 %v246
  %v822 = vunpack.c.l.b16 %v247
  %v823 = vunpack.c.l.b16 %v248
  %v824 = vunpack.c.l.b16 %v249
  %v825 = vunpack.c.l.b16 %v250
  %v826 = vunpack.c.l.b16 %v251
  %v827 = vunpack.c.l.b16 %v252
  %v828 = vunpack.c.l.b16 %v253
  %v829 = vunpack.c.l.b16 %v254
  %v830 = vunpack.c.l.b16 %v255
  %v831 = vunpack.c.l.b16 %v256
  %v832 = vunpack.c.l.b16 %v257
  %v833 = vunpack.c.l.b16 %v258
  %v834 = vunpack.c.l.b16 %v259
  %v835 = vunpack.c.l.b16 %v260
  %v836 = vunpack.c.l.b16 %v261
  %v837 = vunpack.c.l.b16 %v262
  %v838 = vunpack.c.l.b16 %v263
  %v839 = vunpack.c.l.b16 %v264
  %v840 = vunpack.c.l.b16 %v265
  %v841 = vunpack.c.l.b16 %v266
  %v842 = vunpack.c.l.b16 %v267
  %v843 = vunpack.c.l.b16 %v268
  %v844 = vunpack.c.l.b16 %v269
  %v845 = vunpack.c.l.b16 %v270
  %v846 = vunpack.c.l.b16 %v271
  %v847 = vunpack.c.l.b16 %v272
  %v848 = vunpack.c.l.b16 %v273
  %v849 = vunpack.c.l.b16 %v274
  %v850 = vunpack.c.l.b16 %v275
  %v851 = vunpack.c.l.b16 %v276
  %v852 = vunpack.c.l.b16 %v277
  %v853 = vunpack.c.l.b16 %v278
  %v854 = vpack.c.b16 %v599, %v598
  %v855 = vpack.c.b16 %v601, %v600
  %v856 = vpack.c.b16 %v603, %v602
  %v857 = vpack.c.b16 %v605, %v604
  %v858 = vpack.c.b16 %v607, %v606
  %v859 = vpack.c.b16 %v609, %v608
  %v860 = vpack.c.b16 %v611, %v610
  %v861 = vpack.c.b16 %v613, %v612
  %v862 = vpack.c.b16 %v615, %v614
  %v863 = vpack.c.b16 %v617, %v616
  %v864 = vpack.c.b16 %v619, %v618
  %v865 = vpack.c.b16 %v621, %v620
  %v866 = vpack.c.b16 %v623, %v622
  %v867 = vpack.c.b16 %v625, %v624
  %v868 = vpack.c.b16 %v627, %v626
  %v869 = vpack.c.b16 %v629, %v628
  %v870 = vpack.c.b16 %v631, %v630
  %v871 = vpack.c.b16 %v633, %v632
  %v872 = vpack.c.b16 %v635, %v634
  %v873 = vpack.c.b16 %v637, %v636
  %v874 = vpack.c.b16 %v639, %v638
  %v875 = vpack.c.b16 %v641, %v640
  %v876 = vpack.c.b16 %v643, %v642
  %v877 = vpack.c.b16 %v645, %v644
  %v878 = vpack.c.b16 %v647, %v646
  %v879 = vpack.c.b16 %v649, %v648
  %v880 = vpack.c.b16 %v651, %v650
  %v881 = vpack.c.b16 %v653, %v652
  %v882 = vpack.c.b16 %v655, %v654
  %v883 = vpack.c.b16 %v657, %v656
  %v884 = vpack.c.b16 %v659, %v658
  %v885 = vpack.c.b16 %v661, %v660
  %v886 = vpack.c.b16 %v663, %v662
  %v887 = vpack.c.b16 %v665, %v664
  %v888 = vpack.c.b16 %v667, %v666
  %v889 = vpack.c.b16 %v669, %v668
  %v890 = vpack.c.b16 %v671, %v670
  %v891 = vpack.c.b16 %v673, %v672
  %v892 = vpack.c.b16 %v675, %v674
  %v893 = vpack.c.b16 %v677, %v676
  %v894 = vpack.c.b16 %v679, %v678
  %v895 = vpack.c.b16 %v681, %v680
  %v896 = vpack.c.b16 %v683, %v682
  %v897 = vpack.c.b16 %v685, %v684
  %v898 = vpack.c.b16 %v687, %v686
  %v899 = vpack.c.b16 %v689, %v688
  %v900 = vpack.c.b16 %v691, %v690
  %v901 = vpack.c.b16 %v693, %v692
  %v902 = vpack.c.b16 %v695, %v694
  %v903 = vpack.c.b16 %v697, %v696
  %v904 = vpack.c.b16 %v699, %v698
  %v905 = vpack.c.b16 %v701, %v700
  %v906 = vpack.c.b16 %v703, %v702
  %v907 = vpack.c.b16 %v705, %v704
  %v908 = vpack.c.b16 %v707, %v706
  %v909 = vpack.c.b16 %v709, %v708
  %v910 = vpack.c.b16 %v711, %v710
  %v911 = vpack.c.b16 %v713, %v712
  %v912 = vpack.c.b16 %v715, %v714
  %v913 = vpack.c.b16 %v717, %v716
  %v914 = vpack.c.b16 %v719, %v718
  %v915 = vpack.c.b16 %v721, %v720
  %v916 = vpack.c.b16 %v723, %v722
  %v917 = vpack.c.b16 %v725, %v724
  %v918 = vpack.c.b16 %v727, %v726
  %v919 = vpack.c.b16 %v729, %v728
  %v920 = vpack.c.b16 %v731, %v730
  %v921 = vpack.c.b16 %v733, %v732
  %v922 = vpack.c.b16 %v735, %v734
  %v923 = vpack.c.b16 %v737, %v736
  %v924 = vpack.c.b16 %v739, %v738
  %v925 = vpack.c.b16 %v741, %v740
  %v926 = vpack.c.b16 %v743, %v742
  %v927 = vpack.c.b16 %v745, %v744
  %v928 = vpack.c.b16 %v747, %v746
  %v929 = vpack.c.b16 %v749, %v748
  %v930 = vpack.c.b16 %v751, %v750
  %v931 = vpack.c.b16 %v753, %v752
  %v932 = vpack.c.b16 %v755, %v754
  %v933 = vpack.c.b16 %v757, %v756
  %v934 = vpack.c.b16 %v759, %v758
  %v935 = vpack.c.b16 %v761, %v760
  %v936 = vpack.c.b16 %v763, %v762
  %v937 = vpack.c.b16 %v765, %v764
  %v938 = vpack.c.b16 %v767, %v766
  %v939 = vpack.c.b16 %v769, %v768
  %v940 = vpack.c.b16 %v771, %v770
  %v941 = vpack.c.b16 %v773, %v772
  %v942 = vpack.c.b16 %v775, %v774
  %v943 = vpack.c.b16 %v777, %v776
  %v944 = vpack.c.b16 %v779, %v778
  %v945 = vpack.c.b16 %v781, %v780
  %v946 = vpack.c.b16 %v783, %v782
  %v947 = vpack.c.b16 %v785, %v784
  %v948 = vpack.c.b16 %v787, %v786
  %v949 = vpack.c.b16 %v789, %v788
  %v950 = vpack.c.b16 %v791, %v790
  %v951 = vpack.c.b16 %v793, %v792
  %v952 = vpack.c.b16 %v795, %v794
  %v953 = vpack.c.b16 %v797, %v796
  %v954 = vpack.c.b16 %v799, %v798
  %v955 = vpack.c.b16 %v801, %v800
  %v956 = vpack.c.b16 %v803, %v802
  %v957 = vpack.c.b16 %v805, %v804
  %v958 = vpack.c.b16 %v807, %v806
  %v959 = vpack.c.b16 %v809, %v808
  %v960 = vpack.c.b16 %v811, %v810
  %v961 = vpack.c.b16 %v813, %v812
  %v962 = vpack.c.b16 %v815, %v814
  %v963 = vpack.c.b16 %v817, %v816
  %v964 = vpack.c.b16 %v819, %v818
  %v965 = vpack.c.b16 %v821, %v820
  %v966 = vpack.c.b16 %v823, %v822
  %v967 = vpack.c.b16 %v825, %v824
  %v968 = vpack.c.b16 %v827, %v826
  %v969 = vpack.c.b16 %v829, %v828
  %v970 = vpack.c.b16 %v831, %v830
  %v971 = vpack.c.b16 %v833, %v832
  %v972 = vpack.c.b16 %v835, %v834
  %v973 = vpack.c.b16 %v837, %v836
  %v974 = vpack.c.b16 %v839, %v838
  %v975 = vpack.c.b16 %v841, %v840
  %v976 = vpack.c.b16 %v843, %v842
  %v977 = vpack.c.b16 %v845, %v844
  %v978 = vpack.c.b16 %v847, %v846
  %v979 = vpack.c.b16 %v849, %v848
  %v980 = vpack.c.b16 %v851, %v850
  %v981 = vpack.c.b16 %v853, %v852
  %1110 = vmatprep.subr.bf16.mxu0 0
  %1111 = vmatpush1.bf16.msra.mxu0 %v861
  %1112 = vmatprep.subr.bf16.mxu0 0
  %1113 = vmatpush1.bf16.msra.mxu0 %v860
  %1114 = vmatprep.subr.bf16.mxu0 0
  %1115 = vmatpush1.bf16.msra.mxu0 %v859
  %1116 = vmatprep.subr.bf16.mxu0 0
  %1117 = vmatpush1.bf16.msra.mxu0 %v858
  %1118 = vmatprep.subr.bf16.mxu0 0
  %1119 = vmatpush1.bf16.msra.mxu0 %v857
  %1120 = vmatprep.subr.bf16.mxu0 0
  %1121 = vmatpush1.bf16.msra.mxu0 %v856
  %1122 = vmatprep.subr.bf16.mxu0 0
  %1123 = vmatpush1.bf16.msra.mxu0 %v855
  %1124 = vmatprep.subr.bf16.mxu0 0
  %1125 = vmatpush1.bf16.msra.mxu0 %v854
  %1126 = vmatprep.subr.bf16.mxu0 0
  %1127 = vmatpush2.bf16.msra.mxu0 %v869
  %1128 = vmatprep.subr.bf16.mxu0 0
  %1129 = vmatpush2.bf16.msra.mxu0 %v868
  %1130 = vmatprep.subr.bf16.mxu0 0
  %1131 = vmatpush2.bf16.msra.mxu0 %v867
  %1132 = vmatprep.subr.bf16.mxu0 0
  %1133 = vmatpush2.bf16.msra.mxu0 %v866
  %1134 = vmatprep.subr.bf16.mxu0 0
  %1135 = vmatpush2.bf16.msra.mxu0 %v865
  %1136 = vmatprep.subr.bf16.mxu0 0
  %1137 = vmatpush2.bf16.msra.mxu0 %v864
  %1138 = vmatprep.subr.bf16.mxu0 0
  %1139 = vmatpush2.bf16.msra.mxu0 %v863
  %1140 = vmatprep.subr.bf16.mxu0 0
  %1141 = vmatpush2.bf16.msra.mxu0 %v862
  %1142 = vmatprep.mubr.bf16.mxu0 %v311
  %1143 = vmatmul.mubr.bf16.gmra.mxu0 %v310
  %v1144 = vpop.f32.mrf.mxu0
  %v1145 = vadd.f32 %v284, %v1144
  %v1146 = vpop.f32.mrf.mxu0
  %v1147 = vpop.f32.mrf.mxu0
  %v1148 = vpop.f32.mrf.mxu0
  %1149 = vdwg.mxu0
  %1150 = vmatprep.subr.bf16.mxu0 0
  %1151 = vmatpush1.bf16.msra.mxu0 %v877
  %1152 = vmatprep.subr.bf16.mxu0 0
  %1153 = vmatpush1.bf16.msra.mxu0 %v876
  %1154 = vmatprep.subr.bf16.mxu0 0
  %1155 = vmatpush1.bf16.msra.mxu0 %v875
  %1156 = vmatprep.subr.bf16.mxu0 0
  %1157 = vmatpush1.bf16.msra.mxu0 %v874
  %1158 = vmatprep.subr.bf16.mxu0 0
  %1159 = vmatpush1.bf16.msra.mxu0 %v873
  %1160 = vmatprep.subr.bf16.mxu0 0
  %1161 = vmatpush1.bf16.msra.mxu0 %v872
  %1162 = vmatprep.subr.bf16.mxu0 0
  %1163 = vmatpush1.bf16.msra.mxu0 %v871
  %1164 = vmatprep.subr.bf16.mxu0 0
  %1165 = vmatpush1.bf16.msra.mxu0 %v870
  %1166 = vmatprep.subr.bf16.mxu0 0
  %1167 = vmatpush2.bf16.msra.mxu0 %v885
  %1168 = vmatprep.subr.bf16.mxu0 0
  %1169 = vmatpush2.bf16.msra.mxu0 %v884
  %1170 = vmatprep.subr.bf16.mxu0 0
  %1171 = vmatpush2.bf16.msra.mxu0 %v883
  %1172 = vmatprep.subr.bf16.mxu0 0
  %1173 = vmatpush2.bf16.msra.mxu0 %v882
  %1174 = vmatprep.subr.bf16.mxu0 0
  %1175 = vmatpush2.bf16.msra.mxu0 %v881
  %1176 = vmatprep.subr.bf16.mxu0 0
  %1177 = vmatpush2.bf16.msra.mxu0 %v880
  %1178 = vmatprep.subr.bf16.mxu0 0
  %1179 = vmatpush2.bf16.msra.mxu0 %v879
  %1180 = vmatprep.subr.bf16.mxu0 0
  %1181 = vmatpush2.bf16.msra.mxu0 %v878
  %1182 = vmatprep.mubr.bf16.mxu0 %v313
  %1183 = vmatmul.mubr.bf16.gmra.mxu0 %v312
  %v1184 = vpop.f32.mrf.mxu0
  %v1185 = vadd.f32 %v1145, %v1184
  %v1186 = vpop.f32.mrf.mxu0
  %v1187 = vpop.f32.mrf.mxu0
  %v1188 = vpop.f32.mrf.mxu0
  %1189 = vdwg.mxu0
  %1190 = vmatprep.subr.bf16.mxu0 0
  %1191 = vmatpush1.bf16.msra.mxu0 %v893
  %1192 = vmatprep.subr.bf16.mxu0 0
  %1193 = vmatpush1.bf16.msra.mxu0 %v892
  %1194 = vmatprep.subr.bf16.mxu0 0
  %1195 = vmatpush1.bf16.msra.mxu0 %v891
  %1196 = vmatprep.subr.bf16.mxu0 0
  %1197 = vmatpush1.bf16.msra.mxu0 %v890
  %1198 = vmatprep.subr.bf16.mxu0 0
  %1199 = vmatpush1.bf16.msra.mxu0 %v889
  %1200 = vmatprep.subr.bf16.mxu0 0
  %1201 = vmatpush1.bf16.msra.mxu0 %v888
  %1202 = vmatprep.subr.bf16.mxu0 0
  %1203 = vmatpush1.bf16.msra.mxu0 %v887
  %1204 = vmatprep.subr.bf16.mxu0 0
  %1205 = vmatpush1.bf16.msra.mxu0 %v886
  %1206 = vmatprep.subr.bf16.mxu0 0
  %1207 = vmatpush2.bf16.msra.mxu0 %v901
  %1208 = vmatprep.subr.bf16.mxu0 0
  %1209 = vmatpush2.bf16.msra.mxu0 %v900
  %1210 = vmatprep.subr.bf16.mxu0 0
  %1211 = vmatpush2.bf16.msra.mxu0 %v899
  %1212 = vmatprep.subr.bf16.mxu0 0
  %1213 = vmatpush2.bf16.msra.mxu0 %v898
  %1214 = vmatprep.subr.bf16.mxu0 0
  %1215 = vmatpush2.bf16.msra.mxu0 %v897
  %1216 = vmatprep.subr.bf16.mxu0 0
  %1217 = vmatpush2.bf16.msra.mxu0 %v896
  %1218 = vmatprep.subr.bf16.mxu0 0
  %1219 = vmatpush2.bf16.msra.mxu0 %v895
  %1220 = vmatprep.subr.bf16.mxu0 0
  %1221 = vmatpush2.bf16.msra.mxu0 %v894
  %1222 = vmatprep.mubr.bf16.mxu0 %v315
  %1223 = vmatmul.mubr.bf16.gmra.mxu0 %v314
  %v1224 = vpop.f32.mrf.mxu0
  %v1225 = vadd.f32 %v1185, %v1224
  %v1226 = vpop.f32.mrf.mxu0
  %v1227 = vpop.f32.mrf.mxu0
  %v1228 = vpop.f32.mrf.mxu0
  %1229 = vdwg.mxu0
  %1230 = vmatprep.subr.bf16.mxu0 0
  %1231 = vmatpush1.bf16.msra.mxu0 %v909
  %1232 = vmatprep.subr.bf16.mxu0 0
  %1233 = vmatpush1.bf16.msra.mxu0 %v908
  %1234 = vmatprep.subr.bf16.mxu0 0
  %1235 = vmatpush1.bf16.msra.mxu0 %v907
  %1236 = vmatprep.subr.bf16.mxu0 0
  %1237 = vmatpush1.bf16.msra.mxu0 %v906
  %1238 = vmatprep.subr.bf16.mxu0 0
  %1239 = vmatpush1.bf16.msra.mxu0 %v905
  %1240 = vmatprep.subr.bf16.mxu0 0
  %1241 = vmatpush1.bf16.msra.mxu0 %v904
  %1242 = vmatprep.subr.bf16.mxu0 0
  %1243 = vmatpush1.bf16.msra.mxu0 %v903
  %1244 = vmatprep.subr.bf16.mxu0 0
  %1245 = vmatpush1.bf16.msra.mxu0 %v902
  %1246 = vmatprep.subr.bf16.mxu0 0
  %1247 = vmatpush2.bf16.msra.mxu0 %v917
  %1248 = vmatprep.subr.bf16.mxu0 0
  %1249 = vmatpush2.bf16.msra.mxu0 %v916
  %1250 = vmatprep.subr.bf16.mxu0 0
  %1251 = vmatpush2.bf16.msra.mxu0 %v915
  %1252 = vmatprep.subr.bf16.mxu0 0
  %1253 = vmatpush2.bf16.msra.mxu0 %v914
  %1254 = vmatprep.subr.bf16.mxu0 0
  %1255 = vmatpush2.bf16.msra.mxu0 %v913
  %1256 = vmatprep.subr.bf16.mxu0 0
  %1257 = vmatpush2.bf16.msra.mxu0 %v912
  %1258 = vmatprep.subr.bf16.mxu0 0
  %1259 = vmatpush2.bf16.msra.mxu0 %v911
  %1260 = vmatprep.subr.bf16.mxu0 0
  %1261 = vmatpush2.bf16.msra.mxu0 %v910
  %1262 = vmatprep.mubr.bf16.mxu0 %v317
  %1263 = vmatmul.mubr.bf16.gmra.mxu0 %v316
  %v1264 = vpop.f32.mrf.mxu0
  %v1265 = vadd.f32 %v1225, %v1264
  %v1266 = vpop.f32.mrf.mxu0
  %v1267 = vpop.f32.mrf.mxu0
  %v1268 = vpop.f32.mrf.mxu0
  %1269 = vdwg.mxu0
  %1270 = vmatprep.subr.bf16.mxu0 0
  %1271 = vmatpush1.bf16.msra.mxu0 %v925
  %1272 = vmatprep.subr.bf16.mxu0 0
  %1273 = vmatpush1.bf16.msra.mxu0 %v924
  %1274 = vmatprep.subr.bf16.mxu0 0
  %1275 = vmatpush1.bf16.msra.mxu0 %v923
  %1276 = vmatprep.subr.bf16.mxu0 0
  %1277 = vmatpush1.bf16.msra.mxu0 %v922
  %1278 = vmatprep.subr.bf16.mxu0 0
  %1279 = vmatpush1.bf16.msra.mxu0 %v921
  %1280 = vmatprep.subr.bf16.mxu0 0
  %1281 = vmatpush1.bf16.msra.mxu0 %v920
  %1282 = vmatprep.subr.bf16.mxu0 0
  %1283 = vmatpush1.bf16.msra.mxu0 %v919
  %1284 = vmatprep.subr.bf16.mxu0 0
  %1285 = vmatpush1.bf16.msra.mxu0 %v918
  %1286 = vmatprep.subr.bf16.mxu0 0
  %1287 = vmatpush2.bf16.msra.mxu0 %v933
  %1288 = vmatprep.subr.bf16.mxu0 0
  %1289 = vmatpush2.bf16.msra.mxu0 %v932
  %1290 = vmatprep.subr.bf16.mxu0 0
  %1291 = vmatpush2.bf16.msra.mxu0 %v931
  %1292 = vmatprep.subr.bf16.mxu0 0
  %1293 = vmatpush2.bf16.msra.mxu0 %v930
  %1294 = vmatprep.subr.bf16.mxu0 0
  %1295 = vmatpush2.bf16.msra.mxu0 %v929
  %1296 = vmatprep.subr.bf16.mxu0 0
  %1297 = vmatpush2.bf16.msra.mxu0 %v928
  %1298 = vmatprep.subr.bf16.mxu0 0
  %1299 = vmatpush2.bf16.msra.mxu0 %v927
  %1300 = vmatprep.subr.bf16.mxu0 0
  %1301 = vmatpush2.bf16.msra.mxu0 %v926
  %1302 = vmatprep.mubr.bf16.mxu0 %v319
  %1303 = vmatmul.mubr.bf16.gmra.mxu0 %v318
  %v1304 = vpop.f32.mrf.mxu0
  %v1305 = vadd.f32 %v1265, %v1304
  %v1306 = vpop.f32.mrf.mxu0
  %v1307 = vpop.f32.mrf.mxu0
  %v1308 = vpop.f32.mrf.mxu0
  %1309 = vdwg.mxu0
  %1310 = vmatprep.subr.bf16.mxu0 0
  %1311 = vmatpush1.bf16.msra.mxu0 %v941
  %1312 = vmatprep.subr.bf16.mxu0 0
  %1313 = vmatpush1.bf16.msra.mxu0 %v940
  %1314 = vmatprep.subr.bf16.mxu0 0
  %1315 = vmatpush1.bf16.msra.mxu0 %v939
  %1316 = vmatprep.subr.bf16.mxu0 0
  %1317 = vmatpush1.bf16.msra.mxu0 %v938
  %1318 = vmatprep.subr.bf16.mxu0 0
  %1319 = vmatpush1.bf16.msra.mxu0 %v937
  %1320 = vmatprep.subr.bf16.mxu0 0
  %1321 = vmatpush1.bf16.msra.mxu0 %v936
  %1322 = vmatprep.subr.bf16.mxu0 0
  %1323 = vmatpush1.bf16.msra.mxu0 %v935
  %1324 = vmatprep.subr.bf16.mxu0 0
  %1325 = vmatpush1.bf16.msra.mxu0 %v934
  %1326 = vmatprep.subr.bf16.mxu0 0
  %1327 = vmatpush2.bf16.msra.mxu0 %v949
  %1328 = vmatprep.subr.bf16.mxu0 0
  %1329 = vmatpush2.bf16.msra.mxu0 %v948
  %1330 = vmatprep.subr.bf16.mxu0 0
  %1331 = vmatpush2.bf16.msra.mxu0 %v947
  %1332 = vmatprep.subr.bf16.mxu0 0
  %1333 = vmatpush2.bf16.msra.mxu0 %v946
  %1334 = vmatprep.subr.bf16.mxu0 0
  %1335 = vmatpush2.bf16.msra.mxu0 %v945
  %1336 = vmatprep.subr.bf16.mxu0 0
  %1337 = vmatpush2.bf16.msra.mxu0 %v944
  %1338 = vmatprep.subr.bf16.mxu0 0
  %1339 = vmatpush2.bf16.msra.mxu0 %v943
  %1340 = vmatprep.subr.bf16.mxu0 0
  %1341 = vmatpush2.bf16.msra.mxu0 %v942
  %1342 = vmatprep.mubr.bf16.mxu0 %v321
  %1343 = vmatmul.mubr.bf16.gmra.mxu0 %v320
  %v1344 = vpop.f32.mrf.mxu0
  %v1345 = vadd.f32 %v1305, %v1344
  %v1346 = vpop.f32.mrf.mxu0
  %v1347 = vpop.f32.mrf.mxu0
  %v1348 = vpop.f32.mrf.mxu0
  %1349 = vdwg.mxu0
  %1350 = vmatprep.subr.bf16.mxu0 0
  %1351 = vmatpush1.bf16.msra.mxu0 %v957
  %1352 = vmatprep.subr.bf16.mxu0 0
  %1353 = vmatpush1.bf16.msra.mxu0 %v956
  %1354 = vmatprep.subr.bf16.mxu0 0
  %1355 = vmatpush1.bf16.msra.mxu0 %v955
  %1356 = vmatprep.subr.bf16.mxu0 0
  %1357 = vmatpush1.bf16.msra.mxu0 %v954
  %1358 = vmatprep.subr.bf16.mxu0 0
  %1359 = vmatpush1.bf16.msra.mxu0 %v953
  %1360 = vmatprep.subr.bf16.mxu0 0
  %1361 = vmatpush1.bf16.msra.mxu0 %v952
  %1362 = vmatprep.subr.bf16.mxu0 0
  %1363 = vmatpush1.bf16.msra.mxu0 %v951
  %1364 = vmatprep.subr.bf16.mxu0 0
  %1365 = vmatpush1.bf16.msra.mxu0 %v950
  %1366 = vmatprep.subr.bf16.mxu0 0
  %1367 = vmatpush2.bf16.msra.mxu0 %v965
  %1368 = vmatprep.subr.bf16.mxu0 0
  %1369 = vmatpush2.bf16.msra.mxu0 %v964
  %1370 = vmatprep.subr.bf16.mxu0 0
  %1371 = vmatpush2.bf16.msra.mxu0 %v963
  %1372 = vmatprep.subr.bf16.mxu0 0
  %1373 = vmatpush2.bf16.msra.mxu0 %v962
  %1374 = vmatprep.subr.bf16.mxu0 0
  %1375 = vmatpush2.bf16.msra.mxu0 %v961
  %1376 = vmatprep.subr.bf16.mxu0 0
  %1377 = vmatpush2.bf16.msra.mxu0 %v960
  %1378 = vmatprep.subr.bf16.mxu0 0
  %1379 = vmatpush2.bf16.msra.mxu0 %v959
  %1380 = vmatprep.subr.bf16.mxu0 0
  %1381 = vmatpush2.bf16.msra.mxu0 %v958
  %1382 = vmatprep.mubr.bf16.mxu0 %v323
  %1383 = vmatmul.mubr.bf16.gmra.mxu0 %v322
  %v1384 = vpop.f32.mrf.mxu0
  %v1385 = vadd.f32 %v1345, %v1384
  %v1386 = vpop.f32.mrf.mxu0
  %v1387 = vpop.f32.mrf.mxu0
  %v1388 = vpop.f32.mrf.mxu0
  %1389 = vdwg.mxu0
  %1390 = vmatprep.subr.bf16.mxu0 0
  %1391 = vmatpush1.bf16.msra.mxu0 %v973
  %1392 = vmatprep.subr.bf16.mxu0 0
  %1393 = vmatpush1.bf16.msra.mxu0 %v972
  %1394 = vmatprep.subr.bf16.mxu0 0
  %1395 = vmatpush1.bf16.msra.mxu0 %v971
  %1396 = vmatprep.subr.bf16.mxu0 0
  %1397 = vmatpush1.bf16.msra.mxu0 %v970
  %1398 = vmatprep.subr.bf16.mxu0 0
  %1399 = vmatpush1.bf16.msra.mxu0 %v969
  %1400 = vmatprep.subr.bf16.mxu0 0
  %1401 = vmatpush1.bf16.msra.mxu0 %v968
  %1402 = vmatprep.subr.bf16.mxu0 0
  %1403 = vmatpush1.bf16.msra.mxu0 %v967
  %1404 = vmatprep.subr.bf16.mxu0 0
  %1405 = vmatpush1.bf16.msra.mxu0 %v966
  %1406 = vmatprep.subr.bf16.mxu0 0
  %1407 = vmatpush2.bf16.msra.mxu0 %v981
  %1408 = vmatprep.subr.bf16.mxu0 0
  %1409 = vmatpush2.bf16.msra.mxu0 %v980
  %1410 = vmatprep.subr.bf16.mxu0 0
  %1411 = vmatpush2.bf16.msra.mxu0 %v979
  %1412 = vmatprep.subr.bf16.mxu0 0
  %1413 = vmatpush2.bf16.msra.mxu0 %v978
  %1414 = vmatprep.subr.bf16.mxu0 0
  %1415 = vmatpush2.bf16.msra.mxu0 %v977
  %1416 = vmatprep.subr.bf16.mxu0 0
  %1417 = vmatpush2.bf16.msra.mxu0 %v976
  %1418 = vmatprep.subr.bf16.mxu0 0
  %1419 = vmatpush2.bf16.msra.mxu0 %v975
  %1420 = vmatprep.subr.bf16.mxu0 0
  %1421 = vmatpush2.bf16.msra.mxu0 %v974
  %1422 = vmatprep.mubr.bf16.mxu0 %v325
  %1423 = vmatmul.mubr.bf16.gmra.mxu0 %v324
  %v1424 = vpop.f32.mrf.mxu0
  %v1425 = vadd.f32 %v1385, %v1424
  %v1426 = vpop.f32.mrf.mxu0
  %v1427 = vpop.f32.mrf.mxu0
  %v1428 = vpop.f32.mrf.mxu0
  %1429 = vdwg.mxu0
  %1430 = vst [vmem:[%s3] sm:$0xff] %v1425
  // Predicated region
  $region14: #{netlinear_forward.7} parent=0 // pred_check
    _
  $region15: #{netlinear_forward.7} parent=0 // pred_check_branch
    %1432 = sbr.rel (0) target = $region17
  $region16: #{netlinear_forward.7} parent=0 // pred_region
    _
  $region17: #{netlinear_forward.7} parent=0 // pred_fallthru
    _
  // Predicated region
  $region18: #{netlinear_forward.7} parent=0 // pred_check
    _
  $region19: #{netlinear_forward.7} parent=0 // pred_check_branch
    %1434 = sbr.rel (0) target = $region21
  $region20: #{netlinear_forward.7} parent=0 // pred_region
    _
  $region21: #{netlinear_forward.7} parent=0 // pred_fallthru
    _

// kernel: netlinear_forward.5
$region0: #{netlinear_forward.5}
  #allocation0 [shape = 'u32[]', space=smem, size = 0x4, offset = 0x4, fixed_abs, tag = 'smem constant byte address 0x4 - core index']
  #allocation1 [shape = 'u32[144,128]{1,0:T(1,128)}', space=vmem, size = 0x12000, scoped, tag = 'internal scratch']
  %s0 = inlined_call_operand.vmem [shape: bf16[8,2048], index: 0, kind: input, shape index: {}]
  %s1 = inlined_call_operand.hbm [shape: bf16[2048,2048], index: 1, kind: input, shape index: {}]
  %s2 = inlined_call_operand.hbm [shape: f32[1,2048], index: 2, kind: input, shape index: {}]
  %s3 = inlined_call_operand.vmem [shape: bf16[8,2048], index: 3, kind: output, shape index: {}]
  %s4 = sld [smem:[#allocation0]]
  $region53: #{netlinear_forward.5} parent=0
    _
  %s6 = ssub.s32 1, %s4
  %s7 = scalar_select 0, %s6, %s4
  $region1: #{netlinear_forward.5} parent=0
    #allocation2 [shape = 'u8[4194304]{0}', space=vmem, size = 0x400000, scoped, tag = 'input window, operand 1']
    #allocation3 [shape = 's32[2]{0}', space=sflag, size = 0x8, scoped, tag = 'scoped memory for netlinear_forward.5']
    #allocation4 [shape = 'u8[4096]{0}', space=vmem, size = 0x1000, scoped, tag = 'input window, operand 2']
    #allocation5 [shape = 's32[2]{0}', space=sflag, size = 0x8, scoped, tag = 'scoped memory for netlinear_forward.5']
    %8 = vsyncpa [#allocation3], 0
    %s9 = scalar_lea.sflag [#allocation3], 1
    %10 = vsyncpa %s9, 0
    %11 = vsyncpa [#allocation5], 0
    %s12 = scalar_lea.sflag [#allocation5], 1
    %13 = vsyncpa %s12, 0
    loop: start=0, step=1, limit=6
    $region2: #{netlinear_forward.5} parent=1 // loop_pre_header
      _
    $region3: #{netlinear_forward.5} parent=1 // loop_header
      %s15 = sphi 0, %s19
      %p16 = scmp.ge.s32.totalorder %s15, 6
      %s23 = sphi 0, %s23
      %s25 = sphi 0, %s23
      %s26 = sphi 0, %s25
      %s40 = sphi 0, %s26
      %s46 = sphi 0, %s48
      %s49 = sphi 0, %s46
      %s50 = sphi 0, %s49
      %s66 = sphi 0, %s50
      %s72 = sphi 0, %s74
      %s75 = sphi 0, %s72
      %s76 = sphi 0, %s75
      %s92 = sphi 0, %s76
      %s98 = sphi 0, %s100
      %s101 = sphi 0, %s98
      %s102 = sphi 0, %s101
      %s118 = sphi 0, %s102
    $region4: #{netlinear_forward.5} parent=1 // loop_header_branch
      %18 = sbr.rel (%p16) target = $region8
    $region5: #{netlinear_forward.5} parent=1 // loop_body
      %s20 = ssub.s32 %s15, 1
      %s21 = ssub.s32 %s15, 2
      %s22 = sadd.s32 %s15, 1
      %s24 = sadd.s32 %s23, 1
      %p27 = scmp.eq.s32.totalorder %s15, 3
      %p28 = scmp.ne.s32.totalorder %s23, %s25
      %p29 = scmp.eq.s32.totalorder %s15, 0
      %p30 = por %p28, %p29
      %p31 = scmp.ne.s32.totalorder %s23, %s25
      %p32 = scmp.eq.s32.totalorder %s20, 3
      %p33 = por %p31, %p32
      %p34 = scmp.ne.s32.totalorder %s25, %s26
      %p35 = scmp.eq.s32.totalorder %s20, 0
      %p36 = por %p34, %p35
      %p37 = scmp.ne.s32.totalorder %s25, %s26
      %p38 = scmp.eq.s32.totalorder %s21, 3
      %p39 = por %p37, %p38
      %p41 = scmp.ne.s32.totalorder %s26, %s40
      %p42 = scmp.eq.s32.totalorder %s21, 0
      %p43 = por %p41, %p42
      %s44 = ssub.s32 %s15, %s22
      %p45 = scmp.eq.s32.totalorder %s44, 0
      %s47 = sadd.s32 %s46, 1
      %s48 = scalar_select %p45, %s46, %s47
      %p51 = pneg %p45
      %p52 = scmp.eq.s32.totalorder %s15, 3
      %p53 = por %p51, %p52
      %p54 = scmp.ne.s32.totalorder %s46, %s49
      %p55 = scmp.eq.s32.totalorder %s15, 0
      %p56 = por %p54, %p55
      %p57 = scmp.ne.s32.totalorder %s46, %s49
      %p58 = scmp.eq.s32.totalorder %s20, 3
      %p59 = por %p57, %p58
      %p60 = scmp.ne.s32.totalorder %s49, %s50
      %p61 = scmp.eq.s32.totalorder %s20, 0
      %p62 = por %p60, %p61
      %p63 = scmp.ne.s32.totalorder %s49, %s50
      %p64 = scmp.eq.s32.totalorder %s21, 3
      %p65 = por %p63, %p64
      %p67 = scmp.ne.s32.totalorder %s50, %s66
      %p68 = scmp.eq.s32.totalorder %s21, 0
      %p69 = por %p67, %p68
      %s70 = ssub.s32 %s15, %s22
      %p71 = scmp.eq.s32.totalorder %s70, 0
      %s73 = sadd.s32 %s72, 1
      %s74 = scalar_select %p71, %s72, %s73
      %p77 = pneg %p71
      %p78 = scmp.eq.s32.totalorder %s15, 3
      %p79 = por %p77, %p78
      %p80 = scmp.ne.s32.totalorder %s72, %s75
      %p81 = scmp.eq.s32.totalorder %s15, 0
      %p82 = por %p80, %p81
      %p83 = scmp.ne.s32.totalorder %s72, %s75
      %p84 = scmp.eq.s32.totalorder %s20, 3
      %p85 = por %p83, %p84
      %p86 = scmp.ne.s32.totalorder %s75, %s76
      %p87 = scmp.eq.s32.totalorder %s20, 0
      %p88 = por %p86, %p87
      %p89 = scmp.ne.s32.totalorder %s75, %s76
      %p90 = scmp.eq.s32.totalorder %s21, 3
      %p91 = por %p89, %p90
      %p93 = scmp.ne.s32.totalorder %s76, %s92
      %p94 = scmp.eq.s32.totalorder %s21, 0
      %p95 = por %p93, %p94
      %s96 = ssub.s32 %s15, %s22
      %p97 = scmp.eq.s32.totalorder %s96, 0
      %s99 = sadd.s32 %s98, 1
      %s100 = scalar_select %p97, %s98, %s99
      %p103 = pneg %p97
      %p104 = scmp.eq.s32.totalorder %s15, 3
      %p105 = por %p103, %p104
      %p106 = scmp.ne.s32.totalorder %s98, %s101
      %p107 = scmp.eq.s32.totalorder %s15, 0
      %p108 = por %p106, %p107
      %p109 = scmp.ne.s32.totalorder %s98, %s101
      %p110 = scmp.eq.s32.totalorder %s20, 3
      %p111 = por %p109, %p110
      %p112 = scmp.ne.s32.totalorder %s101, %s102
      %p113 = scmp.eq.s32.totalorder %s20, 0
      %p114 = por %p112, %p113
      %p115 = scmp.ne.s32.totalorder %s101, %s102
      %p116 = scmp.eq.s32.totalorder %s21, 3
      %p117 = por %p115, %p116
      %p119 = scmp.ne.s32.totalorder %s102, %s118
      %p120 = scmp.eq.s32.totalorder %s21, 0
      %p121 = por %p119, %p120
      %p122 = scmp.le.s32.totalorder 1, %s15
      %p123 = scmp.lt.s32.totalorder %s15, 5
      %p124 = pnand %p122, %p123
      %p125 = pneg %p124
      // Predicated region
      $region9: #{netlinear_forward.5} parent=5 // pred_check
        _
      $region10: #{netlinear_forward.5} parent=5 // pred_check_branch
        %127 = sbr.rel (%p124) target = $region12
      $region11: #{netlinear_forward.5} parent=5 // pred_region
        %s128 = ssub.s32 %s15, 1
        // Predicated region
        $region13: #{netlinear_forward.5} parent=11 // pred_check
          %p129 = pneg %p36
        $region14: #{netlinear_forward.5} parent=11 // pred_check_branch
          %131 = sbr.rel (%p129) target = $region16
        $region15: #{netlinear_forward.5} parent=11 // pred_region
          _
        $region16: #{netlinear_forward.5} parent=11 // pred_fallthru
          _
      $region12: #{netlinear_forward.5} parent=5 // pred_fallthru
        _
      %p132 = scmp.lt.s32.totalorder %s15, 4
      // Predicated region
      $region17: #{netlinear_forward.5} parent=5 // pred_check
        %p133 = pneg %p132
      $region18: #{netlinear_forward.5} parent=5 // pred_check_branch
        %135 = sbr.rel (%p133) target = $region20
      $region19: #{netlinear_forward.5} parent=5 // pred_region
        // Predicated region
        $region21: #{netlinear_forward.5} parent=19 // pred_check
          %p136 = pneg %p56
        $region22: #{netlinear_forward.5} parent=19 // pred_check_branch
          %138 = sbr.rel (%p136) target = $region24
        $region23: #{netlinear_forward.5} parent=19 // pred_region
          %s139 = sand.u32 %s46, 1
          %s140 = scalar_lea.sflag [#allocation3], %s139
          %s141 = sand.u32 %s46, 1
          %s142 = smul.addr %s141, 4096
          %s143 = scalar_lea.vmem [#allocation2], %s142
          %s144 = smul.u32 4, %s15
          %s146 = ssub.s32 65536, 65536
          %147 = vsyncadd %s140, %s146
          %s148 = smul.addr %s144, 64
          %s149 = scalar_lea.hbm %s1, %s148
          %s150 = sshll.u32 %s143, 4
          %s151 = int_to_ptr.vmem [resolvable:$true] %s150
          %156 = dma.hbm_to_vmem [thread:$0]  %s149, 65536, %s151, %s140, 1024, 256, 16
        $region24: #{netlinear_forward.5} parent=19 // pred_fallthru
          _
        // Predicated region
        $region25: #{netlinear_forward.5} parent=19 // pred_check
          %p157 = pneg %p82
        $region26: #{netlinear_forward.5} parent=19 // pred_check_branch
          %159 = sbr.rel (%p157) target = $region28
        $region27: #{netlinear_forward.5} parent=19 // pred_region
          %s160 = sand.u32 %s72, 1
          %s161 = scalar_lea.sflag [#allocation5], %s160
          %s162 = sand.u32 %s72, 1
          %s163 = smul.addr %s162, 4
          %s164 = scalar_lea.vmem [#allocation4], %s163
          %s165 = smul.u32 4, %s15
          %s167 = ssub.s32 64, 64
          %168 = vsyncadd %s161, %s167
          %s169 = smul.addr %s165, 16
          %s170 = scalar_lea.hbm %s2, %s169
          %s172 = sshll.u32 %s164, 4
          %s173 = int_to_ptr.vmem [resolvable:$true] %s172
          %175 = dma.hbm_to_vmem [thread:$0]  %s170, 64, %s173, %s161
        $region28: #{netlinear_forward.5} parent=19 // pred_fallthru
          _
      $region20: #{netlinear_forward.5} parent=5 // pred_fallthru
        _
      %p176 = scmp.le.s32.totalorder 1, %s15
      %p177 = scmp.lt.s32.totalorder %s15, 5
      %p178 = pnand %p176, %p177
      %p179 = pneg %p178
      // Predicated region
      $region29: #{netlinear_forward.5} parent=5 // pred_check
        _
      $region30: #{netlinear_forward.5} parent=5 // pred_check_branch
        %181 = sbr.rel (%p178) target = $region32
      $region31: #{netlinear_forward.5} parent=5 // pred_region
        %s182 = ssub.s32 %s15, 1
        %s183 = sand.u32 %s49, 1
        %s184 = scalar_lea.sflag [#allocation3], %s183
        %s185 = sand.u32 %s49, 1
        %s186 = smul.addr %s185, 4096
        %s187 = scalar_lea.vmem [#allocation2], %s186
        // Predicated region
        $region33: #{netlinear_forward.5} parent=31 // pred_check
          %p188 = pneg %p62
        $region34: #{netlinear_forward.5} parent=31 // pred_check_branch
          %190 = sbr.rel (%p188) target = $region36
        $region35: #{netlinear_forward.5} parent=31 // pred_region
          %191 = dma.done %s184, 65536
        $region36: #{netlinear_forward.5} parent=31 // pred_fallthru
          _
        %s192 = sand.u32 %s75, 1
        %s193 = scalar_lea.sflag [#allocation5], %s192
        %s194 = sand.u32 %s75, 1
        %s195 = smul.addr %s194, 4
        %s196 = scalar_lea.vmem [#allocation4], %s195
        // Predicated region
        $region37: #{netlinear_forward.5} parent=31 // pred_check
          %p197 = pneg %p88
        $region38: #{netlinear_forward.5} parent=31 // pred_check_branch
          %199 = sbr.rel (%p197) target = $region40
        $region39: #{netlinear_forward.5} parent=31 // pred_region
          %200 = dma.done %s193, 64
        $region40: #{netlinear_forward.5} parent=31 // pred_fallthru
          _
        %p201 = pneg %p36
        %p202 = pneg %p33
        %s203 = sand.u32 %s49, 1
        %s204 = scalar_lea.sflag [#allocation3], %s203
        %s205 = sand.u32 %s49, 1
        %s206 = smul.addr %s205, 4096
        %s207 = scalar_lea.vmem [#allocation2], %s206
        %p208 = pneg %p62
        %p209 = pneg %p59
        %s210 = sand.u32 %s75, 1
        %s211 = scalar_lea.sflag [#allocation5], %s210
        %s212 = sand.u32 %s75, 1
        %s213 = smul.addr %s212, 4
        %s214 = scalar_lea.vmem [#allocation4], %s213
        %p215 = pneg %p88
        %p216 = pneg %p85
        %p217 = pneg %p114
        %p218 = pneg %p111
        %s219 = smul.u32 4, %s20
        %p220 = scmp.lt.s32.totalorder %s219, 15
        %s221 = scalar_select %p220, %s219, 15
        %s222 = smul.addr %s221, 4
        %s223 = scalar_lea.vmem %s3, %s222
        %s224 = smul.u32 4, %s20
        %s225 = smul.u32 4, %s20
        %s226 = smul.u32 4, %s20
        %p227 = scmp.lt.s32.totalorder %s226, 15
        %s228 = scalar_select %p227, %s226, 15
        %s229 = smul.addr %s228, 4
        %s230 = scalar_lea.vmem %s3, %s229
        %s231 = smul.u32 4, %s20
        %v232 = vld [vmem:[%s0] sm:$0xff]
        %v233 = vld [vmem:[%s0 + $0x8] sm:$0xff]
        %v234 = vld [vmem:[%s0 + $0x10] sm:$0xff]
        %v235 = vld [vmem:[%s0 + $0x18] sm:$0xff]
        %v236 = vld [vmem:[%s0 + $0x20] sm:$0xff]
        %v237 = vld [vmem:[%s0 + $0x28] sm:$0xff]
        %v238 = vld [vmem:[%s0 + $0x30] sm:$0xff]
        %v239 = vld [vmem:[%s0 + $0x38] sm:$0xff]
        %v240 = vld [vmem:[%s187] sm:$0xff]
        %v241 = vld [vmem:[%s187 + $0x8] sm:$0xff]
        %v242 = vld [vmem:[%s187 + $0x10] sm:$0xff]
        %v243 = vld [vmem:[%s187 + $0x18] sm:$0xff]
        %v244 = vld [vmem:[%s187 + $0x20] sm:$0xff]
        %v245 = vld [vmem:[%s187 + $0x28] sm:$0xff]
        %v246 = vld [vmem:[%s187 + $0x30] sm:$0xff]
        %v247 = vld [vmem:[%s187 + $0x38] sm:$0xff]
        %v248 = vld [vmem:[%s187 + $0x40] sm:$0xff]
        %v249 = vld [vmem:[%s187 + $0x48] sm:$0xff]
        %v250 = vld [vmem:[%s187 + $0x50] sm:$0xff]
        %v251 = vld [vmem:[%s187 + $0x58] sm:$0xff]
        %v252 = vld [vmem:[%s187 + $0x60] sm:$0xff]
        %v253 = vld [vmem:[%s187 + $0x68] sm:$0xff]
        %v254 = vld [vmem:[%s187 + $0x70] sm:$0xff]
        %v255 = vld [vmem:[%s187 + $0x78] sm:$0xff]
        %v256 = vld [vmem:[%s187 + $0x80] sm:$0xff]
        %v257 = vld [vmem:[%s187 + $0x88] sm:$0xff]
        %v258 = vld [vmem:[%s187 + $0x90] sm:$0xff]
        %v259 = vld [vmem:[%s187 + $0x98] sm:$0xff]
        %v260 = vld [vmem:[%s187 + $0xa0] sm:$0xff]
        %v261 = vld [vmem:[%s187 + $0xa8] sm:$0xff]
        %v262 = vld [vmem:[%s187 + $0xb0] sm:$0xff]
        %v263 = vld [vmem:[%s187 + $0xb8] sm:$0xff]
        %v264 = vld [vmem:[%s187 + $0xc0] sm:$0xff]
        %v265 = vld [vmem:[%s187 + $0xc8] sm:$0xff]
        %v266 = vld [vmem:[%s187 + $0xd0] sm:$0xff]
        %v267 = vld [vmem:[%s187 + $0xd8] sm:$0xff]
        %v268 = vld [vmem:[%s187 + $0xe0] sm:$0xff]
        %v269 = vld [vmem:[%s187 + $0xe8] sm:$0xff]
        %v270 = vld [vmem:[%s187 + $0xf0] sm:$0xff]
        %v271 = vld [vmem:[%s187 + $0xf8] sm:$0xff]
        %v272 = vld [vmem:[%s187 + $0x100] sm:$0xff]
        %v273 = vld [vmem:[%s187 + $0x108] sm:$0xff]
        %v274 = vld [vmem:[%s187 + $0x110] sm:$0xff]
        %v275 = vld [vmem:[%s187 + $0x118] sm:$0xff]
        %v276 = vld [vmem:[%s187 + $0x120] sm:$0xff]
        %v277 = vld [vmem:[%s187 + $0x128] sm:$0xff]
        %v278 = vld [vmem:[%s187 + $0x130] sm:$0xff]
        %v279 = vld [vmem:[%s187 + $0x138] sm:$0xff]
        %v280 = vld [vmem:[%s187 + $0x140] sm:$0xff]
        %v281 = vld [vmem:[%s187 + $0x148] sm:$0xff]
        %v282 = vld [vmem:[%s187 + $0x150] sm:$0xff]
        %v283 = vld [vmem:[%s187 + $0x158] sm:$0xff]
        %v284 = vld [vmem:[%s187 + $0x160] sm:$0xff]
        %v285 = vld [vmem:[%s187 + $0x168] sm:$0xff]
        %v286 = vld [vmem:[%s187 + $0x170] sm:$0xff]
        %v287 = vld [vmem:[%s187 + $0x178] sm:$0xff]
        %v288 = vld [vmem:[%s187 + $0x180] sm:$0xff]
        %v289 = vld [vmem:[%s187 + $0x188] sm:$0xff]
        %v290 = vld [vmem:[%s187 + $0x190] sm:$0xff]
        %v291 = vld [vmem:[%s187 + $0x198] sm:$0xff]
        %v292 = vld [vmem:[%s187 + $0x1a0] sm:$0xff]
        %v293 = vld [vmem:[%s187 + $0x1a8] sm:$0xff]
        %v294 = vld [vmem:[%s187 + $0x1b0] sm:$0xff]
        %v295 = vld [vmem:[%s187 + $0x1b8] sm:$0xff]
        %v296 = vld [vmem:[%s187 + $0x1c0] sm:$0xff]
        %v297 = vld [vmem:[%s187 + $0x1c8] sm:$0xff]
        %v298 = vld [vmem:[%s187 + $0x1d0] sm:$0xff]
        %v299 = vld [vmem:[%s187 + $0x1d8] sm:$0xff]
        %v300 = vld [vmem:[%s187 + $0x1e0] sm:$0xff]
        %v301 = vld [vmem:[%s187 + $0x1e8] sm:$0xff]
        %v302 = vld [vmem:[%s187 + $0x1f0] sm:$0xff]
        %v303 = vld [vmem:[%s187 + $0x1f8] sm:$0xff]
        %v304 = vld [vmem:[%s187 + $0x200] sm:$0xff]
        %v305 = vld [vmem:[%s187 + $0x208] sm:$0xff]
        %v306 = vld [vmem:[%s187 + $0x210] sm:$0xff]
        %v307 = vld [vmem:[%s187 + $0x218] sm:$0xff]
        %v308 = vld [vmem:[%s187 + $0x220] sm:$0xff]
        %v309 = vld [vmem:[%s187 + $0x228] sm:$0xff]
        %v310 = vld [vmem:[%s187 + $0x230] sm:$0xff]
        %v311 = vld [vmem:[%s187 + $0x238] sm:$0xff]
        %v312 = vld [vmem:[%s187 + $0x240] sm:$0xff]
        %v313 = vld [vmem:[%s187 + $0x248] sm:$0xff]
        %v314 = vld [vmem:[%s187 + $0x250] sm:$0xff]
        %v315 = vld [vmem:[%s187 + $0x258] sm:$0xff]
        %v316 = vld [vmem:[%s187 + $0x260] sm:$0xff]
        %v317 = vld [vmem:[%s187 + $0x268] sm:$0xff]
        %v318 = vld [vmem:[%s187 + $0x270] sm:$0xff]
        %v319 = vld [vmem:[%s187 + $0x278] sm:$0xff]
        %v320 = vld [vmem:[%s187 + $0x280] sm:$0xff]
        %v321 = vld [vmem:[%s187 + $0x288] sm:$0xff]
        %v322 = vld [vmem:[%s187 + $0x290] sm:$0xff]
        %v323 = vld [vmem:[%s187 + $0x298] sm:$0xff]
        %v324 = vld [vmem:[%s187 + $0x2a0] sm:$0xff]
        %v325 = vld [vmem:[%s187 + $0x2a8] sm:$0xff]
        %v326 = vld [vmem:[%s187 + $0x2b0] sm:$0xff]
        %v327 = vld [vmem:[%s187 + $0x2b8] sm:$0xff]
        %v328 = vld [vmem:[%s187 + $0x2c0] sm:$0xff]
        %v329 = vld [vmem:[%s187 + $0x2c8] sm:$0xff]
        %v330 = vld [vmem:[%s187 + $0x2d0] sm:$0xff]
        %v331 = vld [vmem:[%s187 + $0x2d8] sm:$0xff]
        %v332 = vld [vmem:[%s187 + $0x2e0] sm:$0xff]
        %v333 = vld [vmem:[%s187 + $0x2e8] sm:$0xff]
        %v334 = vld [vmem:[%s187 + $0x2f0] sm:$0xff]
        %v335 = vld [vmem:[%s187 + $0x2f8] sm:$0xff]
        %v336 = vld [vmem:[%s187 + $0x300] sm:$0xff]
        %v337 = vld [vmem:[%s187 + $0x308] sm:$0xff]
        %v338 = vld [vmem:[%s187 + $0x310] sm:$0xff]
        %v339 = vld [vmem:[%s187 + $0x318] sm:$0xff]
        %v340 = vld [vmem:[%s187 + $0x320] sm:$0xff]
        %v341 = vld [vmem:[%s187 + $0x328] sm:$0xff]
        %v342 = vld [vmem:[%s187 + $0x330] sm:$0xff]
        %v343 = vld [vmem:[%s187 + $0x338] sm:$0xff]
        %v344 = vld [vmem:[%s187 + $0x340] sm:$0xff]
        %v345 = vld [vmem:[%s187 + $0x348] sm:$0xff]
        %v346 = vld [vmem:[%s187 + $0x350] sm:$0xff]
        %v347 = vld [vmem:[%s187 + $0x358] sm:$0xff]
        %v348 = vld [vmem:[%s187 + $0x360] sm:$0xff]
        %v349 = vld [vmem:[%s187 + $0x368] sm:$0xff]
        %v350 = vld [vmem:[%s187 + $0x370] sm:$0xff]
        %v351 = vld [vmem:[%s187 + $0x378] sm:$0xff]
        %v352 = vld [vmem:[%s187 + $0x380] sm:$0xff]
        %v353 = vld [vmem:[%s187 + $0x388] sm:$0xff]
        %v354 = vld [vmem:[%s187 + $0x390] sm:$0xff]
        %v355 = vld [vmem:[%s187 + $0x398] sm:$0xff]
        %v356 = vld [vmem:[%s187 + $0x3a0] sm:$0xff]
        %v357 = vld [vmem:[%s187 + $0x3a8] sm:$0xff]
        %v358 = vld [vmem:[%s187 + $0x3b0] sm:$0xff]
        %v359 = vld [vmem:[%s187 + $0x3b8] sm:$0xff]
        %v360 = vld [vmem:[%s187 + $0x3c0] sm:$0xff]
        %v361 = vld [vmem:[%s187 + $0x3c8] sm:$0xff]
        %v362 = vld [vmem:[%s187 + $0x3d0] sm:$0xff]
        %v363 = vld [vmem:[%s187 + $0x3d8] sm:$0xff]
        %v364 = vld [vmem:[%s187 + $0x3e0] sm:$0xff]
        %v365 = vld [vmem:[%s187 + $0x3e8] sm:$0xff]
        %v366 = vld [vmem:[%s187 + $0x3f0] sm:$0xff]
        %v367 = vld [vmem:[%s187 + $0x3f8] sm:$0xff]
        %v368 = vld [vmem:[%s187 + $0x400] sm:$0xff]
        %v369 = vld [vmem:[%s187 + $0x408] sm:$0xff]
        %v370 = vld [vmem:[%s187 + $0x410] sm:$0xff]
        %v371 = vld [vmem:[%s187 + $0x418] sm:$0xff]
        %v372 = vld [vmem:[%s187 + $0x420] sm:$0xff]
        %v373 = vld [vmem:[%s187 + $0x428] sm:$0xff]
        %v374 = vld [vmem:[%s187 + $0x430] sm:$0xff]
        %v375 = vld [vmem:[%s187 + $0x438] sm:$0xff]
        %v376 = vld [vmem:[%s187 + $0x440] sm:$0xff]
        %v377 = vld [vmem:[%s187 + $0x448] sm:$0xff]
        %v378 = vld [vmem:[%s187 + $0x450] sm:$0xff]
        %v379 = vld [vmem:[%s187 + $0x458] sm:$0xff]
        %v380 = vld [vmem:[%s187 + $0x460] sm:$0xff]
        %v381 = vld [vmem:[%s187 + $0x468] sm:$0xff]
        %v382 = vld [vmem:[%s187 + $0x470] sm:$0xff]
        %v383 = vld [vmem:[%s187 + $0x478] sm:$0xff]
        %v384 = vld [vmem:[%s187 + $0x480] sm:$0xff]
        %v385 = vld [vmem:[%s187 + $0x488] sm:$0xff]
        %v386 = vld [vmem:[%s187 + $0x490] sm:$0xff]
        %v387 = vld [vmem:[%s187 + $0x498] sm:$0xff]
        %v388 = vld [vmem:[%s187 + $0x4a0] sm:$0xff]
        %v389 = vld [vmem:[%s187 + $0x4a8] sm:$0xff]
        %v390 = vld [vmem:[%s187 + $0x4b0] sm:$0xff]
        %v391 = vld [vmem:[%s187 + $0x4b8] sm:$0xff]
        %v392 = vld [vmem:[%s187 + $0x4c0] sm:$0xff]
        %v393 = vld [vmem:[%s187 + $0x4c8] sm:$0xff]
        %v394 = vld [vmem:[%s187 + $0x4d0] sm:$0xff]
        %v395 = vld [vmem:[%s187 + $0x4d8] sm:$0xff]
        %v396 = vld [vmem:[%s187 + $0x4e0] sm:$0xff]
        %v397 = vld [vmem:[%s187 + $0x4e8] sm:$0xff]
        %v398 = vld [vmem:[%s187 + $0x4f0] sm:$0xff]
        %v399 = vld [vmem:[%s187 + $0x4f8] sm:$0xff]
        %v400 = vld [vmem:[%s187 + $0x500] sm:$0xff]
        %v401 = vld [vmem:[%s187 + $0x508] sm:$0xff]
        %v402 = vld [vmem:[%s187 + $0x510] sm:$0xff]
        %v403 = vld [vmem:[%s187 + $0x518] sm:$0xff]
        %v404 = vld [vmem:[%s187 + $0x520] sm:$0xff]
        %v405 = vld [vmem:[%s187 + $0x528] sm:$0xff]
        %v406 = vld [vmem:[%s187 + $0x530] sm:$0xff]
        %v407 = vld [vmem:[%s187 + $0x538] sm:$0xff]
        %v408 = vld [vmem:[%s187 + $0x540] sm:$0xff]
        %v409 = vld [vmem:[%s187 + $0x548] sm:$0xff]
        %v410 = vld [vmem:[%s187 + $0x550] sm:$0xff]
        %v411 = vld [vmem:[%s187 + $0x558] sm:$0xff]
        %v412 = vld [vmem:[%s187 + $0x560] sm:$0xff]
        %v413 = vld [vmem:[%s187 + $0x568] sm:$0xff]
        %v414 = vld [vmem:[%s187 + $0x570] sm:$0xff]
        %v415 = vld [vmem:[%s187 + $0x578] sm:$0xff]
        %v416 = vld [vmem:[%s187 + $0x580] sm:$0xff]
        %v417 = vld [vmem:[%s187 + $0x588] sm:$0xff]
        %v418 = vld [vmem:[%s187 + $0x590] sm:$0xff]
        %v419 = vld [vmem:[%s187 + $0x598] sm:$0xff]
        %v420 = vld [vmem:[%s187 + $0x5a0] sm:$0xff]
        %v421 = vld [vmem:[%s187 + $0x5a8] sm:$0xff]
        %v422 = vld [vmem:[%s187 + $0x5b0] sm:$0xff]
        %v423 = vld [vmem:[%s187 + $0x5b8] sm:$0xff]
        %v424 = vld [vmem:[%s187 + $0x5c0] sm:$0xff]
        %v425 = vld [vmem:[%s187 + $0x5c8] sm:$0xff]
        %v426 = vld [vmem:[%s187 + $0x5d0] sm:$0xff]
        %v427 = vld [vmem:[%s187 + $0x5d8] sm:$0xff]
        %v428 = vld [vmem:[%s187 + $0x5e0] sm:$0xff]
        %v429 = vld [vmem:[%s187 + $0x5e8] sm:$0xff]
        %v430 = vld [vmem:[%s187 + $0x5f0] sm:$0xff]
        %v431 = vld [vmem:[%s187 + $0x5f8] sm:$0xff]
        %v432 = vld [vmem:[%s187 + $0x600] sm:$0xff]
        %v433 = vld [vmem:[%s187 + $0x608] sm:$0xff]
        %v434 = vld [vmem:[%s187 + $0x610] sm:$0xff]
        %v435 = vld [vmem:[%s187 + $0x618] sm:$0xff]
        %v436 = vld [vmem:[%s187 + $0x620] sm:$0xff]
        %v437 = vld [vmem:[%s187 + $0x628] sm:$0xff]
        %v438 = vld [vmem:[%s187 + $0x630] sm:$0xff]
        %v439 = vld [vmem:[%s187 + $0x638] sm:$0xff]
        %v440 = vld [vmem:[%s187 + $0x640] sm:$0xff]
        %v441 = vld [vmem:[%s187 + $0x648] sm:$0xff]
        %v442 = vld [vmem:[%s187 + $0x650] sm:$0xff]
        %v443 = vld [vmem:[%s187 + $0x658] sm:$0xff]
        %v444 = vld [vmem:[%s187 + $0x660] sm:$0xff]
        %v445 = vld [vmem:[%s187 + $0x668] sm:$0xff]
        %v446 = vld [vmem:[%s187 + $0x670] sm:$0xff]
        %v447 = vld [vmem:[%s187 + $0x678] sm:$0xff]
        %v448 = vld [vmem:[%s187 + $0x680] sm:$0xff]
        %v449 = vld [vmem:[%s187 + $0x688] sm:$0xff]
        %v450 = vld [vmem:[%s187 + $0x690] sm:$0xff]
        %v451 = vld [vmem:[%s187 + $0x698] sm:$0xff]
        %v452 = vld [vmem:[%s187 + $0x6a0] sm:$0xff]
        %v453 = vld [vmem:[%s187 + $0x6a8] sm:$0xff]
        %v454 = vld [vmem:[%s187 + $0x6b0] sm:$0xff]
        %v455 = vld [vmem:[%s187 + $0x6b8] sm:$0xff]
        %v456 = vld [vmem:[%s187 + $0x6c0] sm:$0xff]
        %v457 = vld [vmem:[%s187 + $0x6c8] sm:$0xff]
        %v458 = vld [vmem:[%s187 + $0x6d0] sm:$0xff]
        %v459 = vld [vmem:[%s187 + $0x6d8] sm:$0xff]
        %v460 = vld [vmem:[%s187 + $0x6e0] sm:$0xff]
        %v461 = vld [vmem:[%s187 + $0x6e8] sm:$0xff]
        %v462 = vld [vmem:[%s187 + $0x6f0] sm:$0xff]
        %v463 = vld [vmem:[%s187 + $0x6f8] sm:$0xff]
        %v464 = vld [vmem:[%s187 + $0x700] sm:$0xff]
        %v465 = vld [vmem:[%s187 + $0x708] sm:$0xff]
        %v466 = vld [vmem:[%s187 + $0x710] sm:$0xff]
        %v467 = vld [vmem:[%s187 + $0x718] sm:$0xff]
        %v468 = vld [vmem:[%s187 + $0x720] sm:$0xff]
        %v469 = vld [vmem:[%s187 + $0x728] sm:$0xff]
        %v470 = vld [vmem:[%s187 + $0x730] sm:$0xff]
        %v471 = vld [vmem:[%s187 + $0x738] sm:$0xff]
        %v472 = vld [vmem:[%s187 + $0x740] sm:$0xff]
        %v473 = vld [vmem:[%s187 + $0x748] sm:$0xff]
        %v474 = vld [vmem:[%s187 + $0x750] sm:$0xff]
        %v475 = vld [vmem:[%s187 + $0x758] sm:$0xff]
        %v476 = vld [vmem:[%s187 + $0x760] sm:$0xff]
        %v477 = vld [vmem:[%s187 + $0x768] sm:$0xff]
        %v478 = vld [vmem:[%s187 + $0x770] sm:$0xff]
        %v479 = vld [vmem:[%s187 + $0x778] sm:$0xff]
        %v480 = vld [vmem:[%s187 + $0x780] sm:$0xff]
        %v481 = vld [vmem:[%s187 + $0x788] sm:$0xff]
        %v482 = vld [vmem:[%s187 + $0x790] sm:$0xff]
        %v483 = vld [vmem:[%s187 + $0x798] sm:$0xff]
        %v484 = vld [vmem:[%s187 + $0x7a0] sm:$0xff]
        %v485 = vld [vmem:[%s187 + $0x7a8] sm:$0xff]
        %v486 = vld [vmem:[%s187 + $0x7b0] sm:$0xff]
        %v487 = vld [vmem:[%s187 + $0x7b8] sm:$0xff]
        %v488 = vld [vmem:[%s187 + $0x7c0] sm:$0xff]
        %v489 = vld [vmem:[%s187 + $0x7c8] sm:$0xff]
        %v490 = vld [vmem:[%s187 + $0x7d0] sm:$0xff]
        %v491 = vld [vmem:[%s187 + $0x7d8] sm:$0xff]
        %v492 = vld [vmem:[%s187 + $0x7e0] sm:$0xff]
        %v493 = vld [vmem:[%s187 + $0x7e8] sm:$0xff]
        %v494 = vld [vmem:[%s187 + $0x7f0] sm:$0xff]
        %v495 = vld [vmem:[%s187 + $0x7f8] sm:$0xff]
        %v496 = vld [vmem:[%s187 + $0x800] sm:$0xff]
        %v497 = vld [vmem:[%s187 + $0x808] sm:$0xff]
        %v498 = vld [vmem:[%s187 + $0x810] sm:$0xff]
        %v499 = vld [vmem:[%s187 + $0x818] sm:$0xff]
        %v500 = vld [vmem:[%s187 + $0x820] sm:$0xff]
        %v501 = vld [vmem:[%s187 + $0x828] sm:$0xff]
        %v502 = vld [vmem:[%s187 + $0x830] sm:$0xff]
        %v503 = vld [vmem:[%s187 + $0x838] sm:$0xff]
        %v504 = vld [vmem:[%s187 + $0x840] sm:$0xff]
        %v505 = vld [vmem:[%s187 + $0x848] sm:$0xff]
        %v506 = vld [vmem:[%s187 + $0x850] sm:$0xff]
        %v507 = vld [vmem:[%s187 + $0x858] sm:$0xff]
        %v508 = vld [vmem:[%s187 + $0x860] sm:$0xff]
        %v509 = vld [vmem:[%s187 + $0x868] sm:$0xff]
        %v510 = vld [vmem:[%s187 + $0x870] sm:$0xff]
        %v511 = vld [vmem:[%s187 + $0x878] sm:$0xff]
        %v512 = vld [vmem:[%s187 + $0x880] sm:$0xff]
        %v513 = vld [vmem:[%s187 + $0x888] sm:$0xff]
        %v514 = vld [vmem:[%s187 + $0x890] sm:$0xff]
        %v515 = vld [vmem:[%s187 + $0x898] sm:$0xff]
        %v516 = vld [vmem:[%s187 + $0x8a0] sm:$0xff]
        %v517 = vld [vmem:[%s187 + $0x8a8] sm:$0xff]
        %v518 = vld [vmem:[%s187 + $0x8b0] sm:$0xff]
        %v519 = vld [vmem:[%s187 + $0x8b8] sm:$0xff]
        %v520 = vld [vmem:[%s187 + $0x8c0] sm:$0xff]
        %v521 = vld [vmem:[%s187 + $0x8c8] sm:$0xff]
        %v522 = vld [vmem:[%s187 + $0x8d0] sm:$0xff]
        %v523 = vld [vmem:[%s187 + $0x8d8] sm:$0xff]
        %v524 = vld [vmem:[%s187 + $0x8e0] sm:$0xff]
        %v525 = vld [vmem:[%s187 + $0x8e8] sm:$0xff]
        %v526 = vld [vmem:[%s187 + $0x8f0] sm:$0xff]
        %v527 = vld [vmem:[%s187 + $0x8f8] sm:$0xff]
        %v528 = vld [vmem:[%s187 + $0x900] sm:$0xff]
        %v529 = vld [vmem:[%s187 + $0x908] sm:$0xff]
        %v530 = vld [vmem:[%s187 + $0x910] sm:$0xff]
        %v531 = vld [vmem:[%s187 + $0x918] sm:$0xff]
        %v532 = vld [vmem:[%s187 + $0x920] sm:$0xff]
        %v533 = vld [vmem:[%s187 + $0x928] sm:$0xff]
        %v534 = vld [vmem:[%s187 + $0x930] sm:$0xff]
        %v535 = vld [vmem:[%s187 + $0x938] sm:$0xff]
        %v536 = vld [vmem:[%s187 + $0x940] sm:$0xff]
        %v537 = vld [vmem:[%s187 + $0x948] sm:$0xff]
        %v538 = vld [vmem:[%s187 + $0x950] sm:$0xff]
        %v539 = vld [vmem:[%s187 + $0x958] sm:$0xff]
        %v540 = vld [vmem:[%s187 + $0x960] sm:$0xff]
        %v541 = vld [vmem:[%s187 + $0x968] sm:$0xff]
        %v542 = vld [vmem:[%s187 + $0x970] sm:$0xff]
        %v543 = vld [vmem:[%s187 + $0x978] sm:$0xff]
        %v544 = vld [vmem:[%s187 + $0x980] sm:$0xff]
        %v545 = vld [vmem:[%s187 + $0x988] sm:$0xff]
        %v546 = vld [vmem:[%s187 + $0x990] sm:$0xff]
        %v547 = vld [vmem:[%s187 + $0x998] sm:$0xff]
        %v548 = vld [vmem:[%s187 + $0x9a0] sm:$0xff]
        %v549 = vld [vmem:[%s187 + $0x9a8] sm:$0xff]
        %v550 = vld [vmem:[%s187 + $0x9b0] sm:$0xff]
        %v551 = vld [vmem:[%s187 + $0x9b8] sm:$0xff]
        %v552 = vld [vmem:[%s187 + $0x9c0] sm:$0xff]
        %v553 = vld [vmem:[%s187 + $0x9c8] sm:$0xff]
        %v554 = vld [vmem:[%s187 + $0x9d0] sm:$0xff]
        %v555 = vld [vmem:[%s187 + $0x9d8] sm:$0xff]
        %v556 = vld [vmem:[%s187 + $0x9e0] sm:$0xff]
        %v557 = vld [vmem:[%s187 + $0x9e8] sm:$0xff]
        %v558 = vld [vmem:[%s187 + $0x9f0] sm:$0xff]
        %v559 = vld [vmem:[%s187 + $0x9f8] sm:$0xff]
        %v560 = vld [vmem:[%s187 + $0xa00] sm:$0xff]
        %v561 = vld [vmem:[%s187 + $0xa08] sm:$0xff]
        %v562 = vld [vmem:[%s187 + $0xa10] sm:$0xff]
        %v563 = vld [vmem:[%s187 + $0xa18] sm:$0xff]
        %v564 = vld [vmem:[%s187 + $0xa20] sm:$0xff]
        %v565 = vld [vmem:[%s187 + $0xa28] sm:$0xff]
        %v566 = vld [vmem:[%s187 + $0xa30] sm:$0xff]
        %v567 = vld [vmem:[%s187 + $0xa38] sm:$0xff]
        %v568 = vld [vmem:[%s187 + $0xa40] sm:$0xff]
        %v569 = vld [vmem:[%s187 + $0xa48] sm:$0xff]
        %v570 = vld [vmem:[%s187 + $0xa50] sm:$0xff]
        %v571 = vld [vmem:[%s187 + $0xa58] sm:$0xff]
        %v572 = vld [vmem:[%s187 + $0xa60] sm:$0xff]
        %v573 = vld [vmem:[%s187 + $0xa68] sm:$0xff]
        %v574 = vld [vmem:[%s187 + $0xa70] sm:$0xff]
        %v575 = vld [vmem:[%s187 + $0xa78] sm:$0xff]
        %v576 = vld [vmem:[%s187 + $0xa80] sm:$0xff]
        %v577 = vld [vmem:[%s187 + $0xa88] sm:$0xff]
        %v578 = vld [vmem:[%s187 + $0xa90] sm:$0xff]
        %v579 = vld [vmem:[%s187 + $0xa98] sm:$0xff]
        %v580 = vld [vmem:[%s187 + $0xaa0] sm:$0xff]
        %v581 = vld [vmem:[%s187 + $0xaa8] sm:$0xff]
        %v582 = vld [vmem:[%s187 + $0xab0] sm:$0xff]
        %v583 = vld [vmem:[%s187 + $0xab8] sm:$0xff]
        %v584 = vld [vmem:[%s187 + $0xac0] sm:$0xff]
        %v585 = vld [vmem:[%s187 + $0xac8] sm:$0xff]
        %v586 = vld [vmem:[%s187 + $0xad0] sm:$0xff]
        %v587 = vld [vmem:[%s187 + $0xad8] sm:$0xff]
        %v588 = vld [vmem:[%s187 + $0xae0] sm:$0xff]
        %v589 = vld [vmem:[%s187 + $0xae8] sm:$0xff]
        %v590 = vld [vmem:[%s187 + $0xaf0] sm:$0xff]
        %v591 = vld [vmem:[%s187 + $0xaf8] sm:$0xff]
        %v592 = vld [vmem:[%s187 + $0xb00] sm:$0xff]
        %v593 = vld [vmem:[%s187 + $0xb08] sm:$0xff]
        %v594 = vld [vmem:[%s187 + $0xb10] sm:$0xff]
        %v595 = vld [vmem:[%s187 + $0xb18] sm:$0xff]
        %v596 = vld [vmem:[%s187 + $0xb20] sm:$0xff]
        %v597 = vld [vmem:[%s187 + $0xb28] sm:$0xff]
        %v598 = vld [vmem:[%s187 + $0xb30] sm:$0xff]
        %v599 = vld [vmem:[%s187 + $0xb38] sm:$0xff]
        %v600 = vld [vmem:[%s187 + $0xb40] sm:$0xff]
        %v601 = vld [vmem:[%s187 + $0xb48] sm:$0xff]
        %v602 = vld [vmem:[%s187 + $0xb50] sm:$0xff]
        %v603 = vld [vmem:[%s187 + $0xb58] sm:$0xff]
        %v604 = vld [vmem:[%s187 + $0xb60] sm:$0xff]
        %v605 = vld [vmem:[%s187 + $0xb68] sm:$0xff]
        %v606 = vld [vmem:[%s187 + $0xb70] sm:$0xff]
        %v607 = vld [vmem:[%s187 + $0xb78] sm:$0xff]
        %v608 = vld [vmem:[%s187 + $0xb80] sm:$0xff]
        %v609 = vld [vmem:[%s187 + $0xb88] sm:$0xff]
        %v610 = vld [vmem:[%s187 + $0xb90] sm:$0xff]
        %v611 = vld [vmem:[%s187 + $0xb98] sm:$0xff]
        %v612 = vld [vmem:[%s187 + $0xba0] sm:$0xff]
        %v613 = vld [vmem:[%s187 + $0xba8] sm:$0xff]
        %v614 = vld [vmem:[%s187 + $0xbb0] sm:$0xff]
        %v615 = vld [vmem:[%s187 + $0xbb8] sm:$0xff]
        %v616 = vld [vmem:[%s187 + $0xbc0] sm:$0xff]
        %v617 = vld [vmem:[%s187 + $0xbc8] sm:$0xff]
        %v618 = vld [vmem:[%s187 + $0xbd0] sm:$0xff]
        %v619 = vld [vmem:[%s187 + $0xbd8] sm:$0xff]
        %v620 = vld [vmem:[%s187 + $0xbe0] sm:$0xff]
        %v621 = vld [vmem:[%s187 + $0xbe8] sm:$0xff]
        %v622 = vld [vmem:[%s187 + $0xbf0] sm:$0xff]
        %v623 = vld [vmem:[%s187 + $0xbf8] sm:$0xff]
        %v624 = vld [vmem:[%s187 + $0xc00] sm:$0xff]
        %v625 = vld [vmem:[%s187 + $0xc08] sm:$0xff]
        %v626 = vld [vmem:[%s187 + $0xc10] sm:$0xff]
        %v627 = vld [vmem:[%s187 + $0xc18] sm:$0xff]
        %v628 = vld [vmem:[%s187 + $0xc20] sm:$0xff]
        %v629 = vld [vmem:[%s187 + $0xc28] sm:$0xff]
        %v630 = vld [vmem:[%s187 + $0xc30] sm:$0xff]
        %v631 = vld [vmem:[%s187 + $0xc38] sm:$0xff]
        %v632 = vld [vmem:[%s187 + $0xc40] sm:$0xff]
        %v633 = vld [vmem:[%s187 + $0xc48] sm:$0xff]
        %v634 = vld [vmem:[%s187 + $0xc50] sm:$0xff]
        %v635 = vld [vmem:[%s187 + $0xc58] sm:$0xff]
        %v636 = vld [vmem:[%s187 + $0xc60] sm:$0xff]
        %v637 = vld [vmem:[%s187 + $0xc68] sm:$0xff]
        %v638 = vld [vmem:[%s187 + $0xc70] sm:$0xff]
        %v639 = vld [vmem:[%s187 + $0xc78] sm:$0xff]
        %v640 = vld [vmem:[%s187 + $0xc80] sm:$0xff]
        %v641 = vld [vmem:[%s187 + $0xc88] sm:$0xff]
        %v642 = vld [vmem:[%s187 + $0xc90] sm:$0xff]
        %v643 = vld [vmem:[%s187 + $0xc98] sm:$0xff]
        %v644 = vld [vmem:[%s187 + $0xca0] sm:$0xff]
        %v645 = vld [vmem:[%s187 + $0xca8] sm:$0xff]
        %v646 = vld [vmem:[%s187 + $0xcb0] sm:$0xff]
        %v647 = vld [vmem:[%s187 + $0xcb8] sm:$0xff]
        %v648 = vld [vmem:[%s187 + $0xcc0] sm:$0xff]
        %v649 = vld [vmem:[%s187 + $0xcc8] sm:$0xff]
        %v650 = vld [vmem:[%s187 + $0xcd0] sm:$0xff]
        %v651 = vld [vmem:[%s187 + $0xcd8] sm:$0xff]
        %v652 = vld [vmem:[%s187 + $0xce0] sm:$0xff]
        %v653 = vld [vmem:[%s187 + $0xce8] sm:$0xff]
        %v654 = vld [vmem:[%s187 + $0xcf0] sm:$0xff]
        %v655 = vld [vmem:[%s187 + $0xcf8] sm:$0xff]
        %v656 = vld [vmem:[%s187 + $0xd00] sm:$0xff]
        %v657 = vld [vmem:[%s187 + $0xd08] sm:$0xff]
        %v658 = vld [vmem:[%s187 + $0xd10] sm:$0xff]
        %v659 = vld [vmem:[%s187 + $0xd18] sm:$0xff]
        %v660 = vld [vmem:[%s187 + $0xd20] sm:$0xff]
        %v661 = vld [vmem:[%s187 + $0xd28] sm:$0xff]
        %v662 = vld [vmem:[%s187 + $0xd30] sm:$0xff]
        %v663 = vld [vmem:[%s187 + $0xd38] sm:$0xff]
        %v664 = vld [vmem:[%s187 + $0xd40] sm:$0xff]
        %v665 = vld [vmem:[%s187 + $0xd48] sm:$0xff]
        %v666 = vld [vmem:[%s187 + $0xd50] sm:$0xff]
        %v667 = vld [vmem:[%s187 + $0xd58] sm:$0xff]
        %v668 = vld [vmem:[%s187 + $0xd60] sm:$0xff]
        %v669 = vld [vmem:[%s187 + $0xd68] sm:$0xff]
        %v670 = vld [vmem:[%s187 + $0xd70] sm:$0xff]
        %v671 = vld [vmem:[%s187 + $0xd78] sm:$0xff]
        %v672 = vld [vmem:[%s187 + $0xd80] sm:$0xff]
        %v673 = vld [vmem:[%s187 + $0xd88] sm:$0xff]
        %v674 = vld [vmem:[%s187 + $0xd90] sm:$0xff]
        %v675 = vld [vmem:[%s187 + $0xd98] sm:$0xff]
        %v676 = vld [vmem:[%s187 + $0xda0] sm:$0xff]
        %v677 = vld [vmem:[%s187 + $0xda8] sm:$0xff]
        %v678 = vld [vmem:[%s187 + $0xdb0] sm:$0xff]
        %v679 = vld [vmem:[%s187 + $0xdb8] sm:$0xff]
        %v680 = vld [vmem:[%s187 + $0xdc0] sm:$0xff]
        %v681 = vld [vmem:[%s187 + $0xdc8] sm:$0xff]
        %v682 = vld [vmem:[%s187 + $0xdd0] sm:$0xff]
        %v683 = vld [vmem:[%s187 + $0xdd8] sm:$0xff]
        %v684 = vld [vmem:[%s187 + $0xde0] sm:$0xff]
        %v685 = vld [vmem:[%s187 + $0xde8] sm:$0xff]
        %v686 = vld [vmem:[%s187 + $0xdf0] sm:$0xff]
        %v687 = vld [vmem:[%s187 + $0xdf8] sm:$0xff]
        %v688 = vld [vmem:[%s187 + $0xe00] sm:$0xff]
        %v689 = vld [vmem:[%s187 + $0xe08] sm:$0xff]
        %v690 = vld [vmem:[%s187 + $0xe10] sm:$0xff]
        %v691 = vld [vmem:[%s187 + $0xe18] sm:$0xff]
        %v692 = vld [vmem:[%s187 + $0xe20] sm:$0xff]
        %v693 = vld [vmem:[%s187 + $0xe28] sm:$0xff]
        %v694 = vld [vmem:[%s187 + $0xe30] sm:$0xff]
        %v695 = vld [vmem:[%s187 + $0xe38] sm:$0xff]
        %v696 = vld [vmem:[%s187 + $0xe40] sm:$0xff]
        %v697 = vld [vmem:[%s187 + $0xe48] sm:$0xff]
        %v698 = vld [vmem:[%s187 + $0xe50] sm:$0xff]
        %v699 = vld [vmem:[%s187 + $0xe58] sm:$0xff]
        %v700 = vld [vmem:[%s187 + $0xe60] sm:$0xff]
        %v701 = vld [vmem:[%s187 + $0xe68] sm:$0xff]
        %v702 = vld [vmem:[%s187 + $0xe70] sm:$0xff]
        %v703 = vld [vmem:[%s187 + $0xe78] sm:$0xff]
        %v704 = vld [vmem:[%s187 + $0xe80] sm:$0xff]
        %v705 = vld [vmem:[%s187 + $0xe88] sm:$0xff]
        %v706 = vld [vmem:[%s187 + $0xe90] sm:$0xff]
        %v707 = vld [vmem:[%s187 + $0xe98] sm:$0xff]
        %v708 = vld [vmem:[%s187 + $0xea0] sm:$0xff]
        %v709 = vld [vmem:[%s187 + $0xea8] sm:$0xff]
        %v710 = vld [vmem:[%s187 + $0xeb0] sm:$0xff]
        %v711 = vld [vmem:[%s187 + $0xeb8] sm:$0xff]
        %v712 = vld [vmem:[%s187 + $0xec0] sm:$0xff]
        %v713 = vld [vmem:[%s187 + $0xec8] sm:$0xff]
        %v714 = vld [vmem:[%s187 + $0xed0] sm:$0xff]
        %v715 = vld [vmem:[%s187 + $0xed8] sm:$0xff]
        %v716 = vld [vmem:[%s187 + $0xee0] sm:$0xff]
        %v717 = vld [vmem:[%s187 + $0xee8] sm:$0xff]
        %v718 = vld [vmem:[%s187 + $0xef0] sm:$0xff]
        %v719 = vld [vmem:[%s187 + $0xef8] sm:$0xff]
        %v720 = vld [vmem:[%s187 + $0xf00] sm:$0xff]
        %v721 = vld [vmem:[%s187 + $0xf08] sm:$0xff]
        %v722 = vld [vmem:[%s187 + $0xf10] sm:$0xff]
        %v723 = vld [vmem:[%s187 + $0xf18] sm:$0xff]
        %v724 = vld [vmem:[%s187 + $0xf20] sm:$0xff]
        %v725 = vld [vmem:[%s187 + $0xf28] sm:$0xff]
        %v726 = vld [vmem:[%s187 + $0xf30] sm:$0xff]
        %v727 = vld [vmem:[%s187 + $0xf38] sm:$0xff]
        %v728 = vld [vmem:[%s187 + $0xf40] sm:$0xff]
        %v729 = vld [vmem:[%s187 + $0xf48] sm:$0xff]
        %v730 = vld [vmem:[%s187 + $0xf50] sm:$0xff]
        %v731 = vld [vmem:[%s187 + $0xf58] sm:$0xff]
        %v732 = vld [vmem:[%s187 + $0xf60] sm:$0xff]
        %v733 = vld [vmem:[%s187 + $0xf68] sm:$0xff]
        %v734 = vld [vmem:[%s187 + $0xf70] sm:$0xff]
        %v735 = vld [vmem:[%s187 + $0xf78] sm:$0xff]
        %v736 = vld [vmem:[%s187 + $0xf80] sm:$0xff]
        %v737 = vld [vmem:[%s187 + $0xf88] sm:$0xff]
        %v738 = vld [vmem:[%s187 + $0xf90] sm:$0xff]
        %v739 = vld [vmem:[%s187 + $0xf98] sm:$0xff]
        %v740 = vld [vmem:[%s187 + $0xfa0] sm:$0xff]
        %v741 = vld [vmem:[%s187 + $0xfa8] sm:$0xff]
        %v742 = vld [vmem:[%s187 + $0xfb0] sm:$0xff]
        %v743 = vld [vmem:[%s187 + $0xfb8] sm:$0xff]
        %v744 = vld [vmem:[%s187 + $0xfc0] sm:$0xff]
        %v745 = vld [vmem:[%s187 + $0xfc8] sm:$0xff]
        %v746 = vld [vmem:[%s187 + $0xfd0] sm:$0xff]
        %v747 = vld [vmem:[%s187 + $0xfd8] sm:$0xff]
        %v748 = vld [vmem:[%s187 + $0xfe0] sm:$0xff]
        %v749 = vld [vmem:[%s187 + $0xfe8] sm:$0xff]
        %v750 = vld [vmem:[%s187 + $0xff0] sm:$0xff]
        %v751 = vld [vmem:[%s187 + $0xff8] sm:$0xff]
        %v752 = vld [vmem:[%s196] sm:$0xf]
        %v754 = vlaneseq
        %v755 = vshrl.u32 %v754, 7
        %v756 = vsub.s32 0, %v755
        %v757 = vrot.slane %v752, %v756
        %v758 = vlaneseq
        %v759 = vshrl.u32 %v758, 7
        %v760 = vsub.s32 1, %v759
        %v761 = vrot.slane %v752, %v760
        %v762 = vlaneseq
        %v763 = vshrl.u32 %v762, 7
        %v764 = vsub.s32 2, %v763
        %v765 = vrot.slane %v752, %v764
        %v766 = vlaneseq
        %v767 = vshrl.u32 %v766, 7
        %v768 = vsub.s32 3, %v767
        %v769 = vrot.slane %v752, %v768
        %v782 = vunpack.c.l.b16 %v232
        %v783 = vunpack.c.h.b16 %v232
        %v784 = vunpack.c.l.b16 %v233
        %v785 = vunpack.c.h.b16 %v233
        %v786 = vunpack.c.l.b16 %v234
        %v787 = vunpack.c.h.b16 %v234
        %v788 = vunpack.c.l.b16 %v235
        %v789 = vunpack.c.h.b16 %v235
        %v790 = vunpack.c.l.b16 %v236
        %v791 = vunpack.c.h.b16 %v236
        %v792 = vunpack.c.l.b16 %v237
        %v793 = vunpack.c.h.b16 %v237
        %v794 = vunpack.c.l.b16 %v238
        %v795 = vunpack.c.h.b16 %v238
        %v796 = vunpack.c.l.b16 %v239
        %v797 = vunpack.c.h.b16 %v239
        %v798 = vpack.c.b16 %v782, %v782
        %v799 = vpack.c.b16 %v783, %v783
        %v800 = vpack.c.b16 %v784, %v784
        %v801 = vpack.c.b16 %v785, %v785
        %v802 = vpack.c.b16 %v786, %v786
        %v803 = vpack.c.b16 %v787, %v787
        %v804 = vpack.c.b16 %v788, %v788
        %v805 = vpack.c.b16 %v789, %v789
        %v806 = vpack.c.b16 %v790, %v790
        %v807 = vpack.c.b16 %v791, %v791
        %v808 = vpack.c.b16 %v792, %v792
        %v809 = vpack.c.b16 %v793, %v793
        %v810 = vpack.c.b16 %v794, %v794
        %v811 = vpack.c.b16 %v795, %v795
        %v812 = vpack.c.b16 %v796, %v796
        %v813 = vpack.c.b16 %v797, %v797
        %v1342 = vunpack.c.l.b16 %v240
        %v1343 = vunpack.c.h.b16 %v240
        %v1344 = vunpack.c.l.b16 %v241
        %v1345 = vunpack.c.h.b16 %v241
        %v1346 = vunpack.c.l.b16 %v242
        %v1347 = vunpack.c.h.b16 %v242
        %v1348 = vunpack.c.l.b16 %v243
        %v1349 = vunpack.c.h.b16 %v243
        %v1350 = vunpack.c.l.b16 %v244
        %v1351 = vunpack.c.h.b16 %v244
        %v1352 = vunpack.c.l.b16 %v245
        %v1353 = vunpack.c.h.b16 %v245
        %v1354 = vunpack.c.l.b16 %v246
        %v1355 = vunpack.c.h.b16 %v246
        %v1356 = vunpack.c.l.b16 %v247
        %v1357 = vunpack.c.h.b16 %v247
        %v1358 = vunpack.c.l.b16 %v248
        %v1359 = vunpack.c.h.b16 %v248
        %v1360 = vunpack.c.l.b16 %v249
        %v1361 = vunpack.c.h.b16 %v249
        %v1362 = vunpack.c.l.b16 %v250
        %v1363 = vunpack.c.h.b16 %v250
        %v1364 = vunpack.c.l.b16 %v251
        %v1365 = vunpack.c.h.b16 %v251
        %v1366 = vunpack.c.l.b16 %v252
        %v1367 = vunpack.c.h.b16 %v252
        %v1368 = vunpack.c.l.b16 %v253
        %v1369 = vunpack.c.h.b16 %v253
        %v1370 = vunpack.c.l.b16 %v254
        %v1371 = vunpack.c.h.b16 %v254
        %v1372 = vunpack.c.l.b16 %v255
        %v1373 = vunpack.c.h.b16 %v255
        %v1374 = vunpack.c.l.b16 %v256
        %v1375 = vunpack.c.h.b16 %v256
        %v1376 = vunpack.c.l.b16 %v257
        %v1377 = vunpack.c.h.b16 %v257
        %v1378 = vunpack.c.l.b16 %v258
        %v1379 = vunpack.c.h.b16 %v258
        %v1380 = vunpack.c.l.b16 %v259
        %v1381 = vunpack.c.h.b16 %v259
        %v1382 = vunpack.c.l.b16 %v260
        %v1383 = vunpack.c.h.b16 %v260
        %v1384 = vunpack.c.l.b16 %v261
        %v1385 = vunpack.c.h.b16 %v261
        %v1386 = vunpack.c.l.b16 %v262
        %v1387 = vunpack.c.h.b16 %v262
        %v1388 = vunpack.c.l.b16 %v263
        %v1389 = vunpack.c.h.b16 %v263
        %v1390 = vunpack.c.l.b16 %v264
        %v1391 = vunpack.c.h.b16 %v264
        %v1392 = vunpack.c.l.b16 %v265
        %v1393 = vunpack.c.h.b16 %v265
        %v1394 = vunpack.c.l.b16 %v266
        %v1395 = vunpack.c.h.b16 %v266
        %v1396 = vunpack.c.l.b16 %v267
        %v1397 = vunpack.c.h.b16 %v267
        %v1398 = vunpack.c.l.b16 %v268
        %v1399 = vunpack.c.h.b16 %v268
        %v1400 = vunpack.c.l.b16 %v269
        %v1401 = vunpack.c.h.b16 %v269
        %v1402 = vunpack.c.l.b16 %v270
        %v1403 = vunpack.c.h.b16 %v270
        %v1404 = vunpack.c.l.b16 %v271
        %v1405 = vunpack.c.h.b16 %v271
        %v1406 = vunpack.c.l.b16 %v272
        %v1407 = vunpack.c.h.b16 %v272
        %v1408 = vunpack.c.l.b16 %v273
        %v1409 = vunpack.c.h.b16 %v273
        %v1410 = vunpack.c.l.b16 %v274
        %v1411 = vunpack.c.h.b16 %v274
        %v1412 = vunpack.c.l.b16 %v275
        %v1413 = vunpack.c.h.b16 %v275
        %v1414 = vunpack.c.l.b16 %v276
        %v1415 = vunpack.c.h.b16 %v276
        %v1416 = vunpack.c.l.b16 %v277
        %v1417 = vunpack.c.h.b16 %v277
        %v1418 = vunpack.c.l.b16 %v278
        %v1419 = vunpack.c.h.b16 %v278
        %v1420 = vunpack.c.l.b16 %v279
        %v1421 = vunpack.c.h.b16 %v279
        %v1422 = vunpack.c.l.b16 %v280
        %v1423 = vunpack.c.h.b16 %v280
        %v1424 = vunpack.c.l.b16 %v281
        %v1425 = vunpack.c.h.b16 %v281
        %v1426 = vunpack.c.l.b16 %v282
        %v1427 = vunpack.c.h.b16 %v282
        %v1428 = vunpack.c.l.b16 %v283
        %v1429 = vunpack.c.h.b16 %v283
        %v1430 = vunpack.c.l.b16 %v284
        %v1431 = vunpack.c.h.b16 %v284
        %v1432 = vunpack.c.l.b16 %v285
        %v1433 = vunpack.c.h.b16 %v285
        %v1434 = vunpack.c.l.b16 %v286
        %v1435 = vunpack.c.h.b16 %v286
        %v1436 = vunpack.c.l.b16 %v287
        %v1437 = vunpack.c.h.b16 %v287
        %v1438 = vunpack.c.l.b16 %v288
        %v1439 = vunpack.c.h.b16 %v288
        %v1440 = vunpack.c.l.b16 %v289
        %v1441 = vunpack.c.h.b16 %v289
        %v1442 = vunpack.c.l.b16 %v290
        %v1443 = vunpack.c.h.b16 %v290
        %v1444 = vunpack.c.l.b16 %v291
        %v1445 = vunpack.c.h.b16 %v291
        %v1446 = vunpack.c.l.b16 %v292
        %v1447 = vunpack.c.h.b16 %v292
        %v1448 = vunpack.c.l.b16 %v293
        %v1449 = vunpack.c.h.b16 %v293
        %v1450 = vunpack.c.l.b16 %v294
        %v1451 = vunpack.c.h.b16 %v294
        %v1452 = vunpack.c.l.b16 %v295
        %v1453 = vunpack.c.h.b16 %v295
        %v1454 = vunpack.c.l.b16 %v296
        %v1455 = vunpack.c.h.b16 %v296
        %v1456 = vunpack.c.l.b16 %v297
        %v1457 = vunpack.c.h.b16 %v297
        %v1458 = vunpack.c.l.b16 %v298
        %v1459 = vunpack.c.h.b16 %v298
        %v1460 = vunpack.c.l.b16 %v299
        %v1461 = vunpack.c.h.b16 %v299
        %v1462 = vunpack.c.l.b16 %v300
        %v1463 = vunpack.c.h.b16 %v300
        %v1464 = vunpack.c.l.b16 %v301
        %v1465 = vunpack.c.h.b16 %v301
        %v1466 = vunpack.c.l.b16 %v302
        %v1467 = vunpack.c.h.b16 %v302
        %v1468 = vunpack.c.l.b16 %v303
        %v1469 = vunpack.c.h.b16 %v303
        %v1470 = vunpack.c.l.b16 %v304
        %v1471 = vunpack.c.h.b16 %v304
        %v1472 = vunpack.c.l.b16 %v305
        %v1473 = vunpack.c.h.b16 %v305
        %v1474 = vunpack.c.l.b16 %v306
        %v1475 = vunpack.c.h.b16 %v306
        %v1476 = vunpack.c.l.b16 %v307
        %v1477 = vunpack.c.h.b16 %v307
        %v1478 = vunpack.c.l.b16 %v308
        %v1479 = vunpack.c.h.b16 %v308
        %v1480 = vunpack.c.l.b16 %v309
        %v1481 = vunpack.c.h.b16 %v309
        %v1482 = vunpack.c.l.b16 %v310
        %v1483 = vunpack.c.h.b16 %v310
        %v1484 = vunpack.c.l.b16 %v311
        %v1485 = vunpack.c.h.b16 %v311
        %v1486 = vunpack.c.l.b16 %v312
        %v1487 = vunpack.c.h.b16 %v312
        %v1488 = vunpack.c.l.b16 %v313
        %v1489 = vunpack.c.h.b16 %v313
        %v1490 = vunpack.c.l.b16 %v314
        %v1491 = vunpack.c.h.b16 %v314
        %v1492 = vunpack.c.l.b16 %v315
        %v1493 = vunpack.c.h.b16 %v315
        %v1494 = vunpack.c.l.b16 %v316
        %v1495 = vunpack.c.h.b16 %v316
        %v1496 = vunpack.c.l.b16 %v317
        %v1497 = vunpack.c.h.b16 %v317
        %v1498 = vunpack.c.l.b16 %v318
        %v1499 = vunpack.c.h.b16 %v318
        %v1500 = vunpack.c.l.b16 %v319
        %v1501 = vunpack.c.h.b16 %v319
        %v1502 = vunpack.c.l.b16 %v320
        %v1503 = vunpack.c.h.b16 %v320
        %v1504 = vunpack.c.l.b16 %v321
        %v1505 = vunpack.c.h.b16 %v321
        %v1506 = vunpack.c.l.b16 %v322
        %v1507 = vunpack.c.h.b16 %v322
        %v1508 = vunpack.c.l.b16 %v323
        %v1509 = vunpack.c.h.b16 %v323
        %v1510 = vunpack.c.l.b16 %v324
        %v1511 = vunpack.c.h.b16 %v324
        %v1512 = vunpack.c.l.b16 %v325
        %v1513 = vunpack.c.h.b16 %v325
        %v1514 = vunpack.c.l.b16 %v326
        %v1515 = vunpack.c.h.b16 %v326
        %v1516 = vunpack.c.l.b16 %v327
        %v1517 = vunpack.c.h.b16 %v327
        %v1518 = vunpack.c.l.b16 %v328
        %v1519 = vunpack.c.h.b16 %v328
        %v1520 = vunpack.c.l.b16 %v329
        %v1521 = vunpack.c.h.b16 %v329
        %v1522 = vunpack.c.l.b16 %v330
        %v1523 = vunpack.c.h.b16 %v330
        %v1524 = vunpack.c.l.b16 %v331
        %v1525 = vunpack.c.h.b16 %v331
        %v1526 = vunpack.c.l.b16 %v332
        %v1527 = vunpack.c.h.b16 %v332
        %v1528 = vunpack.c.l.b16 %v333
        %v1529 = vunpack.c.h.b16 %v333
        %v1530 = vunpack.c.l.b16 %v334
        %v1531 = vunpack.c.h.b16 %v334
        %v1532 = vunpack.c.l.b16 %v335
        %v1533 = vunpack.c.h.b16 %v335
        %v1534 = vunpack.c.l.b16 %v336
        %v1535 = vunpack.c.h.b16 %v336
        %v1536 = vunpack.c.l.b16 %v337
        %v1537 = vunpack.c.h.b16 %v337
        %v1538 = vunpack.c.l.b16 %v338
        %v1539 = vunpack.c.h.b16 %v338
        %v1540 = vunpack.c.l.b16 %v339
        %v1541 = vunpack.c.h.b16 %v339
        %v1542 = vunpack.c.l.b16 %v340
        %v1543 = vunpack.c.h.b16 %v340
        %v1544 = vunpack.c.l.b16 %v341
        %v1545 = vunpack.c.h.b16 %v341
        %v1546 = vunpack.c.l.b16 %v342
        %v1547 = vunpack.c.h.b16 %v342
        %v1548 = vunpack.c.l.b16 %v343
        %v1549 = vunpack.c.h.b16 %v343
        %v1550 = vunpack.c.l.b16 %v344
        %v1551 = vunpack.c.h.b16 %v344
        %v1552 = vunpack.c.l.b16 %v345
        %v1553 = vunpack.c.h.b16 %v345
        %v1554 = vunpack.c.l.b16 %v346
        %v1555 = vunpack.c.h.b16 %v346
        %v1556 = vunpack.c.l.b16 %v347
        %v1557 = vunpack.c.h.b16 %v347
        %v1558 = vunpack.c.l.b16 %v348
        %v1559 = vunpack.c.h.b16 %v348
        %v1560 = vunpack.c.l.b16 %v349
        %v1561 = vunpack.c.h.b16 %v349
        %v1562 = vunpack.c.l.b16 %v350
        %v1563 = vunpack.c.h.b16 %v350
        %v1564 = vunpack.c.l.b16 %v351
        %v1565 = vunpack.c.h.b16 %v351
        %v1566 = vunpack.c.l.b16 %v352
        %v1567 = vunpack.c.h.b16 %v352
        %v1568 = vunpack.c.l.b16 %v353
        %v1569 = vunpack.c.h.b16 %v353
        %v1570 = vunpack.c.l.b16 %v354
        %v1571 = vunpack.c.h.b16 %v354
        %v1572 = vunpack.c.l.b16 %v355
        %v1573 = vunpack.c.h.b16 %v355
        %v1574 = vunpack.c.l.b16 %v356
        %v1575 = vunpack.c.h.b16 %v356
        %v1576 = vunpack.c.l.b16 %v357
        %v1577 = vunpack.c.h.b16 %v357
        %v1578 = vunpack.c.l.b16 %v358
        %v1579 = vunpack.c.h.b16 %v358
        %v1580 = vunpack.c.l.b16 %v359
        %v1581 = vunpack.c.h.b16 %v359
        %v1582 = vunpack.c.l.b16 %v360
        %v1583 = vunpack.c.h.b16 %v360
        %v1584 = vunpack.c.l.b16 %v361
        %v1585 = vunpack.c.h.b16 %v361
        %v1586 = vunpack.c.l.b16 %v362
        %v1587 = vunpack.c.h.b16 %v362
        %v1588 = vunpack.c.l.b16 %v363
        %v1589 = vunpack.c.h.b16 %v363
        %v1590 = vunpack.c.l.b16 %v364
        %v1591 = vunpack.c.h.b16 %v364
        %v1592 = vunpack.c.l.b16 %v365
        %v1593 = vunpack.c.h.b16 %v365
        %v1594 = vunpack.c.l.b16 %v366
        %v1595 = vunpack.c.h.b16 %v366
        %v1596 = vunpack.c.l.b16 %v367
        %v1597 = vunpack.c.h.b16 %v367
        %v1598 = vunpack.c.l.b16 %v368
        %v1599 = vunpack.c.h.b16 %v368
        %v1600 = vunpack.c.l.b16 %v369
        %v1601 = vunpack.c.h.b16 %v369
        %v1602 = vunpack.c.l.b16 %v370
        %v1603 = vunpack.c.h.b16 %v370
        %v1604 = vunpack.c.l.b16 %v371
        %v1605 = vunpack.c.h.b16 %v371
        %v1606 = vunpack.c.l.b16 %v372
        %v1607 = vunpack.c.h.b16 %v372
        %v1608 = vunpack.c.l.b16 %v373
        %v1609 = vunpack.c.h.b16 %v373
        %v1610 = vunpack.c.l.b16 %v374
        %v1611 = vunpack.c.h.b16 %v374
        %v1612 = vunpack.c.l.b16 %v375
        %v1613 = vunpack.c.h.b16 %v375
        %v1614 = vunpack.c.l.b16 %v376
        %v1615 = vunpack.c.h.b16 %v376
        %v1616 = vunpack.c.l.b16 %v377
        %v1617 = vunpack.c.h.b16 %v377
        %v1618 = vunpack.c.l.b16 %v378
        %v1619 = vunpack.c.h.b16 %v378
        %v1620 = vunpack.c.l.b16 %v379
        %v1621 = vunpack.c.h.b16 %v379
        %v1622 = vunpack.c.l.b16 %v380
        %v1623 = vunpack.c.h.b16 %v380
        %v1624 = vunpack.c.l.b16 %v381
        %v1625 = vunpack.c.h.b16 %v381
        %v1626 = vunpack.c.l.b16 %v382
        %v1627 = vunpack.c.h.b16 %v382
        %v1628 = vunpack.c.l.b16 %v383
        %v1629 = vunpack.c.h.b16 %v383
        %v1630 = vunpack.c.l.b16 %v384
        %v1631 = vunpack.c.h.b16 %v384
        %v1632 = vunpack.c.l.b16 %v385
        %v1633 = vunpack.c.h.b16 %v385
        %v1634 = vunpack.c.l.b16 %v386
        %v1635 = vunpack.c.h.b16 %v386
        %v1636 = vunpack.c.l.b16 %v387
        %v1637 = vunpack.c.h.b16 %v387
        %v1638 = vunpack.c.l.b16 %v388
        %v1639 = vunpack.c.h.b16 %v388
        %v1640 = vunpack.c.l.b16 %v389
        %v1641 = vunpack.c.h.b16 %v389
        %v1642 = vunpack.c.l.b16 %v390
        %v1643 = vunpack.c.h.b16 %v390
        %v1644 = vunpack.c.l.b16 %v391
        %v1645 = vunpack.c.h.b16 %v391
        %v1646 = vunpack.c.l.b16 %v392
        %v1647 = vunpack.c.h.b16 %v392
        %v1648 = vunpack.c.l.b16 %v393
        %v1649 = vunpack.c.h.b16 %v393
        %v1650 = vunpack.c.l.b16 %v394
        %v1651 = vunpack.c.h.b16 %v394
        %v1652 = vunpack.c.l.b16 %v395
        %v1653 = vunpack.c.h.b16 %v395
        %v1654 = vunpack.c.l.b16 %v396
        %v1655 = vunpack.c.h.b16 %v396
        %v1656 = vunpack.c.l.b16 %v397
        %v1657 = vunpack.c.h.b16 %v397
        %v1658 = vunpack.c.l.b16 %v398
        %v1659 = vunpack.c.h.b16 %v398
        %v1660 = vunpack.c.l.b16 %v399
        %v1661 = vunpack.c.h.b16 %v399
        %v1662 = vunpack.c.l.b16 %v400
        %v1663 = vunpack.c.h.b16 %v400
        %v1664 = vunpack.c.l.b16 %v401
        %v1665 = vunpack.c.h.b16 %v401
        %v1666 = vunpack.c.l.b16 %v402
        %v1667 = vunpack.c.h.b16 %v402
        %v1668 = vunpack.c.l.b16 %v403
        %v1669 = vunpack.c.h.b16 %v403
        %v1670 = vunpack.c.l.b16 %v404
        %v1671 = vunpack.c.h.b16 %v404
        %v1672 = vunpack.c.l.b16 %v405
        %v1673 = vunpack.c.h.b16 %v405
        %v1674 = vunpack.c.l.b16 %v406
        %v1675 = vunpack.c.h.b16 %v406
        %v1676 = vunpack.c.l.b16 %v407
        %v1677 = vunpack.c.h.b16 %v407
        %v1678 = vunpack.c.l.b16 %v408
        %v1679 = vunpack.c.h.b16 %v408
        %v1680 = vunpack.c.l.b16 %v409
        %v1681 = vunpack.c.h.b16 %v409
        %v1682 = vunpack.c.l.b16 %v410
        %v1683 = vunpack.c.h.b16 %v410
        %v1684 = vunpack.c.l.b16 %v411
        %v1685 = vunpack.c.h.b16 %v411
        %v1686 = vunpack.c.l.b16 %v412
        %v1687 = vunpack.c.h.b16 %v412
        %v1688 = vunpack.c.l.b16 %v413
        %v1689 = vunpack.c.h.b16 %v413
        %v1690 = vunpack.c.l.b16 %v414
        %v1691 = vunpack.c.h.b16 %v414
        %v1692 = vunpack.c.l.b16 %v415
        %v1693 = vunpack.c.h.b16 %v415
        %v1694 = vunpack.c.l.b16 %v416
        %v1695 = vunpack.c.h.b16 %v416
        %v1696 = vunpack.c.l.b16 %v417
        %v1697 = vunpack.c.h.b16 %v417
        %v1698 = vunpack.c.l.b16 %v418
        %v1699 = vunpack.c.h.b16 %v418
        %v1700 = vunpack.c.l.b16 %v419
        %v1701 = vunpack.c.h.b16 %v419
        %v1702 = vunpack.c.l.b16 %v420
        %v1703 = vunpack.c.h.b16 %v420
        %v1704 = vunpack.c.l.b16 %v421
        %v1705 = vunpack.c.h.b16 %v421
        %v1706 = vunpack.c.l.b16 %v422
        %v1707 = vunpack.c.h.b16 %v422
        %v1708 = vunpack.c.l.b16 %v423
        %v1709 = vunpack.c.h.b16 %v423
        %v1710 = vunpack.c.l.b16 %v424
        %v1711 = vunpack.c.h.b16 %v424
        %v1712 = vunpack.c.l.b16 %v425
        %v1713 = vunpack.c.h.b16 %v425
        %v1714 = vunpack.c.l.b16 %v426
        %v1715 = vunpack.c.h.b16 %v426
        %v1716 = vunpack.c.l.b16 %v427
        %v1717 = vunpack.c.h.b16 %v427
        %v1718 = vunpack.c.l.b16 %v428
        %v1719 = vunpack.c.h.b16 %v428
        %v1720 = vunpack.c.l.b16 %v429
        %v1721 = vunpack.c.h.b16 %v429
        %v1722 = vunpack.c.l.b16 %v430
        %v1723 = vunpack.c.h.b16 %v430
        %v1724 = vunpack.c.l.b16 %v431
        %v1725 = vunpack.c.h.b16 %v431
        %v1726 = vunpack.c.l.b16 %v432
        %v1727 = vunpack.c.h.b16 %v432
        %v1728 = vunpack.c.l.b16 %v433
        %v1729 = vunpack.c.h.b16 %v433
        %v1730 = vunpack.c.l.b16 %v434
        %v1731 = vunpack.c.h.b16 %v434
        %v1732 = vunpack.c.l.b16 %v435
        %v1733 = vunpack.c.h.b16 %v435
        %v1734 = vunpack.c.l.b16 %v436
        %v1735 = vunpack.c.h.b16 %v436
        %v1736 = vunpack.c.l.b16 %v437
        %v1737 = vunpack.c.h.b16 %v437
        %v1738 = vunpack.c.l.b16 %v438
        %v1739 = vunpack.c.h.b16 %v438
        %v1740 = vunpack.c.l.b16 %v439
        %v1741 = vunpack.c.h.b16 %v439
        %v1742 = vunpack.c.l.b16 %v440
        %v1743 = vunpack.c.h.b16 %v440
        %v1744 = vunpack.c.l.b16 %v441
        %v1745 = vunpack.c.h.b16 %v441
        %v1746 = vunpack.c.l.b16 %v442
        %v1747 = vunpack.c.h.b16 %v442
        %v1748 = vunpack.c.l.b16 %v443
        %v1749 = vunpack.c.h.b16 %v443
        %v1750 = vunpack.c.l.b16 %v444
        %v1751 = vunpack.c.h.b16 %v444
        %v1752 = vunpack.c.l.b16 %v445
        %v1753 = vunpack.c.h.b16 %v445
        %v1754 = vunpack.c.l.b16 %v446
        %v1755 = vunpack.c.h.b16 %v446
        %v1756 = vunpack.c.l.b16 %v447
        %v1757 = vunpack.c.h.b16 %v447
        %v1758 = vunpack.c.l.b16 %v448
        %v1759 = vunpack.c.h.b16 %v448
        %v1760 = vunpack.c.l.b16 %v449
        %v1761 = vunpack.c.h.b16 %v449
        %v1762 = vunpack.c.l.b16 %v450
        %v1763 = vunpack.c.h.b16 %v450
        %v1764 = vunpack.c.l.b16 %v451
        %v1765 = vunpack.c.h.b16 %v451
        %v1766 = vunpack.c.l.b16 %v452
        %v1767 = vunpack.c.h.b16 %v452
        %v1768 = vunpack.c.l.b16 %v453
        %v1769 = vunpack.c.h.b16 %v453
        %v1770 = vunpack.c.l.b16 %v454
        %v1771 = vunpack.c.h.b16 %v454
        %v1772 = vunpack.c.l.b16 %v455
        %v1773 = vunpack.c.h.b16 %v455
        %v1774 = vunpack.c.l.b16 %v456
        %v1775 = vunpack.c.h.b16 %v456
        %v1776 = vunpack.c.l.b16 %v457
        %v1777 = vunpack.c.h.b16 %v457
        %v1778 = vunpack.c.l.b16 %v458
        %v1779 = vunpack.c.h.b16 %v458
        %v1780 = vunpack.c.l.b16 %v459
        %v1781 = vunpack.c.h.b16 %v459
        %v1782 = vunpack.c.l.b16 %v460
        %v1783 = vunpack.c.h.b16 %v460
        %v1784 = vunpack.c.l.b16 %v461
        %v1785 = vunpack.c.h.b16 %v461
        %v1786 = vunpack.c.l.b16 %v462
        %v1787 = vunpack.c.h.b16 %v462
        %v1788 = vunpack.c.l.b16 %v463
        %v1789 = vunpack.c.h.b16 %v463
        %v1790 = vunpack.c.l.b16 %v464
        %v1791 = vunpack.c.h.b16 %v464
        %v1792 = vunpack.c.l.b16 %v465
        %v1793 = vunpack.c.h.b16 %v465
        %v1794 = vunpack.c.l.b16 %v466
        %v1795 = vunpack.c.h.b16 %v466
        %v1796 = vunpack.c.l.b16 %v467
        %v1797 = vunpack.c.h.b16 %v467
        %v1798 = vunpack.c.l.b16 %v468
        %v1799 = vunpack.c.h.b16 %v468
        %v1800 = vunpack.c.l.b16 %v469
        %v1801 = vunpack.c.h.b16 %v469
        %v1802 = vunpack.c.l.b16 %v470
        %v1803 = vunpack.c.h.b16 %v470
        %v1804 = vunpack.c.l.b16 %v471
        %v1805 = vunpack.c.h.b16 %v471
        %v1806 = vunpack.c.l.b16 %v472
        %v1807 = vunpack.c.h.b16 %v472
        %v1808 = vunpack.c.l.b16 %v473
        %v1809 = vunpack.c.h.b16 %v473
        %v1810 = vunpack.c.l.b16 %v474
        %v1811 = vunpack.c.h.b16 %v474
        %v1812 = vunpack.c.l.b16 %v475
        %v1813 = vunpack.c.h.b16 %v475
        %v1814 = vunpack.c.l.b16 %v476
        %v1815 = vunpack.c.h.b16 %v476
        %v1816 = vunpack.c.l.b16 %v477
        %v1817 = vunpack.c.h.b16 %v477
        %v1818 = vunpack.c.l.b16 %v478
        %v1819 = vunpack.c.h.b16 %v478
        %v1820 = vunpack.c.l.b16 %v479
        %v1821 = vunpack.c.h.b16 %v479
        %v1822 = vunpack.c.l.b16 %v480
        %v1823 = vunpack.c.h.b16 %v480
        %v1824 = vunpack.c.l.b16 %v481
        %v1825 = vunpack.c.h.b16 %v481
        %v1826 = vunpack.c.l.b16 %v482
        %v1827 = vunpack.c.h.b16 %v482
        %v1828 = vunpack.c.l.b16 %v483
        %v1829 = vunpack.c.h.b16 %v483
        %v1830 = vunpack.c.l.b16 %v484
        %v1831 = vunpack.c.h.b16 %v484
        %v1832 = vunpack.c.l.b16 %v485
        %v1833 = vunpack.c.h.b16 %v485
        %v1834 = vunpack.c.l.b16 %v486
        %v1835 = vunpack.c.h.b16 %v486
        %v1836 = vunpack.c.l.b16 %v487
        %v1837 = vunpack.c.h.b16 %v487
        %v1838 = vunpack.c.l.b16 %v488
        %v1839 = vunpack.c.h.b16 %v488
        %v1840 = vunpack.c.l.b16 %v489
        %v1841 = vunpack.c.h.b16 %v489
        %v1842 = vunpack.c.l.b16 %v490
        %v1843 = vunpack.c.h.b16 %v490
        %v1844 = vunpack.c.l.b16 %v491
        %v1845 = vunpack.c.h.b16 %v491
        %v1846 = vunpack.c.l.b16 %v492
        %v1847 = vunpack.c.h.b16 %v492
        %v1848 = vunpack.c.l.b16 %v493
        %v1849 = vunpack.c.h.b16 %v493
        %v1850 = vunpack.c.l.b16 %v494
        %v1851 = vunpack.c.h.b16 %v494
        %v1852 = vunpack.c.l.b16 %v495
        %v1853 = vunpack.c.h.b16 %v495
        %v1854 = vunpack.c.l.b16 %v496
        %v1855 = vunpack.c.h.b16 %v496
        %v1856 = vunpack.c.l.b16 %v497
        %v1857 = vunpack.c.h.b16 %v497
        %v1858 = vunpack.c.l.b16 %v498
        %v1859 = vunpack.c.h.b16 %v498
        %v1860 = vunpack.c.l.b16 %v499
        %v1861 = vunpack.c.h.b16 %v499
        %v1862 = vunpack.c.l.b16 %v500
        %v1863 = vunpack.c.h.b16 %v500
        %v1864 = vunpack.c.l.b16 %v501
        %v1865 = vunpack.c.h.b16 %v501
        %v1866 = vunpack.c.l.b16 %v502
        %v1867 = vunpack.c.h.b16 %v502
        %v1868 = vunpack.c.l.b16 %v503
        %v1869 = vunpack.c.h.b16 %v503
        %v1870 = vunpack.c.l.b16 %v504
        %v1871 = vunpack.c.h.b16 %v504
        %v1872 = vunpack.c.l.b16 %v505
        %v1873 = vunpack.c.h.b16 %v505
        %v1874 = vunpack.c.l.b16 %v506
        %v1875 = vunpack.c.h.b16 %v506
        %v1876 = vunpack.c.l.b16 %v507
        %v1877 = vunpack.c.h.b16 %v507
        %v1878 = vunpack.c.l.b16 %v508
        %v1879 = vunpack.c.h.b16 %v508
        %v1880 = vunpack.c.l.b16 %v509
        %v1881 = vunpack.c.h.b16 %v509
        %v1882 = vunpack.c.l.b16 %v510
        %v1883 = vunpack.c.h.b16 %v510
        %v1884 = vunpack.c.l.b16 %v511
        %v1885 = vunpack.c.h.b16 %v511
        %v1886 = vunpack.c.l.b16 %v512
        %v1887 = vunpack.c.h.b16 %v512
        %v1888 = vunpack.c.l.b16 %v513
        %v1889 = vunpack.c.h.b16 %v513
        %v1890 = vunpack.c.l.b16 %v514
        %v1891 = vunpack.c.h.b16 %v514
        %v1892 = vunpack.c.l.b16 %v515
        %v1893 = vunpack.c.h.b16 %v515
        %v1894 = vunpack.c.l.b16 %v516
        %v1895 = vunpack.c.h.b16 %v516
        %v1896 = vunpack.c.l.b16 %v517
        %v1897 = vunpack.c.h.b16 %v517
        %v1898 = vunpack.c.l.b16 %v518
        %v1899 = vunpack.c.h.b16 %v518
        %v1900 = vunpack.c.l.b16 %v519
        %v1901 = vunpack.c.h.b16 %v519
        %v1902 = vunpack.c.l.b16 %v520
        %v1903 = vunpack.c.h.b16 %v520
        %v1904 = vunpack.c.l.b16 %v521
        %v1905 = vunpack.c.h.b16 %v521
        %v1906 = vunpack.c.l.b16 %v522
        %v1907 = vunpack.c.h.b16 %v522
        %v1908 = vunpack.c.l.b16 %v523
        %v1909 = vunpack.c.h.b16 %v523
        %v1910 = vunpack.c.l.b16 %v524
        %v1911 = vunpack.c.h.b16 %v524
        %v1912 = vunpack.c.l.b16 %v525
        %v1913 = vunpack.c.h.b16 %v525
        %v1914 = vunpack.c.l.b16 %v526
        %v1915 = vunpack.c.h.b16 %v526
        %v1916 = vunpack.c.l.b16 %v527
        %v1917 = vunpack.c.h.b16 %v527
        %v1918 = vunpack.c.l.b16 %v528
        %v1919 = vunpack.c.h.b16 %v528
        %v1920 = vunpack.c.l.b16 %v529
        %v1921 = vunpack.c.h.b16 %v529
        %v1922 = vunpack.c.l.b16 %v530
        %v1923 = vunpack.c.h.b16 %v530
        %v1924 = vunpack.c.l.b16 %v531
        %v1925 = vunpack.c.h.b16 %v531
        %v1926 = vunpack.c.l.b16 %v532
        %v1927 = vunpack.c.h.b16 %v532
        %v1928 = vunpack.c.l.b16 %v533
        %v1929 = vunpack.c.h.b16 %v533
        %v1930 = vunpack.c.l.b16 %v534
        %v1931 = vunpack.c.h.b16 %v534
        %v1932 = vunpack.c.l.b16 %v535
        %v1933 = vunpack.c.h.b16 %v535
        %v1934 = vunpack.c.l.b16 %v536
        %v1935 = vunpack.c.h.b16 %v536
        %v1936 = vunpack.c.l.b16 %v537
        %v1937 = vunpack.c.h.b16 %v537
        %v1938 = vunpack.c.l.b16 %v538
        %v1939 = vunpack.c.h.b16 %v538
        %v1940 = vunpack.c.l.b16 %v539
        %v1941 = vunpack.c.h.b16 %v539
        %v1942 = vunpack.c.l.b16 %v540
        %v1943 = vunpack.c.h.b16 %v540
        %v1944 = vunpack.c.l.b16 %v541
        %v1945 = vunpack.c.h.b16 %v541
        %v1946 = vunpack.c.l.b16 %v542
        %v1947 = vunpack.c.h.b16 %v542
        %v1948 = vunpack.c.l.b16 %v543
        %v1949 = vunpack.c.h.b16 %v543
        %v1950 = vunpack.c.l.b16 %v544
        %v1951 = vunpack.c.h.b16 %v544
        %v1952 = vunpack.c.l.b16 %v545
        %v1953 = vunpack.c.h.b16 %v545
        %v1954 = vunpack.c.l.b16 %v546
        %v1955 = vunpack.c.h.b16 %v546
        %v1956 = vunpack.c.l.b16 %v547
        %v1957 = vunpack.c.h.b16 %v547
        %v1958 = vunpack.c.l.b16 %v548
        %v1959 = vunpack.c.h.b16 %v548
        %v1960 = vunpack.c.l.b16 %v549
        %v1961 = vunpack.c.h.b16 %v549
        %v1962 = vunpack.c.l.b16 %v550
        %v1963 = vunpack.c.h.b16 %v550
        %v1964 = vunpack.c.l.b16 %v551
        %v1965 = vunpack.c.h.b16 %v551
        %v1966 = vunpack.c.l.b16 %v552
        %v1967 = vunpack.c.h.b16 %v552
        %v1968 = vunpack.c.l.b16 %v553
        %v1969 = vunpack.c.h.b16 %v553
        %v1970 = vunpack.c.l.b16 %v554
        %v1971 = vunpack.c.h.b16 %v554
        %v1972 = vunpack.c.l.b16 %v555
        %v1973 = vunpack.c.h.b16 %v555
        %v1974 = vunpack.c.l.b16 %v556
        %v1975 = vunpack.c.h.b16 %v556
        %v1976 = vunpack.c.l.b16 %v557
        %v1977 = vunpack.c.h.b16 %v557
        %v1978 = vunpack.c.l.b16 %v558
        %v1979 = vunpack.c.h.b16 %v558
        %v1980 = vunpack.c.l.b16 %v559
        %v1981 = vunpack.c.h.b16 %v559
        %v1982 = vunpack.c.l.b16 %v560
        %v1983 = vunpack.c.h.b16 %v560
        %v1984 = vunpack.c.l.b16 %v561
        %v1985 = vunpack.c.h.b16 %v561
        %v1986 = vunpack.c.l.b16 %v562
        %v1987 = vunpack.c.h.b16 %v562
        %v1988 = vunpack.c.l.b16 %v563
        %v1989 = vunpack.c.h.b16 %v563
        %v1990 = vunpack.c.l.b16 %v564
        %v1991 = vunpack.c.h.b16 %v564
        %v1992 = vunpack.c.l.b16 %v565
        %v1993 = vunpack.c.h.b16 %v565
        %v1994 = vunpack.c.l.b16 %v566
        %v1995 = vunpack.c.h.b16 %v566
        %v1996 = vunpack.c.l.b16 %v567
        %v1997 = vunpack.c.h.b16 %v567
        %v1998 = vunpack.c.l.b16 %v568
        %v1999 = vunpack.c.h.b16 %v568
        %v2000 = vunpack.c.l.b16 %v569
        %v2001 = vunpack.c.h.b16 %v569
        %v2002 = vunpack.c.l.b16 %v570
        %v2003 = vunpack.c.h.b16 %v570
        %v2004 = vunpack.c.l.b16 %v571
        %v2005 = vunpack.c.h.b16 %v571
        %v2006 = vunpack.c.l.b16 %v572
        %v2007 = vunpack.c.h.b16 %v572
        %v2008 = vunpack.c.l.b16 %v573
        %v2009 = vunpack.c.h.b16 %v573
        %v2010 = vunpack.c.l.b16 %v574
        %v2011 = vunpack.c.h.b16 %v574
        %v2012 = vunpack.c.l.b16 %v575
        %v2013 = vunpack.c.h.b16 %v575
        %v2014 = vunpack.c.l.b16 %v576
        %v2015 = vunpack.c.h.b16 %v576
        %v2016 = vunpack.c.l.b16 %v577
        %v2017 = vunpack.c.h.b16 %v577
        %v2018 = vunpack.c.l.b16 %v578
        %v2019 = vunpack.c.h.b16 %v578
        %v2020 = vunpack.c.l.b16 %v579
        %v2021 = vunpack.c.h.b16 %v579
        %v2022 = vunpack.c.l.b16 %v580
        %v2023 = vunpack.c.h.b16 %v580
        %v2024 = vunpack.c.l.b16 %v581
        %v2025 = vunpack.c.h.b16 %v581
        %v2026 = vunpack.c.l.b16 %v582
        %v2027 = vunpack.c.h.b16 %v582
        %v2028 = vunpack.c.l.b16 %v583
        %v2029 = vunpack.c.h.b16 %v583
        %v2030 = vunpack.c.l.b16 %v584
        %v2031 = vunpack.c.h.b16 %v584
        %v2032 = vunpack.c.l.b16 %v585
        %v2033 = vunpack.c.h.b16 %v585
        %v2034 = vunpack.c.l.b16 %v586
        %v2035 = vunpack.c.h.b16 %v586
        %v2036 = vunpack.c.l.b16 %v587
        %v2037 = vunpack.c.h.b16 %v587
        %v2038 = vunpack.c.l.b16 %v588
        %v2039 = vunpack.c.h.b16 %v588
        %v2040 = vunpack.c.l.b16 %v589
        %v2041 = vunpack.c.h.b16 %v589
        %v2042 = vunpack.c.l.b16 %v590
        %v2043 = vunpack.c.h.b16 %v590
        %v2044 = vunpack.c.l.b16 %v591
        %v2045 = vunpack.c.h.b16 %v591
        %v2046 = vunpack.c.l.b16 %v592
        %v2047 = vunpack.c.h.b16 %v592
        %v2048 = vunpack.c.l.b16 %v593
        %v2049 = vunpack.c.h.b16 %v593
        %v2050 = vunpack.c.l.b16 %v594
        %v2051 = vunpack.c.h.b16 %v594
        %v2052 = vunpack.c.l.b16 %v595
        %v2053 = vunpack.c.h.b16 %v595
        %v2054 = vunpack.c.l.b16 %v596
        %v2055 = vunpack.c.h.b16 %v596
        %v2056 = vunpack.c.l.b16 %v597
        %v2057 = vunpack.c.h.b16 %v597
        %v2058 = vunpack.c.l.b16 %v598
        %v2059 = vunpack.c.h.b16 %v598
        %v2060 = vunpack.c.l.b16 %v599
        %v2061 = vunpack.c.h.b16 %v599
        %v2062 = vunpack.c.l.b16 %v600
        %v2063 = vunpack.c.h.b16 %v600
        %v2064 = vunpack.c.l.b16 %v601
        %v2065 = vunpack.c.h.b16 %v601
        %v2066 = vunpack.c.l.b16 %v602
        %v2067 = vunpack.c.h.b16 %v602
        %v2068 = vunpack.c.l.b16 %v603
        %v2069 = vunpack.c.h.b16 %v603
        %v2070 = vunpack.c.l.b16 %v604
        %v2071 = vunpack.c.h.b16 %v604
        %v2072 = vunpack.c.l.b16 %v605
        %v2073 = vunpack.c.h.b16 %v605
        %v2074 = vunpack.c.l.b16 %v606
        %v2075 = vunpack.c.h.b16 %v606
        %v2076 = vunpack.c.l.b16 %v607
        %v2077 = vunpack.c.h.b16 %v607
        %v2078 = vunpack.c.l.b16 %v608
        %v2079 = vunpack.c.h.b16 %v608
        %v2080 = vunpack.c.l.b16 %v609
        %v2081 = vunpack.c.h.b16 %v609
        %v2082 = vunpack.c.l.b16 %v610
        %v2083 = vunpack.c.h.b16 %v610
        %v2084 = vunpack.c.l.b16 %v611
        %v2085 = vunpack.c.h.b16 %v611
        %v2086 = vunpack.c.l.b16 %v612
        %v2087 = vunpack.c.h.b16 %v612
        %v2088 = vunpack.c.l.b16 %v613
        %v2089 = vunpack.c.h.b16 %v613
        %v2090 = vunpack.c.l.b16 %v614
        %v2091 = vunpack.c.h.b16 %v614
        %v2092 = vunpack.c.l.b16 %v615
        %v2093 = vunpack.c.h.b16 %v615
        %v2094 = vunpack.c.l.b16 %v616
        %v2095 = vunpack.c.h.b16 %v616
        %v2096 = vunpack.c.l.b16 %v617
        %v2097 = vunpack.c.h.b16 %v617
        %v2098 = vunpack.c.l.b16 %v618
        %v2099 = vunpack.c.h.b16 %v618
        %v2100 = vunpack.c.l.b16 %v619
        %v2101 = vunpack.c.h.b16 %v619
        %v2102 = vunpack.c.l.b16 %v620
        %v2103 = vunpack.c.h.b16 %v620
        %v2104 = vunpack.c.l.b16 %v621
        %v2105 = vunpack.c.h.b16 %v621
        %v2106 = vunpack.c.l.b16 %v622
        %v2107 = vunpack.c.h.b16 %v622
        %v2108 = vunpack.c.l.b16 %v623
        %v2109 = vunpack.c.h.b16 %v623
        %v2110 = vunpack.c.l.b16 %v624
        %v2111 = vunpack.c.h.b16 %v624
        %v2112 = vunpack.c.l.b16 %v625
        %v2113 = vunpack.c.h.b16 %v625
        %v2114 = vunpack.c.l.b16 %v626
        %v2115 = vunpack.c.h.b16 %v626
        %v2116 = vunpack.c.l.b16 %v627
        %v2117 = vunpack.c.h.b16 %v627
        %v2118 = vunpack.c.l.b16 %v628
        %v2119 = vunpack.c.h.b16 %v628
        %v2120 = vunpack.c.l.b16 %v629
        %v2121 = vunpack.c.h.b16 %v629
        %v2122 = vunpack.c.l.b16 %v630
        %v2123 = vunpack.c.h.b16 %v630
        %v2124 = vunpack.c.l.b16 %v631
        %v2125 = vunpack.c.h.b16 %v631
        %v2126 = vunpack.c.l.b16 %v632
        %v2127 = vunpack.c.h.b16 %v632
        %v2128 = vunpack.c.l.b16 %v633
        %v2129 = vunpack.c.h.b16 %v633
        %v2130 = vunpack.c.l.b16 %v634
        %v2131 = vunpack.c.h.b16 %v634
        %v2132 = vunpack.c.l.b16 %v635
        %v2133 = vunpack.c.h.b16 %v635
        %v2134 = vunpack.c.l.b16 %v636
        %v2135 = vunpack.c.h.b16 %v636
        %v2136 = vunpack.c.l.b16 %v637
        %v2137 = vunpack.c.h.b16 %v637
        %v2138 = vunpack.c.l.b16 %v638
        %v2139 = vunpack.c.h.b16 %v638
        %v2140 = vunpack.c.l.b16 %v639
        %v2141 = vunpack.c.h.b16 %v639
        %v2142 = vunpack.c.l.b16 %v640
        %v2143 = vunpack.c.h.b16 %v640
        %v2144 = vunpack.c.l.b16 %v641
        %v2145 = vunpack.c.h.b16 %v641
        %v2146 = vunpack.c.l.b16 %v642
        %v2147 = vunpack.c.h.b16 %v642
        %v2148 = vunpack.c.l.b16 %v643
        %v2149 = vunpack.c.h.b16 %v643
        %v2150 = vunpack.c.l.b16 %v644
        %v2151 = vunpack.c.h.b16 %v644
        %v2152 = vunpack.c.l.b16 %v645
        %v2153 = vunpack.c.h.b16 %v645
        %v2154 = vunpack.c.l.b16 %v646
        %v2155 = vunpack.c.h.b16 %v646
        %v2156 = vunpack.c.l.b16 %v647
        %v2157 = vunpack.c.h.b16 %v647
        %v2158 = vunpack.c.l.b16 %v648
        %v2159 = vunpack.c.h.b16 %v648
        %v2160 = vunpack.c.l.b16 %v649
        %v2161 = vunpack.c.h.b16 %v649
        %v2162 = vunpack.c.l.b16 %v650
        %v2163 = vunpack.c.h.b16 %v650
        %v2164 = vunpack.c.l.b16 %v651
        %v2165 = vunpack.c.h.b16 %v651
        %v2166 = vunpack.c.l.b16 %v652
        %v2167 = vunpack.c.h.b16 %v652
        %v2168 = vunpack.c.l.b16 %v653
        %v2169 = vunpack.c.h.b16 %v653
        %v2170 = vunpack.c.l.b16 %v654
        %v2171 = vunpack.c.h.b16 %v654
        %v2172 = vunpack.c.l.b16 %v655
        %v2173 = vunpack.c.h.b16 %v655
        %v2174 = vunpack.c.l.b16 %v656
        %v2175 = vunpack.c.h.b16 %v656
        %v2176 = vunpack.c.l.b16 %v657
        %v2177 = vunpack.c.h.b16 %v657
        %v2178 = vunpack.c.l.b16 %v658
        %v2179 = vunpack.c.h.b16 %v658
        %v2180 = vunpack.c.l.b16 %v659
        %v2181 = vunpack.c.h.b16 %v659
        %v2182 = vunpack.c.l.b16 %v660
        %v2183 = vunpack.c.h.b16 %v660
        %v2184 = vunpack.c.l.b16 %v661
        %v2185 = vunpack.c.h.b16 %v661
        %v2186 = vunpack.c.l.b16 %v662
        %v2187 = vunpack.c.h.b16 %v662
        %v2188 = vunpack.c.l.b16 %v663
        %v2189 = vunpack.c.h.b16 %v663
        %v2190 = vunpack.c.l.b16 %v664
        %v2191 = vunpack.c.h.b16 %v664
        %v2192 = vunpack.c.l.b16 %v665
        %v2193 = vunpack.c.h.b16 %v665
        %v2194 = vunpack.c.l.b16 %v666
        %v2195 = vunpack.c.h.b16 %v666
        %v2196 = vunpack.c.l.b16 %v667
        %v2197 = vunpack.c.h.b16 %v667
        %v2198 = vunpack.c.l.b16 %v668
        %v2199 = vunpack.c.h.b16 %v668
        %v2200 = vunpack.c.l.b16 %v669
        %v2201 = vunpack.c.h.b16 %v669
        %v2202 = vunpack.c.l.b16 %v670
        %v2203 = vunpack.c.h.b16 %v670
        %v2204 = vunpack.c.l.b16 %v671
        %v2205 = vunpack.c.h.b16 %v671
        %v2206 = vunpack.c.l.b16 %v672
        %v2207 = vunpack.c.h.b16 %v672
        %v2208 = vunpack.c.l.b16 %v673
        %v2209 = vunpack.c.h.b16 %v673
        %v2210 = vunpack.c.l.b16 %v674
        %v2211 = vunpack.c.h.b16 %v674
        %v2212 = vunpack.c.l.b16 %v675
        %v2213 = vunpack.c.h.b16 %v675
        %v2214 = vunpack.c.l.b16 %v676
        %v2215 = vunpack.c.h.b16 %v676
        %v2216 = vunpack.c.l.b16 %v677
        %v2217 = vunpack.c.h.b16 %v677
        %v2218 = vunpack.c.l.b16 %v678
        %v2219 = vunpack.c.h.b16 %v678
        %v2220 = vunpack.c.l.b16 %v679
        %v2221 = vunpack.c.h.b16 %v679
        %v2222 = vunpack.c.l.b16 %v680
        %v2223 = vunpack.c.h.b16 %v680
        %v2224 = vunpack.c.l.b16 %v681
        %v2225 = vunpack.c.h.b16 %v681
        %v2226 = vunpack.c.l.b16 %v682
        %v2227 = vunpack.c.h.b16 %v682
        %v2228 = vunpack.c.l.b16 %v683
        %v2229 = vunpack.c.h.b16 %v683
        %v2230 = vunpack.c.l.b16 %v684
        %v2231 = vunpack.c.h.b16 %v684
        %v2232 = vunpack.c.l.b16 %v685
        %v2233 = vunpack.c.h.b16 %v685
        %v2234 = vunpack.c.l.b16 %v686
        %v2235 = vunpack.c.h.b16 %v686
        %v2236 = vunpack.c.l.b16 %v687
        %v2237 = vunpack.c.h.b16 %v687
        %v2238 = vunpack.c.l.b16 %v688
        %v2239 = vunpack.c.h.b16 %v688
        %v2240 = vunpack.c.l.b16 %v689
        %v2241 = vunpack.c.h.b16 %v689
        %v2242 = vunpack.c.l.b16 %v690
        %v2243 = vunpack.c.h.b16 %v690
        %v2244 = vunpack.c.l.b16 %v691
        %v2245 = vunpack.c.h.b16 %v691
        %v2246 = vunpack.c.l.b16 %v692
        %v2247 = vunpack.c.h.b16 %v692
        %v2248 = vunpack.c.l.b16 %v693
        %v2249 = vunpack.c.h.b16 %v693
        %v2250 = vunpack.c.l.b16 %v694
        %v2251 = vunpack.c.h.b16 %v694
        %v2252 = vunpack.c.l.b16 %v695
        %v2253 = vunpack.c.h.b16 %v695
        %v2254 = vunpack.c.l.b16 %v696
        %v2255 = vunpack.c.h.b16 %v696
        %v2256 = vunpack.c.l.b16 %v697
        %v2257 = vunpack.c.h.b16 %v697
        %v2258 = vunpack.c.l.b16 %v698
        %v2259 = vunpack.c.h.b16 %v698
        %v2260 = vunpack.c.l.b16 %v699
        %v2261 = vunpack.c.h.b16 %v699
        %v2262 = vunpack.c.l.b16 %v700
        %v2263 = vunpack.c.h.b16 %v700
        %v2264 = vunpack.c.l.b16 %v701
        %v2265 = vunpack.c.h.b16 %v701
        %v2266 = vunpack.c.l.b16 %v702
        %v2267 = vunpack.c.h.b16 %v702
        %v2268 = vunpack.c.l.b16 %v703
        %v2269 = vunpack.c.h.b16 %v703
        %v2270 = vunpack.c.l.b16 %v704
        %v2271 = vunpack.c.h.b16 %v704
        %v2272 = vunpack.c.l.b16 %v705
        %v2273 = vunpack.c.h.b16 %v705
        %v2274 = vunpack.c.l.b16 %v706
        %v2275 = vunpack.c.h.b16 %v706
        %v2276 = vunpack.c.l.b16 %v707
        %v2277 = vunpack.c.h.b16 %v707
        %v2278 = vunpack.c.l.b16 %v708
        %v2279 = vunpack.c.h.b16 %v708
        %v2280 = vunpack.c.l.b16 %v709
        %v2281 = vunpack.c.h.b16 %v709
        %v2282 = vunpack.c.l.b16 %v710
        %v2283 = vunpack.c.h.b16 %v710
        %v2284 = vunpack.c.l.b16 %v711
        %v2285 = vunpack.c.h.b16 %v711
        %v2286 = vunpack.c.l.b16 %v712
        %v2287 = vunpack.c.h.b16 %v712
        %v2288 = vunpack.c.l.b16 %v713
        %v2289 = vunpack.c.h.b16 %v713
        %v2290 = vunpack.c.l.b16 %v714
        %v2291 = vunpack.c.h.b16 %v714
        %v2292 = vunpack.c.l.b16 %v715
        %v2293 = vunpack.c.h.b16 %v715
        %v2294 = vunpack.c.l.b16 %v716
        %v2295 = vunpack.c.h.b16 %v716
        %v2296 = vunpack.c.l.b16 %v717
        %v2297 = vunpack.c.h.b16 %v717
        %v2298 = vunpack.c.l.b16 %v718
        %v2299 = vunpack.c.h.b16 %v718
        %v2300 = vunpack.c.l.b16 %v719
        %v2301 = vunpack.c.h.b16 %v719
        %v2302 = vunpack.c.l.b16 %v720
        %v2303 = vunpack.c.h.b16 %v720
        %v2304 = vunpack.c.l.b16 %v721
        %v2305 = vunpack.c.h.b16 %v721
        %v2306 = vunpack.c.l.b16 %v722
        %v2307 = vunpack.c.h.b16 %v722
        %v2308 = vunpack.c.l.b16 %v723
        %v2309 = vunpack.c.h.b16 %v723
        %v2310 = vunpack.c.l.b16 %v724
        %v2311 = vunpack.c.h.b16 %v724
        %v2312 = vunpack.c.l.b16 %v725
        %v2313 = vunpack.c.h.b16 %v725
        %v2314 = vunpack.c.l.b16 %v726
        %v2315 = vunpack.c.h.b16 %v726
        %v2316 = vunpack.c.l.b16 %v727
        %v2317 = vunpack.c.h.b16 %v727
        %v2318 = vunpack.c.l.b16 %v728
        %v2319 = vunpack.c.h.b16 %v728
        %v2320 = vunpack.c.l.b16 %v729
        %v2321 = vunpack.c.h.b16 %v729
        %v2322 = vunpack.c.l.b16 %v730
        %v2323 = vunpack.c.h.b16 %v730
        %v2324 = vunpack.c.l.b16 %v731
        %v2325 = vunpack.c.h.b16 %v731
        %v2326 = vunpack.c.l.b16 %v732
        %v2327 = vunpack.c.h.b16 %v732
        %v2328 = vunpack.c.l.b16 %v733
        %v2329 = vunpack.c.h.b16 %v733
        %v2330 = vunpack.c.l.b16 %v734
        %v2331 = vunpack.c.h.b16 %v734
        %v2332 = vunpack.c.l.b16 %v735
        %v2333 = vunpack.c.h.b16 %v735
        %v2334 = vunpack.c.l.b16 %v736
        %v2335 = vunpack.c.h.b16 %v736
        %v2336 = vunpack.c.l.b16 %v737
        %v2337 = vunpack.c.h.b16 %v737
        %v2338 = vunpack.c.l.b16 %v738
        %v2339 = vunpack.c.h.b16 %v738
        %v2340 = vunpack.c.l.b16 %v739
        %v2341 = vunpack.c.h.b16 %v739
        %v2342 = vunpack.c.l.b16 %v740
        %v2343 = vunpack.c.h.b16 %v740
        %v2344 = vunpack.c.l.b16 %v741
        %v2345 = vunpack.c.h.b16 %v741
        %v2346 = vunpack.c.l.b16 %v742
        %v2347 = vunpack.c.h.b16 %v742
        %v2348 = vunpack.c.l.b16 %v743
        %v2349 = vunpack.c.h.b16 %v743
        %v2350 = vunpack.c.l.b16 %v744
        %v2351 = vunpack.c.h.b16 %v744
        %v2352 = vunpack.c.l.b16 %v745
        %v2353 = vunpack.c.h.b16 %v745
        %v2354 = vunpack.c.l.b16 %v746
        %v2355 = vunpack.c.h.b16 %v746
        %v2356 = vunpack.c.l.b16 %v747
        %v2357 = vunpack.c.h.b16 %v747
        %v2358 = vunpack.c.l.b16 %v748
        %v2359 = vunpack.c.h.b16 %v748
        %v2360 = vunpack.c.l.b16 %v749
        %v2361 = vunpack.c.h.b16 %v749
        %v2362 = vunpack.c.l.b16 %v750
        %v2363 = vunpack.c.h.b16 %v750
        %v2364 = vunpack.c.l.b16 %v751
        %v2365 = vunpack.c.h.b16 %v751
        %v2366 = vpack.c.b16 %v1346, %v1342
        %v2367 = vpack.c.b16 %v1347, %v1343
        %v2368 = vpack.c.b16 %v1348, %v1344
        %v2369 = vpack.c.b16 %v1349, %v1345
        %v2370 = vpack.c.b16 %v1354, %v1350
        %v2371 = vpack.c.b16 %v1355, %v1351
        %v2372 = vpack.c.b16 %v1356, %v1352
        %v2373 = vpack.c.b16 %v1357, %v1353
        %v2374 = vpack.c.b16 %v1362, %v1358
        %v2375 = vpack.c.b16 %v1363, %v1359
        %v2376 = vpack.c.b16 %v1364, %v1360
        %v2377 = vpack.c.b16 %v1365, %v1361
        %v2378 = vpack.c.b16 %v1370, %v1366
        %v2379 = vpack.c.b16 %v1371, %v1367
        %v2380 = vpack.c.b16 %v1372, %v1368
        %v2381 = vpack.c.b16 %v1373, %v1369
        %v2382 = vpack.c.b16 %v1378, %v1374
        %v2383 = vpack.c.b16 %v1379, %v1375
        %v2384 = vpack.c.b16 %v1380, %v1376
        %v2385 = vpack.c.b16 %v1381, %v1377
        %v2386 = vpack.c.b16 %v1386, %v1382
        %v2387 = vpack.c.b16 %v1387, %v1383
        %v2388 = vpack.c.b16 %v1388, %v1384
        %v2389 = vpack.c.b16 %v1389, %v1385
        %v2390 = vpack.c.b16 %v1394, %v1390
        %v2391 = vpack.c.b16 %v1395, %v1391
        %v2392 = vpack.c.b16 %v1396, %v1392
        %v2393 = vpack.c.b16 %v1397, %v1393
        %v2394 = vpack.c.b16 %v1402, %v1398
        %v2395 = vpack.c.b16 %v1403, %v1399
        %v2396 = vpack.c.b16 %v1404, %v1400
        %v2397 = vpack.c.b16 %v1405, %v1401
        %v2398 = vpack.c.b16 %v1410, %v1406
        %v2399 = vpack.c.b16 %v1411, %v1407
        %v2400 = vpack.c.b16 %v1412, %v1408
        %v2401 = vpack.c.b16 %v1413, %v1409
        %v2402 = vpack.c.b16 %v1418, %v1414
        %v2403 = vpack.c.b16 %v1419, %v1415
        %v2404 = vpack.c.b16 %v1420, %v1416
        %v2405 = vpack.c.b16 %v1421, %v1417
        %v2406 = vpack.c.b16 %v1426, %v1422
        %v2407 = vpack.c.b16 %v1427, %v1423
        %v2408 = vpack.c.b16 %v1428, %v1424
        %v2409 = vpack.c.b16 %v1429, %v1425
        %v2410 = vpack.c.b16 %v1434, %v1430
        %v2411 = vpack.c.b16 %v1435, %v1431
        %v2412 = vpack.c.b16 %v1436, %v1432
        %v2413 = vpack.c.b16 %v1437, %v1433
        %v2414 = vpack.c.b16 %v1442, %v1438
        %v2415 = vpack.c.b16 %v1443, %v1439
        %v2416 = vpack.c.b16 %v1444, %v1440
        %v2417 = vpack.c.b16 %v1445, %v1441
        %v2418 = vpack.c.b16 %v1450, %v1446
        %v2419 = vpack.c.b16 %v1451, %v1447
        %v2420 = vpack.c.b16 %v1452, %v1448
        %v2421 = vpack.c.b16 %v1453, %v1449
        %v2422 = vpack.c.b16 %v1458, %v1454
        %v2423 = vpack.c.b16 %v1459, %v1455
        %v2424 = vpack.c.b16 %v1460, %v1456
        %v2425 = vpack.c.b16 %v1461, %v1457
        %v2426 = vpack.c.b16 %v1466, %v1462
        %v2427 = vpack.c.b16 %v1467, %v1463
        %v2428 = vpack.c.b16 %v1468, %v1464
        %v2429 = vpack.c.b16 %v1469, %v1465
        %v2430 = vpack.c.b16 %v1474, %v1470
        %v2431 = vpack.c.b16 %v1475, %v1471
        %v2432 = vpack.c.b16 %v1476, %v1472
        %v2433 = vpack.c.b16 %v1477, %v1473
        %v2434 = vpack.c.b16 %v1482, %v1478
        %v2435 = vpack.c.b16 %v1483, %v1479
        %v2436 = vpack.c.b16 %v1484, %v1480
        %v2437 = vpack.c.b16 %v1485, %v1481
        %v2438 = vpack.c.b16 %v1490, %v1486
        %v2439 = vpack.c.b16 %v1491, %v1487
        %v2440 = vpack.c.b16 %v1492, %v1488
        %v2441 = vpack.c.b16 %v1493, %v1489
        %v2442 = vpack.c.b16 %v1498, %v1494
        %v2443 = vpack.c.b16 %v1499, %v1495
        %v2444 = vpack.c.b16 %v1500, %v1496
        %v2445 = vpack.c.b16 %v1501, %v1497
        %v2446 = vpack.c.b16 %v1506, %v1502
        %v2447 = vpack.c.b16 %v1507, %v1503
        %v2448 = vpack.c.b16 %v1508, %v1504
        %v2449 = vpack.c.b16 %v1509, %v1505
        %v2450 = vpack.c.b16 %v1514, %v1510
        %v2451 = vpack.c.b16 %v1515, %v1511
        %v2452 = vpack.c.b16 %v1516, %v1512
        %v2453 = vpack.c.b16 %v1517, %v1513
        %v2454 = vpack.c.b16 %v1522, %v1518
        %v2455 = vpack.c.b16 %v1523, %v1519
        %v2456 = vpack.c.b16 %v1524, %v1520
        %v2457 = vpack.c.b16 %v1525, %v1521
        %v2458 = vpack.c.b16 %v1530, %v1526
        %v2459 = vpack.c.b16 %v1531, %v1527
        %v2460 = vpack.c.b16 %v1532, %v1528
        %v2461 = vpack.c.b16 %v1533, %v1529
        %v2462 = vpack.c.b16 %v1538, %v1534
        %v2463 = vpack.c.b16 %v1539, %v1535
        %v2464 = vpack.c.b16 %v1540, %v1536
        %v2465 = vpack.c.b16 %v1541, %v1537
        %v2466 = vpack.c.b16 %v1546, %v1542
        %v2467 = vpack.c.b16 %v1547, %v1543
        %v2468 = vpack.c.b16 %v1548, %v1544
        %v2469 = vpack.c.b16 %v1549, %v1545
        %v2470 = vpack.c.b16 %v1554, %v1550
        %v2471 = vpack.c.b16 %v1555, %v1551
        %v2472 = vpack.c.b16 %v1556, %v1552
        %v2473 = vpack.c.b16 %v1557, %v1553
        %v2474 = vpack.c.b16 %v1562, %v1558
        %v2475 = vpack.c.b16 %v1563, %v1559
        %v2476 = vpack.c.b16 %v1564, %v1560
        %v2477 = vpack.c.b16 %v1565, %v1561
        %v2478 = vpack.c.b16 %v1570, %v1566
        %v2479 = vpack.c.b16 %v1571, %v1567
        %v2480 = vpack.c.b16 %v1572, %v1568
        %v2481 = vpack.c.b16 %v1573, %v1569
        %v2482 = vpack.c.b16 %v1578, %v1574
        %v2483 = vpack.c.b16 %v1579, %v1575
        %v2484 = vpack.c.b16 %v1580, %v1576
        %v2485 = vpack.c.b16 %v1581, %v1577
        %v2486 = vpack.c.b16 %v1586, %v1582
        %v2487 = vpack.c.b16 %v1587, %v1583
        %v2488 = vpack.c.b16 %v1588, %v1584
        %v2489 = vpack.c.b16 %v1589, %v1585
        %v2490 = vpack.c.b16 %v1594, %v1590
        %v2491 = vpack.c.b16 %v1595, %v1591
        %v2492 = vpack.c.b16 %v1596, %v1592
        %v2493 = vpack.c.b16 %v1597, %v1593
        %v2494 = vpack.c.b16 %v1602, %v1598
        %v2495 = vpack.c.b16 %v1603, %v1599
        %v2496 = vpack.c.b16 %v1604, %v1600
        %v2497 = vpack.c.b16 %v1605, %v1601
        %v2498 = vpack.c.b16 %v1610, %v1606
        %v2499 = vpack.c.b16 %v1611, %v1607
        %v2500 = vpack.c.b16 %v1612, %v1608
        %v2501 = vpack.c.b16 %v1613, %v1609
        %v2502 = vpack.c.b16 %v1618, %v1614
        %v2503 = vpack.c.b16 %v1619, %v1615
        %v2504 = vpack.c.b16 %v1620, %v1616
        %v2505 = vpack.c.b16 %v1621, %v1617
        %v2506 = vpack.c.b16 %v1626, %v1622
        %v2507 = vpack.c.b16 %v1627, %v1623
        %v2508 = vpack.c.b16 %v1628, %v1624
        %v2509 = vpack.c.b16 %v1629, %v1625
        %v2510 = vpack.c.b16 %v1634, %v1630
        %v2511 = vpack.c.b16 %v1635, %v1631
        %v2512 = vpack.c.b16 %v1636, %v1632
        %v2513 = vpack.c.b16 %v1637, %v1633
        %v2514 = vpack.c.b16 %v1642, %v1638
        %v2515 = vpack.c.b16 %v1643, %v1639
        %v2516 = vpack.c.b16 %v1644, %v1640
        %v2517 = vpack.c.b16 %v1645, %v1641
        %v2518 = vpack.c.b16 %v1650, %v1646
        %v2519 = vpack.c.b16 %v1651, %v1647
        %v2520 = vpack.c.b16 %v1652, %v1648
        %v2521 = vpack.c.b16 %v1653, %v1649
        %v2522 = vpack.c.b16 %v1658, %v1654
        %v2523 = vpack.c.b16 %v1659, %v1655
        %v2524 = vpack.c.b16 %v1660, %v1656
        %v2525 = vpack.c.b16 %v1661, %v1657
        %v2526 = vpack.c.b16 %v1666, %v1662
        %v2527 = vpack.c.b16 %v1667, %v1663
        %v2528 = vpack.c.b16 %v1668, %v1664
        %v2529 = vpack.c.b16 %v1669, %v1665
        %v2530 = vpack.c.b16 %v1674, %v1670
        %v2531 = vpack.c.b16 %v1675, %v1671
        %v2532 = vpack.c.b16 %v1676, %v1672
        %v2533 = vpack.c.b16 %v1677, %v1673
        %v2534 = vpack.c.b16 %v1682, %v1678
        %v2535 = vpack.c.b16 %v1683, %v1679
        %v2536 = vpack.c.b16 %v1684, %v1680
        %v2537 = vpack.c.b16 %v1685, %v1681
        %v2538 = vpack.c.b16 %v1690, %v1686
        %v2539 = vpack.c.b16 %v1691, %v1687
        %v2540 = vpack.c.b16 %v1692, %v1688
        %v2541 = vpack.c.b16 %v1693, %v1689
        %v2542 = vpack.c.b16 %v1698, %v1694
        %v2543 = vpack.c.b16 %v1699, %v1695
        %v2544 = vpack.c.b16 %v1700, %v1696
        %v2545 = vpack.c.b16 %v1701, %v1697
        %v2546 = vpack.c.b16 %v1706, %v1702
        %v2547 = vpack.c.b16 %v1707, %v1703
        %v2548 = vpack.c.b16 %v1708, %v1704
        %v2549 = vpack.c.b16 %v1709, %v1705
        %v2550 = vpack.c.b16 %v1714, %v1710
        %v2551 = vpack.c.b16 %v1715, %v1711
        %v2552 = vpack.c.b16 %v1716, %v1712
        %v2553 = vpack.c.b16 %v1717, %v1713
        %v2554 = vpack.c.b16 %v1722, %v1718
        %v2555 = vpack.c.b16 %v1723, %v1719
        %v2556 = vpack.c.b16 %v1724, %v1720
        %v2557 = vpack.c.b16 %v1725, %v1721
        %v2558 = vpack.c.b16 %v1730, %v1726
        %v2559 = vpack.c.b16 %v1731, %v1727
        %v2560 = vpack.c.b16 %v1732, %v1728
        %v2561 = vpack.c.b16 %v1733, %v1729
        %v2562 = vpack.c.b16 %v1738, %v1734
        %v2563 = vpack.c.b16 %v1739, %v1735
        %v2564 = vpack.c.b16 %v1740, %v1736
        %v2565 = vpack.c.b16 %v1741, %v1737
        %v2566 = vpack.c.b16 %v1746, %v1742
        %v2567 = vpack.c.b16 %v1747, %v1743
        %v2568 = vpack.c.b16 %v1748, %v1744
        %v2569 = vpack.c.b16 %v1749, %v1745
        %v2570 = vpack.c.b16 %v1754, %v1750
        %v2571 = vpack.c.b16 %v1755, %v1751
        %v2572 = vpack.c.b16 %v1756, %v1752
        %v2573 = vpack.c.b16 %v1757, %v1753
        %v2574 = vpack.c.b16 %v1762, %v1758
        %v2575 = vpack.c.b16 %v1763, %v1759
        %v2576 = vpack.c.b16 %v1764, %v1760
        %v2577 = vpack.c.b16 %v1765, %v1761
        %v2578 = vpack.c.b16 %v1770, %v1766
        %v2579 = vpack.c.b16 %v1771, %v1767
        %v2580 = vpack.c.b16 %v1772, %v1768
        %v2581 = vpack.c.b16 %v1773, %v1769
        %v2582 = vpack.c.b16 %v1778, %v1774
        %v2583 = vpack.c.b16 %v1779, %v1775
        %v2584 = vpack.c.b16 %v1780, %v1776
        %v2585 = vpack.c.b16 %v1781, %v1777
        %v2586 = vpack.c.b16 %v1786, %v1782
        %v2587 = vpack.c.b16 %v1787, %v1783
        %v2588 = vpack.c.b16 %v1788, %v1784
        %v2589 = vpack.c.b16 %v1789, %v1785
        %v2590 = vpack.c.b16 %v1794, %v1790
        %v2591 = vpack.c.b16 %v1795, %v1791
        %v2592 = vpack.c.b16 %v1796, %v1792
        %v2593 = vpack.c.b16 %v1797, %v1793
        %v2594 = vpack.c.b16 %v1802, %v1798
        %v2595 = vpack.c.b16 %v1803, %v1799
        %v2596 = vpack.c.b16 %v1804, %v1800
        %v2597 = vpack.c.b16 %v1805, %v1801
        %v2598 = vpack.c.b16 %v1810, %v1806
        %v2599 = vpack.c.b16 %v1811, %v1807
        %v2600 = vpack.c.b16 %v1812, %v1808
        %v2601 = vpack.c.b16 %v1813, %v1809
        %v2602 = vpack.c.b16 %v1818, %v1814
        %v2603 = vpack.c.b16 %v1819, %v1815
        %v2604 = vpack.c.b16 %v1820, %v1816
        %v2605 = vpack.c.b16 %v1821, %v1817
        %v2606 = vpack.c.b16 %v1826, %v1822
        %v2607 = vpack.c.b16 %v1827, %v1823
        %v2608 = vpack.c.b16 %v1828, %v1824
        %v2609 = vpack.c.b16 %v1829, %v1825
        %v2610 = vpack.c.b16 %v1834, %v1830
        %v2611 = vpack.c.b16 %v1835, %v1831
        %v2612 = vpack.c.b16 %v1836, %v1832
        %v2613 = vpack.c.b16 %v1837, %v1833
        %v2614 = vpack.c.b16 %v1842, %v1838
        %v2615 = vpack.c.b16 %v1843, %v1839
        %v2616 = vpack.c.b16 %v1844, %v1840
        %v2617 = vpack.c.b16 %v1845, %v1841
        %v2618 = vpack.c.b16 %v1850, %v1846
        %v2619 = vpack.c.b16 %v1851, %v1847
        %v2620 = vpack.c.b16 %v1852, %v1848
        %v2621 = vpack.c.b16 %v1853, %v1849
        %v2622 = vpack.c.b16 %v1858, %v1854
        %v2623 = vpack.c.b16 %v1859, %v1855
        %v2624 = vpack.c.b16 %v1860, %v1856
        %v2625 = vpack.c.b16 %v1861, %v1857
        %v2626 = vpack.c.b16 %v1866, %v1862
        %v2627 = vpack.c.b16 %v1867, %v1863
        %v2628 = vpack.c.b16 %v1868, %v1864
        %v2629 = vpack.c.b16 %v1869, %v1865
        %v2630 = vpack.c.b16 %v1874, %v1870
        %v2631 = vpack.c.b16 %v1875, %v1871
        %v2632 = vpack.c.b16 %v1876, %v1872
        %v2633 = vpack.c.b16 %v1877, %v1873
        %v2634 = vpack.c.b16 %v1882, %v1878
        %v2635 = vpack.c.b16 %v1883, %v1879
        %v2636 = vpack.c.b16 %v1884, %v1880
        %v2637 = vpack.c.b16 %v1885, %v1881
        %v2638 = vpack.c.b16 %v1890, %v1886
        %v2639 = vpack.c.b16 %v1891, %v1887
        %v2640 = vpack.c.b16 %v1892, %v1888
        %v2641 = vpack.c.b16 %v1893, %v1889
        %v2642 = vpack.c.b16 %v1898, %v1894
        %v2643 = vpack.c.b16 %v1899, %v1895
        %v2644 = vpack.c.b16 %v1900, %v1896
        %v2645 = vpack.c.b16 %v1901, %v1897
        %v2646 = vpack.c.b16 %v1906, %v1902
        %v2647 = vpack.c.b16 %v1907, %v1903
        %v2648 = vpack.c.b16 %v1908, %v1904
        %v2649 = vpack.c.b16 %v1909, %v1905
        %v2650 = vpack.c.b16 %v1914, %v1910
        %v2651 = vpack.c.b16 %v1915, %v1911
        %v2652 = vpack.c.b16 %v1916, %v1912
        %v2653 = vpack.c.b16 %v1917, %v1913
        %v2654 = vpack.c.b16 %v1922, %v1918
        %v2655 = vpack.c.b16 %v1923, %v1919
        %v2656 = vpack.c.b16 %v1924, %v1920
        %v2657 = vpack.c.b16 %v1925, %v1921
        %v2658 = vpack.c.b16 %v1930, %v1926
        %v2659 = vpack.c.b16 %v1931, %v1927
        %v2660 = vpack.c.b16 %v1932, %v1928
        %v2661 = vpack.c.b16 %v1933, %v1929
        %v2662 = vpack.c.b16 %v1938, %v1934
        %v2663 = vpack.c.b16 %v1939, %v1935
        %v2664 = vpack.c.b16 %v1940, %v1936
        %v2665 = vpack.c.b16 %v1941, %v1937
        %v2666 = vpack.c.b16 %v1946, %v1942
        %v2667 = vpack.c.b16 %v1947, %v1943
        %v2668 = vpack.c.b16 %v1948, %v1944
        %v2669 = vpack.c.b16 %v1949, %v1945
        %v2670 = vpack.c.b16 %v1954, %v1950
        %v2671 = vpack.c.b16 %v1955, %v1951
        %v2672 = vpack.c.b16 %v1956, %v1952
        %v2673 = vpack.c.b16 %v1957, %v1953
        %v2674 = vpack.c.b16 %v1962, %v1958
        %v2675 = vpack.c.b16 %v1963, %v1959
        %v2676 = vpack.c.b16 %v1964, %v1960
        %v2677 = vpack.c.b16 %v1965, %v1961
        %v2678 = vpack.c.b16 %v1970, %v1966
        %v2679 = vpack.c.b16 %v1971, %v1967
        %v2680 = vpack.c.b16 %v1972, %v1968
        %v2681 = vpack.c.b16 %v1973, %v1969
        %v2682 = vpack.c.b16 %v1978, %v1974
        %v2683 = vpack.c.b16 %v1979, %v1975
        %v2684 = vpack.c.b16 %v1980, %v1976
        %v2685 = vpack.c.b16 %v1981, %v1977
        %v2686 = vpack.c.b16 %v1986, %v1982
        %v2687 = vpack.c.b16 %v1987, %v1983
        %v2688 = vpack.c.b16 %v1988, %v1984
        %v2689 = vpack.c.b16 %v1989, %v1985
        %v2690 = vpack.c.b16 %v1994, %v1990
        %v2691 = vpack.c.b16 %v1995, %v1991
        %v2692 = vpack.c.b16 %v1996, %v1992
        %v2693 = vpack.c.b16 %v1997, %v1993
        %v2694 = vpack.c.b16 %v2002, %v1998
        %v2695 = vpack.c.b16 %v2003, %v1999
        %v2696 = vpack.c.b16 %v2004, %v2000
        %v2697 = vpack.c.b16 %v2005, %v2001
        %v2698 = vpack.c.b16 %v2010, %v2006
        %v2699 = vpack.c.b16 %v2011, %v2007
        %v2700 = vpack.c.b16 %v2012, %v2008
        %v2701 = vpack.c.b16 %v2013, %v2009
        %v2702 = vpack.c.b16 %v2018, %v2014
        %v2703 = vpack.c.b16 %v2019, %v2015
        %v2704 = vpack.c.b16 %v2020, %v2016
        %v2705 = vpack.c.b16 %v2021, %v2017
        %v2706 = vpack.c.b16 %v2026, %v2022
        %v2707 = vpack.c.b16 %v2027, %v2023
        %v2708 = vpack.c.b16 %v2028, %v2024
        %v2709 = vpack.c.b16 %v2029, %v2025
        %v2710 = vpack.c.b16 %v2034, %v2030
        %v2711 = vpack.c.b16 %v2035, %v2031
        %v2712 = vpack.c.b16 %v2036, %v2032
        %v2713 = vpack.c.b16 %v2037, %v2033
        %v2714 = vpack.c.b16 %v2042, %v2038
        %v2715 = vpack.c.b16 %v2043, %v2039
        %v2716 = vpack.c.b16 %v2044, %v2040
        %v2717 = vpack.c.b16 %v2045, %v2041
        %v2718 = vpack.c.b16 %v2050, %v2046
        %v2719 = vpack.c.b16 %v2051, %v2047
        %v2720 = vpack.c.b16 %v2052, %v2048
        %v2721 = vpack.c.b16 %v2053, %v2049
        %v2722 = vpack.c.b16 %v2058, %v2054
        %v2723 = vpack.c.b16 %v2059, %v2055
        %v2724 = vpack.c.b16 %v2060, %v2056
        %v2725 = vpack.c.b16 %v2061, %v2057
        %v2726 = vpack.c.b16 %v2066, %v2062
        %v2727 = vpack.c.b16 %v2067, %v2063
        %v2728 = vpack.c.b16 %v2068, %v2064
        %v2729 = vpack.c.b16 %v2069, %v2065
        %v2730 = vpack.c.b16 %v2074, %v2070
        %v2731 = vpack.c.b16 %v2075, %v2071
        %v2732 = vpack.c.b16 %v2076, %v2072
        %v2733 = vpack.c.b16 %v2077, %v2073
        %v2734 = vpack.c.b16 %v2082, %v2078
        %v2735 = vpack.c.b16 %v2083, %v2079
        %v2736 = vpack.c.b16 %v2084, %v2080
        %v2737 = vpack.c.b16 %v2085, %v2081
        %v2738 = vpack.c.b16 %v2090, %v2086
        %v2739 = vpack.c.b16 %v2091, %v2087
        %v2740 = vpack.c.b16 %v2092, %v2088
        %v2741 = vpack.c.b16 %v2093, %v2089
        %v2742 = vpack.c.b16 %v2098, %v2094
        %v2743 = vpack.c.b16 %v2099, %v2095
        %v2744 = vpack.c.b16 %v2100, %v2096
        %v2745 = vpack.c.b16 %v2101, %v2097
        %v2746 = vpack.c.b16 %v2106, %v2102
        %v2747 = vpack.c.b16 %v2107, %v2103
        %v2748 = vpack.c.b16 %v2108, %v2104
        %v2749 = vpack.c.b16 %v2109, %v2105
        %v2750 = vpack.c.b16 %v2114, %v2110
        %v2751 = vpack.c.b16 %v2115, %v2111
        %v2752 = vpack.c.b16 %v2116, %v2112
        %v2753 = vpack.c.b16 %v2117, %v2113
        %v2754 = vpack.c.b16 %v2122, %v2118
        %v2755 = vpack.c.b16 %v2123, %v2119
        %v2756 = vpack.c.b16 %v2124, %v2120
        %v2757 = vpack.c.b16 %v2125, %v2121
        %v2758 = vpack.c.b16 %v2130, %v2126
        %v2759 = vpack.c.b16 %v2131, %v2127
        %v2760 = vpack.c.b16 %v2132, %v2128
        %v2761 = vpack.c.b16 %v2133, %v2129
        %v2762 = vpack.c.b16 %v2138, %v2134
        %v2763 = vpack.c.b16 %v2139, %v2135
        %v2764 = vpack.c.b16 %v2140, %v2136
        %v2765 = vpack.c.b16 %v2141, %v2137
        %v2766 = vpack.c.b16 %v2146, %v2142
        %v2767 = vpack.c.b16 %v2147, %v2143
        %v2768 = vpack.c.b16 %v2148, %v2144
        %v2769 = vpack.c.b16 %v2149, %v2145
        %v2770 = vpack.c.b16 %v2154, %v2150
        %v2771 = vpack.c.b16 %v2155, %v2151
        %v2772 = vpack.c.b16 %v2156, %v2152
        %v2773 = vpack.c.b16 %v2157, %v2153
        %v2774 = vpack.c.b16 %v2162, %v2158
        %v2775 = vpack.c.b16 %v2163, %v2159
        %v2776 = vpack.c.b16 %v2164, %v2160
        %v2777 = vpack.c.b16 %v2165, %v2161
        %v2778 = vpack.c.b16 %v2170, %v2166
        %v2779 = vpack.c.b16 %v2171, %v2167
        %v2780 = vpack.c.b16 %v2172, %v2168
        %v2781 = vpack.c.b16 %v2173, %v2169
        %v2782 = vpack.c.b16 %v2178, %v2174
        %v2783 = vpack.c.b16 %v2179, %v2175
        %v2784 = vpack.c.b16 %v2180, %v2176
        %v2785 = vpack.c.b16 %v2181, %v2177
        %v2786 = vpack.c.b16 %v2186, %v2182
        %v2787 = vpack.c.b16 %v2187, %v2183
        %v2788 = vpack.c.b16 %v2188, %v2184
        %v2789 = vpack.c.b16 %v2189, %v2185
        %v2790 = vpack.c.b16 %v2194, %v2190
        %v2791 = vpack.c.b16 %v2195, %v2191
        %v2792 = vpack.c.b16 %v2196, %v2192
        %v2793 = vpack.c.b16 %v2197, %v2193
        %v2794 = vpack.c.b16 %v2202, %v2198
        %v2795 = vpack.c.b16 %v2203, %v2199
        %v2796 = vpack.c.b16 %v2204, %v2200
        %v2797 = vpack.c.b16 %v2205, %v2201
        %v2798 = vpack.c.b16 %v2210, %v2206
        %v2799 = vpack.c.b16 %v2211, %v2207
        %v2800 = vpack.c.b16 %v2212, %v2208
        %v2801 = vpack.c.b16 %v2213, %v2209
        %v2802 = vpack.c.b16 %v2218, %v2214
        %v2803 = vpack.c.b16 %v2219, %v2215
        %v2804 = vpack.c.b16 %v2220, %v2216
        %v2805 = vpack.c.b16 %v2221, %v2217
        %v2806 = vpack.c.b16 %v2226, %v2222
        %v2807 = vpack.c.b16 %v2227, %v2223
        %v2808 = vpack.c.b16 %v2228, %v2224
        %v2809 = vpack.c.b16 %v2229, %v2225
        %v2810 = vpack.c.b16 %v2234, %v2230
        %v2811 = vpack.c.b16 %v2235, %v2231
        %v2812 = vpack.c.b16 %v2236, %v2232
        %v2813 = vpack.c.b16 %v2237, %v2233
        %v2814 = vpack.c.b16 %v2242, %v2238
        %v2815 = vpack.c.b16 %v2243, %v2239
        %v2816 = vpack.c.b16 %v2244, %v2240
        %v2817 = vpack.c.b16 %v2245, %v2241
        %v2818 = vpack.c.b16 %v2250, %v2246
        %v2819 = vpack.c.b16 %v2251, %v2247
        %v2820 = vpack.c.b16 %v2252, %v2248
        %v2821 = vpack.c.b16 %v2253, %v2249
        %v2822 = vpack.c.b16 %v2258, %v2254
        %v2823 = vpack.c.b16 %v2259, %v2255
        %v2824 = vpack.c.b16 %v2260, %v2256
        %v2825 = vpack.c.b16 %v2261, %v2257
        %v2826 = vpack.c.b16 %v2266, %v2262
        %v2827 = vpack.c.b16 %v2267, %v2263
        %v2828 = vpack.c.b16 %v2268, %v2264
        %v2829 = vpack.c.b16 %v2269, %v2265
        %v2830 = vpack.c.b16 %v2274, %v2270
        %v2831 = vpack.c.b16 %v2275, %v2271
        %v2832 = vpack.c.b16 %v2276, %v2272
        %v2833 = vpack.c.b16 %v2277, %v2273
        %v2834 = vpack.c.b16 %v2282, %v2278
        %v2835 = vpack.c.b16 %v2283, %v2279
        %v2836 = vpack.c.b16 %v2284, %v2280
        %v2837 = vpack.c.b16 %v2285, %v2281
        %v2838 = vpack.c.b16 %v2290, %v2286
        %v2839 = vpack.c.b16 %v2291, %v2287
        %v2840 = vpack.c.b16 %v2292, %v2288
        %v2841 = vpack.c.b16 %v2293, %v2289
        %v2842 = vpack.c.b16 %v2298, %v2294
        %v2843 = vpack.c.b16 %v2299, %v2295
        %v2844 = vpack.c.b16 %v2300, %v2296
        %v2845 = vpack.c.b16 %v2301, %v2297
        %v2846 = vpack.c.b16 %v2306, %v2302
        %v2847 = vpack.c.b16 %v2307, %v2303
        %v2848 = vpack.c.b16 %v2308, %v2304
        %v2849 = vpack.c.b16 %v2309, %v2305
        %v2850 = vpack.c.b16 %v2314, %v2310
        %v2851 = vpack.c.b16 %v2315, %v2311
        %v2852 = vpack.c.b16 %v2316, %v2312
        %v2853 = vpack.c.b16 %v2317, %v2313
        %v2854 = vpack.c.b16 %v2322, %v2318
        %v2855 = vpack.c.b16 %v2323, %v2319
        %v2856 = vpack.c.b16 %v2324, %v2320
        %v2857 = vpack.c.b16 %v2325, %v2321
        %v2858 = vpack.c.b16 %v2330, %v2326
        %v2859 = vpack.c.b16 %v2331, %v2327
        %v2860 = vpack.c.b16 %v2332, %v2328
        %v2861 = vpack.c.b16 %v2333, %v2329
        %v2862 = vpack.c.b16 %v2338, %v2334
        %v2863 = vpack.c.b16 %v2339, %v2335
        %v2864 = vpack.c.b16 %v2340, %v2336
        %v2865 = vpack.c.b16 %v2341, %v2337
        %v2866 = vpack.c.b16 %v2346, %v2342
        %v2867 = vpack.c.b16 %v2347, %v2343
        %v2868 = vpack.c.b16 %v2348, %v2344
        %v2869 = vpack.c.b16 %v2349, %v2345
        %v2870 = vpack.c.b16 %v2354, %v2350
        %v2871 = vpack.c.b16 %v2355, %v2351
        %v2872 = vpack.c.b16 %v2356, %v2352
        %v2873 = vpack.c.b16 %v2357, %v2353
        %v2874 = vpack.c.b16 %v2362, %v2358
        %v2875 = vpack.c.b16 %v2363, %v2359
        %v2876 = vpack.c.b16 %v2364, %v2360
        %v2877 = vpack.c.b16 %v2365, %v2361
        %3390 = vmatprep.subr.bf16.mxu0 %v2395
        %3391 = vmatpush1.bf16.msra.mxu0 %v2394
        %3392 = vmatprep.subr.bf16.mxu0 %v2391
        %3393 = vmatpush1.bf16.msra.mxu0 %v2390
        %3394 = vmatprep.subr.bf16.mxu0 %v2387
        %3395 = vmatpush1.bf16.msra.mxu0 %v2386
        %3396 = vmatprep.subr.bf16.mxu0 %v2383
        %3397 = vmatpush1.bf16.msra.mxu0 %v2382
        %3398 = vmatprep.subr.bf16.mxu0 %v2379
        %3399 = vmatpush1.bf16.msra.mxu0 %v2378
        %3400 = vmatprep.subr.bf16.mxu0 %v2375
        %3401 = vmatpush1.bf16.msra.mxu0 %v2374
        %3402 = vmatprep.subr.bf16.mxu0 %v2371
        %3403 = vmatpush1.bf16.msra.mxu0 %v2370
        %3404 = vmatprep.subr.bf16.mxu0 %v2367
        %3405 = vmatpush1.bf16.msra.mxu0 %v2366
        %3406 = vmatprep.subr.bf16.mxu0 %v2427
        %3407 = vmatpush2.bf16.msra.mxu0 %v2426
        %3408 = vmatprep.subr.bf16.mxu0 %v2423
        %3409 = vmatpush2.bf16.msra.mxu0 %v2422
        %3410 = vmatprep.subr.bf16.mxu0 %v2419
        %3411 = vmatpush2.bf16.msra.mxu0 %v2418
        %3412 = vmatprep.subr.bf16.mxu0 %v2415
        %3413 = vmatpush2.bf16.msra.mxu0 %v2414
        %3414 = vmatprep.subr.bf16.mxu0 %v2411
        %3415 = vmatpush2.bf16.msra.mxu0 %v2410
        %3416 = vmatprep.subr.bf16.mxu0 %v2407
        %3417 = vmatpush2.bf16.msra.mxu0 %v2406
        %3418 = vmatprep.subr.bf16.mxu0 %v2403
        %3419 = vmatpush2.bf16.msra.mxu0 %v2402
        %3420 = vmatprep.subr.bf16.mxu0 %v2399
        %3421 = vmatpush2.bf16.msra.mxu0 %v2398
        %3422 = vmatprep.mubr.bf16.mxu0 %v799
        %3423 = vmatmul.mubr.bf16.gmra.mxu0 %v798
        %v3424 = vpop.f32.mrf.mxu0
        %v3425 = vadd.f32 %v757, %v3424
        %v3426 = vpop.f32.mrf.mxu0
        %v3427 = vadd.f32 %v761, %v3426
        %v3428 = vpop.f32.mrf.mxu0
        %v3429 = vpop.f32.mrf.mxu0
        %3430 = vdwg.mxu0
        %3431 = vmatprep.subr.bf16.mxu0 %v2459
        %3432 = vmatpush1.bf16.msra.mxu0 %v2458
        %3433 = vmatprep.subr.bf16.mxu0 %v2455
        %3434 = vmatpush1.bf16.msra.mxu0 %v2454
        %3435 = vmatprep.subr.bf16.mxu0 %v2451
        %3436 = vmatpush1.bf16.msra.mxu0 %v2450
        %3437 = vmatprep.subr.bf16.mxu0 %v2447
        %3438 = vmatpush1.bf16.msra.mxu0 %v2446
        %3439 = vmatprep.subr.bf16.mxu0 %v2443
        %3440 = vmatpush1.bf16.msra.mxu0 %v2442
        %3441 = vmatprep.subr.bf16.mxu0 %v2439
        %3442 = vmatpush1.bf16.msra.mxu0 %v2438
        %3443 = vmatprep.subr.bf16.mxu0 %v2435
        %3444 = vmatpush1.bf16.msra.mxu0 %v2434
        %3445 = vmatprep.subr.bf16.mxu0 %v2431
        %3446 = vmatpush1.bf16.msra.mxu0 %v2430
        %3447 = vmatprep.subr.bf16.mxu0 %v2491
        %3448 = vmatpush2.bf16.msra.mxu0 %v2490
        %3449 = vmatprep.subr.bf16.mxu0 %v2487
        %3450 = vmatpush2.bf16.msra.mxu0 %v2486
        %3451 = vmatprep.subr.bf16.mxu0 %v2483
        %3452 = vmatpush2.bf16.msra.mxu0 %v2482
        %3453 = vmatprep.subr.bf16.mxu0 %v2479
        %3454 = vmatpush2.bf16.msra.mxu0 %v2478
        %3455 = vmatprep.subr.bf16.mxu0 %v2475
        %3456 = vmatpush2.bf16.msra.mxu0 %v2474
        %3457 = vmatprep.subr.bf16.mxu0 %v2471
        %3458 = vmatpush2.bf16.msra.mxu0 %v2470
        %3459 = vmatprep.subr.bf16.mxu0 %v2467
        %3460 = vmatpush2.bf16.msra.mxu0 %v2466
        %3461 = vmatprep.subr.bf16.mxu0 %v2463
        %3462 = vmatpush2.bf16.msra.mxu0 %v2462
        %3463 = vmatprep.mubr.bf16.mxu0 %v801
        %3464 = vmatmul.mubr.bf16.gmra.mxu0 %v800
        %v3465 = vpop.f32.mrf.mxu0
        %v3466 = vadd.f32 %v3425, %v3465
        %v3467 = vpop.f32.mrf.mxu0
        %v3468 = vadd.f32 %v3427, %v3467
        %v3469 = vpop.f32.mrf.mxu0
        %v3470 = vpop.f32.mrf.mxu0
        %3471 = vdwg.mxu0
        %3472 = vmatprep.subr.bf16.mxu0 %v2523
        %3473 = vmatpush1.bf16.msra.mxu0 %v2522
        %3474 = vmatprep.subr.bf16.mxu0 %v2519
        %3475 = vmatpush1.bf16.msra.mxu0 %v2518
        %3476 = vmatprep.subr.bf16.mxu0 %v2515
        %3477 = vmatpush1.bf16.msra.mxu0 %v2514
        %3478 = vmatprep.subr.bf16.mxu0 %v2511
        %3479 = vmatpush1.bf16.msra.mxu0 %v2510
        %3480 = vmatprep.subr.bf16.mxu0 %v2507
        %3481 = vmatpush1.bf16.msra.mxu0 %v2506
        %3482 = vmatprep.subr.bf16.mxu0 %v2503
        %3483 = vmatpush1.bf16.msra.mxu0 %v2502
        %3484 = vmatprep.subr.bf16.mxu0 %v2499
        %3485 = vmatpush1.bf16.msra.mxu0 %v2498
        %3486 = vmatprep.subr.bf16.mxu0 %v2495
        %3487 = vmatpush1.bf16.msra.mxu0 %v2494
        %3488 = vmatprep.subr.bf16.mxu0 %v2555
        %3489 = vmatpush2.bf16.msra.mxu0 %v2554
        %3490 = vmatprep.subr.bf16.mxu0 %v2551
        %3491 = vmatpush2.bf16.msra.mxu0 %v2550
        %3492 = vmatprep.subr.bf16.mxu0 %v2547
        %3493 = vmatpush2.bf16.msra.mxu0 %v2546
        %3494 = vmatprep.subr.bf16.mxu0 %v2543
        %3495 = vmatpush2.bf16.msra.mxu0 %v2542
        %3496 = vmatprep.subr.bf16.mxu0 %v2539
        %3497 = vmatpush2.bf16.msra.mxu0 %v2538
        %3498 = vmatprep.subr.bf16.mxu0 %v2535
        %3499 = vmatpush2.bf16.msra.mxu0 %v2534
        %3500 = vmatprep.subr.bf16.mxu0 %v2531
        %3501 = vmatpush2.bf16.msra.mxu0 %v2530
        %3502 = vmatprep.subr.bf16.mxu0 %v2527
        %3503 = vmatpush2.bf16.msra.mxu0 %v2526
        %3504 = vmatprep.mubr.bf16.mxu0 %v803
        %3505 = vmatmul.mubr.bf16.gmra.mxu0 %v802
        %v3506 = vpop.f32.mrf.mxu0
        %v3507 = vadd.f32 %v3466, %v3506
        %v3508 = vpop.f32.mrf.mxu0
        %v3509 = vadd.f32 %v3468, %v3508
        %v3510 = vpop.f32.mrf.mxu0
        %v3511 = vpop.f32.mrf.mxu0
        %3512 = vdwg.mxu0
        %3513 = vmatprep.subr.bf16.mxu0 %v2587
        %3514 = vmatpush1.bf16.msra.mxu0 %v2586
        %3515 = vmatprep.subr.bf16.mxu0 %v2583
        %3516 = vmatpush1.bf16.msra.mxu0 %v2582
        %3517 = vmatprep.subr.bf16.mxu0 %v2579
        %3518 = vmatpush1.bf16.msra.mxu0 %v2578
        %3519 = vmatprep.subr.bf16.mxu0 %v2575
        %3520 = vmatpush1.bf16.msra.mxu0 %v2574
        %3521 = vmatprep.subr.bf16.mxu0 %v2571
        %3522 = vmatpush1.bf16.msra.mxu0 %v2570
        %3523 = vmatprep.subr.bf16.mxu0 %v2567
        %3524 = vmatpush1.bf16.msra.mxu0 %v2566
        %3525 = vmatprep.subr.bf16.mxu0 %v2563
        %3526 = vmatpush1.bf16.msra.mxu0 %v2562
        %3527 = vmatprep.subr.bf16.mxu0 %v2559
        %3528 = vmatpush1.bf16.msra.mxu0 %v2558
        %3529 = vmatprep.subr.bf16.mxu0 %v2619
        %3530 = vmatpush2.bf16.msra.mxu0 %v2618
        %3531 = vmatprep.subr.bf16.mxu0 %v2615
        %3532 = vmatpush2.bf16.msra.mxu0 %v2614
        %3533 = vmatprep.subr.bf16.mxu0 %v2611
        %3534 = vmatpush2.bf16.msra.mxu0 %v2610
        %3535 = vmatprep.subr.bf16.mxu0 %v2607
        %3536 = vmatpush2.bf16.msra.mxu0 %v2606
        %3537 = vmatprep.subr.bf16.mxu0 %v2603
        %3538 = vmatpush2.bf16.msra.mxu0 %v2602
        %3539 = vmatprep.subr.bf16.mxu0 %v2599
        %3540 = vmatpush2.bf16.msra.mxu0 %v2598
        %3541 = vmatprep.subr.bf16.mxu0 %v2595
        %3542 = vmatpush2.bf16.msra.mxu0 %v2594
        %3543 = vmatprep.subr.bf16.mxu0 %v2591
        %3544 = vmatpush2.bf16.msra.mxu0 %v2590
        %3545 = vmatprep.mubr.bf16.mxu0 %v805
        %3546 = vmatmul.mubr.bf16.gmra.mxu0 %v804
        %v3547 = vpop.f32.mrf.mxu0
        %v3548 = vadd.f32 %v3507, %v3547
        %v3549 = vpop.f32.mrf.mxu0
        %v3550 = vadd.f32 %v3509, %v3549
        %v3551 = vpop.f32.mrf.mxu0
        %v3552 = vpop.f32.mrf.mxu0
        %3553 = vdwg.mxu0
        %3554 = vmatprep.subr.bf16.mxu0 %v2651
        %3555 = vmatpush1.bf16.msra.mxu0 %v2650
        %3556 = vmatprep.subr.bf16.mxu0 %v2647
        %3557 = vmatpush1.bf16.msra.mxu0 %v2646
        %3558 = vmatprep.subr.bf16.mxu0 %v2643
        %3559 = vmatpush1.bf16.msra.mxu0 %v2642
        %3560 = vmatprep.subr.bf16.mxu0 %v2639
        %3561 = vmatpush1.bf16.msra.mxu0 %v2638
        %3562 = vmatprep.subr.bf16.mxu0 %v2635
        %3563 = vmatpush1.bf16.msra.mxu0 %v2634
        %3564 = vmatprep.subr.bf16.mxu0 %v2631
        %3565 = vmatpush1.bf16.msra.mxu0 %v2630
        %3566 = vmatprep.subr.bf16.mxu0 %v2627
        %3567 = vmatpush1.bf16.msra.mxu0 %v2626
        %3568 = vmatprep.subr.bf16.mxu0 %v2623
        %3569 = vmatpush1.bf16.msra.mxu0 %v2622
        %3570 = vmatprep.subr.bf16.mxu0 %v2683
        %3571 = vmatpush2.bf16.msra.mxu0 %v2682
        %3572 = vmatprep.subr.bf16.mxu0 %v2679
        %3573 = vmatpush2.bf16.msra.mxu0 %v2678
        %3574 = vmatprep.subr.bf16.mxu0 %v2675
        %3575 = vmatpush2.bf16.msra.mxu0 %v2674
        %3576 = vmatprep.subr.bf16.mxu0 %v2671
        %3577 = vmatpush2.bf16.msra.mxu0 %v2670
        %3578 = vmatprep.subr.bf16.mxu0 %v2667
        %3579 = vmatpush2.bf16.msra.mxu0 %v2666
        %3580 = vmatprep.subr.bf16.mxu0 %v2663
        %3581 = vmatpush2.bf16.msra.mxu0 %v2662
        %3582 = vmatprep.subr.bf16.mxu0 %v2659
        %3583 = vmatpush2.bf16.msra.mxu0 %v2658
        %3584 = vmatprep.subr.bf16.mxu0 %v2655
        %3585 = vmatpush2.bf16.msra.mxu0 %v2654
        %3586 = vmatprep.mubr.bf16.mxu0 %v807
        %3587 = vmatmul.mubr.bf16.gmra.mxu0 %v806
        %v3588 = vpop.f32.mrf.mxu0
        %v3589 = vadd.f32 %v3548, %v3588
        %v3590 = vpop.f32.mrf.mxu0
        %v3591 = vadd.f32 %v3550, %v3590
        %v3592 = vpop.f32.mrf.mxu0
        %v3593 = vpop.f32.mrf.mxu0
        %3594 = vdwg.mxu0
        %3595 = vmatprep.subr.bf16.mxu0 %v2715
        %3596 = vmatpush1.bf16.msra.mxu0 %v2714
        %3597 = vmatprep.subr.bf16.mxu0 %v2711
        %3598 = vmatpush1.bf16.msra.mxu0 %v2710
        %3599 = vmatprep.subr.bf16.mxu0 %v2707
        %3600 = vmatpush1.bf16.msra.mxu0 %v2706
        %3601 = vmatprep.subr.bf16.mxu0 %v2703
        %3602 = vmatpush1.bf16.msra.mxu0 %v2702
        %3603 = vmatprep.subr.bf16.mxu0 %v2699
        %3604 = vmatpush1.bf16.msra.mxu0 %v2698
        %3605 = vmatprep.subr.bf16.mxu0 %v2695
        %3606 = vmatpush1.bf16.msra.mxu0 %v2694
        %3607 = vmatprep.subr.bf16.mxu0 %v2691
        %3608 = vmatpush1.bf16.msra.mxu0 %v2690
        %3609 = vmatprep.subr.bf16.mxu0 %v2687
        %3610 = vmatpush1.bf16.msra.mxu0 %v2686
        %3611 = vmatprep.subr.bf16.mxu0 %v2747
        %3612 = vmatpush2.bf16.msra.mxu0 %v2746
        %3613 = vmatprep.subr.bf16.mxu0 %v2743
        %3614 = vmatpush2.bf16.msra.mxu0 %v2742
        %3615 = vmatprep.subr.bf16.mxu0 %v2739
        %3616 = vmatpush2.bf16.msra.mxu0 %v2738
        %3617 = vmatprep.subr.bf16.mxu0 %v2735
        %3618 = vmatpush2.bf16.msra.mxu0 %v2734
        %3619 = vmatprep.subr.bf16.mxu0 %v2731
        %3620 = vmatpush2.bf16.msra.mxu0 %v2730
        %3621 = vmatprep.subr.bf16.mxu0 %v2727
        %3622 = vmatpush2.bf16.msra.mxu0 %v2726
        %3623 = vmatprep.subr.bf16.mxu0 %v2723
        %3624 = vmatpush2.bf16.msra.mxu0 %v2722
        %3625 = vmatprep.subr.bf16.mxu0 %v2719
        %3626 = vmatpush2.bf16.msra.mxu0 %v2718
        %3627 = vmatprep.mubr.bf16.mxu0 %v809
        %3628 = vmatmul.mubr.bf16.gmra.mxu0 %v808
        %v3629 = vpop.f32.mrf.mxu0
        %v3630 = vadd.f32 %v3589, %v3629
        %v3631 = vpop.f32.mrf.mxu0
        %v3632 = vadd.f32 %v3591, %v3631
        %v3633 = vpop.f32.mrf.mxu0
        %v3634 = vpop.f32.mrf.mxu0
        %3635 = vdwg.mxu0
        %3636 = vmatprep.subr.bf16.mxu0 %v2779
        %3637 = vmatpush1.bf16.msra.mxu0 %v2778
        %3638 = vmatprep.subr.bf16.mxu0 %v2775
        %3639 = vmatpush1.bf16.msra.mxu0 %v2774
        %3640 = vmatprep.subr.bf16.mxu0 %v2771
        %3641 = vmatpush1.bf16.msra.mxu0 %v2770
        %3642 = vmatprep.subr.bf16.mxu0 %v2767
        %3643 = vmatpush1.bf16.msra.mxu0 %v2766
        %3644 = vmatprep.subr.bf16.mxu0 %v2763
        %3645 = vmatpush1.bf16.msra.mxu0 %v2762
        %3646 = vmatprep.subr.bf16.mxu0 %v2759
        %3647 = vmatpush1.bf16.msra.mxu0 %v2758
        %3648 = vmatprep.subr.bf16.mxu0 %v2755
        %3649 = vmatpush1.bf16.msra.mxu0 %v2754
        %3650 = vmatprep.subr.bf16.mxu0 %v2751
        %3651 = vmatpush1.bf16.msra.mxu0 %v2750
        %3652 = vmatprep.subr.bf16.mxu0 %v2811
        %3653 = vmatpush2.bf16.msra.mxu0 %v2810
        %3654 = vmatprep.subr.bf16.mxu0 %v2807
        %3655 = vmatpush2.bf16.msra.mxu0 %v2806
        %3656 = vmatprep.subr.bf16.mxu0 %v2803
        %3657 = vmatpush2.bf16.msra.mxu0 %v2802
        %3658 = vmatprep.subr.bf16.mxu0 %v2799
        %3659 = vmatpush2.bf16.msra.mxu0 %v2798
        %3660 = vmatprep.subr.bf16.mxu0 %v2795
        %3661 = vmatpush2.bf16.msra.mxu0 %v2794
        %3662 = vmatprep.subr.bf16.mxu0 %v2791
        %3663 = vmatpush2.bf16.msra.mxu0 %v2790
        %3664 = vmatprep.subr.bf16.mxu0 %v2787
        %3665 = vmatpush2.bf16.msra.mxu0 %v2786
        %3666 = vmatprep.subr.bf16.mxu0 %v2783
        %3667 = vmatpush2.bf16.msra.mxu0 %v2782
        %3668 = vmatprep.mubr.bf16.mxu0 %v811
        %3669 = vmatmul.mubr.bf16.gmra.mxu0 %v810
        %v3670 = vpop.f32.mrf.mxu0
        %v3671 = vadd.f32 %v3630, %v3670
        %v3672 = vpop.f32.mrf.mxu0
        %v3673 = vadd.f32 %v3632, %v3672
        %v3674 = vpop.f32.mrf.mxu0
        %v3675 = vpop.f32.mrf.mxu0
        %3676 = vdwg.mxu0
        %3677 = vmatprep.subr.bf16.mxu0 %v2843
        %3678 = vmatpush1.bf16.msra.mxu0 %v2842
        %3679 = vmatprep.subr.bf16.mxu0 %v2839
        %3680 = vmatpush1.bf16.msra.mxu0 %v2838
        %3681 = vmatprep.subr.bf16.mxu0 %v2835
        %3682 = vmatpush1.bf16.msra.mxu0 %v2834
        %3683 = vmatprep.subr.bf16.mxu0 %v2831
        %3684 = vmatpush1.bf16.msra.mxu0 %v2830
        %3685 = vmatprep.subr.bf16.mxu0 %v2827
        %3686 = vmatpush1.bf16.msra.mxu0 %v2826
        %3687 = vmatprep.subr.bf16.mxu0 %v2823
        %3688 = vmatpush1.bf16.msra.mxu0 %v2822
        %3689 = vmatprep.subr.bf16.mxu0 %v2819
        %3690 = vmatpush1.bf16.msra.mxu0 %v2818
        %3691 = vmatprep.subr.bf16.mxu0 %v2815
        %3692 = vmatpush1.bf16.msra.mxu0 %v2814
        %3693 = vmatprep.subr.bf16.mxu0 %v2875
        %3694 = vmatpush2.bf16.msra.mxu0 %v2874
        %3695 = vmatprep.subr.bf16.mxu0 %v2871
        %3696 = vmatpush2.bf16.msra.mxu0 %v2870
        %3697 = vmatprep.subr.bf16.mxu0 %v2867
        %3698 = vmatpush2.bf16.msra.mxu0 %v2866
        %3699 = vmatprep.subr.bf16.mxu0 %v2863
        %3700 = vmatpush2.bf16.msra.mxu0 %v2862
        %3701 = vmatprep.subr.bf16.mxu0 %v2859
        %3702 = vmatpush2.bf16.msra.mxu0 %v2858
        %3703 = vmatprep.subr.bf16.mxu0 %v2855
        %3704 = vmatpush2.bf16.msra.mxu0 %v2854
        %3705 = vmatprep.subr.bf16.mxu0 %v2851
        %3706 = vmatpush2.bf16.msra.mxu0 %v2850
        %3707 = vmatprep.subr.bf16.mxu0 %v2847
        %3708 = vmatpush2.bf16.msra.mxu0 %v2846
        %3709 = vmatprep.mubr.bf16.mxu0 %v813
        %3710 = vmatmul.mubr.bf16.gmra.mxu0 %v812
        %v3711 = vpop.f32.mrf.mxu0
        %v3712 = vadd.f32 %v3671, %v3711
        %v3713 = vpop.f32.mrf.mxu0
        %v3714 = vadd.f32 %v3673, %v3713
        %v3715 = vpop.f32.mrf.mxu0
        %v3716 = vpop.f32.mrf.mxu0
        %3717 = vdwg.mxu0
        %3718 = vmatprep.subr.bf16.mxu0 %v2397
        %3719 = vmatpush1.bf16.msra.mxu0 %v2396
        %3720 = vmatprep.subr.bf16.mxu0 %v2393
        %3721 = vmatpush1.bf16.msra.mxu0 %v2392
        %3722 = vmatprep.subr.bf16.mxu0 %v2389
        %3723 = vmatpush1.bf16.msra.mxu0 %v2388
        %3724 = vmatprep.subr.bf16.mxu0 %v2385
        %3725 = vmatpush1.bf16.msra.mxu0 %v2384
        %3726 = vmatprep.subr.bf16.mxu0 %v2381
        %3727 = vmatpush1.bf16.msra.mxu0 %v2380
        %3728 = vmatprep.subr.bf16.mxu0 %v2377
        %3729 = vmatpush1.bf16.msra.mxu0 %v2376
        %3730 = vmatprep.subr.bf16.mxu0 %v2373
        %3731 = vmatpush1.bf16.msra.mxu0 %v2372
        %3732 = vmatprep.subr.bf16.mxu0 %v2369
        %3733 = vmatpush1.bf16.msra.mxu0 %v2368
        %3734 = vmatprep.subr.bf16.mxu0 %v2429
        %3735 = vmatpush2.bf16.msra.mxu0 %v2428
        %3736 = vmatprep.subr.bf16.mxu0 %v2425
        %3737 = vmatpush2.bf16.msra.mxu0 %v2424
        %3738 = vmatprep.subr.bf16.mxu0 %v2421
        %3739 = vmatpush2.bf16.msra.mxu0 %v2420
        %3740 = vmatprep.subr.bf16.mxu0 %v2417
        %3741 = vmatpush2.bf16.msra.mxu0 %v2416
        %3742 = vmatprep.subr.bf16.mxu0 %v2413
        %3743 = vmatpush2.bf16.msra.mxu0 %v2412
        %3744 = vmatprep.subr.bf16.mxu0 %v2409
        %3745 = vmatpush2.bf16.msra.mxu0 %v2408
        %3746 = vmatprep.subr.bf16.mxu0 %v2405
        %3747 = vmatpush2.bf16.msra.mxu0 %v2404
        %3748 = vmatprep.subr.bf16.mxu0 %v2401
        %3749 = vmatpush2.bf16.msra.mxu0 %v2400
        %3750 = vmatprep.mubr.bf16.mxu0 %v799
        %3751 = vmatmul.mubr.bf16.gmra.mxu0 %v798
        %v3752 = vpop.f32.mrf.mxu0
        %v3753 = vadd.f32 %v765, %v3752
        %v3754 = vpop.f32.mrf.mxu0
        %v3755 = vadd.f32 %v769, %v3754
        %v3756 = vpop.f32.mrf.mxu0
        %v3757 = vpop.f32.mrf.mxu0
        %3758 = vdwg.mxu0
        %3759 = vmatprep.subr.bf16.mxu0 %v2461
        %3760 = vmatpush1.bf16.msra.mxu0 %v2460
        %3761 = vmatprep.subr.bf16.mxu0 %v2457
        %3762 = vmatpush1.bf16.msra.mxu0 %v2456
        %3763 = vmatprep.subr.bf16.mxu0 %v2453
        %3764 = vmatpush1.bf16.msra.mxu0 %v2452
        %3765 = vmatprep.subr.bf16.mxu0 %v2449
        %3766 = vmatpush1.bf16.msra.mxu0 %v2448
        %3767 = vmatprep.subr.bf16.mxu0 %v2445
        %3768 = vmatpush1.bf16.msra.mxu0 %v2444
        %3769 = vmatprep.subr.bf16.mxu0 %v2441
        %3770 = vmatpush1.bf16.msra.mxu0 %v2440
        %3771 = vmatprep.subr.bf16.mxu0 %v2437
        %3772 = vmatpush1.bf16.msra.mxu0 %v2436
        %3773 = vmatprep.subr.bf16.mxu0 %v2433
        %3774 = vmatpush1.bf16.msra.mxu0 %v2432
        %3775 = vmatprep.subr.bf16.mxu0 %v2493
        %3776 = vmatpush2.bf16.msra.mxu0 %v2492
        %3777 = vmatprep.subr.bf16.mxu0 %v2489
        %3778 = vmatpush2.bf16.msra.mxu0 %v2488
        %3779 = vmatprep.subr.bf16.mxu0 %v2485
        %3780 = vmatpush2.bf16.msra.mxu0 %v2484
        %3781 = vmatprep.subr.bf16.mxu0 %v2481
        %3782 = vmatpush2.bf16.msra.mxu0 %v2480
        %3783 = vmatprep.subr.bf16.mxu0 %v2477
        %3784 = vmatpush2.bf16.msra.mxu0 %v2476
        %3785 = vmatprep.subr.bf16.mxu0 %v2473
        %3786 = vmatpush2.bf16.msra.mxu0 %v2472
        %3787 = vmatprep.subr.bf16.mxu0 %v2469
        %3788 = vmatpush2.bf16.msra.mxu0 %v2468
        %3789 = vmatprep.subr.bf16.mxu0 %v2465
        %3790 = vmatpush2.bf16.msra.mxu0 %v2464
        %3791 = vmatprep.mubr.bf16.mxu0 %v801
        %3792 = vmatmul.mubr.bf16.gmra.mxu0 %v800
        %v3793 = vpop.f32.mrf.mxu0
        %v3794 = vadd.f32 %v3753, %v3793
        %v3795 = vpop.f32.mrf.mxu0
        %v3796 = vadd.f32 %v3755, %v3795
        %v3797 = vpop.f32.mrf.mxu0
        %v3798 = vpop.f32.mrf.mxu0
        %3799 = vdwg.mxu0
        %3800 = vmatprep.subr.bf16.mxu0 %v2525
        %3801 = vmatpush1.bf16.msra.mxu0 %v2524
        %3802 = vmatprep.subr.bf16.mxu0 %v2521
        %3803 = vmatpush1.bf16.msra.mxu0 %v2520
        %3804 = vmatprep.subr.bf16.mxu0 %v2517
        %3805 = vmatpush1.bf16.msra.mxu0 %v2516
        %3806 = vmatprep.subr.bf16.mxu0 %v2513
        %3807 = vmatpush1.bf16.msra.mxu0 %v2512
        %3808 = vmatprep.subr.bf16.mxu0 %v2509
        %3809 = vmatpush1.bf16.msra.mxu0 %v2508
        %3810 = vmatprep.subr.bf16.mxu0 %v2505
        %3811 = vmatpush1.bf16.msra.mxu0 %v2504
        %3812 = vmatprep.subr.bf16.mxu0 %v2501
        %3813 = vmatpush1.bf16.msra.mxu0 %v2500
        %3814 = vmatprep.subr.bf16.mxu0 %v2497
        %3815 = vmatpush1.bf16.msra.mxu0 %v2496
        %3816 = vmatprep.subr.bf16.mxu0 %v2557
        %3817 = vmatpush2.bf16.msra.mxu0 %v2556
        %3818 = vmatprep.subr.bf16.mxu0 %v2553
        %3819 = vmatpush2.bf16.msra.mxu0 %v2552
        %3820 = vmatprep.subr.bf16.mxu0 %v2549
        %3821 = vmatpush2.bf16.msra.mxu0 %v2548
        %3822 = vmatprep.subr.bf16.mxu0 %v2545
        %3823 = vmatpush2.bf16.msra.mxu0 %v2544
        %3824 = vmatprep.subr.bf16.mxu0 %v2541
        %3825 = vmatpush2.bf16.msra.mxu0 %v2540
        %3826 = vmatprep.subr.bf16.mxu0 %v2537
        %3827 = vmatpush2.bf16.msra.mxu0 %v2536
        %3828 = vmatprep.subr.bf16.mxu0 %v2533
        %3829 = vmatpush2.bf16.msra.mxu0 %v2532
        %3830 = vmatprep.subr.bf16.mxu0 %v2529
        %3831 = vmatpush2.bf16.msra.mxu0 %v2528
        %3832 = vmatprep.mubr.bf16.mxu0 %v803
        %3833 = vmatmul.mubr.bf16.gmra.mxu0 %v802
        %v3834 = vpop.f32.mrf.mxu0
        %v3835 = vadd.f32 %v3794, %v3834
        %v3836 = vpop.f32.mrf.mxu0
        %v3837 = vadd.f32 %v3796, %v3836
        %v3838 = vpop.f32.mrf.mxu0
        %v3839 = vpop.f32.mrf.mxu0
        %3840 = vdwg.mxu0
        %3841 = vmatprep.subr.bf16.mxu0 %v2589
        %3842 = vmatpush1.bf16.msra.mxu0 %v2588
        %3843 = vmatprep.subr.bf16.mxu0 %v2585
        %3844 = vmatpush1.bf16.msra.mxu0 %v2584
        %3845 = vmatprep.subr.bf16.mxu0 %v2581
        %3846 = vmatpush1.bf16.msra.mxu0 %v2580
        %3847 = vmatprep.subr.bf16.mxu0 %v2577
        %3848 = vmatpush1.bf16.msra.mxu0 %v2576
        %3849 = vmatprep.subr.bf16.mxu0 %v2573
        %3850 = vmatpush1.bf16.msra.mxu0 %v2572
        %3851 = vmatprep.subr.bf16.mxu0 %v2569
        %3852 = vmatpush1.bf16.msra.mxu0 %v2568
        %3853 = vmatprep.subr.bf16.mxu0 %v2565
        %3854 = vmatpush1.bf16.msra.mxu0 %v2564
        %3855 = vmatprep.subr.bf16.mxu0 %v2561
        %3856 = vmatpush1.bf16.msra.mxu0 %v2560
        %3857 = vmatprep.subr.bf16.mxu0 %v2621
        %3858 = vmatpush2.bf16.msra.mxu0 %v2620
        %3859 = vmatprep.subr.bf16.mxu0 %v2617
        %3860 = vmatpush2.bf16.msra.mxu0 %v2616
        %3861 = vmatprep.subr.bf16.mxu0 %v2613
        %3862 = vmatpush2.bf16.msra.mxu0 %v2612
        %3863 = vmatprep.subr.bf16.mxu0 %v2609
        %3864 = vmatpush2.bf16.msra.mxu0 %v2608
        %3865 = vmatprep.subr.bf16.mxu0 %v2605
        %3866 = vmatpush2.bf16.msra.mxu0 %v2604
        %3867 = vmatprep.subr.bf16.mxu0 %v2601
        %3868 = vmatpush2.bf16.msra.mxu0 %v2600
        %3869 = vmatprep.subr.bf16.mxu0 %v2597
        %3870 = vmatpush2.bf16.msra.mxu0 %v2596
        %3871 = vmatprep.subr.bf16.mxu0 %v2593
        %3872 = vmatpush2.bf16.msra.mxu0 %v2592
        %3873 = vmatprep.mubr.bf16.mxu0 %v805
        %3874 = vmatmul.mubr.bf16.gmra.mxu0 %v804
        %v3875 = vpop.f32.mrf.mxu0
        %v3876 = vadd.f32 %v3835, %v3875
        %v3877 = vpop.f32.mrf.mxu0
        %v3878 = vadd.f32 %v3837, %v3877
        %v3879 = vpop.f32.mrf.mxu0
        %v3880 = vpop.f32.mrf.mxu0
        %3881 = vdwg.mxu0
        %3882 = vmatprep.subr.bf16.mxu0 %v2653
        %3883 = vmatpush1.bf16.msra.mxu0 %v2652
        %3884 = vmatprep.subr.bf16.mxu0 %v2649
        %3885 = vmatpush1.bf16.msra.mxu0 %v2648
        %3886 = vmatprep.subr.bf16.mxu0 %v2645
        %3887 = vmatpush1.bf16.msra.mxu0 %v2644
        %3888 = vmatprep.subr.bf16.mxu0 %v2641
        %3889 = vmatpush1.bf16.msra.mxu0 %v2640
        %3890 = vmatprep.subr.bf16.mxu0 %v2637
        %3891 = vmatpush1.bf16.msra.mxu0 %v2636
        %3892 = vmatprep.subr.bf16.mxu0 %v2633
        %3893 = vmatpush1.bf16.msra.mxu0 %v2632
        %3894 = vmatprep.subr.bf16.mxu0 %v2629
        %3895 = vmatpush1.bf16.msra.mxu0 %v2628
        %3896 = vmatprep.subr.bf16.mxu0 %v2625
        %3897 = vmatpush1.bf16.msra.mxu0 %v2624
        %3898 = vmatprep.subr.bf16.mxu0 %v2685
        %3899 = vmatpush2.bf16.msra.mxu0 %v2684
        %3900 = vmatprep.subr.bf16.mxu0 %v2681
        %3901 = vmatpush2.bf16.msra.mxu0 %v2680
        %3902 = vmatprep.subr.bf16.mxu0 %v2677
        %3903 = vmatpush2.bf16.msra.mxu0 %v2676
        %3904 = vmatprep.subr.bf16.mxu0 %v2673
        %3905 = vmatpush2.bf16.msra.mxu0 %v2672
        %3906 = vmatprep.subr.bf16.mxu0 %v2669
        %3907 = vmatpush2.bf16.msra.mxu0 %v2668
        %3908 = vmatprep.subr.bf16.mxu0 %v2665
        %3909 = vmatpush2.bf16.msra.mxu0 %v2664
        %3910 = vmatprep.subr.bf16.mxu0 %v2661
        %3911 = vmatpush2.bf16.msra.mxu0 %v2660
        %3912 = vmatprep.subr.bf16.mxu0 %v2657
        %3913 = vmatpush2.bf16.msra.mxu0 %v2656
        %3914 = vmatprep.mubr.bf16.mxu0 %v807
        %3915 = vmatmul.mubr.bf16.gmra.mxu0 %v806
        %v3916 = vpop.f32.mrf.mxu0
        %v3917 = vadd.f32 %v3876, %v3916
        %v3918 = vpop.f32.mrf.mxu0
        %v3919 = vadd.f32 %v3878, %v3918
        %v3920 = vpop.f32.mrf.mxu0
        %v3921 = vpop.f32.mrf.mxu0
        %3922 = vdwg.mxu0
        %3923 = vmatprep.subr.bf16.mxu0 %v2717
        %3924 = vmatpush1.bf16.msra.mxu0 %v2716
        %3925 = vmatprep.subr.bf16.mxu0 %v2713
        %3926 = vmatpush1.bf16.msra.mxu0 %v2712
        %3927 = vmatprep.subr.bf16.mxu0 %v2709
        %3928 = vmatpush1.bf16.msra.mxu0 %v2708
        %3929 = vmatprep.subr.bf16.mxu0 %v2705
        %3930 = vmatpush1.bf16.msra.mxu0 %v2704
        %3931 = vmatprep.subr.bf16.mxu0 %v2701
        %3932 = vmatpush1.bf16.msra.mxu0 %v2700
        %3933 = vmatprep.subr.bf16.mxu0 %v2697
        %3934 = vmatpush1.bf16.msra.mxu0 %v2696
        %3935 = vmatprep.subr.bf16.mxu0 %v2693
        %3936 = vmatpush1.bf16.msra.mxu0 %v2692
        %3937 = vmatprep.subr.bf16.mxu0 %v2689
        %3938 = vmatpush1.bf16.msra.mxu0 %v2688
        %3939 = vmatprep.subr.bf16.mxu0 %v2749
        %3940 = vmatpush2.bf16.msra.mxu0 %v2748
        %3941 = vmatprep.subr.bf16.mxu0 %v2745
        %3942 = vmatpush2.bf16.msra.mxu0 %v2744
        %3943 = vmatprep.subr.bf16.mxu0 %v2741
        %3944 = vmatpush2.bf16.msra.mxu0 %v2740
        %3945 = vmatprep.subr.bf16.mxu0 %v2737
        %3946 = vmatpush2.bf16.msra.mxu0 %v2736
        %3947 = vmatprep.subr.bf16.mxu0 %v2733
        %3948 = vmatpush2.bf16.msra.mxu0 %v2732
        %3949 = vmatprep.subr.bf16.mxu0 %v2729
        %3950 = vmatpush2.bf16.msra.mxu0 %v2728
        %3951 = vmatprep.subr.bf16.mxu0 %v2725
        %3952 = vmatpush2.bf16.msra.mxu0 %v2724
        %3953 = vmatprep.subr.bf16.mxu0 %v2721
        %3954 = vmatpush2.bf16.msra.mxu0 %v2720
        %3955 = vmatprep.mubr.bf16.mxu0 %v809
        %3956 = vmatmul.mubr.bf16.gmra.mxu0 %v808
        %v3957 = vpop.f32.mrf.mxu0
        %v3958 = vadd.f32 %v3917, %v3957
        %v3959 = vpop.f32.mrf.mxu0
        %v3960 = vadd.f32 %v3919, %v3959
        %v3961 = vpop.f32.mrf.mxu0
        %v3962 = vpop.f32.mrf.mxu0
        %3963 = vdwg.mxu0
        %3964 = vmatprep.subr.bf16.mxu0 %v2781
        %3965 = vmatpush1.bf16.msra.mxu0 %v2780
        %3966 = vmatprep.subr.bf16.mxu0 %v2777
        %3967 = vmatpush1.bf16.msra.mxu0 %v2776
        %3968 = vmatprep.subr.bf16.mxu0 %v2773
        %3969 = vmatpush1.bf16.msra.mxu0 %v2772
        %3970 = vmatprep.subr.bf16.mxu0 %v2769
        %3971 = vmatpush1.bf16.msra.mxu0 %v2768
        %3972 = vmatprep.subr.bf16.mxu0 %v2765
        %3973 = vmatpush1.bf16.msra.mxu0 %v2764
        %3974 = vmatprep.subr.bf16.mxu0 %v2761
        %3975 = vmatpush1.bf16.msra.mxu0 %v2760
        %3976 = vmatprep.subr.bf16.mxu0 %v2757
        %3977 = vmatpush1.bf16.msra.mxu0 %v2756
        %3978 = vmatprep.subr.bf16.mxu0 %v2753
        %3979 = vmatpush1.bf16.msra.mxu0 %v2752
        %3980 = vmatprep.subr.bf16.mxu0 %v2813
        %3981 = vmatpush2.bf16.msra.mxu0 %v2812
        %3982 = vmatprep.subr.bf16.mxu0 %v2809
        %3983 = vmatpush2.bf16.msra.mxu0 %v2808
        %3984 = vmatprep.subr.bf16.mxu0 %v2805
        %3985 = vmatpush2.bf16.msra.mxu0 %v2804
        %3986 = vmatprep.subr.bf16.mxu0 %v2801
        %3987 = vmatpush2.bf16.msra.mxu0 %v2800
        %3988 = vmatprep.subr.bf16.mxu0 %v2797
        %3989 = vmatpush2.bf16.msra.mxu0 %v2796
        %3990 = vmatprep.subr.bf16.mxu0 %v2793
        %3991 = vmatpush2.bf16.msra.mxu0 %v2792
        %3992 = vmatprep.subr.bf16.mxu0 %v2789
        %3993 = vmatpush2.bf16.msra.mxu0 %v2788
        %3994 = vmatprep.subr.bf16.mxu0 %v2785
        %3995 = vmatpush2.bf16.msra.mxu0 %v2784
        %3996 = vmatprep.mubr.bf16.mxu0 %v811
        %3997 = vmatmul.mubr.bf16.gmra.mxu0 %v810
        %v3998 = vpop.f32.mrf.mxu0
        %v3999 = vadd.f32 %v3958, %v3998
        %v4000 = vpop.f32.mrf.mxu0
        %v4001 = vadd.f32 %v3960, %v4000
        %v4002 = vpop.f32.mrf.mxu0
        %v4003 = vpop.f32.mrf.mxu0
        %4004 = vdwg.mxu0
        %4005 = vmatprep.subr.bf16.mxu0 %v2845
        %4006 = vmatpush1.bf16.msra.mxu0 %v2844
        %4007 = vmatprep.subr.bf16.mxu0 %v2841
        %4008 = vmatpush1.bf16.msra.mxu0 %v2840
        %4009 = vmatprep.subr.bf16.mxu0 %v2837
        %4010 = vmatpush1.bf16.msra.mxu0 %v2836
        %4011 = vmatprep.subr.bf16.mxu0 %v2833
        %4012 = vmatpush1.bf16.msra.mxu0 %v2832
        %4013 = vmatprep.subr.bf16.mxu0 %v2829
        %4014 = vmatpush1.bf16.msra.mxu0 %v2828
        %4015 = vmatprep.subr.bf16.mxu0 %v2825
        %4016 = vmatpush1.bf16.msra.mxu0 %v2824
        %4017 = vmatprep.subr.bf16.mxu0 %v2821
        %4018 = vmatpush1.bf16.msra.mxu0 %v2820
        %4019 = vmatprep.subr.bf16.mxu0 %v2817
        %4020 = vmatpush1.bf16.msra.mxu0 %v2816
        %4021 = vmatprep.subr.bf16.mxu0 %v2877
        %4022 = vmatpush2.bf16.msra.mxu0 %v2876
        %4023 = vmatprep.subr.bf16.mxu0 %v2873
        %4024 = vmatpush2.bf16.msra.mxu0 %v2872
        %4025 = vmatprep.subr.bf16.mxu0 %v2869
        %4026 = vmatpush2.bf16.msra.mxu0 %v2868
        %4027 = vmatprep.subr.bf16.mxu0 %v2865
        %4028 = vmatpush2.bf16.msra.mxu0 %v2864
        %4029 = vmatprep.subr.bf16.mxu0 %v2861
        %4030 = vmatpush2.bf16.msra.mxu0 %v2860
        %4031 = vmatprep.subr.bf16.mxu0 %v2857
        %4032 = vmatpush2.bf16.msra.mxu0 %v2856
        %4033 = vmatprep.subr.bf16.mxu0 %v2853
        %4034 = vmatpush2.bf16.msra.mxu0 %v2852
        %4035 = vmatprep.subr.bf16.mxu0 %v2849
        %4036 = vmatpush2.bf16.msra.mxu0 %v2848
        %4037 = vmatprep.mubr.bf16.mxu0 %v813
        %4038 = vmatmul.mubr.bf16.gmra.mxu0 %v812
        %v4039 = vpop.f32.mrf.mxu0
        %v4040 = vadd.f32 %v3999, %v4039
        %v4041 = vpop.f32.mrf.mxu0
        %v4042 = vadd.f32 %v4001, %v4041
        %v4043 = vpop.f32.mrf.mxu0
        %v4044 = vpop.f32.mrf.mxu0
        %4045 = vdwg.mxu0
        %v4046 = vtanh.pop %v3712
        %v4047 = vtanh.pop %v3714
        %v4048 = vtanh.pop %v4040
        %v4049 = vtanh.pop %v4042
        %v4050 = vpack.c.bf16 %v4046, %v4046
        %v4051 = vpack.c.bf16 %v4047, %v4047
        %v4052 = vpack.c.bf16 %v4048, %v4048
        %v4053 = vpack.c.bf16 %v4049, %v4049
        %v4058 = vunpack.c.l.b16 %v4050
        %v4059 = vunpack.c.l.b16 %v4051
        %v4060 = vunpack.c.l.b16 %v4052
        %v4061 = vunpack.c.l.b16 %v4053
        %v4062 = vpack.c.b16 %v4059, %v4058
        %v4063 = vpack.c.b16 %v4061, %v4060
        %4066 = vst [vmem:[%s230] sm:$0xff] %v4062
        %4067 = vst [vmem:[%s230 + $0x8] sm:$0xff] %v4063
        %s4068 = smul.u32 4, %s20
        %p4069 = scmp.lt.s32.totalorder %s4068, 15
        %s4070 = scalar_select %p4069, %s4068, 15
        %s4071 = smul.addr %s4070, 4
        %s4072 = scalar_lea.vmem %s3, %s4071
        // Predicated region
        $region41: #{netlinear_forward.5} parent=31 // pred_check
          %p4073 = pneg %p111
        $region42: #{netlinear_forward.5} parent=31 // pred_check_branch
          %4075 = sbr.rel (%p4073) target = $region44
        $region43: #{netlinear_forward.5} parent=31 // pred_region
          %s4076 = smul.u32 4, %s20
        $region44: #{netlinear_forward.5} parent=31 // pred_fallthru
          _
      $region32: #{netlinear_forward.5} parent=5 // pred_fallthru
        _
      %p4077 = scmp.le.s32.totalorder 2, %s15
      // Predicated region
      $region45: #{netlinear_forward.5} parent=5 // pred_check
        %p4078 = pneg %p4077
      $region46: #{netlinear_forward.5} parent=5 // pred_check_branch
        %4080 = sbr.rel (%p4078) target = $region48
      $region47: #{netlinear_forward.5} parent=5 // pred_region
        %s4081 = ssub.s32 %s15, 2
        // Predicated region
        $region49: #{netlinear_forward.5} parent=47 // pred_check
          %p4082 = pneg %p117
        $region50: #{netlinear_forward.5} parent=47 // pred_check_branch
          %4084 = sbr.rel (%p4082) target = $region52
        $region51: #{netlinear_forward.5} parent=47 // pred_region
          %s4085 = smul.u32 4, %s21
          %p4086 = scmp.lt.s32.totalorder %s4085, 15
          %s4087 = scalar_select %p4086, %s4085, 15
          %s4088 = smul.addr %s4087, 4
          %s4089 = scalar_lea.vmem %s3, %s4088
        $region52: #{netlinear_forward.5} parent=47 // pred_fallthru
          _
      $region48: #{netlinear_forward.5} parent=5 // pred_fallthru
        _
    $region6: #{netlinear_forward.5} parent=1 // loop_footer
      %s19 = sadd.s32 1, %s15
    $region7: #{netlinear_forward.5} parent=1 // loop_footer_branch
      %14 = sbr.rel target = $region3
    $region8: #{netlinear_forward.5} parent=1 // loop_exit
      _
    %4090 = vsyncpa [#allocation3], 1
    %s4091 = scalar_lea.sflag [#allocation3], 1
    %4092 = vsyncpa %s4091, 1
    %4093 = vsyncpa [#allocation5], 1
    %s4094 = scalar_lea.sflag [#allocation5], 1
    %4095 = vsyncpa %s4094, 1

// kernel: netlinear_forward.6
$region0: #{netlinear_forward.6}
  #allocation0 [shape = 'u32[]', space=smem, size = 0x4, offset = 0x4, fixed_abs, tag = 'smem constant byte address 0x4 - core index']
  #allocation1 [shape = 'u32[144,128]{1,0:T(1,128)}', space=vmem, size = 0x12000, scoped, tag = 'internal scratch']
  %s0 = inlined_call_operand.vmem [shape: bf16[8,2048], index: 0, kind: input, shape index: {}]
  %s1 = inlined_call_operand.vmem [shape: bf16[2048,2048], index: 1, kind: input, shape index: {}]
  %s2 = inlined_call_operand.vmem [shape: f32[1,2048], index: 2, kind: input, shape index: {}]
  %s3 = inlined_call_operand.vmem [shape: bf16[8,2048], index: 3, kind: output, shape index: {}]
  %s4 = sld [smem:[#allocation0]]
  $region68: #{netlinear_forward.6} parent=0
    _
  %s6 = ssub.s32 1, %s4
  %s7 = scalar_select 0, %s6, %s4
  $region1: #{netlinear_forward.6} parent=0
    #allocation2 [shape = 'u8[4194304]{0}', space=vmem, size = 0x400000, scoped, tag = 'input window, operand 1']
    loop: start=0, step=1, limit=6
    $region2: #{netlinear_forward.6} parent=1 // loop_pre_header
      _
    $region3: #{netlinear_forward.6} parent=1 // loop_header
      %s9 = sphi 0, %s13
      %p10 = scmp.ge.s32.totalorder %s9, 6
      %s17 = sphi 0, %s17
      %s19 = sphi 0, %s17
      %s20 = sphi 0, %s19
      %s34 = sphi 0, %s20
      %s40 = sphi 0, %s42
      %s43 = sphi 0, %s40
      %s44 = sphi 0, %s43
      %s60 = sphi 0, %s44
      %s66 = sphi 0, %s68
      %s69 = sphi 0, %s66
      %s70 = sphi 0, %s69
      %s86 = sphi 0, %s70
      %s92 = sphi 0, %s94
      %s95 = sphi 0, %s92
      %s96 = sphi 0, %s95
      %s112 = sphi 0, %s96
    $region4: #{netlinear_forward.6} parent=1 // loop_header_branch
      %12 = sbr.rel (%p10) target = $region8
    $region5: #{netlinear_forward.6} parent=1 // loop_body
      %s14 = ssub.s32 %s9, 1
      %s15 = ssub.s32 %s9, 2
      %s16 = sadd.s32 %s9, 1
      %s18 = sadd.s32 %s17, 1
      %p21 = scmp.eq.s32.totalorder %s9, 3
      %p22 = scmp.ne.s32.totalorder %s17, %s19
      %p23 = scmp.eq.s32.totalorder %s9, 0
      %p24 = por %p22, %p23
      %p25 = scmp.ne.s32.totalorder %s17, %s19
      %p26 = scmp.eq.s32.totalorder %s14, 3
      %p27 = por %p25, %p26
      %p28 = scmp.ne.s32.totalorder %s19, %s20
      %p29 = scmp.eq.s32.totalorder %s14, 0
      %p30 = por %p28, %p29
      %p31 = scmp.ne.s32.totalorder %s19, %s20
      %p32 = scmp.eq.s32.totalorder %s15, 3
      %p33 = por %p31, %p32
      %p35 = scmp.ne.s32.totalorder %s20, %s34
      %p36 = scmp.eq.s32.totalorder %s15, 0
      %p37 = por %p35, %p36
      %s38 = ssub.s32 %s9, %s16
      %p39 = scmp.eq.s32.totalorder %s38, 0
      %s41 = sadd.s32 %s40, 1
      %s42 = scalar_select %p39, %s40, %s41
      %p45 = pneg %p39
      %p46 = scmp.eq.s32.totalorder %s9, 3
      %p47 = por %p45, %p46
      %p48 = scmp.ne.s32.totalorder %s40, %s43
      %p49 = scmp.eq.s32.totalorder %s9, 0
      %p50 = por %p48, %p49
      %p51 = scmp.ne.s32.totalorder %s40, %s43
      %p52 = scmp.eq.s32.totalorder %s14, 3
      %p53 = por %p51, %p52
      %p54 = scmp.ne.s32.totalorder %s43, %s44
      %p55 = scmp.eq.s32.totalorder %s14, 0
      %p56 = por %p54, %p55
      %p57 = scmp.ne.s32.totalorder %s43, %s44
      %p58 = scmp.eq.s32.totalorder %s15, 3
      %p59 = por %p57, %p58
      %p61 = scmp.ne.s32.totalorder %s44, %s60
      %p62 = scmp.eq.s32.totalorder %s15, 0
      %p63 = por %p61, %p62
      %s64 = ssub.s32 %s9, %s16
      %p65 = scmp.eq.s32.totalorder %s64, 0
      %s67 = sadd.s32 %s66, 1
      %s68 = scalar_select %p65, %s66, %s67
      %p71 = pneg %p65
      %p72 = scmp.eq.s32.totalorder %s9, 3
      %p73 = por %p71, %p72
      %p74 = scmp.ne.s32.totalorder %s66, %s69
      %p75 = scmp.eq.s32.totalorder %s9, 0
      %p76 = por %p74, %p75
      %p77 = scmp.ne.s32.totalorder %s66, %s69
      %p78 = scmp.eq.s32.totalorder %s14, 3
      %p79 = por %p77, %p78
      %p80 = scmp.ne.s32.totalorder %s69, %s70
      %p81 = scmp.eq.s32.totalorder %s14, 0
      %p82 = por %p80, %p81
      %p83 = scmp.ne.s32.totalorder %s69, %s70
      %p84 = scmp.eq.s32.totalorder %s15, 3
      %p85 = por %p83, %p84
      %p87 = scmp.ne.s32.totalorder %s70, %s86
      %p88 = scmp.eq.s32.totalorder %s15, 0
      %p89 = por %p87, %p88
      %s90 = ssub.s32 %s9, %s16
      %p91 = scmp.eq.s32.totalorder %s90, 0
      %s93 = sadd.s32 %s92, 1
      %s94 = scalar_select %p91, %s92, %s93
      %p97 = pneg %p91
      %p98 = scmp.eq.s32.totalorder %s9, 3
      %p99 = por %p97, %p98
      %p100 = scmp.ne.s32.totalorder %s92, %s95
      %p101 = scmp.eq.s32.totalorder %s9, 0
      %p102 = por %p100, %p101
      %p103 = scmp.ne.s32.totalorder %s92, %s95
      %p104 = scmp.eq.s32.totalorder %s14, 3
      %p105 = por %p103, %p104
      %p106 = scmp.ne.s32.totalorder %s95, %s96
      %p107 = scmp.eq.s32.totalorder %s14, 0
      %p108 = por %p106, %p107
      %p109 = scmp.ne.s32.totalorder %s95, %s96
      %p110 = scmp.eq.s32.totalorder %s15, 3
      %p111 = por %p109, %p110
      %p113 = scmp.ne.s32.totalorder %s96, %s112
      %p114 = scmp.eq.s32.totalorder %s15, 0
      %p115 = por %p113, %p114
      %p116 = scmp.le.s32.totalorder 1, %s9
      %p117 = scmp.lt.s32.totalorder %s9, 5
      %p118 = pnand %p116, %p117
      %p119 = pneg %p118
      // Predicated region
      $region9: #{netlinear_forward.6} parent=5 // pred_check
        _
      $region10: #{netlinear_forward.6} parent=5 // pred_check_branch
        %121 = sbr.rel (%p118) target = $region12
      $region11: #{netlinear_forward.6} parent=5 // pred_region
        %s122 = ssub.s32 %s9, 1
        // Predicated region
        $region13: #{netlinear_forward.6} parent=11 // pred_check
          %p123 = pneg %p30
        $region14: #{netlinear_forward.6} parent=11 // pred_check_branch
          %125 = sbr.rel (%p123) target = $region16
        $region15: #{netlinear_forward.6} parent=11 // pred_region
          _
        $region16: #{netlinear_forward.6} parent=11 // pred_fallthru
          _
      $region12: #{netlinear_forward.6} parent=5 // pred_fallthru
        _
      %p126 = scmp.lt.s32.totalorder %s9, 4
      // Predicated region
      $region17: #{netlinear_forward.6} parent=5 // pred_check
        %p127 = pneg %p126
      $region18: #{netlinear_forward.6} parent=5 // pred_check_branch
        %129 = sbr.rel (%p127) target = $region20
      $region19: #{netlinear_forward.6} parent=5 // pred_region
        // Predicated region
        $region21: #{netlinear_forward.6} parent=19 // pred_check
          %p130 = pneg %p50
        $region22: #{netlinear_forward.6} parent=19 // pred_check_branch
          %132 = sbr.rel (%p130) target = $region24
        $region23: #{netlinear_forward.6} parent=19 // pred_region
          %s133 = sand.u32 %s40, 1
          %s134 = sand.u32 %s40, 1
          %s135 = smul.addr %s134, 4096
          %s136 = scalar_lea.vmem [#allocation2], %s135
          %s137 = smul.u32 4, %s9
          %s138 = smul.addr %s137, 4
          %s139 = scalar_lea.vmem %s1, %s138
          // Predicated region
          $region25: #{netlinear_forward.6} parent=23 // pred_check
            _
          $region26: #{netlinear_forward.6} parent=23 // pred_check_branch
            %141 = sbr.rel (0) target = $region28
          $region27: #{netlinear_forward.6} parent=23 // pred_region
            // Predicated region
            $region29: #{netlinear_forward.6} parent=27 // pred_check
              _
            $region30: #{netlinear_forward.6} parent=27 // pred_check_branch
              %143 = sbr.rel (0) target = $region32
            $region31: #{netlinear_forward.6} parent=27 // pred_region
              loop: start=0, step=1, limit=1
              $region33: #{netlinear_forward.6} parent=31 // loop_pre_header
                _
              $region34: #{netlinear_forward.6} parent=31 // loop_header
                %s145 = sphi 0, %s149
                %p146 = scmp.ge.s32.totalorder %s145, 1
                %s150 = sphi %s139, %s139
                %s151 = sphi %s136, %s136
              $region35: #{netlinear_forward.6} parent=31 // loop_header_branch
                %148 = sbr.rel (%p146) target = $region39
              $region36: #{netlinear_forward.6} parent=31 // loop_body
                %v152 = vld [vmem:[%s150] sm:$0xff]
                %153 = vst [vmem:[%s151] sm:$0xff] %v152
                %v154 = vld [vmem:[%s150 + $0x8] sm:$0xff]
                %155 = vst [vmem:[%s151 + $0x8] sm:$0xff] %v154
                %v156 = vld [vmem:[%s150 + $0x40] sm:$0xff]
                %157 = vst [vmem:[%s151 + $0x10] sm:$0xff] %v156
                %v158 = vld [vmem:[%s150 + $0x48] sm:$0xff]
                %159 = vst [vmem:[%s151 + $0x18] sm:$0xff] %v158
                %v160 = vld [vmem:[%s150 + $0x80] sm:$0xff]
                %161 = vst [vmem:[%s151 + $0x20] sm:$0xff] %v160
                %v162 = vld [vmem:[%s150 + $0x88] sm:$0xff]
                %163 = vst [vmem:[%s151 + $0x28] sm:$0xff] %v162
                %v164 = vld [vmem:[%s150 + $0xc0] sm:$0xff]
                %165 = vst [vmem:[%s151 + $0x30] sm:$0xff] %v164
                %v166 = vld [vmem:[%s150 + $0xc8] sm:$0xff]
                %167 = vst [vmem:[%s151 + $0x38] sm:$0xff] %v166
                %v168 = vld [vmem:[%s150 + $0x100] sm:$0xff]
                %169 = vst [vmem:[%s151 + $0x40] sm:$0xff] %v168
                %v170 = vld [vmem:[%s150 + $0x108] sm:$0xff]
                %171 = vst [vmem:[%s151 + $0x48] sm:$0xff] %v170
                %v172 = vld [vmem:[%s150 + $0x140] sm:$0xff]
                %173 = vst [vmem:[%s151 + $0x50] sm:$0xff] %v172
                %v174 = vld [vmem:[%s150 + $0x148] sm:$0xff]
                %175 = vst [vmem:[%s151 + $0x58] sm:$0xff] %v174
                %v176 = vld [vmem:[%s150 + $0x180] sm:$0xff]
                %177 = vst [vmem:[%s151 + $0x60] sm:$0xff] %v176
                %v178 = vld [vmem:[%s150 + $0x188] sm:$0xff]
                %179 = vst [vmem:[%s151 + $0x68] sm:$0xff] %v178
                %v180 = vld [vmem:[%s150 + $0x1c0] sm:$0xff]
                %181 = vst [vmem:[%s151 + $0x70] sm:$0xff] %v180
                %v182 = vld [vmem:[%s150 + $0x1c8] sm:$0xff]
                %183 = vst [vmem:[%s151 + $0x78] sm:$0xff] %v182
                %v184 = vld [vmem:[%s150 + $0x200] sm:$0xff]
                %185 = vst [vmem:[%s151 + $0x80] sm:$0xff] %v184
                %v186 = vld [vmem:[%s150 + $0x208] sm:$0xff]
                %187 = vst [vmem:[%s151 + $0x88] sm:$0xff] %v186
                %v188 = vld [vmem:[%s150 + $0x240] sm:$0xff]
                %189 = vst [vmem:[%s151 + $0x90] sm:$0xff] %v188
                %v190 = vld [vmem:[%s150 + $0x248] sm:$0xff]
                %191 = vst [vmem:[%s151 + $0x98] sm:$0xff] %v190
                %v192 = vld [vmem:[%s150 + $0x280] sm:$0xff]
                %193 = vst [vmem:[%s151 + $0xa0] sm:$0xff] %v192
                %v194 = vld [vmem:[%s150 + $0x288] sm:$0xff]
                %195 = vst [vmem:[%s151 + $0xa8] sm:$0xff] %v194
                %v196 = vld [vmem:[%s150 + $0x2c0] sm:$0xff]
                %197 = vst [vmem:[%s151 + $0xb0] sm:$0xff] %v196
                %v198 = vld [vmem:[%s150 + $0x2c8] sm:$0xff]
                %199 = vst [vmem:[%s151 + $0xb8] sm:$0xff] %v198
                %v200 = vld [vmem:[%s150 + $0x300] sm:$0xff]
                %201 = vst [vmem:[%s151 + $0xc0] sm:$0xff] %v200
                %v202 = vld [vmem:[%s150 + $0x308] sm:$0xff]
                %203 = vst [vmem:[%s151 + $0xc8] sm:$0xff] %v202
                %v204 = vld [vmem:[%s150 + $0x340] sm:$0xff]
                %205 = vst [vmem:[%s151 + $0xd0] sm:$0xff] %v204
                %v206 = vld [vmem:[%s150 + $0x348] sm:$0xff]
                %207 = vst [vmem:[%s151 + $0xd8] sm:$0xff] %v206
                %v208 = vld [vmem:[%s150 + $0x380] sm:$0xff]
                %209 = vst [vmem:[%s151 + $0xe0] sm:$0xff] %v208
                %v210 = vld [vmem:[%s150 + $0x388] sm:$0xff]
                %211 = vst [vmem:[%s151 + $0xe8] sm:$0xff] %v210
                %v212 = vld [vmem:[%s150 + $0x3c0] sm:$0xff]
                %213 = vst [vmem:[%s151 + $0xf0] sm:$0xff] %v212
                %v214 = vld [vmem:[%s150 + $0x3c8] sm:$0xff]
                %215 = vst [vmem:[%s151 + $0xf8] sm:$0xff] %v214
                %v216 = vld [vmem:[%s150 + $0x400] sm:$0xff]
                %217 = vst [vmem:[%s151 + $0x100] sm:$0xff] %v216
                %v218 = vld [vmem:[%s150 + $0x408] sm:$0xff]
                %219 = vst [vmem:[%s151 + $0x108] sm:$0xff] %v218
                %v220 = vld [vmem:[%s150 + $0x440] sm:$0xff]
                %221 = vst [vmem:[%s151 + $0x110] sm:$0xff] %v220
                %v222 = vld [vmem:[%s150 + $0x448] sm:$0xff]
                %223 = vst [vmem:[%s151 + $0x118] sm:$0xff] %v222
                %v224 = vld [vmem:[%s150 + $0x480] sm:$0xff]
                %225 = vst [vmem:[%s151 + $0x120] sm:$0xff] %v224
                %v226 = vld [vmem:[%s150 + $0x488] sm:$0xff]
                %227 = vst [vmem:[%s151 + $0x128] sm:$0xff] %v226
                %v228 = vld [vmem:[%s150 + $0x4c0] sm:$0xff]
                %229 = vst [vmem:[%s151 + $0x130] sm:$0xff] %v228
                %v230 = vld [vmem:[%s150 + $0x4c8] sm:$0xff]
                %231 = vst [vmem:[%s151 + $0x138] sm:$0xff] %v230
                %v232 = vld [vmem:[%s150 + $0x500] sm:$0xff]
                %233 = vst [vmem:[%s151 + $0x140] sm:$0xff] %v232
                %v234 = vld [vmem:[%s150 + $0x508] sm:$0xff]
                %235 = vst [vmem:[%s151 + $0x148] sm:$0xff] %v234
                %v236 = vld [vmem:[%s150 + $0x540] sm:$0xff]
                %237 = vst [vmem:[%s151 + $0x150] sm:$0xff] %v236
                %v238 = vld [vmem:[%s150 + $0x548] sm:$0xff]
                %239 = vst [vmem:[%s151 + $0x158] sm:$0xff] %v238
                %v240 = vld [vmem:[%s150 + $0x580] sm:$0xff]
                %241 = vst [vmem:[%s151 + $0x160] sm:$0xff] %v240
                %v242 = vld [vmem:[%s150 + $0x588] sm:$0xff]
                %243 = vst [vmem:[%s151 + $0x168] sm:$0xff] %v242
                %v244 = vld [vmem:[%s150 + $0x5c0] sm:$0xff]
                %245 = vst [vmem:[%s151 + $0x170] sm:$0xff] %v244
                %v246 = vld [vmem:[%s150 + $0x5c8] sm:$0xff]
                %247 = vst [vmem:[%s151 + $0x178] sm:$0xff] %v246
                %v248 = vld [vmem:[%s150 + $0x600] sm:$0xff]
                %249 = vst [vmem:[%s151 + $0x180] sm:$0xff] %v248
                %v250 = vld [vmem:[%s150 + $0x608] sm:$0xff]
                %251 = vst [vmem:[%s151 + $0x188] sm:$0xff] %v250
                %v252 = vld [vmem:[%s150 + $0x640] sm:$0xff]
                %253 = vst [vmem:[%s151 + $0x190] sm:$0xff] %v252
                %v254 = vld [vmem:[%s150 + $0x648] sm:$0xff]
                %255 = vst [vmem:[%s151 + $0x198] sm:$0xff] %v254
                %v256 = vld [vmem:[%s150 + $0x680] sm:$0xff]
                %257 = vst [vmem:[%s151 + $0x1a0] sm:$0xff] %v256
                %v258 = vld [vmem:[%s150 + $0x688] sm:$0xff]
                %259 = vst [vmem:[%s151 + $0x1a8] sm:$0xff] %v258
                %v260 = vld [vmem:[%s150 + $0x6c0] sm:$0xff]
                %261 = vst [vmem:[%s151 + $0x1b0] sm:$0xff] %v260
                %v262 = vld [vmem:[%s150 + $0x6c8] sm:$0xff]
                %263 = vst [vmem:[%s151 + $0x1b8] sm:$0xff] %v262
                %v264 = vld [vmem:[%s150 + $0x700] sm:$0xff]
                %265 = vst [vmem:[%s151 + $0x1c0] sm:$0xff] %v264
                %v266 = vld [vmem:[%s150 + $0x708] sm:$0xff]
                %267 = vst [vmem:[%s151 + $0x1c8] sm:$0xff] %v266
                %v268 = vld [vmem:[%s150 + $0x740] sm:$0xff]
                %269 = vst [vmem:[%s151 + $0x1d0] sm:$0xff] %v268
                %v270 = vld [vmem:[%s150 + $0x748] sm:$0xff]
                %271 = vst [vmem:[%s151 + $0x1d8] sm:$0xff] %v270
                %v272 = vld [vmem:[%s150 + $0x780] sm:$0xff]
                %273 = vst [vmem:[%s151 + $0x1e0] sm:$0xff] %v272
                %v274 = vld [vmem:[%s150 + $0x788] sm:$0xff]
                %275 = vst [vmem:[%s151 + $0x1e8] sm:$0xff] %v274
                %v276 = vld [vmem:[%s150 + $0x7c0] sm:$0xff]
                %277 = vst [vmem:[%s151 + $0x1f0] sm:$0xff] %v276
                %v278 = vld [vmem:[%s150 + $0x7c8] sm:$0xff]
                %279 = vst [vmem:[%s151 + $0x1f8] sm:$0xff] %v278
                %v280 = vld [vmem:[%s150 + $0x800] sm:$0xff]
                %281 = vst [vmem:[%s151 + $0x200] sm:$0xff] %v280
                %v282 = vld [vmem:[%s150 + $0x808] sm:$0xff]
                %283 = vst [vmem:[%s151 + $0x208] sm:$0xff] %v282
                %v284 = vld [vmem:[%s150 + $0x840] sm:$0xff]
                %285 = vst [vmem:[%s151 + $0x210] sm:$0xff] %v284
                %v286 = vld [vmem:[%s150 + $0x848] sm:$0xff]
                %287 = vst [vmem:[%s151 + $0x218] sm:$0xff] %v286
                %v288 = vld [vmem:[%s150 + $0x880] sm:$0xff]
                %289 = vst [vmem:[%s151 + $0x220] sm:$0xff] %v288
                %v290 = vld [vmem:[%s150 + $0x888] sm:$0xff]
                %291 = vst [vmem:[%s151 + $0x228] sm:$0xff] %v290
                %v292 = vld [vmem:[%s150 + $0x8c0] sm:$0xff]
                %293 = vst [vmem:[%s151 + $0x230] sm:$0xff] %v292
                %v294 = vld [vmem:[%s150 + $0x8c8] sm:$0xff]
                %295 = vst [vmem:[%s151 + $0x238] sm:$0xff] %v294
                %v296 = vld [vmem:[%s150 + $0x900] sm:$0xff]
                %297 = vst [vmem:[%s151 + $0x240] sm:$0xff] %v296
                %v298 = vld [vmem:[%s150 + $0x908] sm:$0xff]
                %299 = vst [vmem:[%s151 + $0x248] sm:$0xff] %v298
                %v300 = vld [vmem:[%s150 + $0x940] sm:$0xff]
                %301 = vst [vmem:[%s151 + $0x250] sm:$0xff] %v300
                %v302 = vld [vmem:[%s150 + $0x948] sm:$0xff]
                %303 = vst [vmem:[%s151 + $0x258] sm:$0xff] %v302
                %v304 = vld [vmem:[%s150 + $0x980] sm:$0xff]
                %305 = vst [vmem:[%s151 + $0x260] sm:$0xff] %v304
                %v306 = vld [vmem:[%s150 + $0x988] sm:$0xff]
                %307 = vst [vmem:[%s151 + $0x268] sm:$0xff] %v306
                %v308 = vld [vmem:[%s150 + $0x9c0] sm:$0xff]
                %309 = vst [vmem:[%s151 + $0x270] sm:$0xff] %v308
                %v310 = vld [vmem:[%s150 + $0x9c8] sm:$0xff]
                %311 = vst [vmem:[%s151 + $0x278] sm:$0xff] %v310
                %v312 = vld [vmem:[%s150 + $0xa00] sm:$0xff]
                %313 = vst [vmem:[%s151 + $0x280] sm:$0xff] %v312
                %v314 = vld [vmem:[%s150 + $0xa08] sm:$0xff]
                %315 = vst [vmem:[%s151 + $0x288] sm:$0xff] %v314
                %v316 = vld [vmem:[%s150 + $0xa40] sm:$0xff]
                %317 = vst [vmem:[%s151 + $0x290] sm:$0xff] %v316
                %v318 = vld [vmem:[%s150 + $0xa48] sm:$0xff]
                %319 = vst [vmem:[%s151 + $0x298] sm:$0xff] %v318
                %v320 = vld [vmem:[%s150 + $0xa80] sm:$0xff]
                %321 = vst [vmem:[%s151 + $0x2a0] sm:$0xff] %v320
                %v322 = vld [vmem:[%s150 + $0xa88] sm:$0xff]
                %323 = vst [vmem:[%s151 + $0x2a8] sm:$0xff] %v322
                %v324 = vld [vmem:[%s150 + $0xac0] sm:$0xff]
                %325 = vst [vmem:[%s151 + $0x2b0] sm:$0xff] %v324
                %v326 = vld [vmem:[%s150 + $0xac8] sm:$0xff]
                %327 = vst [vmem:[%s151 + $0x2b8] sm:$0xff] %v326
                %v328 = vld [vmem:[%s150 + $0xb00] sm:$0xff]
                %329 = vst [vmem:[%s151 + $0x2c0] sm:$0xff] %v328
                %v330 = vld [vmem:[%s150 + $0xb08] sm:$0xff]
                %331 = vst [vmem:[%s151 + $0x2c8] sm:$0xff] %v330
                %v332 = vld [vmem:[%s150 + $0xb40] sm:$0xff]
                %333 = vst [vmem:[%s151 + $0x2d0] sm:$0xff] %v332
                %v334 = vld [vmem:[%s150 + $0xb48] sm:$0xff]
                %335 = vst [vmem:[%s151 + $0x2d8] sm:$0xff] %v334
                %v336 = vld [vmem:[%s150 + $0xb80] sm:$0xff]
                %337 = vst [vmem:[%s151 + $0x2e0] sm:$0xff] %v336
                %v338 = vld [vmem:[%s150 + $0xb88] sm:$0xff]
                %339 = vst [vmem:[%s151 + $0x2e8] sm:$0xff] %v338
                %v340 = vld [vmem:[%s150 + $0xbc0] sm:$0xff]
                %341 = vst [vmem:[%s151 + $0x2f0] sm:$0xff] %v340
                %v342 = vld [vmem:[%s150 + $0xbc8] sm:$0xff]
                %343 = vst [vmem:[%s151 + $0x2f8] sm:$0xff] %v342
                %v344 = vld [vmem:[%s150 + $0xc00] sm:$0xff]
                %345 = vst [vmem:[%s151 + $0x300] sm:$0xff] %v344
                %v346 = vld [vmem:[%s150 + $0xc08] sm:$0xff]
                %347 = vst [vmem:[%s151 + $0x308] sm:$0xff] %v346
                %v348 = vld [vmem:[%s150 + $0xc40] sm:$0xff]
                %349 = vst [vmem:[%s151 + $0x310] sm:$0xff] %v348
                %v350 = vld [vmem:[%s150 + $0xc48] sm:$0xff]
                %351 = vst [vmem:[%s151 + $0x318] sm:$0xff] %v350
                %v352 = vld [vmem:[%s150 + $0xc80] sm:$0xff]
                %353 = vst [vmem:[%s151 + $0x320] sm:$0xff] %v352
                %v354 = vld [vmem:[%s150 + $0xc88] sm:$0xff]
                %355 = vst [vmem:[%s151 + $0x328] sm:$0xff] %v354
                %v356 = vld [vmem:[%s150 + $0xcc0] sm:$0xff]
                %357 = vst [vmem:[%s151 + $0x330] sm:$0xff] %v356
                %v358 = vld [vmem:[%s150 + $0xcc8] sm:$0xff]
                %359 = vst [vmem:[%s151 + $0x338] sm:$0xff] %v358
                %v360 = vld [vmem:[%s150 + $0xd00] sm:$0xff]
                %361 = vst [vmem:[%s151 + $0x340] sm:$0xff] %v360
                %v362 = vld [vmem:[%s150 + $0xd08] sm:$0xff]
                %363 = vst [vmem:[%s151 + $0x348] sm:$0xff] %v362
                %v364 = vld [vmem:[%s150 + $0xd40] sm:$0xff]
                %365 = vst [vmem:[%s151 + $0x350] sm:$0xff] %v364
                %v366 = vld [vmem:[%s150 + $0xd48] sm:$0xff]
                %367 = vst [vmem:[%s151 + $0x358] sm:$0xff] %v366
                %v368 = vld [vmem:[%s150 + $0xd80] sm:$0xff]
                %369 = vst [vmem:[%s151 + $0x360] sm:$0xff] %v368
                %v370 = vld [vmem:[%s150 + $0xd88] sm:$0xff]
                %371 = vst [vmem:[%s151 + $0x368] sm:$0xff] %v370
                %v372 = vld [vmem:[%s150 + $0xdc0] sm:$0xff]
                %373 = vst [vmem:[%s151 + $0x370] sm:$0xff] %v372
                %v374 = vld [vmem:[%s150 + $0xdc8] sm:$0xff]
                %375 = vst [vmem:[%s151 + $0x378] sm:$0xff] %v374
                %v376 = vld [vmem:[%s150 + $0xe00] sm:$0xff]
                %377 = vst [vmem:[%s151 + $0x380] sm:$0xff] %v376
                %v378 = vld [vmem:[%s150 + $0xe08] sm:$0xff]
                %379 = vst [vmem:[%s151 + $0x388] sm:$0xff] %v378
                %v380 = vld [vmem:[%s150 + $0xe40] sm:$0xff]
                %381 = vst [vmem:[%s151 + $0x390] sm:$0xff] %v380
                %v382 = vld [vmem:[%s150 + $0xe48] sm:$0xff]
                %383 = vst [vmem:[%s151 + $0x398] sm:$0xff] %v382
                %v384 = vld [vmem:[%s150 + $0xe80] sm:$0xff]
                %385 = vst [vmem:[%s151 + $0x3a0] sm:$0xff] %v384
                %v386 = vld [vmem:[%s150 + $0xe88] sm:$0xff]
                %387 = vst [vmem:[%s151 + $0x3a8] sm:$0xff] %v386
                %v388 = vld [vmem:[%s150 + $0xec0] sm:$0xff]
                %389 = vst [vmem:[%s151 + $0x3b0] sm:$0xff] %v388
                %v390 = vld [vmem:[%s150 + $0xec8] sm:$0xff]
                %391 = vst [vmem:[%s151 + $0x3b8] sm:$0xff] %v390
                %v392 = vld [vmem:[%s150 + $0xf00] sm:$0xff]
                %393 = vst [vmem:[%s151 + $0x3c0] sm:$0xff] %v392
                %v394 = vld [vmem:[%s150 + $0xf08] sm:$0xff]
                %395 = vst [vmem:[%s151 + $0x3c8] sm:$0xff] %v394
                %v396 = vld [vmem:[%s150 + $0xf40] sm:$0xff]
                %397 = vst [vmem:[%s151 + $0x3d0] sm:$0xff] %v396
                %v398 = vld [vmem:[%s150 + $0xf48] sm:$0xff]
                %399 = vst [vmem:[%s151 + $0x3d8] sm:$0xff] %v398
                %v400 = vld [vmem:[%s150 + $0xf80] sm:$0xff]
                %401 = vst [vmem:[%s151 + $0x3e0] sm:$0xff] %v400
                %v402 = vld [vmem:[%s150 + $0xf88] sm:$0xff]
                %403 = vst [vmem:[%s151 + $0x3e8] sm:$0xff] %v402
                %v404 = vld [vmem:[%s150 + $0xfc0] sm:$0xff]
                %405 = vst [vmem:[%s151 + $0x3f0] sm:$0xff] %v404
                %v406 = vld [vmem:[%s150 + $0xfc8] sm:$0xff]
                %407 = vst [vmem:[%s151 + $0x3f8] sm:$0xff] %v406
                %v408 = vld [vmem:[%s150 + $0x1000] sm:$0xff]
                %409 = vst [vmem:[%s151 + $0x400] sm:$0xff] %v408
                %v410 = vld [vmem:[%s150 + $0x1008] sm:$0xff]
                %411 = vst [vmem:[%s151 + $0x408] sm:$0xff] %v410
                %v412 = vld [vmem:[%s150 + $0x1040] sm:$0xff]
                %413 = vst [vmem:[%s151 + $0x410] sm:$0xff] %v412
                %v414 = vld [vmem:[%s150 + $0x1048] sm:$0xff]
                %415 = vst [vmem:[%s151 + $0x418] sm:$0xff] %v414
                %v416 = vld [vmem:[%s150 + $0x1080] sm:$0xff]
                %417 = vst [vmem:[%s151 + $0x420] sm:$0xff] %v416
                %v418 = vld [vmem:[%s150 + $0x1088] sm:$0xff]
                %419 = vst [vmem:[%s151 + $0x428] sm:$0xff] %v418
                %v420 = vld [vmem:[%s150 + $0x10c0] sm:$0xff]
                %421 = vst [vmem:[%s151 + $0x430] sm:$0xff] %v420
                %v422 = vld [vmem:[%s150 + $0x10c8] sm:$0xff]
                %423 = vst [vmem:[%s151 + $0x438] sm:$0xff] %v422
                %v424 = vld [vmem:[%s150 + $0x1100] sm:$0xff]
                %425 = vst [vmem:[%s151 + $0x440] sm:$0xff] %v424
                %v426 = vld [vmem:[%s150 + $0x1108] sm:$0xff]
                %427 = vst [vmem:[%s151 + $0x448] sm:$0xff] %v426
                %v428 = vld [vmem:[%s150 + $0x1140] sm:$0xff]
                %429 = vst [vmem:[%s151 + $0x450] sm:$0xff] %v428
                %v430 = vld [vmem:[%s150 + $0x1148] sm:$0xff]
                %431 = vst [vmem:[%s151 + $0x458] sm:$0xff] %v430
                %v432 = vld [vmem:[%s150 + $0x1180] sm:$0xff]
                %433 = vst [vmem:[%s151 + $0x460] sm:$0xff] %v432
                %v434 = vld [vmem:[%s150 + $0x1188] sm:$0xff]
                %435 = vst [vmem:[%s151 + $0x468] sm:$0xff] %v434
                %v436 = vld [vmem:[%s150 + $0x11c0] sm:$0xff]
                %437 = vst [vmem:[%s151 + $0x470] sm:$0xff] %v436
                %v438 = vld [vmem:[%s150 + $0x11c8] sm:$0xff]
                %439 = vst [vmem:[%s151 + $0x478] sm:$0xff] %v438
                %v440 = vld [vmem:[%s150 + $0x1200] sm:$0xff]
                %441 = vst [vmem:[%s151 + $0x480] sm:$0xff] %v440
                %v442 = vld [vmem:[%s150 + $0x1208] sm:$0xff]
                %443 = vst [vmem:[%s151 + $0x488] sm:$0xff] %v442
                %v444 = vld [vmem:[%s150 + $0x1240] sm:$0xff]
                %445 = vst [vmem:[%s151 + $0x490] sm:$0xff] %v444
                %v446 = vld [vmem:[%s150 + $0x1248] sm:$0xff]
                %447 = vst [vmem:[%s151 + $0x498] sm:$0xff] %v446
                %v448 = vld [vmem:[%s150 + $0x1280] sm:$0xff]
                %449 = vst [vmem:[%s151 + $0x4a0] sm:$0xff] %v448
                %v450 = vld [vmem:[%s150 + $0x1288] sm:$0xff]
                %451 = vst [vmem:[%s151 + $0x4a8] sm:$0xff] %v450
                %v452 = vld [vmem:[%s150 + $0x12c0] sm:$0xff]
                %453 = vst [vmem:[%s151 + $0x4b0] sm:$0xff] %v452
                %v454 = vld [vmem:[%s150 + $0x12c8] sm:$0xff]
                %455 = vst [vmem:[%s151 + $0x4b8] sm:$0xff] %v454
                %v456 = vld [vmem:[%s150 + $0x1300] sm:$0xff]
                %457 = vst [vmem:[%s151 + $0x4c0] sm:$0xff] %v456
                %v458 = vld [vmem:[%s150 + $0x1308] sm:$0xff]
                %459 = vst [vmem:[%s151 + $0x4c8] sm:$0xff] %v458
                %v460 = vld [vmem:[%s150 + $0x1340] sm:$0xff]
                %461 = vst [vmem:[%s151 + $0x4d0] sm:$0xff] %v460
                %v462 = vld [vmem:[%s150 + $0x1348] sm:$0xff]
                %463 = vst [vmem:[%s151 + $0x4d8] sm:$0xff] %v462
                %v464 = vld [vmem:[%s150 + $0x1380] sm:$0xff]
                %465 = vst [vmem:[%s151 + $0x4e0] sm:$0xff] %v464
                %v466 = vld [vmem:[%s150 + $0x1388] sm:$0xff]
                %467 = vst [vmem:[%s151 + $0x4e8] sm:$0xff] %v466
                %v468 = vld [vmem:[%s150 + $0x13c0] sm:$0xff]
                %469 = vst [vmem:[%s151 + $0x4f0] sm:$0xff] %v468
                %v470 = vld [vmem:[%s150 + $0x13c8] sm:$0xff]
                %471 = vst [vmem:[%s151 + $0x4f8] sm:$0xff] %v470
                %v472 = vld [vmem:[%s150 + $0x1400] sm:$0xff]
                %473 = vst [vmem:[%s151 + $0x500] sm:$0xff] %v472
                %v474 = vld [vmem:[%s150 + $0x1408] sm:$0xff]
                %475 = vst [vmem:[%s151 + $0x508] sm:$0xff] %v474
                %v476 = vld [vmem:[%s150 + $0x1440] sm:$0xff]
                %477 = vst [vmem:[%s151 + $0x510] sm:$0xff] %v476
                %v478 = vld [vmem:[%s150 + $0x1448] sm:$0xff]
                %479 = vst [vmem:[%s151 + $0x518] sm:$0xff] %v478
                %v480 = vld [vmem:[%s150 + $0x1480] sm:$0xff]
                %481 = vst [vmem:[%s151 + $0x520] sm:$0xff] %v480
                %v482 = vld [vmem:[%s150 + $0x1488] sm:$0xff]
                %483 = vst [vmem:[%s151 + $0x528] sm:$0xff] %v482
                %v484 = vld [vmem:[%s150 + $0x14c0] sm:$0xff]
                %485 = vst [vmem:[%s151 + $0x530] sm:$0xff] %v484
                %v486 = vld [vmem:[%s150 + $0x14c8] sm:$0xff]
                %487 = vst [vmem:[%s151 + $0x538] sm:$0xff] %v486
                %v488 = vld [vmem:[%s150 + $0x1500] sm:$0xff]
                %489 = vst [vmem:[%s151 + $0x540] sm:$0xff] %v488
                %v490 = vld [vmem:[%s150 + $0x1508] sm:$0xff]
                %491 = vst [vmem:[%s151 + $0x548] sm:$0xff] %v490
                %v492 = vld [vmem:[%s150 + $0x1540] sm:$0xff]
                %493 = vst [vmem:[%s151 + $0x550] sm:$0xff] %v492
                %v494 = vld [vmem:[%s150 + $0x1548] sm:$0xff]
                %495 = vst [vmem:[%s151 + $0x558] sm:$0xff] %v494
                %v496 = vld [vmem:[%s150 + $0x1580] sm:$0xff]
                %497 = vst [vmem:[%s151 + $0x560] sm:$0xff] %v496
                %v498 = vld [vmem:[%s150 + $0x1588] sm:$0xff]
                %499 = vst [vmem:[%s151 + $0x568] sm:$0xff] %v498
                %v500 = vld [vmem:[%s150 + $0x15c0] sm:$0xff]
                %501 = vst [vmem:[%s151 + $0x570] sm:$0xff] %v500
                %v502 = vld [vmem:[%s150 + $0x15c8] sm:$0xff]
                %503 = vst [vmem:[%s151 + $0x578] sm:$0xff] %v502
                %v504 = vld [vmem:[%s150 + $0x1600] sm:$0xff]
                %505 = vst [vmem:[%s151 + $0x580] sm:$0xff] %v504
                %v506 = vld [vmem:[%s150 + $0x1608] sm:$0xff]
                %507 = vst [vmem:[%s151 + $0x588] sm:$0xff] %v506
                %v508 = vld [vmem:[%s150 + $0x1640] sm:$0xff]
                %509 = vst [vmem:[%s151 + $0x590] sm:$0xff] %v508
                %v510 = vld [vmem:[%s150 + $0x1648] sm:$0xff]
                %511 = vst [vmem:[%s151 + $0x598] sm:$0xff] %v510
                %v512 = vld [vmem:[%s150 + $0x1680] sm:$0xff]
                %513 = vst [vmem:[%s151 + $0x5a0] sm:$0xff] %v512
                %v514 = vld [vmem:[%s150 + $0x1688] sm:$0xff]
                %515 = vst [vmem:[%s151 + $0x5a8] sm:$0xff] %v514
                %v516 = vld [vmem:[%s150 + $0x16c0] sm:$0xff]
                %517 = vst [vmem:[%s151 + $0x5b0] sm:$0xff] %v516
                %v518 = vld [vmem:[%s150 + $0x16c8] sm:$0xff]
                %519 = vst [vmem:[%s151 + $0x5b8] sm:$0xff] %v518
                %v520 = vld [vmem:[%s150 + $0x1700] sm:$0xff]
                %521 = vst [vmem:[%s151 + $0x5c0] sm:$0xff] %v520
                %v522 = vld [vmem:[%s150 + $0x1708] sm:$0xff]
                %523 = vst [vmem:[%s151 + $0x5c8] sm:$0xff] %v522
                %v524 = vld [vmem:[%s150 + $0x1740] sm:$0xff]
                %525 = vst [vmem:[%s151 + $0x5d0] sm:$0xff] %v524
                %v526 = vld [vmem:[%s150 + $0x1748] sm:$0xff]
                %527 = vst [vmem:[%s151 + $0x5d8] sm:$0xff] %v526
                %v528 = vld [vmem:[%s150 + $0x1780] sm:$0xff]
                %529 = vst [vmem:[%s151 + $0x5e0] sm:$0xff] %v528
                %v530 = vld [vmem:[%s150 + $0x1788] sm:$0xff]
                %531 = vst [vmem:[%s151 + $0x5e8] sm:$0xff] %v530
                %v532 = vld [vmem:[%s150 + $0x17c0] sm:$0xff]
                %533 = vst [vmem:[%s151 + $0x5f0] sm:$0xff] %v532
                %v534 = vld [vmem:[%s150 + $0x17c8] sm:$0xff]
                %535 = vst [vmem:[%s151 + $0x5f8] sm:$0xff] %v534
                %v536 = vld [vmem:[%s150 + $0x1800] sm:$0xff]
                %537 = vst [vmem:[%s151 + $0x600] sm:$0xff] %v536
                %v538 = vld [vmem:[%s150 + $0x1808] sm:$0xff]
                %539 = vst [vmem:[%s151 + $0x608] sm:$0xff] %v538
                %v540 = vld [vmem:[%s150 + $0x1840] sm:$0xff]
                %541 = vst [vmem:[%s151 + $0x610] sm:$0xff] %v540
                %v542 = vld [vmem:[%s150 + $0x1848] sm:$0xff]
                %543 = vst [vmem:[%s151 + $0x618] sm:$0xff] %v542
                %v544 = vld [vmem:[%s150 + $0x1880] sm:$0xff]
                %545 = vst [vmem:[%s151 + $0x620] sm:$0xff] %v544
                %v546 = vld [vmem:[%s150 + $0x1888] sm:$0xff]
                %547 = vst [vmem:[%s151 + $0x628] sm:$0xff] %v546
                %v548 = vld [vmem:[%s150 + $0x18c0] sm:$0xff]
                %549 = vst [vmem:[%s151 + $0x630] sm:$0xff] %v548
                %v550 = vld [vmem:[%s150 + $0x18c8] sm:$0xff]
                %551 = vst [vmem:[%s151 + $0x638] sm:$0xff] %v550
                %v552 = vld [vmem:[%s150 + $0x1900] sm:$0xff]
                %553 = vst [vmem:[%s151 + $0x640] sm:$0xff] %v552
                %v554 = vld [vmem:[%s150 + $0x1908] sm:$0xff]
                %555 = vst [vmem:[%s151 + $0x648] sm:$0xff] %v554
                %v556 = vld [vmem:[%s150 + $0x1940] sm:$0xff]
                %557 = vst [vmem:[%s151 + $0x650] sm:$0xff] %v556
                %v558 = vld [vmem:[%s150 + $0x1948] sm:$0xff]
                %559 = vst [vmem:[%s151 + $0x658] sm:$0xff] %v558
                %v560 = vld [vmem:[%s150 + $0x1980] sm:$0xff]
                %561 = vst [vmem:[%s151 + $0x660] sm:$0xff] %v560
                %v562 = vld [vmem:[%s150 + $0x1988] sm:$0xff]
                %563 = vst [vmem:[%s151 + $0x668] sm:$0xff] %v562
                %v564 = vld [vmem:[%s150 + $0x19c0] sm:$0xff]
                %565 = vst [vmem:[%s151 + $0x670] sm:$0xff] %v564
                %v566 = vld [vmem:[%s150 + $0x19c8] sm:$0xff]
                %567 = vst [vmem:[%s151 + $0x678] sm:$0xff] %v566
                %v568 = vld [vmem:[%s150 + $0x1a00] sm:$0xff]
                %569 = vst [vmem:[%s151 + $0x680] sm:$0xff] %v568
                %v570 = vld [vmem:[%s150 + $0x1a08] sm:$0xff]
                %571 = vst [vmem:[%s151 + $0x688] sm:$0xff] %v570
                %v572 = vld [vmem:[%s150 + $0x1a40] sm:$0xff]
                %573 = vst [vmem:[%s151 + $0x690] sm:$0xff] %v572
                %v574 = vld [vmem:[%s150 + $0x1a48] sm:$0xff]
                %575 = vst [vmem:[%s151 + $0x698] sm:$0xff] %v574
                %v576 = vld [vmem:[%s150 + $0x1a80] sm:$0xff]
                %577 = vst [vmem:[%s151 + $0x6a0] sm:$0xff] %v576
                %v578 = vld [vmem:[%s150 + $0x1a88] sm:$0xff]
                %579 = vst [vmem:[%s151 + $0x6a8] sm:$0xff] %v578
                %v580 = vld [vmem:[%s150 + $0x1ac0] sm:$0xff]
                %581 = vst [vmem:[%s151 + $0x6b0] sm:$0xff] %v580
                %v582 = vld [vmem:[%s150 + $0x1ac8] sm:$0xff]
                %583 = vst [vmem:[%s151 + $0x6b8] sm:$0xff] %v582
                %v584 = vld [vmem:[%s150 + $0x1b00] sm:$0xff]
                %585 = vst [vmem:[%s151 + $0x6c0] sm:$0xff] %v584
                %v586 = vld [vmem:[%s150 + $0x1b08] sm:$0xff]
                %587 = vst [vmem:[%s151 + $0x6c8] sm:$0xff] %v586
                %v588 = vld [vmem:[%s150 + $0x1b40] sm:$0xff]
                %589 = vst [vmem:[%s151 + $0x6d0] sm:$0xff] %v588
                %v590 = vld [vmem:[%s150 + $0x1b48] sm:$0xff]
                %591 = vst [vmem:[%s151 + $0x6d8] sm:$0xff] %v590
                %v592 = vld [vmem:[%s150 + $0x1b80] sm:$0xff]
                %593 = vst [vmem:[%s151 + $0x6e0] sm:$0xff] %v592
                %v594 = vld [vmem:[%s150 + $0x1b88] sm:$0xff]
                %595 = vst [vmem:[%s151 + $0x6e8] sm:$0xff] %v594
                %v596 = vld [vmem:[%s150 + $0x1bc0] sm:$0xff]
                %597 = vst [vmem:[%s151 + $0x6f0] sm:$0xff] %v596
                %v598 = vld [vmem:[%s150 + $0x1bc8] sm:$0xff]
                %599 = vst [vmem:[%s151 + $0x6f8] sm:$0xff] %v598
                %v600 = vld [vmem:[%s150 + $0x1c00] sm:$0xff]
                %601 = vst [vmem:[%s151 + $0x700] sm:$0xff] %v600
                %v602 = vld [vmem:[%s150 + $0x1c08] sm:$0xff]
                %603 = vst [vmem:[%s151 + $0x708] sm:$0xff] %v602
                %v604 = vld [vmem:[%s150 + $0x1c40] sm:$0xff]
                %605 = vst [vmem:[%s151 + $0x710] sm:$0xff] %v604
                %v606 = vld [vmem:[%s150 + $0x1c48] sm:$0xff]
                %607 = vst [vmem:[%s151 + $0x718] sm:$0xff] %v606
                %v608 = vld [vmem:[%s150 + $0x1c80] sm:$0xff]
                %609 = vst [vmem:[%s151 + $0x720] sm:$0xff] %v608
                %v610 = vld [vmem:[%s150 + $0x1c88] sm:$0xff]
                %611 = vst [vmem:[%s151 + $0x728] sm:$0xff] %v610
                %v612 = vld [vmem:[%s150 + $0x1cc0] sm:$0xff]
                %613 = vst [vmem:[%s151 + $0x730] sm:$0xff] %v612
                %v614 = vld [vmem:[%s150 + $0x1cc8] sm:$0xff]
                %615 = vst [vmem:[%s151 + $0x738] sm:$0xff] %v614
                %v616 = vld [vmem:[%s150 + $0x1d00] sm:$0xff]
                %617 = vst [vmem:[%s151 + $0x740] sm:$0xff] %v616
                %v618 = vld [vmem:[%s150 + $0x1d08] sm:$0xff]
                %619 = vst [vmem:[%s151 + $0x748] sm:$0xff] %v618
                %v620 = vld [vmem:[%s150 + $0x1d40] sm:$0xff]
                %621 = vst [vmem:[%s151 + $0x750] sm:$0xff] %v620
                %v622 = vld [vmem:[%s150 + $0x1d48] sm:$0xff]
                %623 = vst [vmem:[%s151 + $0x758] sm:$0xff] %v622
                %v624 = vld [vmem:[%s150 + $0x1d80] sm:$0xff]
                %625 = vst [vmem:[%s151 + $0x760] sm:$0xff] %v624
                %v626 = vld [vmem:[%s150 + $0x1d88] sm:$0xff]
                %627 = vst [vmem:[%s151 + $0x768] sm:$0xff] %v626
                %v628 = vld [vmem:[%s150 + $0x1dc0] sm:$0xff]
                %629 = vst [vmem:[%s151 + $0x770] sm:$0xff] %v628
                %v630 = vld [vmem:[%s150 + $0x1dc8] sm:$0xff]
                %631 = vst [vmem:[%s151 + $0x778] sm:$0xff] %v630
                %v632 = vld [vmem:[%s150 + $0x1e00] sm:$0xff]
                %633 = vst [vmem:[%s151 + $0x780] sm:$0xff] %v632
                %v634 = vld [vmem:[%s150 + $0x1e08] sm:$0xff]
                %635 = vst [vmem:[%s151 + $0x788] sm:$0xff] %v634
                %v636 = vld [vmem:[%s150 + $0x1e40] sm:$0xff]
                %637 = vst [vmem:[%s151 + $0x790] sm:$0xff] %v636
                %v638 = vld [vmem:[%s150 + $0x1e48] sm:$0xff]
                %639 = vst [vmem:[%s151 + $0x798] sm:$0xff] %v638
                %v640 = vld [vmem:[%s150 + $0x1e80] sm:$0xff]
                %641 = vst [vmem:[%s151 + $0x7a0] sm:$0xff] %v640
                %v642 = vld [vmem:[%s150 + $0x1e88] sm:$0xff]
                %643 = vst [vmem:[%s151 + $0x7a8] sm:$0xff] %v642
                %v644 = vld [vmem:[%s150 + $0x1ec0] sm:$0xff]
                %645 = vst [vmem:[%s151 + $0x7b0] sm:$0xff] %v644
                %v646 = vld [vmem:[%s150 + $0x1ec8] sm:$0xff]
                %647 = vst [vmem:[%s151 + $0x7b8] sm:$0xff] %v646
                %v648 = vld [vmem:[%s150 + $0x1f00] sm:$0xff]
                %649 = vst [vmem:[%s151 + $0x7c0] sm:$0xff] %v648
                %v650 = vld [vmem:[%s150 + $0x1f08] sm:$0xff]
                %651 = vst [vmem:[%s151 + $0x7c8] sm:$0xff] %v650
                %v652 = vld [vmem:[%s150 + $0x1f40] sm:$0xff]
                %653 = vst [vmem:[%s151 + $0x7d0] sm:$0xff] %v652
                %v654 = vld [vmem:[%s150 + $0x1f48] sm:$0xff]
                %655 = vst [vmem:[%s151 + $0x7d8] sm:$0xff] %v654
                %v656 = vld [vmem:[%s150 + $0x1f80] sm:$0xff]
                %657 = vst [vmem:[%s151 + $0x7e0] sm:$0xff] %v656
                %v658 = vld [vmem:[%s150 + $0x1f88] sm:$0xff]
                %659 = vst [vmem:[%s151 + $0x7e8] sm:$0xff] %v658
                %v660 = vld [vmem:[%s150 + $0x1fc0] sm:$0xff]
                %661 = vst [vmem:[%s151 + $0x7f0] sm:$0xff] %v660
                %v662 = vld [vmem:[%s150 + $0x1fc8] sm:$0xff]
                %663 = vst [vmem:[%s151 + $0x7f8] sm:$0xff] %v662
                %v664 = vld [vmem:[%s150 + $0x2000] sm:$0xff]
                %665 = vst [vmem:[%s151 + $0x800] sm:$0xff] %v664
                %v666 = vld [vmem:[%s150 + $0x2008] sm:$0xff]
                %667 = vst [vmem:[%s151 + $0x808] sm:$0xff] %v666
                %v668 = vld [vmem:[%s150 + $0x2040] sm:$0xff]
                %669 = vst [vmem:[%s151 + $0x810] sm:$0xff] %v668
                %v670 = vld [vmem:[%s150 + $0x2048] sm:$0xff]
                %671 = vst [vmem:[%s151 + $0x818] sm:$0xff] %v670
                %v672 = vld [vmem:[%s150 + $0x2080] sm:$0xff]
                %673 = vst [vmem:[%s151 + $0x820] sm:$0xff] %v672
                %v674 = vld [vmem:[%s150 + $0x2088] sm:$0xff]
                %675 = vst [vmem:[%s151 + $0x828] sm:$0xff] %v674
                %v676 = vld [vmem:[%s150 + $0x20c0] sm:$0xff]
                %677 = vst [vmem:[%s151 + $0x830] sm:$0xff] %v676
                %v678 = vld [vmem:[%s150 + $0x20c8] sm:$0xff]
                %679 = vst [vmem:[%s151 + $0x838] sm:$0xff] %v678
                %v680 = vld [vmem:[%s150 + $0x2100] sm:$0xff]
                %681 = vst [vmem:[%s151 + $0x840] sm:$0xff] %v680
                %v682 = vld [vmem:[%s150 + $0x2108] sm:$0xff]
                %683 = vst [vmem:[%s151 + $0x848] sm:$0xff] %v682
                %v684 = vld [vmem:[%s150 + $0x2140] sm:$0xff]
                %685 = vst [vmem:[%s151 + $0x850] sm:$0xff] %v684
                %v686 = vld [vmem:[%s150 + $0x2148] sm:$0xff]
                %687 = vst [vmem:[%s151 + $0x858] sm:$0xff] %v686
                %v688 = vld [vmem:[%s150 + $0x2180] sm:$0xff]
                %689 = vst [vmem:[%s151 + $0x860] sm:$0xff] %v688
                %v690 = vld [vmem:[%s150 + $0x2188] sm:$0xff]
                %691 = vst [vmem:[%s151 + $0x868] sm:$0xff] %v690
                %v692 = vld [vmem:[%s150 + $0x21c0] sm:$0xff]
                %693 = vst [vmem:[%s151 + $0x870] sm:$0xff] %v692
                %v694 = vld [vmem:[%s150 + $0x21c8] sm:$0xff]
                %695 = vst [vmem:[%s151 + $0x878] sm:$0xff] %v694
                %v696 = vld [vmem:[%s150 + $0x2200] sm:$0xff]
                %697 = vst [vmem:[%s151 + $0x880] sm:$0xff] %v696
                %v698 = vld [vmem:[%s150 + $0x2208] sm:$0xff]
                %699 = vst [vmem:[%s151 + $0x888] sm:$0xff] %v698
                %v700 = vld [vmem:[%s150 + $0x2240] sm:$0xff]
                %701 = vst [vmem:[%s151 + $0x890] sm:$0xff] %v700
                %v702 = vld [vmem:[%s150 + $0x2248] sm:$0xff]
                %703 = vst [vmem:[%s151 + $0x898] sm:$0xff] %v702
                %v704 = vld [vmem:[%s150 + $0x2280] sm:$0xff]
                %705 = vst [vmem:[%s151 + $0x8a0] sm:$0xff] %v704
                %v706 = vld [vmem:[%s150 + $0x2288] sm:$0xff]
                %707 = vst [vmem:[%s151 + $0x8a8] sm:$0xff] %v706
                %v708 = vld [vmem:[%s150 + $0x22c0] sm:$0xff]
                %709 = vst [vmem:[%s151 + $0x8b0] sm:$0xff] %v708
                %v710 = vld [vmem:[%s150 + $0x22c8] sm:$0xff]
                %711 = vst [vmem:[%s151 + $0x8b8] sm:$0xff] %v710
                %v712 = vld [vmem:[%s150 + $0x2300] sm:$0xff]
                %713 = vst [vmem:[%s151 + $0x8c0] sm:$0xff] %v712
                %v714 = vld [vmem:[%s150 + $0x2308] sm:$0xff]
                %715 = vst [vmem:[%s151 + $0x8c8] sm:$0xff] %v714
                %v716 = vld [vmem:[%s150 + $0x2340] sm:$0xff]
                %717 = vst [vmem:[%s151 + $0x8d0] sm:$0xff] %v716
                %v718 = vld [vmem:[%s150 + $0x2348] sm:$0xff]
                %719 = vst [vmem:[%s151 + $0x8d8] sm:$0xff] %v718
                %v720 = vld [vmem:[%s150 + $0x2380] sm:$0xff]
                %721 = vst [vmem:[%s151 + $0x8e0] sm:$0xff] %v720
                %v722 = vld [vmem:[%s150 + $0x2388] sm:$0xff]
                %723 = vst [vmem:[%s151 + $0x8e8] sm:$0xff] %v722
                %v724 = vld [vmem:[%s150 + $0x23c0] sm:$0xff]
                %725 = vst [vmem:[%s151 + $0x8f0] sm:$0xff] %v724
                %v726 = vld [vmem:[%s150 + $0x23c8] sm:$0xff]
                %727 = vst [vmem:[%s151 + $0x8f8] sm:$0xff] %v726
                %v728 = vld [vmem:[%s150 + $0x2400] sm:$0xff]
                %729 = vst [vmem:[%s151 + $0x900] sm:$0xff] %v728
                %v730 = vld [vmem:[%s150 + $0x2408] sm:$0xff]
                %731 = vst [vmem:[%s151 + $0x908] sm:$0xff] %v730
                %v732 = vld [vmem:[%s150 + $0x2440] sm:$0xff]
                %733 = vst [vmem:[%s151 + $0x910] sm:$0xff] %v732
                %v734 = vld [vmem:[%s150 + $0x2448] sm:$0xff]
                %735 = vst [vmem:[%s151 + $0x918] sm:$0xff] %v734
                %v736 = vld [vmem:[%s150 + $0x2480] sm:$0xff]
                %737 = vst [vmem:[%s151 + $0x920] sm:$0xff] %v736
                %v738 = vld [vmem:[%s150 + $0x2488] sm:$0xff]
                %739 = vst [vmem:[%s151 + $0x928] sm:$0xff] %v738
                %v740 = vld [vmem:[%s150 + $0x24c0] sm:$0xff]
                %741 = vst [vmem:[%s151 + $0x930] sm:$0xff] %v740
                %v742 = vld [vmem:[%s150 + $0x24c8] sm:$0xff]
                %743 = vst [vmem:[%s151 + $0x938] sm:$0xff] %v742
                %v744 = vld [vmem:[%s150 + $0x2500] sm:$0xff]
                %745 = vst [vmem:[%s151 + $0x940] sm:$0xff] %v744
                %v746 = vld [vmem:[%s150 + $0x2508] sm:$0xff]
                %747 = vst [vmem:[%s151 + $0x948] sm:$0xff] %v746
                %v748 = vld [vmem:[%s150 + $0x2540] sm:$0xff]
                %749 = vst [vmem:[%s151 + $0x950] sm:$0xff] %v748
                %v750 = vld [vmem:[%s150 + $0x2548] sm:$0xff]
                %751 = vst [vmem:[%s151 + $0x958] sm:$0xff] %v750
                %v752 = vld [vmem:[%s150 + $0x2580] sm:$0xff]
                %753 = vst [vmem:[%s151 + $0x960] sm:$0xff] %v752
                %v754 = vld [vmem:[%s150 + $0x2588] sm:$0xff]
                %755 = vst [vmem:[%s151 + $0x968] sm:$0xff] %v754
                %v756 = vld [vmem:[%s150 + $0x25c0] sm:$0xff]
                %757 = vst [vmem:[%s151 + $0x970] sm:$0xff] %v756
                %v758 = vld [vmem:[%s150 + $0x25c8] sm:$0xff]
                %759 = vst [vmem:[%s151 + $0x978] sm:$0xff] %v758
                %v760 = vld [vmem:[%s150 + $0x2600] sm:$0xff]
                %761 = vst [vmem:[%s151 + $0x980] sm:$0xff] %v760
                %v762 = vld [vmem:[%s150 + $0x2608] sm:$0xff]
                %763 = vst [vmem:[%s151 + $0x988] sm:$0xff] %v762
                %v764 = vld [vmem:[%s150 + $0x2640] sm:$0xff]
                %765 = vst [vmem:[%s151 + $0x990] sm:$0xff] %v764
                %v766 = vld [vmem:[%s150 + $0x2648] sm:$0xff]
                %767 = vst [vmem:[%s151 + $0x998] sm:$0xff] %v766
                %v768 = vld [vmem:[%s150 + $0x2680] sm:$0xff]
                %769 = vst [vmem:[%s151 + $0x9a0] sm:$0xff] %v768
                %v770 = vld [vmem:[%s150 + $0x2688] sm:$0xff]
                %771 = vst [vmem:[%s151 + $0x9a8] sm:$0xff] %v770
                %v772 = vld [vmem:[%s150 + $0x26c0] sm:$0xff]
                %773 = vst [vmem:[%s151 + $0x9b0] sm:$0xff] %v772
                %v774 = vld [vmem:[%s150 + $0x26c8] sm:$0xff]
                %775 = vst [vmem:[%s151 + $0x9b8] sm:$0xff] %v774
                %v776 = vld [vmem:[%s150 + $0x2700] sm:$0xff]
                %777 = vst [vmem:[%s151 + $0x9c0] sm:$0xff] %v776
                %v778 = vld [vmem:[%s150 + $0x2708] sm:$0xff]
                %779 = vst [vmem:[%s151 + $0x9c8] sm:$0xff] %v778
                %v780 = vld [vmem:[%s150 + $0x2740] sm:$0xff]
                %781 = vst [vmem:[%s151 + $0x9d0] sm:$0xff] %v780
                %v782 = vld [vmem:[%s150 + $0x2748] sm:$0xff]
                %783 = vst [vmem:[%s151 + $0x9d8] sm:$0xff] %v782
                %v784 = vld [vmem:[%s150 + $0x2780] sm:$0xff]
                %785 = vst [vmem:[%s151 + $0x9e0] sm:$0xff] %v784
                %v786 = vld [vmem:[%s150 + $0x2788] sm:$0xff]
                %787 = vst [vmem:[%s151 + $0x9e8] sm:$0xff] %v786
                %v788 = vld [vmem:[%s150 + $0x27c0] sm:$0xff]
                %789 = vst [vmem:[%s151 + $0x9f0] sm:$0xff] %v788
                %v790 = vld [vmem:[%s150 + $0x27c8] sm:$0xff]
                %791 = vst [vmem:[%s151 + $0x9f8] sm:$0xff] %v790
                %v792 = vld [vmem:[%s150 + $0x2800] sm:$0xff]
                %793 = vst [vmem:[%s151 + $0xa00] sm:$0xff] %v792
                %v794 = vld [vmem:[%s150 + $0x2808] sm:$0xff]
                %795 = vst [vmem:[%s151 + $0xa08] sm:$0xff] %v794
                %v796 = vld [vmem:[%s150 + $0x2840] sm:$0xff]
                %797 = vst [vmem:[%s151 + $0xa10] sm:$0xff] %v796
                %v798 = vld [vmem:[%s150 + $0x2848] sm:$0xff]
                %799 = vst [vmem:[%s151 + $0xa18] sm:$0xff] %v798
                %v800 = vld [vmem:[%s150 + $0x2880] sm:$0xff]
                %801 = vst [vmem:[%s151 + $0xa20] sm:$0xff] %v800
                %v802 = vld [vmem:[%s150 + $0x2888] sm:$0xff]
                %803 = vst [vmem:[%s151 + $0xa28] sm:$0xff] %v802
                %v804 = vld [vmem:[%s150 + $0x28c0] sm:$0xff]
                %805 = vst [vmem:[%s151 + $0xa30] sm:$0xff] %v804
                %v806 = vld [vmem:[%s150 + $0x28c8] sm:$0xff]
                %807 = vst [vmem:[%s151 + $0xa38] sm:$0xff] %v806
                %v808 = vld [vmem:[%s150 + $0x2900] sm:$0xff]
                %809 = vst [vmem:[%s151 + $0xa40] sm:$0xff] %v808
                %v810 = vld [vmem:[%s150 + $0x2908] sm:$0xff]
                %811 = vst [vmem:[%s151 + $0xa48] sm:$0xff] %v810
                %v812 = vld [vmem:[%s150 + $0x2940] sm:$0xff]
                %813 = vst [vmem:[%s151 + $0xa50] sm:$0xff] %v812
                %v814 = vld [vmem:[%s150 + $0x2948] sm:$0xff]
                %815 = vst [vmem:[%s151 + $0xa58] sm:$0xff] %v814
                %v816 = vld [vmem:[%s150 + $0x2980] sm:$0xff]
                %817 = vst [vmem:[%s151 + $0xa60] sm:$0xff] %v816
                %v818 = vld [vmem:[%s150 + $0x2988] sm:$0xff]
                %819 = vst [vmem:[%s151 + $0xa68] sm:$0xff] %v818
                %v820 = vld [vmem:[%s150 + $0x29c0] sm:$0xff]
                %821 = vst [vmem:[%s151 + $0xa70] sm:$0xff] %v820
                %v822 = vld [vmem:[%s150 + $0x29c8] sm:$0xff]
                %823 = vst [vmem:[%s151 + $0xa78] sm:$0xff] %v822
                %v824 = vld [vmem:[%s150 + $0x2a00] sm:$0xff]
                %825 = vst [vmem:[%s151 + $0xa80] sm:$0xff] %v824
                %v826 = vld [vmem:[%s150 + $0x2a08] sm:$0xff]
                %827 = vst [vmem:[%s151 + $0xa88] sm:$0xff] %v826
                %v828 = vld [vmem:[%s150 + $0x2a40] sm:$0xff]
                %829 = vst [vmem:[%s151 + $0xa90] sm:$0xff] %v828
                %v830 = vld [vmem:[%s150 + $0x2a48] sm:$0xff]
                %831 = vst [vmem:[%s151 + $0xa98] sm:$0xff] %v830
                %v832 = vld [vmem:[%s150 + $0x2a80] sm:$0xff]
                %833 = vst [vmem:[%s151 + $0xaa0] sm:$0xff] %v832
                %v834 = vld [vmem:[%s150 + $0x2a88] sm:$0xff]
                %835 = vst [vmem:[%s151 + $0xaa8] sm:$0xff] %v834
                %v836 = vld [vmem:[%s150 + $0x2ac0] sm:$0xff]
                %837 = vst [vmem:[%s151 + $0xab0] sm:$0xff] %v836
                %v838 = vld [vmem:[%s150 + $0x2ac8] sm:$0xff]
                %839 = vst [vmem:[%s151 + $0xab8] sm:$0xff] %v838
                %v840 = vld [vmem:[%s150 + $0x2b00] sm:$0xff]
                %841 = vst [vmem:[%s151 + $0xac0] sm:$0xff] %v840
                %v842 = vld [vmem:[%s150 + $0x2b08] sm:$0xff]
                %843 = vst [vmem:[%s151 + $0xac8] sm:$0xff] %v842
                %v844 = vld [vmem:[%s150 + $0x2b40] sm:$0xff]
                %845 = vst [vmem:[%s151 + $0xad0] sm:$0xff] %v844
                %v846 = vld [vmem:[%s150 + $0x2b48] sm:$0xff]
                %847 = vst [vmem:[%s151 + $0xad8] sm:$0xff] %v846
                %v848 = vld [vmem:[%s150 + $0x2b80] sm:$0xff]
                %849 = vst [vmem:[%s151 + $0xae0] sm:$0xff] %v848
                %v850 = vld [vmem:[%s150 + $0x2b88] sm:$0xff]
                %851 = vst [vmem:[%s151 + $0xae8] sm:$0xff] %v850
                %v852 = vld [vmem:[%s150 + $0x2bc0] sm:$0xff]
                %853 = vst [vmem:[%s151 + $0xaf0] sm:$0xff] %v852
                %v854 = vld [vmem:[%s150 + $0x2bc8] sm:$0xff]
                %855 = vst [vmem:[%s151 + $0xaf8] sm:$0xff] %v854
                %v856 = vld [vmem:[%s150 + $0x2c00] sm:$0xff]
                %857 = vst [vmem:[%s151 + $0xb00] sm:$0xff] %v856
                %v858 = vld [vmem:[%s150 + $0x2c08] sm:$0xff]
                %859 = vst [vmem:[%s151 + $0xb08] sm:$0xff] %v858
                %v860 = vld [vmem:[%s150 + $0x2c40] sm:$0xff]
                %861 = vst [vmem:[%s151 + $0xb10] sm:$0xff] %v860
                %v862 = vld [vmem:[%s150 + $0x2c48] sm:$0xff]
                %863 = vst [vmem:[%s151 + $0xb18] sm:$0xff] %v862
                %v864 = vld [vmem:[%s150 + $0x2c80] sm:$0xff]
                %865 = vst [vmem:[%s151 + $0xb20] sm:$0xff] %v864
                %v866 = vld [vmem:[%s150 + $0x2c88] sm:$0xff]
                %867 = vst [vmem:[%s151 + $0xb28] sm:$0xff] %v866
                %v868 = vld [vmem:[%s150 + $0x2cc0] sm:$0xff]
                %869 = vst [vmem:[%s151 + $0xb30] sm:$0xff] %v868
                %v870 = vld [vmem:[%s150 + $0x2cc8] sm:$0xff]
                %871 = vst [vmem:[%s151 + $0xb38] sm:$0xff] %v870
                %v872 = vld [vmem:[%s150 + $0x2d00] sm:$0xff]
                %873 = vst [vmem:[%s151 + $0xb40] sm:$0xff] %v872
                %v874 = vld [vmem:[%s150 + $0x2d08] sm:$0xff]
                %875 = vst [vmem:[%s151 + $0xb48] sm:$0xff] %v874
                %v876 = vld [vmem:[%s150 + $0x2d40] sm:$0xff]
                %877 = vst [vmem:[%s151 + $0xb50] sm:$0xff] %v876
                %v878 = vld [vmem:[%s150 + $0x2d48] sm:$0xff]
                %879 = vst [vmem:[%s151 + $0xb58] sm:$0xff] %v878
                %v880 = vld [vmem:[%s150 + $0x2d80] sm:$0xff]
                %881 = vst [vmem:[%s151 + $0xb60] sm:$0xff] %v880
                %v882 = vld [vmem:[%s150 + $0x2d88] sm:$0xff]
                %883 = vst [vmem:[%s151 + $0xb68] sm:$0xff] %v882
                %v884 = vld [vmem:[%s150 + $0x2dc0] sm:$0xff]
                %885 = vst [vmem:[%s151 + $0xb70] sm:$0xff] %v884
                %v886 = vld [vmem:[%s150 + $0x2dc8] sm:$0xff]
                %887 = vst [vmem:[%s151 + $0xb78] sm:$0xff] %v886
                %v888 = vld [vmem:[%s150 + $0x2e00] sm:$0xff]
                %889 = vst [vmem:[%s151 + $0xb80] sm:$0xff] %v888
                %v890 = vld [vmem:[%s150 + $0x2e08] sm:$0xff]
                %891 = vst [vmem:[%s151 + $0xb88] sm:$0xff] %v890
                %v892 = vld [vmem:[%s150 + $0x2e40] sm:$0xff]
                %893 = vst [vmem:[%s151 + $0xb90] sm:$0xff] %v892
                %v894 = vld [vmem:[%s150 + $0x2e48] sm:$0xff]
                %895 = vst [vmem:[%s151 + $0xb98] sm:$0xff] %v894
                %v896 = vld [vmem:[%s150 + $0x2e80] sm:$0xff]
                %897 = vst [vmem:[%s151 + $0xba0] sm:$0xff] %v896
                %v898 = vld [vmem:[%s150 + $0x2e88] sm:$0xff]
                %899 = vst [vmem:[%s151 + $0xba8] sm:$0xff] %v898
                %v900 = vld [vmem:[%s150 + $0x2ec0] sm:$0xff]
                %901 = vst [vmem:[%s151 + $0xbb0] sm:$0xff] %v900
                %v902 = vld [vmem:[%s150 + $0x2ec8] sm:$0xff]
                %903 = vst [vmem:[%s151 + $0xbb8] sm:$0xff] %v902
                %v904 = vld [vmem:[%s150 + $0x2f00] sm:$0xff]
                %905 = vst [vmem:[%s151 + $0xbc0] sm:$0xff] %v904
                %v906 = vld [vmem:[%s150 + $0x2f08] sm:$0xff]
                %907 = vst [vmem:[%s151 + $0xbc8] sm:$0xff] %v906
                %v908 = vld [vmem:[%s150 + $0x2f40] sm:$0xff]
                %909 = vst [vmem:[%s151 + $0xbd0] sm:$0xff] %v908
                %v910 = vld [vmem:[%s150 + $0x2f48] sm:$0xff]
                %911 = vst [vmem:[%s151 + $0xbd8] sm:$0xff] %v910
                %v912 = vld [vmem:[%s150 + $0x2f80] sm:$0xff]
                %913 = vst [vmem:[%s151 + $0xbe0] sm:$0xff] %v912
                %v914 = vld [vmem:[%s150 + $0x2f88] sm:$0xff]
                %915 = vst [vmem:[%s151 + $0xbe8] sm:$0xff] %v914
                %v916 = vld [vmem:[%s150 + $0x2fc0] sm:$0xff]
                %917 = vst [vmem:[%s151 + $0xbf0] sm:$0xff] %v916
                %v918 = vld [vmem:[%s150 + $0x2fc8] sm:$0xff]
                %919 = vst [vmem:[%s151 + $0xbf8] sm:$0xff] %v918
                %v920 = vld [vmem:[%s150 + $0x3000] sm:$0xff]
                %921 = vst [vmem:[%s151 + $0xc00] sm:$0xff] %v920
                %v922 = vld [vmem:[%s150 + $0x3008] sm:$0xff]
                %923 = vst [vmem:[%s151 + $0xc08] sm:$0xff] %v922
                %v924 = vld [vmem:[%s150 + $0x3040] sm:$0xff]
                %925 = vst [vmem:[%s151 + $0xc10] sm:$0xff] %v924
                %v926 = vld [vmem:[%s150 + $0x3048] sm:$0xff]
                %927 = vst [vmem:[%s151 + $0xc18] sm:$0xff] %v926
                %v928 = vld [vmem:[%s150 + $0x3080] sm:$0xff]
                %929 = vst [vmem:[%s151 + $0xc20] sm:$0xff] %v928
                %v930 = vld [vmem:[%s150 + $0x3088] sm:$0xff]
                %931 = vst [vmem:[%s151 + $0xc28] sm:$0xff] %v930
                %v932 = vld [vmem:[%s150 + $0x30c0] sm:$0xff]
                %933 = vst [vmem:[%s151 + $0xc30] sm:$0xff] %v932
                %v934 = vld [vmem:[%s150 + $0x30c8] sm:$0xff]
                %935 = vst [vmem:[%s151 + $0xc38] sm:$0xff] %v934
                %v936 = vld [vmem:[%s150 + $0x3100] sm:$0xff]
                %937 = vst [vmem:[%s151 + $0xc40] sm:$0xff] %v936
                %v938 = vld [vmem:[%s150 + $0x3108] sm:$0xff]
                %939 = vst [vmem:[%s151 + $0xc48] sm:$0xff] %v938
                %v940 = vld [vmem:[%s150 + $0x3140] sm:$0xff]
                %941 = vst [vmem:[%s151 + $0xc50] sm:$0xff] %v940
                %v942 = vld [vmem:[%s150 + $0x3148] sm:$0xff]
                %943 = vst [vmem:[%s151 + $0xc58] sm:$0xff] %v942
                %v944 = vld [vmem:[%s150 + $0x3180] sm:$0xff]
                %945 = vst [vmem:[%s151 + $0xc60] sm:$0xff] %v944
                %v946 = vld [vmem:[%s150 + $0x3188] sm:$0xff]
                %947 = vst [vmem:[%s151 + $0xc68] sm:$0xff] %v946
                %v948 = vld [vmem:[%s150 + $0x31c0] sm:$0xff]
                %949 = vst [vmem:[%s151 + $0xc70] sm:$0xff] %v948
                %v950 = vld [vmem:[%s150 + $0x31c8] sm:$0xff]
                %951 = vst [vmem:[%s151 + $0xc78] sm:$0xff] %v950
                %v952 = vld [vmem:[%s150 + $0x3200] sm:$0xff]
                %953 = vst [vmem:[%s151 + $0xc80] sm:$0xff] %v952
                %v954 = vld [vmem:[%s150 + $0x3208] sm:$0xff]
                %955 = vst [vmem:[%s151 + $0xc88] sm:$0xff] %v954
                %v956 = vld [vmem:[%s150 + $0x3240] sm:$0xff]
                %957 = vst [vmem:[%s151 + $0xc90] sm:$0xff] %v956
                %v958 = vld [vmem:[%s150 + $0x3248] sm:$0xff]
                %959 = vst [vmem:[%s151 + $0xc98] sm:$0xff] %v958
                %v960 = vld [vmem:[%s150 + $0x3280] sm:$0xff]
                %961 = vst [vmem:[%s151 + $0xca0] sm:$0xff] %v960
                %v962 = vld [vmem:[%s150 + $0x3288] sm:$0xff]
                %963 = vst [vmem:[%s151 + $0xca8] sm:$0xff] %v962
                %v964 = vld [vmem:[%s150 + $0x32c0] sm:$0xff]
                %965 = vst [vmem:[%s151 + $0xcb0] sm:$0xff] %v964
                %v966 = vld [vmem:[%s150 + $0x32c8] sm:$0xff]
                %967 = vst [vmem:[%s151 + $0xcb8] sm:$0xff] %v966
                %v968 = vld [vmem:[%s150 + $0x3300] sm:$0xff]
                %969 = vst [vmem:[%s151 + $0xcc0] sm:$0xff] %v968
                %v970 = vld [vmem:[%s150 + $0x3308] sm:$0xff]
                %971 = vst [vmem:[%s151 + $0xcc8] sm:$0xff] %v970
                %v972 = vld [vmem:[%s150 + $0x3340] sm:$0xff]
                %973 = vst [vmem:[%s151 + $0xcd0] sm:$0xff] %v972
                %v974 = vld [vmem:[%s150 + $0x3348] sm:$0xff]
                %975 = vst [vmem:[%s151 + $0xcd8] sm:$0xff] %v974
                %v976 = vld [vmem:[%s150 + $0x3380] sm:$0xff]
                %977 = vst [vmem:[%s151 + $0xce0] sm:$0xff] %v976
                %v978 = vld [vmem:[%s150 + $0x3388] sm:$0xff]
                %979 = vst [vmem:[%s151 + $0xce8] sm:$0xff] %v978
                %v980 = vld [vmem:[%s150 + $0x33c0] sm:$0xff]
                %981 = vst [vmem:[%s151 + $0xcf0] sm:$0xff] %v980
                %v982 = vld [vmem:[%s150 + $0x33c8] sm:$0xff]
                %983 = vst [vmem:[%s151 + $0xcf8] sm:$0xff] %v982
                %v984 = vld [vmem:[%s150 + $0x3400] sm:$0xff]
                %985 = vst [vmem:[%s151 + $0xd00] sm:$0xff] %v984
                %v986 = vld [vmem:[%s150 + $0x3408] sm:$0xff]
                %987 = vst [vmem:[%s151 + $0xd08] sm:$0xff] %v986
                %v988 = vld [vmem:[%s150 + $0x3440] sm:$0xff]
                %989 = vst [vmem:[%s151 + $0xd10] sm:$0xff] %v988
                %v990 = vld [vmem:[%s150 + $0x3448] sm:$0xff]
                %991 = vst [vmem:[%s151 + $0xd18] sm:$0xff] %v990
                %v992 = vld [vmem:[%s150 + $0x3480] sm:$0xff]
                %993 = vst [vmem:[%s151 + $0xd20] sm:$0xff] %v992
                %v994 = vld [vmem:[%s150 + $0x3488] sm:$0xff]
                %995 = vst [vmem:[%s151 + $0xd28] sm:$0xff] %v994
                %v996 = vld [vmem:[%s150 + $0x34c0] sm:$0xff]
                %997 = vst [vmem:[%s151 + $0xd30] sm:$0xff] %v996
                %v998 = vld [vmem:[%s150 + $0x34c8] sm:$0xff]
                %999 = vst [vmem:[%s151 + $0xd38] sm:$0xff] %v998
                %v1000 = vld [vmem:[%s150 + $0x3500] sm:$0xff]
                %1001 = vst [vmem:[%s151 + $0xd40] sm:$0xff] %v1000
                %v1002 = vld [vmem:[%s150 + $0x3508] sm:$0xff]
                %1003 = vst [vmem:[%s151 + $0xd48] sm:$0xff] %v1002
                %v1004 = vld [vmem:[%s150 + $0x3540] sm:$0xff]
                %1005 = vst [vmem:[%s151 + $0xd50] sm:$0xff] %v1004
                %v1006 = vld [vmem:[%s150 + $0x3548] sm:$0xff]
                %1007 = vst [vmem:[%s151 + $0xd58] sm:$0xff] %v1006
                %v1008 = vld [vmem:[%s150 + $0x3580] sm:$0xff]
                %1009 = vst [vmem:[%s151 + $0xd60] sm:$0xff] %v1008
                %v1010 = vld [vmem:[%s150 + $0x3588] sm:$0xff]
                %1011 = vst [vmem:[%s151 + $0xd68] sm:$0xff] %v1010
                %v1012 = vld [vmem:[%s150 + $0x35c0] sm:$0xff]
                %1013 = vst [vmem:[%s151 + $0xd70] sm:$0xff] %v1012
                %v1014 = vld [vmem:[%s150 + $0x35c8] sm:$0xff]
                %1015 = vst [vmem:[%s151 + $0xd78] sm:$0xff] %v1014
                %v1016 = vld [vmem:[%s150 + $0x3600] sm:$0xff]
                %1017 = vst [vmem:[%s151 + $0xd80] sm:$0xff] %v1016
                %v1018 = vld [vmem:[%s150 + $0x3608] sm:$0xff]
                %1019 = vst [vmem:[%s151 + $0xd88] sm:$0xff] %v1018
                %v1020 = vld [vmem:[%s150 + $0x3640] sm:$0xff]
                %1021 = vst [vmem:[%s151 + $0xd90] sm:$0xff] %v1020
                %v1022 = vld [vmem:[%s150 + $0x3648] sm:$0xff]
                %1023 = vst [vmem:[%s151 + $0xd98] sm:$0xff] %v1022
                %v1024 = vld [vmem:[%s150 + $0x3680] sm:$0xff]
                %1025 = vst [vmem:[%s151 + $0xda0] sm:$0xff] %v1024
                %v1026 = vld [vmem:[%s150 + $0x3688] sm:$0xff]
                %1027 = vst [vmem:[%s151 + $0xda8] sm:$0xff] %v1026
                %v1028 = vld [vmem:[%s150 + $0x36c0] sm:$0xff]
                %1029 = vst [vmem:[%s151 + $0xdb0] sm:$0xff] %v1028
                %v1030 = vld [vmem:[%s150 + $0x36c8] sm:$0xff]
                %1031 = vst [vmem:[%s151 + $0xdb8] sm:$0xff] %v1030
                %v1032 = vld [vmem:[%s150 + $0x3700] sm:$0xff]
                %1033 = vst [vmem:[%s151 + $0xdc0] sm:$0xff] %v1032
                %v1034 = vld [vmem:[%s150 + $0x3708] sm:$0xff]
                %1035 = vst [vmem:[%s151 + $0xdc8] sm:$0xff] %v1034
                %v1036 = vld [vmem:[%s150 + $0x3740] sm:$0xff]
                %1037 = vst [vmem:[%s151 + $0xdd0] sm:$0xff] %v1036
                %v1038 = vld [vmem:[%s150 + $0x3748] sm:$0xff]
                %1039 = vst [vmem:[%s151 + $0xdd8] sm:$0xff] %v1038
                %v1040 = vld [vmem:[%s150 + $0x3780] sm:$0xff]
                %1041 = vst [vmem:[%s151 + $0xde0] sm:$0xff] %v1040
                %v1042 = vld [vmem:[%s150 + $0x3788] sm:$0xff]
                %1043 = vst [vmem:[%s151 + $0xde8] sm:$0xff] %v1042
                %v1044 = vld [vmem:[%s150 + $0x37c0] sm:$0xff]
                %1045 = vst [vmem:[%s151 + $0xdf0] sm:$0xff] %v1044
                %v1046 = vld [vmem:[%s150 + $0x37c8] sm:$0xff]
                %1047 = vst [vmem:[%s151 + $0xdf8] sm:$0xff] %v1046
                %v1048 = vld [vmem:[%s150 + $0x3800] sm:$0xff]
                %1049 = vst [vmem:[%s151 + $0xe00] sm:$0xff] %v1048
                %v1050 = vld [vmem:[%s150 + $0x3808] sm:$0xff]
                %1051 = vst [vmem:[%s151 + $0xe08] sm:$0xff] %v1050
                %v1052 = vld [vmem:[%s150 + $0x3840] sm:$0xff]
                %1053 = vst [vmem:[%s151 + $0xe10] sm:$0xff] %v1052
                %v1054 = vld [vmem:[%s150 + $0x3848] sm:$0xff]
                %1055 = vst [vmem:[%s151 + $0xe18] sm:$0xff] %v1054
                %v1056 = vld [vmem:[%s150 + $0x3880] sm:$0xff]
                %1057 = vst [vmem:[%s151 + $0xe20] sm:$0xff] %v1056
                %v1058 = vld [vmem:[%s150 + $0x3888] sm:$0xff]
                %1059 = vst [vmem:[%s151 + $0xe28] sm:$0xff] %v1058
                %v1060 = vld [vmem:[%s150 + $0x38c0] sm:$0xff]
                %1061 = vst [vmem:[%s151 + $0xe30] sm:$0xff] %v1060
                %v1062 = vld [vmem:[%s150 + $0x38c8] sm:$0xff]
                %1063 = vst [vmem:[%s151 + $0xe38] sm:$0xff] %v1062
                %v1064 = vld [vmem:[%s150 + $0x3900] sm:$0xff]
                %1065 = vst [vmem:[%s151 + $0xe40] sm:$0xff] %v1064
                %v1066 = vld [vmem:[%s150 + $0x3908] sm:$0xff]
                %1067 = vst [vmem:[%s151 + $0xe48] sm:$0xff] %v1066
                %v1068 = vld [vmem:[%s150 + $0x3940] sm:$0xff]
                %1069 = vst [vmem:[%s151 + $0xe50] sm:$0xff] %v1068
                %v1070 = vld [vmem:[%s150 + $0x3948] sm:$0xff]
                %1071 = vst [vmem:[%s151 + $0xe58] sm:$0xff] %v1070
                %v1072 = vld [vmem:[%s150 + $0x3980] sm:$0xff]
                %1073 = vst [vmem:[%s151 + $0xe60] sm:$0xff] %v1072
                %v1074 = vld [vmem:[%s150 + $0x3988] sm:$0xff]
                %1075 = vst [vmem:[%s151 + $0xe68] sm:$0xff] %v1074
                %v1076 = vld [vmem:[%s150 + $0x39c0] sm:$0xff]
                %1077 = vst [vmem:[%s151 + $0xe70] sm:$0xff] %v1076
                %v1078 = vld [vmem:[%s150 + $0x39c8] sm:$0xff]
                %1079 = vst [vmem:[%s151 + $0xe78] sm:$0xff] %v1078
                %v1080 = vld [vmem:[%s150 + $0x3a00] sm:$0xff]
                %1081 = vst [vmem:[%s151 + $0xe80] sm:$0xff] %v1080
                %v1082 = vld [vmem:[%s150 + $0x3a08] sm:$0xff]
                %1083 = vst [vmem:[%s151 + $0xe88] sm:$0xff] %v1082
                %v1084 = vld [vmem:[%s150 + $0x3a40] sm:$0xff]
                %1085 = vst [vmem:[%s151 + $0xe90] sm:$0xff] %v1084
                %v1086 = vld [vmem:[%s150 + $0x3a48] sm:$0xff]
                %1087 = vst [vmem:[%s151 + $0xe98] sm:$0xff] %v1086
                %v1088 = vld [vmem:[%s150 + $0x3a80] sm:$0xff]
                %1089 = vst [vmem:[%s151 + $0xea0] sm:$0xff] %v1088
                %v1090 = vld [vmem:[%s150 + $0x3a88] sm:$0xff]
                %1091 = vst [vmem:[%s151 + $0xea8] sm:$0xff] %v1090
                %v1092 = vld [vmem:[%s150 + $0x3ac0] sm:$0xff]
                %1093 = vst [vmem:[%s151 + $0xeb0] sm:$0xff] %v1092
                %v1094 = vld [vmem:[%s150 + $0x3ac8] sm:$0xff]
                %1095 = vst [vmem:[%s151 + $0xeb8] sm:$0xff] %v1094
                %v1096 = vld [vmem:[%s150 + $0x3b00] sm:$0xff]
                %1097 = vst [vmem:[%s151 + $0xec0] sm:$0xff] %v1096
                %v1098 = vld [vmem:[%s150 + $0x3b08] sm:$0xff]
                %1099 = vst [vmem:[%s151 + $0xec8] sm:$0xff] %v1098
                %v1100 = vld [vmem:[%s150 + $0x3b40] sm:$0xff]
                %1101 = vst [vmem:[%s151 + $0xed0] sm:$0xff] %v1100
                %v1102 = vld [vmem:[%s150 + $0x3b48] sm:$0xff]
                %1103 = vst [vmem:[%s151 + $0xed8] sm:$0xff] %v1102
                %v1104 = vld [vmem:[%s150 + $0x3b80] sm:$0xff]
                %1105 = vst [vmem:[%s151 + $0xee0] sm:$0xff] %v1104
                %v1106 = vld [vmem:[%s150 + $0x3b88] sm:$0xff]
                %1107 = vst [vmem:[%s151 + $0xee8] sm:$0xff] %v1106
                %v1108 = vld [vmem:[%s150 + $0x3bc0] sm:$0xff]
                %1109 = vst [vmem:[%s151 + $0xef0] sm:$0xff] %v1108
                %v1110 = vld [vmem:[%s150 + $0x3bc8] sm:$0xff]
                %1111 = vst [vmem:[%s151 + $0xef8] sm:$0xff] %v1110
                %v1112 = vld [vmem:[%s150 + $0x3c00] sm:$0xff]
                %1113 = vst [vmem:[%s151 + $0xf00] sm:$0xff] %v1112
                %v1114 = vld [vmem:[%s150 + $0x3c08] sm:$0xff]
                %1115 = vst [vmem:[%s151 + $0xf08] sm:$0xff] %v1114
                %v1116 = vld [vmem:[%s150 + $0x3c40] sm:$0xff]
                %1117 = vst [vmem:[%s151 + $0xf10] sm:$0xff] %v1116
                %v1118 = vld [vmem:[%s150 + $0x3c48] sm:$0xff]
                %1119 = vst [vmem:[%s151 + $0xf18] sm:$0xff] %v1118
                %v1120 = vld [vmem:[%s150 + $0x3c80] sm:$0xff]
                %1121 = vst [vmem:[%s151 + $0xf20] sm:$0xff] %v1120
                %v1122 = vld [vmem:[%s150 + $0x3c88] sm:$0xff]
                %1123 = vst [vmem:[%s151 + $0xf28] sm:$0xff] %v1122
                %v1124 = vld [vmem:[%s150 + $0x3cc0] sm:$0xff]
                %1125 = vst [vmem:[%s151 + $0xf30] sm:$0xff] %v1124
                %v1126 = vld [vmem:[%s150 + $0x3cc8] sm:$0xff]
                %1127 = vst [vmem:[%s151 + $0xf38] sm:$0xff] %v1126
                %v1128 = vld [vmem:[%s150 + $0x3d00] sm:$0xff]
                %1129 = vst [vmem:[%s151 + $0xf40] sm:$0xff] %v1128
                %v1130 = vld [vmem:[%s150 + $0x3d08] sm:$0xff]
                %1131 = vst [vmem:[%s151 + $0xf48] sm:$0xff] %v1130
                %v1132 = vld [vmem:[%s150 + $0x3d40] sm:$0xff]
                %1133 = vst [vmem:[%s151 + $0xf50] sm:$0xff] %v1132
                %v1134 = vld [vmem:[%s150 + $0x3d48] sm:$0xff]
                %1135 = vst [vmem:[%s151 + $0xf58] sm:$0xff] %v1134
                %v1136 = vld [vmem:[%s150 + $0x3d80] sm:$0xff]
                %1137 = vst [vmem:[%s151 + $0xf60] sm:$0xff] %v1136
                %v1138 = vld [vmem:[%s150 + $0x3d88] sm:$0xff]
                %1139 = vst [vmem:[%s151 + $0xf68] sm:$0xff] %v1138
                %v1140 = vld [vmem:[%s150 + $0x3dc0] sm:$0xff]
                %1141 = vst [vmem:[%s151 + $0xf70] sm:$0xff] %v1140
                %v1142 = vld [vmem:[%s150 + $0x3dc8] sm:$0xff]
                %1143 = vst [vmem:[%s151 + $0xf78] sm:$0xff] %v1142
                %v1144 = vld [vmem:[%s150 + $0x3e00] sm:$0xff]
                %1145 = vst [vmem:[%s151 + $0xf80] sm:$0xff] %v1144
                %v1146 = vld [vmem:[%s150 + $0x3e08] sm:$0xff]
                %1147 = vst [vmem:[%s151 + $0xf88] sm:$0xff] %v1146
                %v1148 = vld [vmem:[%s150 + $0x3e40] sm:$0xff]
                %1149 = vst [vmem:[%s151 + $0xf90] sm:$0xff] %v1148
                %v1150 = vld [vmem:[%s150 + $0x3e48] sm:$0xff]
                %1151 = vst [vmem:[%s151 + $0xf98] sm:$0xff] %v1150
                %v1152 = vld [vmem:[%s150 + $0x3e80] sm:$0xff]
                %1153 = vst [vmem:[%s151 + $0xfa0] sm:$0xff] %v1152
                %v1154 = vld [vmem:[%s150 + $0x3e88] sm:$0xff]
                %1155 = vst [vmem:[%s151 + $0xfa8] sm:$0xff] %v1154
                %v1156 = vld [vmem:[%s150 + $0x3ec0] sm:$0xff]
                %1157 = vst [vmem:[%s151 + $0xfb0] sm:$0xff] %v1156
                %v1158 = vld [vmem:[%s150 + $0x3ec8] sm:$0xff]
                %1159 = vst [vmem:[%s151 + $0xfb8] sm:$0xff] %v1158
                %v1160 = vld [vmem:[%s150 + $0x3f00] sm:$0xff]
                %1161 = vst [vmem:[%s151 + $0xfc0] sm:$0xff] %v1160
                %v1162 = vld [vmem:[%s150 + $0x3f08] sm:$0xff]
                %1163 = vst [vmem:[%s151 + $0xfc8] sm:$0xff] %v1162
                %v1164 = vld [vmem:[%s150 + $0x3f40] sm:$0xff]
                %1165 = vst [vmem:[%s151 + $0xfd0] sm:$0xff] %v1164
                %v1166 = vld [vmem:[%s150 + $0x3f48] sm:$0xff]
                %1167 = vst [vmem:[%s151 + $0xfd8] sm:$0xff] %v1166
                %v1168 = vld [vmem:[%s150 + $0x3f80] sm:$0xff]
                %1169 = vst [vmem:[%s151 + $0xfe0] sm:$0xff] %v1168
                %v1170 = vld [vmem:[%s150 + $0x3f88] sm:$0xff]
                %1171 = vst [vmem:[%s151 + $0xfe8] sm:$0xff] %v1170
                %v1172 = vld [vmem:[%s150 + $0x3fc0] sm:$0xff]
                %1173 = vst [vmem:[%s151 + $0xff0] sm:$0xff] %v1172
                %v1174 = vld [vmem:[%s150 + $0x3fc8] sm:$0xff]
                %1175 = vst [vmem:[%s151 + $0xff8] sm:$0xff] %v1174
              $region37: #{netlinear_forward.6} parent=31 // loop_footer
                %s149 = sadd.s32 1, %s145
              $region38: #{netlinear_forward.6} parent=31 // loop_footer_branch
                %144 = sbr.rel target = $region34
              $region39: #{netlinear_forward.6} parent=31 // loop_exit
                _
            $region32: #{netlinear_forward.6} parent=27 // pred_fallthru
              _
            // Predicated region
            $region40: #{netlinear_forward.6} parent=27 // pred_check
              _
            $region41: #{netlinear_forward.6} parent=27 // pred_check_branch
              %1177 = sbr.rel target = $region43
            $region42: #{netlinear_forward.6} parent=27 // pred_region
              _
            $region43: #{netlinear_forward.6} parent=27 // pred_fallthru
              _
          $region28: #{netlinear_forward.6} parent=23 // pred_fallthru
            _
          %1178 = vnop
        $region24: #{netlinear_forward.6} parent=19 // pred_fallthru
          _
        // Predicated region
        $region44: #{netlinear_forward.6} parent=19 // pred_check
          %p1179 = pneg %p76
        $region45: #{netlinear_forward.6} parent=19 // pred_check_branch
          %1181 = sbr.rel (%p1179) target = $region47
        $region46: #{netlinear_forward.6} parent=19 // pred_region
          %s1182 = smul.u32 4, %s9
          %p1183 = scmp.lt.s32.totalorder %s1182, 15
          %s1184 = scalar_select %p1183, %s1182, 15
          %s1185 = scalar_lea.vmem %s2, %s1184
          %s1186 = smul.u32 4, %s9
        $region47: #{netlinear_forward.6} parent=19 // pred_fallthru
          _
      $region20: #{netlinear_forward.6} parent=5 // pred_fallthru
        _
      %p1187 = scmp.le.s32.totalorder 1, %s9
      %p1188 = scmp.lt.s32.totalorder %s9, 5
      %p1189 = pnand %p1187, %p1188
      %p1190 = pneg %p1189
      // Predicated region
      $region48: #{netlinear_forward.6} parent=5 // pred_check
        _
      $region49: #{netlinear_forward.6} parent=5 // pred_check_branch
        %1192 = sbr.rel (%p1189) target = $region51
      $region50: #{netlinear_forward.6} parent=5 // pred_region
        %s1193 = ssub.s32 %s9, 1
        %s1194 = sand.u32 %s43, 1
        %s1195 = sand.u32 %s43, 1
        %s1196 = smul.addr %s1195, 4096
        %s1197 = scalar_lea.vmem [#allocation2], %s1196
        // Predicated region
        $region52: #{netlinear_forward.6} parent=50 // pred_check
          %p1198 = pneg %p56
        $region53: #{netlinear_forward.6} parent=50 // pred_check_branch
          %1200 = sbr.rel (%p1198) target = $region55
        $region54: #{netlinear_forward.6} parent=50 // pred_region
          _
        $region55: #{netlinear_forward.6} parent=50 // pred_fallthru
          _
        %p1201 = pneg %p30
        %p1202 = pneg %p27
        %s1203 = sand.u32 %s43, 1
        %s1204 = sand.u32 %s43, 1
        %s1205 = smul.addr %s1204, 4096
        %s1206 = scalar_lea.vmem [#allocation2], %s1205
        %p1207 = pneg %p56
        %p1208 = pneg %p53
        %s1209 = smul.u32 4, %s14
        %p1210 = scmp.lt.s32.totalorder %s1209, 15
        %s1211 = scalar_select %p1210, %s1209, 15
        %s1212 = scalar_lea.vmem %s2, %s1211
        %p1213 = pneg %p82
        %p1214 = pneg %p79
        %p1215 = pneg %p108
        %p1216 = pneg %p105
        %s1217 = smul.u32 4, %s14
        %p1218 = scmp.lt.s32.totalorder %s1217, 15
        %s1219 = scalar_select %p1218, %s1217, 15
        %s1220 = smul.addr %s1219, 4
        %s1221 = scalar_lea.vmem %s3, %s1220
        %s1222 = smul.u32 4, %s14
        %s1223 = smul.u32 4, %s14
        %p1224 = scmp.lt.s32.totalorder %s1223, 15
        %s1225 = scalar_select %p1224, %s1223, 15
        %s1226 = scalar_lea.vmem %s2, %s1225
        %s1227 = smul.u32 4, %s14
        %s1228 = smul.u32 4, %s14
        %p1229 = scmp.lt.s32.totalorder %s1228, 15
        %s1230 = scalar_select %p1229, %s1228, 15
        %s1231 = smul.addr %s1230, 4
        %s1232 = scalar_lea.vmem %s3, %s1231
        %s1233 = smul.u32 4, %s14
        %v1234 = vld [vmem:[%s0] sm:$0xff]
        %v1235 = vld [vmem:[%s0 + $0x8] sm:$0xff]
        %v1236 = vld [vmem:[%s0 + $0x10] sm:$0xff]
        %v1237 = vld [vmem:[%s0 + $0x18] sm:$0xff]
        %v1238 = vld [vmem:[%s0 + $0x20] sm:$0xff]
        %v1239 = vld [vmem:[%s0 + $0x28] sm:$0xff]
        %v1240 = vld [vmem:[%s0 + $0x30] sm:$0xff]
        %v1241 = vld [vmem:[%s0 + $0x38] sm:$0xff]
        %v1242 = vld [vmem:[%s1197] sm:$0xff]
        %v1243 = vld [vmem:[%s1197 + $0x8] sm:$0xff]
        %v1244 = vld [vmem:[%s1197 + $0x10] sm:$0xff]
        %v1245 = vld [vmem:[%s1197 + $0x18] sm:$0xff]
        %v1246 = vld [vmem:[%s1197 + $0x20] sm:$0xff]
        %v1247 = vld [vmem:[%s1197 + $0x28] sm:$0xff]
        %v1248 = vld [vmem:[%s1197 + $0x30] sm:$0xff]
        %v1249 = vld [vmem:[%s1197 + $0x38] sm:$0xff]
        %v1250 = vld [vmem:[%s1197 + $0x40] sm:$0xff]
        %v1251 = vld [vmem:[%s1197 + $0x48] sm:$0xff]
        %v1252 = vld [vmem:[%s1197 + $0x50] sm:$0xff]
        %v1253 = vld [vmem:[%s1197 + $0x58] sm:$0xff]
        %v1254 = vld [vmem:[%s1197 + $0x60] sm:$0xff]
        %v1255 = vld [vmem:[%s1197 + $0x68] sm:$0xff]
        %v1256 = vld [vmem:[%s1197 + $0x70] sm:$0xff]
        %v1257 = vld [vmem:[%s1197 + $0x78] sm:$0xff]
        %v1258 = vld [vmem:[%s1197 + $0x80] sm:$0xff]
        %v1259 = vld [vmem:[%s1197 + $0x88] sm:$0xff]
        %v1260 = vld [vmem:[%s1197 + $0x90] sm:$0xff]
        %v1261 = vld [vmem:[%s1197 + $0x98] sm:$0xff]
        %v1262 = vld [vmem:[%s1197 + $0xa0] sm:$0xff]
        %v1263 = vld [vmem:[%s1197 + $0xa8] sm:$0xff]
        %v1264 = vld [vmem:[%s1197 + $0xb0] sm:$0xff]
        %v1265 = vld [vmem:[%s1197 + $0xb8] sm:$0xff]
        %v1266 = vld [vmem:[%s1197 + $0xc0] sm:$0xff]
        %v1267 = vld [vmem:[%s1197 + $0xc8] sm:$0xff]
        %v1268 = vld [vmem:[%s1197 + $0xd0] sm:$0xff]
        %v1269 = vld [vmem:[%s1197 + $0xd8] sm:$0xff]
        %v1270 = vld [vmem:[%s1197 + $0xe0] sm:$0xff]
        %v1271 = vld [vmem:[%s1197 + $0xe8] sm:$0xff]
        %v1272 = vld [vmem:[%s1197 + $0xf0] sm:$0xff]
        %v1273 = vld [vmem:[%s1197 + $0xf8] sm:$0xff]
        %v1274 = vld [vmem:[%s1197 + $0x100] sm:$0xff]
        %v1275 = vld [vmem:[%s1197 + $0x108] sm:$0xff]
        %v1276 = vld [vmem:[%s1197 + $0x110] sm:$0xff]
        %v1277 = vld [vmem:[%s1197 + $0x118] sm:$0xff]
        %v1278 = vld [vmem:[%s1197 + $0x120] sm:$0xff]
        %v1279 = vld [vmem:[%s1197 + $0x128] sm:$0xff]
        %v1280 = vld [vmem:[%s1197 + $0x130] sm:$0xff]
        %v1281 = vld [vmem:[%s1197 + $0x138] sm:$0xff]
        %v1282 = vld [vmem:[%s1197 + $0x140] sm:$0xff]
        %v1283 = vld [vmem:[%s1197 + $0x148] sm:$0xff]
        %v1284 = vld [vmem:[%s1197 + $0x150] sm:$0xff]
        %v1285 = vld [vmem:[%s1197 + $0x158] sm:$0xff]
        %v1286 = vld [vmem:[%s1197 + $0x160] sm:$0xff]
        %v1287 = vld [vmem:[%s1197 + $0x168] sm:$0xff]
        %v1288 = vld [vmem:[%s1197 + $0x170] sm:$0xff]
        %v1289 = vld [vmem:[%s1197 + $0x178] sm:$0xff]
        %v1290 = vld [vmem:[%s1197 + $0x180] sm:$0xff]
        %v1291 = vld [vmem:[%s1197 + $0x188] sm:$0xff]
        %v1292 = vld [vmem:[%s1197 + $0x190] sm:$0xff]
        %v1293 = vld [vmem:[%s1197 + $0x198] sm:$0xff]
        %v1294 = vld [vmem:[%s1197 + $0x1a0] sm:$0xff]
        %v1295 = vld [vmem:[%s1197 + $0x1a8] sm:$0xff]
        %v1296 = vld [vmem:[%s1197 + $0x1b0] sm:$0xff]
        %v1297 = vld [vmem:[%s1197 + $0x1b8] sm:$0xff]
        %v1298 = vld [vmem:[%s1197 + $0x1c0] sm:$0xff]
        %v1299 = vld [vmem:[%s1197 + $0x1c8] sm:$0xff]
        %v1300 = vld [vmem:[%s1197 + $0x1d0] sm:$0xff]
        %v1301 = vld [vmem:[%s1197 + $0x1d8] sm:$0xff]
        %v1302 = vld [vmem:[%s1197 + $0x1e0] sm:$0xff]
        %v1303 = vld [vmem:[%s1197 + $0x1e8] sm:$0xff]
        %v1304 = vld [vmem:[%s1197 + $0x1f0] sm:$0xff]
        %v1305 = vld [vmem:[%s1197 + $0x1f8] sm:$0xff]
        %v1306 = vld [vmem:[%s1197 + $0x200] sm:$0xff]
        %v1307 = vld [vmem:[%s1197 + $0x208] sm:$0xff]
        %v1308 = vld [vmem:[%s1197 + $0x210] sm:$0xff]
        %v1309 = vld [vmem:[%s1197 + $0x218] sm:$0xff]
        %v1310 = vld [vmem:[%s1197 + $0x220] sm:$0xff]
        %v1311 = vld [vmem:[%s1197 + $0x228] sm:$0xff]
        %v1312 = vld [vmem:[%s1197 + $0x230] sm:$0xff]
        %v1313 = vld [vmem:[%s1197 + $0x238] sm:$0xff]
        %v1314 = vld [vmem:[%s1197 + $0x240] sm:$0xff]
        %v1315 = vld [vmem:[%s1197 + $0x248] sm:$0xff]
        %v1316 = vld [vmem:[%s1197 + $0x250] sm:$0xff]
        %v1317 = vld [vmem:[%s1197 + $0x258] sm:$0xff]
        %v1318 = vld [vmem:[%s1197 + $0x260] sm:$0xff]
        %v1319 = vld [vmem:[%s1197 + $0x268] sm:$0xff]
        %v1320 = vld [vmem:[%s1197 + $0x270] sm:$0xff]
        %v1321 = vld [vmem:[%s1197 + $0x278] sm:$0xff]
        %v1322 = vld [vmem:[%s1197 + $0x280] sm:$0xff]
        %v1323 = vld [vmem:[%s1197 + $0x288] sm:$0xff]
        %v1324 = vld [vmem:[%s1197 + $0x290] sm:$0xff]
        %v1325 = vld [vmem:[%s1197 + $0x298] sm:$0xff]
        %v1326 = vld [vmem:[%s1197 + $0x2a0] sm:$0xff]
        %v1327 = vld [vmem:[%s1197 + $0x2a8] sm:$0xff]
        %v1328 = vld [vmem:[%s1197 + $0x2b0] sm:$0xff]
        %v1329 = vld [vmem:[%s1197 + $0x2b8] sm:$0xff]
        %v1330 = vld [vmem:[%s1197 + $0x2c0] sm:$0xff]
        %v1331 = vld [vmem:[%s1197 + $0x2c8] sm:$0xff]
        %v1332 = vld [vmem:[%s1197 + $0x2d0] sm:$0xff]
        %v1333 = vld [vmem:[%s1197 + $0x2d8] sm:$0xff]
        %v1334 = vld [vmem:[%s1197 + $0x2e0] sm:$0xff]
        %v1335 = vld [vmem:[%s1197 + $0x2e8] sm:$0xff]
        %v1336 = vld [vmem:[%s1197 + $0x2f0] sm:$0xff]
        %v1337 = vld [vmem:[%s1197 + $0x2f8] sm:$0xff]
        %v1338 = vld [vmem:[%s1197 + $0x300] sm:$0xff]
        %v1339 = vld [vmem:[%s1197 + $0x308] sm:$0xff]
        %v1340 = vld [vmem:[%s1197 + $0x310] sm:$0xff]
        %v1341 = vld [vmem:[%s1197 + $0x318] sm:$0xff]
        %v1342 = vld [vmem:[%s1197 + $0x320] sm:$0xff]
        %v1343 = vld [vmem:[%s1197 + $0x328] sm:$0xff]
        %v1344 = vld [vmem:[%s1197 + $0x330] sm:$0xff]
        %v1345 = vld [vmem:[%s1197 + $0x338] sm:$0xff]
        %v1346 = vld [vmem:[%s1197 + $0x340] sm:$0xff]
        %v1347 = vld [vmem:[%s1197 + $0x348] sm:$0xff]
        %v1348 = vld [vmem:[%s1197 + $0x350] sm:$0xff]
        %v1349 = vld [vmem:[%s1197 + $0x358] sm:$0xff]
        %v1350 = vld [vmem:[%s1197 + $0x360] sm:$0xff]
        %v1351 = vld [vmem:[%s1197 + $0x368] sm:$0xff]
        %v1352 = vld [vmem:[%s1197 + $0x370] sm:$0xff]
        %v1353 = vld [vmem:[%s1197 + $0x378] sm:$0xff]
        %v1354 = vld [vmem:[%s1197 + $0x380] sm:$0xff]
        %v1355 = vld [vmem:[%s1197 + $0x388] sm:$0xff]
        %v1356 = vld [vmem:[%s1197 + $0x390] sm:$0xff]
        %v1357 = vld [vmem:[%s1197 + $0x398] sm:$0xff]
        %v1358 = vld [vmem:[%s1197 + $0x3a0] sm:$0xff]
        %v1359 = vld [vmem:[%s1197 + $0x3a8] sm:$0xff]
        %v1360 = vld [vmem:[%s1197 + $0x3b0] sm:$0xff]
        %v1361 = vld [vmem:[%s1197 + $0x3b8] sm:$0xff]
        %v1362 = vld [vmem:[%s1197 + $0x3c0] sm:$0xff]
        %v1363 = vld [vmem:[%s1197 + $0x3c8] sm:$0xff]
        %v1364 = vld [vmem:[%s1197 + $0x3d0] sm:$0xff]
        %v1365 = vld [vmem:[%s1197 + $0x3d8] sm:$0xff]
        %v1366 = vld [vmem:[%s1197 + $0x3e0] sm:$0xff]
        %v1367 = vld [vmem:[%s1197 + $0x3e8] sm:$0xff]
        %v1368 = vld [vmem:[%s1197 + $0x3f0] sm:$0xff]
        %v1369 = vld [vmem:[%s1197 + $0x3f8] sm:$0xff]
        %v1370 = vld [vmem:[%s1197 + $0x400] sm:$0xff]
        %v1371 = vld [vmem:[%s1197 + $0x408] sm:$0xff]
        %v1372 = vld [vmem:[%s1197 + $0x410] sm:$0xff]
        %v1373 = vld [vmem:[%s1197 + $0x418] sm:$0xff]
        %v1374 = vld [vmem:[%s1197 + $0x420] sm:$0xff]
        %v1375 = vld [vmem:[%s1197 + $0x428] sm:$0xff]
        %v1376 = vld [vmem:[%s1197 + $0x430] sm:$0xff]
        %v1377 = vld [vmem:[%s1197 + $0x438] sm:$0xff]
        %v1378 = vld [vmem:[%s1197 + $0x440] sm:$0xff]
        %v1379 = vld [vmem:[%s1197 + $0x448] sm:$0xff]
        %v1380 = vld [vmem:[%s1197 + $0x450] sm:$0xff]
        %v1381 = vld [vmem:[%s1197 + $0x458] sm:$0xff]
        %v1382 = vld [vmem:[%s1197 + $0x460] sm:$0xff]
        %v1383 = vld [vmem:[%s1197 + $0x468] sm:$0xff]
        %v1384 = vld [vmem:[%s1197 + $0x470] sm:$0xff]
        %v1385 = vld [vmem:[%s1197 + $0x478] sm:$0xff]
        %v1386 = vld [vmem:[%s1197 + $0x480] sm:$0xff]
        %v1387 = vld [vmem:[%s1197 + $0x488] sm:$0xff]
        %v1388 = vld [vmem:[%s1197 + $0x490] sm:$0xff]
        %v1389 = vld [vmem:[%s1197 + $0x498] sm:$0xff]
        %v1390 = vld [vmem:[%s1197 + $0x4a0] sm:$0xff]
        %v1391 = vld [vmem:[%s1197 + $0x4a8] sm:$0xff]
        %v1392 = vld [vmem:[%s1197 + $0x4b0] sm:$0xff]
        %v1393 = vld [vmem:[%s1197 + $0x4b8] sm:$0xff]
        %v1394 = vld [vmem:[%s1197 + $0x4c0] sm:$0xff]
        %v1395 = vld [vmem:[%s1197 + $0x4c8] sm:$0xff]
        %v1396 = vld [vmem:[%s1197 + $0x4d0] sm:$0xff]
        %v1397 = vld [vmem:[%s1197 + $0x4d8] sm:$0xff]
        %v1398 = vld [vmem:[%s1197 + $0x4e0] sm:$0xff]
        %v1399 = vld [vmem:[%s1197 + $0x4e8] sm:$0xff]
        %v1400 = vld [vmem:[%s1197 + $0x4f0] sm:$0xff]
        %v1401 = vld [vmem:[%s1197 + $0x4f8] sm:$0xff]
        %v1402 = vld [vmem:[%s1197 + $0x500] sm:$0xff]
        %v1403 = vld [vmem:[%s1197 + $0x508] sm:$0xff]
        %v1404 = vld [vmem:[%s1197 + $0x510] sm:$0xff]
        %v1405 = vld [vmem:[%s1197 + $0x518] sm:$0xff]
        %v1406 = vld [vmem:[%s1197 + $0x520] sm:$0xff]
        %v1407 = vld [vmem:[%s1197 + $0x528] sm:$0xff]
        %v1408 = vld [vmem:[%s1197 + $0x530] sm:$0xff]
        %v1409 = vld [vmem:[%s1197 + $0x538] sm:$0xff]
        %v1410 = vld [vmem:[%s1197 + $0x540] sm:$0xff]
        %v1411 = vld [vmem:[%s1197 + $0x548] sm:$0xff]
        %v1412 = vld [vmem:[%s1197 + $0x550] sm:$0xff]
        %v1413 = vld [vmem:[%s1197 + $0x558] sm:$0xff]
        %v1414 = vld [vmem:[%s1197 + $0x560] sm:$0xff]
        %v1415 = vld [vmem:[%s1197 + $0x568] sm:$0xff]
        %v1416 = vld [vmem:[%s1197 + $0x570] sm:$0xff]
        %v1417 = vld [vmem:[%s1197 + $0x578] sm:$0xff]
        %v1418 = vld [vmem:[%s1197 + $0x580] sm:$0xff]
        %v1419 = vld [vmem:[%s1197 + $0x588] sm:$0xff]
        %v1420 = vld [vmem:[%s1197 + $0x590] sm:$0xff]
        %v1421 = vld [vmem:[%s1197 + $0x598] sm:$0xff]
        %v1422 = vld [vmem:[%s1197 + $0x5a0] sm:$0xff]
        %v1423 = vld [vmem:[%s1197 + $0x5a8] sm:$0xff]
        %v1424 = vld [vmem:[%s1197 + $0x5b0] sm:$0xff]
        %v1425 = vld [vmem:[%s1197 + $0x5b8] sm:$0xff]
        %v1426 = vld [vmem:[%s1197 + $0x5c0] sm:$0xff]
        %v1427 = vld [vmem:[%s1197 + $0x5c8] sm:$0xff]
        %v1428 = vld [vmem:[%s1197 + $0x5d0] sm:$0xff]
        %v1429 = vld [vmem:[%s1197 + $0x5d8] sm:$0xff]
        %v1430 = vld [vmem:[%s1197 + $0x5e0] sm:$0xff]
        %v1431 = vld [vmem:[%s1197 + $0x5e8] sm:$0xff]
        %v1432 = vld [vmem:[%s1197 + $0x5f0] sm:$0xff]
        %v1433 = vld [vmem:[%s1197 + $0x5f8] sm:$0xff]
        %v1434 = vld [vmem:[%s1197 + $0x600] sm:$0xff]
        %v1435 = vld [vmem:[%s1197 + $0x608] sm:$0xff]
        %v1436 = vld [vmem:[%s1197 + $0x610] sm:$0xff]
        %v1437 = vld [vmem:[%s1197 + $0x618] sm:$0xff]
        %v1438 = vld [vmem:[%s1197 + $0x620] sm:$0xff]
        %v1439 = vld [vmem:[%s1197 + $0x628] sm:$0xff]
        %v1440 = vld [vmem:[%s1197 + $0x630] sm:$0xff]
        %v1441 = vld [vmem:[%s1197 + $0x638] sm:$0xff]
        %v1442 = vld [vmem:[%s1197 + $0x640] sm:$0xff]
        %v1443 = vld [vmem:[%s1197 + $0x648] sm:$0xff]
        %v1444 = vld [vmem:[%s1197 + $0x650] sm:$0xff]
        %v1445 = vld [vmem:[%s1197 + $0x658] sm:$0xff]
        %v1446 = vld [vmem:[%s1197 + $0x660] sm:$0xff]
        %v1447 = vld [vmem:[%s1197 + $0x668] sm:$0xff]
        %v1448 = vld [vmem:[%s1197 + $0x670] sm:$0xff]
        %v1449 = vld [vmem:[%s1197 + $0x678] sm:$0xff]
        %v1450 = vld [vmem:[%s1197 + $0x680] sm:$0xff]
        %v1451 = vld [vmem:[%s1197 + $0x688] sm:$0xff]
        %v1452 = vld [vmem:[%s1197 + $0x690] sm:$0xff]
        %v1453 = vld [vmem:[%s1197 + $0x698] sm:$0xff]
        %v1454 = vld [vmem:[%s1197 + $0x6a0] sm:$0xff]
        %v1455 = vld [vmem:[%s1197 + $0x6a8] sm:$0xff]
        %v1456 = vld [vmem:[%s1197 + $0x6b0] sm:$0xff]
        %v1457 = vld [vmem:[%s1197 + $0x6b8] sm:$0xff]
        %v1458 = vld [vmem:[%s1197 + $0x6c0] sm:$0xff]
        %v1459 = vld [vmem:[%s1197 + $0x6c8] sm:$0xff]
        %v1460 = vld [vmem:[%s1197 + $0x6d0] sm:$0xff]
        %v1461 = vld [vmem:[%s1197 + $0x6d8] sm:$0xff]
        %v1462 = vld [vmem:[%s1197 + $0x6e0] sm:$0xff]
        %v1463 = vld [vmem:[%s1197 + $0x6e8] sm:$0xff]
        %v1464 = vld [vmem:[%s1197 + $0x6f0] sm:$0xff]
        %v1465 = vld [vmem:[%s1197 + $0x6f8] sm:$0xff]
        %v1466 = vld [vmem:[%s1197 + $0x700] sm:$0xff]
        %v1467 = vld [vmem:[%s1197 + $0x708] sm:$0xff]
        %v1468 = vld [vmem:[%s1197 + $0x710] sm:$0xff]
        %v1469 = vld [vmem:[%s1197 + $0x718] sm:$0xff]
        %v1470 = vld [vmem:[%s1197 + $0x720] sm:$0xff]
        %v1471 = vld [vmem:[%s1197 + $0x728] sm:$0xff]
        %v1472 = vld [vmem:[%s1197 + $0x730] sm:$0xff]
        %v1473 = vld [vmem:[%s1197 + $0x738] sm:$0xff]
        %v1474 = vld [vmem:[%s1197 + $0x740] sm:$0xff]
        %v1475 = vld [vmem:[%s1197 + $0x748] sm:$0xff]
        %v1476 = vld [vmem:[%s1197 + $0x750] sm:$0xff]
        %v1477 = vld [vmem:[%s1197 + $0x758] sm:$0xff]
        %v1478 = vld [vmem:[%s1197 + $0x760] sm:$0xff]
        %v1479 = vld [vmem:[%s1197 + $0x768] sm:$0xff]
        %v1480 = vld [vmem:[%s1197 + $0x770] sm:$0xff]
        %v1481 = vld [vmem:[%s1197 + $0x778] sm:$0xff]
        %v1482 = vld [vmem:[%s1197 + $0x780] sm:$0xff]
        %v1483 = vld [vmem:[%s1197 + $0x788] sm:$0xff]
        %v1484 = vld [vmem:[%s1197 + $0x790] sm:$0xff]
        %v1485 = vld [vmem:[%s1197 + $0x798] sm:$0xff]
        %v1486 = vld [vmem:[%s1197 + $0x7a0] sm:$0xff]
        %v1487 = vld [vmem:[%s1197 + $0x7a8] sm:$0xff]
        %v1488 = vld [vmem:[%s1197 + $0x7b0] sm:$0xff]
        %v1489 = vld [vmem:[%s1197 + $0x7b8] sm:$0xff]
        %v1490 = vld [vmem:[%s1197 + $0x7c0] sm:$0xff]
        %v1491 = vld [vmem:[%s1197 + $0x7c8] sm:$0xff]
        %v1492 = vld [vmem:[%s1197 + $0x7d0] sm:$0xff]
        %v1493 = vld [vmem:[%s1197 + $0x7d8] sm:$0xff]
        %v1494 = vld [vmem:[%s1197 + $0x7e0] sm:$0xff]
        %v1495 = vld [vmem:[%s1197 + $0x7e8] sm:$0xff]
        %v1496 = vld [vmem:[%s1197 + $0x7f0] sm:$0xff]
        %v1497 = vld [vmem:[%s1197 + $0x7f8] sm:$0xff]
        %v1498 = vld [vmem:[%s1197 + $0x800] sm:$0xff]
        %v1499 = vld [vmem:[%s1197 + $0x808] sm:$0xff]
        %v1500 = vld [vmem:[%s1197 + $0x810] sm:$0xff]
        %v1501 = vld [vmem:[%s1197 + $0x818] sm:$0xff]
        %v1502 = vld [vmem:[%s1197 + $0x820] sm:$0xff]
        %v1503 = vld [vmem:[%s1197 + $0x828] sm:$0xff]
        %v1504 = vld [vmem:[%s1197 + $0x830] sm:$0xff]
        %v1505 = vld [vmem:[%s1197 + $0x838] sm:$0xff]
        %v1506 = vld [vmem:[%s1197 + $0x840] sm:$0xff]
        %v1507 = vld [vmem:[%s1197 + $0x848] sm:$0xff]
        %v1508 = vld [vmem:[%s1197 + $0x850] sm:$0xff]
        %v1509 = vld [vmem:[%s1197 + $0x858] sm:$0xff]
        %v1510 = vld [vmem:[%s1197 + $0x860] sm:$0xff]
        %v1511 = vld [vmem:[%s1197 + $0x868] sm:$0xff]
        %v1512 = vld [vmem:[%s1197 + $0x870] sm:$0xff]
        %v1513 = vld [vmem:[%s1197 + $0x878] sm:$0xff]
        %v1514 = vld [vmem:[%s1197 + $0x880] sm:$0xff]
        %v1515 = vld [vmem:[%s1197 + $0x888] sm:$0xff]
        %v1516 = vld [vmem:[%s1197 + $0x890] sm:$0xff]
        %v1517 = vld [vmem:[%s1197 + $0x898] sm:$0xff]
        %v1518 = vld [vmem:[%s1197 + $0x8a0] sm:$0xff]
        %v1519 = vld [vmem:[%s1197 + $0x8a8] sm:$0xff]
        %v1520 = vld [vmem:[%s1197 + $0x8b0] sm:$0xff]
        %v1521 = vld [vmem:[%s1197 + $0x8b8] sm:$0xff]
        %v1522 = vld [vmem:[%s1197 + $0x8c0] sm:$0xff]
        %v1523 = vld [vmem:[%s1197 + $0x8c8] sm:$0xff]
        %v1524 = vld [vmem:[%s1197 + $0x8d0] sm:$0xff]
        %v1525 = vld [vmem:[%s1197 + $0x8d8] sm:$0xff]
        %v1526 = vld [vmem:[%s1197 + $0x8e0] sm:$0xff]
        %v1527 = vld [vmem:[%s1197 + $0x8e8] sm:$0xff]
        %v1528 = vld [vmem:[%s1197 + $0x8f0] sm:$0xff]
        %v1529 = vld [vmem:[%s1197 + $0x8f8] sm:$0xff]
        %v1530 = vld [vmem:[%s1197 + $0x900] sm:$0xff]
        %v1531 = vld [vmem:[%s1197 + $0x908] sm:$0xff]
        %v1532 = vld [vmem:[%s1197 + $0x910] sm:$0xff]
        %v1533 = vld [vmem:[%s1197 + $0x918] sm:$0xff]
        %v1534 = vld [vmem:[%s1197 + $0x920] sm:$0xff]
        %v1535 = vld [vmem:[%s1197 + $0x928] sm:$0xff]
        %v1536 = vld [vmem:[%s1197 + $0x930] sm:$0xff]
        %v1537 = vld [vmem:[%s1197 + $0x938] sm:$0xff]
        %v1538 = vld [vmem:[%s1197 + $0x940] sm:$0xff]
        %v1539 = vld [vmem:[%s1197 + $0x948] sm:$0xff]
        %v1540 = vld [vmem:[%s1197 + $0x950] sm:$0xff]
        %v1541 = vld [vmem:[%s1197 + $0x958] sm:$0xff]
        %v1542 = vld [vmem:[%s1197 + $0x960] sm:$0xff]
        %v1543 = vld [vmem:[%s1197 + $0x968] sm:$0xff]
        %v1544 = vld [vmem:[%s1197 + $0x970] sm:$0xff]
        %v1545 = vld [vmem:[%s1197 + $0x978] sm:$0xff]
        %v1546 = vld [vmem:[%s1197 + $0x980] sm:$0xff]
        %v1547 = vld [vmem:[%s1197 + $0x988] sm:$0xff]
        %v1548 = vld [vmem:[%s1197 + $0x990] sm:$0xff]
        %v1549 = vld [vmem:[%s1197 + $0x998] sm:$0xff]
        %v1550 = vld [vmem:[%s1197 + $0x9a0] sm:$0xff]
        %v1551 = vld [vmem:[%s1197 + $0x9a8] sm:$0xff]
        %v1552 = vld [vmem:[%s1197 + $0x9b0] sm:$0xff]
        %v1553 = vld [vmem:[%s1197 + $0x9b8] sm:$0xff]
        %v1554 = vld [vmem:[%s1197 + $0x9c0] sm:$0xff]
        %v1555 = vld [vmem:[%s1197 + $0x9c8] sm:$0xff]
        %v1556 = vld [vmem:[%s1197 + $0x9d0] sm:$0xff]
        %v1557 = vld [vmem:[%s1197 + $0x9d8] sm:$0xff]
        %v1558 = vld [vmem:[%s1197 + $0x9e0] sm:$0xff]
        %v1559 = vld [vmem:[%s1197 + $0x9e8] sm:$0xff]
        %v1560 = vld [vmem:[%s1197 + $0x9f0] sm:$0xff]
        %v1561 = vld [vmem:[%s1197 + $0x9f8] sm:$0xff]
        %v1562 = vld [vmem:[%s1197 + $0xa00] sm:$0xff]
        %v1563 = vld [vmem:[%s1197 + $0xa08] sm:$0xff]
        %v1564 = vld [vmem:[%s1197 + $0xa10] sm:$0xff]
        %v1565 = vld [vmem:[%s1197 + $0xa18] sm:$0xff]
        %v1566 = vld [vmem:[%s1197 + $0xa20] sm:$0xff]
        %v1567 = vld [vmem:[%s1197 + $0xa28] sm:$0xff]
        %v1568 = vld [vmem:[%s1197 + $0xa30] sm:$0xff]
        %v1569 = vld [vmem:[%s1197 + $0xa38] sm:$0xff]
        %v1570 = vld [vmem:[%s1197 + $0xa40] sm:$0xff]
        %v1571 = vld [vmem:[%s1197 + $0xa48] sm:$0xff]
        %v1572 = vld [vmem:[%s1197 + $0xa50] sm:$0xff]
        %v1573 = vld [vmem:[%s1197 + $0xa58] sm:$0xff]
        %v1574 = vld [vmem:[%s1197 + $0xa60] sm:$0xff]
        %v1575 = vld [vmem:[%s1197 + $0xa68] sm:$0xff]
        %v1576 = vld [vmem:[%s1197 + $0xa70] sm:$0xff]
        %v1577 = vld [vmem:[%s1197 + $0xa78] sm:$0xff]
        %v1578 = vld [vmem:[%s1197 + $0xa80] sm:$0xff]
        %v1579 = vld [vmem:[%s1197 + $0xa88] sm:$0xff]
        %v1580 = vld [vmem:[%s1197 + $0xa90] sm:$0xff]
        %v1581 = vld [vmem:[%s1197 + $0xa98] sm:$0xff]
        %v1582 = vld [vmem:[%s1197 + $0xaa0] sm:$0xff]
        %v1583 = vld [vmem:[%s1197 + $0xaa8] sm:$0xff]
        %v1584 = vld [vmem:[%s1197 + $0xab0] sm:$0xff]
        %v1585 = vld [vmem:[%s1197 + $0xab8] sm:$0xff]
        %v1586 = vld [vmem:[%s1197 + $0xac0] sm:$0xff]
        %v1587 = vld [vmem:[%s1197 + $0xac8] sm:$0xff]
        %v1588 = vld [vmem:[%s1197 + $0xad0] sm:$0xff]
        %v1589 = vld [vmem:[%s1197 + $0xad8] sm:$0xff]
        %v1590 = vld [vmem:[%s1197 + $0xae0] sm:$0xff]
        %v1591 = vld [vmem:[%s1197 + $0xae8] sm:$0xff]
        %v1592 = vld [vmem:[%s1197 + $0xaf0] sm:$0xff]
        %v1593 = vld [vmem:[%s1197 + $0xaf8] sm:$0xff]
        %v1594 = vld [vmem:[%s1197 + $0xb00] sm:$0xff]
        %v1595 = vld [vmem:[%s1197 + $0xb08] sm:$0xff]
        %v1596 = vld [vmem:[%s1197 + $0xb10] sm:$0xff]
        %v1597 = vld [vmem:[%s1197 + $0xb18] sm:$0xff]
        %v1598 = vld [vmem:[%s1197 + $0xb20] sm:$0xff]
        %v1599 = vld [vmem:[%s1197 + $0xb28] sm:$0xff]
        %v1600 = vld [vmem:[%s1197 + $0xb30] sm:$0xff]
        %v1601 = vld [vmem:[%s1197 + $0xb38] sm:$0xff]
        %v1602 = vld [vmem:[%s1197 + $0xb40] sm:$0xff]
        %v1603 = vld [vmem:[%s1197 + $0xb48] sm:$0xff]
        %v1604 = vld [vmem:[%s1197 + $0xb50] sm:$0xff]
        %v1605 = vld [vmem:[%s1197 + $0xb58] sm:$0xff]
        %v1606 = vld [vmem:[%s1197 + $0xb60] sm:$0xff]
        %v1607 = vld [vmem:[%s1197 + $0xb68] sm:$0xff]
        %v1608 = vld [vmem:[%s1197 + $0xb70] sm:$0xff]
        %v1609 = vld [vmem:[%s1197 + $0xb78] sm:$0xff]
        %v1610 = vld [vmem:[%s1197 + $0xb80] sm:$0xff]
        %v1611 = vld [vmem:[%s1197 + $0xb88] sm:$0xff]
        %v1612 = vld [vmem:[%s1197 + $0xb90] sm:$0xff]
        %v1613 = vld [vmem:[%s1197 + $0xb98] sm:$0xff]
        %v1614 = vld [vmem:[%s1197 + $0xba0] sm:$0xff]
        %v1615 = vld [vmem:[%s1197 + $0xba8] sm:$0xff]
        %v1616 = vld [vmem:[%s1197 + $0xbb0] sm:$0xff]
        %v1617 = vld [vmem:[%s1197 + $0xbb8] sm:$0xff]
        %v1618 = vld [vmem:[%s1197 + $0xbc0] sm:$0xff]
        %v1619 = vld [vmem:[%s1197 + $0xbc8] sm:$0xff]
        %v1620 = vld [vmem:[%s1197 + $0xbd0] sm:$0xff]
        %v1621 = vld [vmem:[%s1197 + $0xbd8] sm:$0xff]
        %v1622 = vld [vmem:[%s1197 + $0xbe0] sm:$0xff]
        %v1623 = vld [vmem:[%s1197 + $0xbe8] sm:$0xff]
        %v1624 = vld [vmem:[%s1197 + $0xbf0] sm:$0xff]
        %v1625 = vld [vmem:[%s1197 + $0xbf8] sm:$0xff]
        %v1626 = vld [vmem:[%s1197 + $0xc00] sm:$0xff]
        %v1627 = vld [vmem:[%s1197 + $0xc08] sm:$0xff]
        %v1628 = vld [vmem:[%s1197 + $0xc10] sm:$0xff]
        %v1629 = vld [vmem:[%s1197 + $0xc18] sm:$0xff]
        %v1630 = vld [vmem:[%s1197 + $0xc20] sm:$0xff]
        %v1631 = vld [vmem:[%s1197 + $0xc28] sm:$0xff]
        %v1632 = vld [vmem:[%s1197 + $0xc30] sm:$0xff]
        %v1633 = vld [vmem:[%s1197 + $0xc38] sm:$0xff]
        %v1634 = vld [vmem:[%s1197 + $0xc40] sm:$0xff]
        %v1635 = vld [vmem:[%s1197 + $0xc48] sm:$0xff]
        %v1636 = vld [vmem:[%s1197 + $0xc50] sm:$0xff]
        %v1637 = vld [vmem:[%s1197 + $0xc58] sm:$0xff]
        %v1638 = vld [vmem:[%s1197 + $0xc60] sm:$0xff]
        %v1639 = vld [vmem:[%s1197 + $0xc68] sm:$0xff]
        %v1640 = vld [vmem:[%s1197 + $0xc70] sm:$0xff]
        %v1641 = vld [vmem:[%s1197 + $0xc78] sm:$0xff]
        %v1642 = vld [vmem:[%s1197 + $0xc80] sm:$0xff]
        %v1643 = vld [vmem:[%s1197 + $0xc88] sm:$0xff]
        %v1644 = vld [vmem:[%s1197 + $0xc90] sm:$0xff]
        %v1645 = vld [vmem:[%s1197 + $0xc98] sm:$0xff]
        %v1646 = vld [vmem:[%s1197 + $0xca0] sm:$0xff]
        %v1647 = vld [vmem:[%s1197 + $0xca8] sm:$0xff]
        %v1648 = vld [vmem:[%s1197 + $0xcb0] sm:$0xff]
        %v1649 = vld [vmem:[%s1197 + $0xcb8] sm:$0xff]
        %v1650 = vld [vmem:[%s1197 + $0xcc0] sm:$0xff]
        %v1651 = vld [vmem:[%s1197 + $0xcc8] sm:$0xff]
        %v1652 = vld [vmem:[%s1197 + $0xcd0] sm:$0xff]
        %v1653 = vld [vmem:[%s1197 + $0xcd8] sm:$0xff]
        %v1654 = vld [vmem:[%s1197 + $0xce0] sm:$0xff]
        %v1655 = vld [vmem:[%s1197 + $0xce8] sm:$0xff]
        %v1656 = vld [vmem:[%s1197 + $0xcf0] sm:$0xff]
        %v1657 = vld [vmem:[%s1197 + $0xcf8] sm:$0xff]
        %v1658 = vld [vmem:[%s1197 + $0xd00] sm:$0xff]
        %v1659 = vld [vmem:[%s1197 + $0xd08] sm:$0xff]
        %v1660 = vld [vmem:[%s1197 + $0xd10] sm:$0xff]
        %v1661 = vld [vmem:[%s1197 + $0xd18] sm:$0xff]
        %v1662 = vld [vmem:[%s1197 + $0xd20] sm:$0xff]
        %v1663 = vld [vmem:[%s1197 + $0xd28] sm:$0xff]
        %v1664 = vld [vmem:[%s1197 + $0xd30] sm:$0xff]
        %v1665 = vld [vmem:[%s1197 + $0xd38] sm:$0xff]
        %v1666 = vld [vmem:[%s1197 + $0xd40] sm:$0xff]
        %v1667 = vld [vmem:[%s1197 + $0xd48] sm:$0xff]
        %v1668 = vld [vmem:[%s1197 + $0xd50] sm:$0xff]
        %v1669 = vld [vmem:[%s1197 + $0xd58] sm:$0xff]
        %v1670 = vld [vmem:[%s1197 + $0xd60] sm:$0xff]
        %v1671 = vld [vmem:[%s1197 + $0xd68] sm:$0xff]
        %v1672 = vld [vmem:[%s1197 + $0xd70] sm:$0xff]
        %v1673 = vld [vmem:[%s1197 + $0xd78] sm:$0xff]
        %v1674 = vld [vmem:[%s1197 + $0xd80] sm:$0xff]
        %v1675 = vld [vmem:[%s1197 + $0xd88] sm:$0xff]
        %v1676 = vld [vmem:[%s1197 + $0xd90] sm:$0xff]
        %v1677 = vld [vmem:[%s1197 + $0xd98] sm:$0xff]
        %v1678 = vld [vmem:[%s1197 + $0xda0] sm:$0xff]
        %v1679 = vld [vmem:[%s1197 + $0xda8] sm:$0xff]
        %v1680 = vld [vmem:[%s1197 + $0xdb0] sm:$0xff]
        %v1681 = vld [vmem:[%s1197 + $0xdb8] sm:$0xff]
        %v1682 = vld [vmem:[%s1197 + $0xdc0] sm:$0xff]
        %v1683 = vld [vmem:[%s1197 + $0xdc8] sm:$0xff]
        %v1684 = vld [vmem:[%s1197 + $0xdd0] sm:$0xff]
        %v1685 = vld [vmem:[%s1197 + $0xdd8] sm:$0xff]
        %v1686 = vld [vmem:[%s1197 + $0xde0] sm:$0xff]
        %v1687 = vld [vmem:[%s1197 + $0xde8] sm:$0xff]
        %v1688 = vld [vmem:[%s1197 + $0xdf0] sm:$0xff]
        %v1689 = vld [vmem:[%s1197 + $0xdf8] sm:$0xff]
        %v1690 = vld [vmem:[%s1197 + $0xe00] sm:$0xff]
        %v1691 = vld [vmem:[%s1197 + $0xe08] sm:$0xff]
        %v1692 = vld [vmem:[%s1197 + $0xe10] sm:$0xff]
        %v1693 = vld [vmem:[%s1197 + $0xe18] sm:$0xff]
        %v1694 = vld [vmem:[%s1197 + $0xe20] sm:$0xff]
        %v1695 = vld [vmem:[%s1197 + $0xe28] sm:$0xff]
        %v1696 = vld [vmem:[%s1197 + $0xe30] sm:$0xff]
        %v1697 = vld [vmem:[%s1197 + $0xe38] sm:$0xff]
        %v1698 = vld [vmem:[%s1197 + $0xe40] sm:$0xff]
        %v1699 = vld [vmem:[%s1197 + $0xe48] sm:$0xff]
        %v1700 = vld [vmem:[%s1197 + $0xe50] sm:$0xff]
        %v1701 = vld [vmem:[%s1197 + $0xe58] sm:$0xff]
        %v1702 = vld [vmem:[%s1197 + $0xe60] sm:$0xff]
        %v1703 = vld [vmem:[%s1197 + $0xe68] sm:$0xff]
        %v1704 = vld [vmem:[%s1197 + $0xe70] sm:$0xff]
        %v1705 = vld [vmem:[%s1197 + $0xe78] sm:$0xff]
        %v1706 = vld [vmem:[%s1197 + $0xe80] sm:$0xff]
        %v1707 = vld [vmem:[%s1197 + $0xe88] sm:$0xff]
        %v1708 = vld [vmem:[%s1197 + $0xe90] sm:$0xff]
        %v1709 = vld [vmem:[%s1197 + $0xe98] sm:$0xff]
        %v1710 = vld [vmem:[%s1197 + $0xea0] sm:$0xff]
        %v1711 = vld [vmem:[%s1197 + $0xea8] sm:$0xff]
        %v1712 = vld [vmem:[%s1197 + $0xeb0] sm:$0xff]
        %v1713 = vld [vmem:[%s1197 + $0xeb8] sm:$0xff]
        %v1714 = vld [vmem:[%s1197 + $0xec0] sm:$0xff]
        %v1715 = vld [vmem:[%s1197 + $0xec8] sm:$0xff]
        %v1716 = vld [vmem:[%s1197 + $0xed0] sm:$0xff]
        %v1717 = vld [vmem:[%s1197 + $0xed8] sm:$0xff]
        %v1718 = vld [vmem:[%s1197 + $0xee0] sm:$0xff]
        %v1719 = vld [vmem:[%s1197 + $0xee8] sm:$0xff]
        %v1720 = vld [vmem:[%s1197 + $0xef0] sm:$0xff]
        %v1721 = vld [vmem:[%s1197 + $0xef8] sm:$0xff]
        %v1722 = vld [vmem:[%s1197 + $0xf00] sm:$0xff]
        %v1723 = vld [vmem:[%s1197 + $0xf08] sm:$0xff]
        %v1724 = vld [vmem:[%s1197 + $0xf10] sm:$0xff]
        %v1725 = vld [vmem:[%s1197 + $0xf18] sm:$0xff]
        %v1726 = vld [vmem:[%s1197 + $0xf20] sm:$0xff]
        %v1727 = vld [vmem:[%s1197 + $0xf28] sm:$0xff]
        %v1728 = vld [vmem:[%s1197 + $0xf30] sm:$0xff]
        %v1729 = vld [vmem:[%s1197 + $0xf38] sm:$0xff]
        %v1730 = vld [vmem:[%s1197 + $0xf40] sm:$0xff]
        %v1731 = vld [vmem:[%s1197 + $0xf48] sm:$0xff]
        %v1732 = vld [vmem:[%s1197 + $0xf50] sm:$0xff]
        %v1733 = vld [vmem:[%s1197 + $0xf58] sm:$0xff]
        %v1734 = vld [vmem:[%s1197 + $0xf60] sm:$0xff]
        %v1735 = vld [vmem:[%s1197 + $0xf68] sm:$0xff]
        %v1736 = vld [vmem:[%s1197 + $0xf70] sm:$0xff]
        %v1737 = vld [vmem:[%s1197 + $0xf78] sm:$0xff]
        %v1738 = vld [vmem:[%s1197 + $0xf80] sm:$0xff]
        %v1739 = vld [vmem:[%s1197 + $0xf88] sm:$0xff]
        %v1740 = vld [vmem:[%s1197 + $0xf90] sm:$0xff]
        %v1741 = vld [vmem:[%s1197 + $0xf98] sm:$0xff]
        %v1742 = vld [vmem:[%s1197 + $0xfa0] sm:$0xff]
        %v1743 = vld [vmem:[%s1197 + $0xfa8] sm:$0xff]
        %v1744 = vld [vmem:[%s1197 + $0xfb0] sm:$0xff]
        %v1745 = vld [vmem:[%s1197 + $0xfb8] sm:$0xff]
        %v1746 = vld [vmem:[%s1197 + $0xfc0] sm:$0xff]
        %v1747 = vld [vmem:[%s1197 + $0xfc8] sm:$0xff]
        %v1748 = vld [vmem:[%s1197 + $0xfd0] sm:$0xff]
        %v1749 = vld [vmem:[%s1197 + $0xfd8] sm:$0xff]
        %v1750 = vld [vmem:[%s1197 + $0xfe0] sm:$0xff]
        %v1751 = vld [vmem:[%s1197 + $0xfe8] sm:$0xff]
        %v1752 = vld [vmem:[%s1197 + $0xff0] sm:$0xff]
        %v1753 = vld [vmem:[%s1197 + $0xff8] sm:$0xff]
        %v1754 = vld [vmem:[%s1226] sm:$0xf]
        %v1756 = vlaneseq
        %v1757 = vshrl.u32 %v1756, 7
        %v1758 = vsub.s32 0, %v1757
        %v1759 = vrot.slane %v1754, %v1758
        %v1760 = vlaneseq
        %v1761 = vshrl.u32 %v1760, 7
        %v1762 = vsub.s32 1, %v1761
        %v1763 = vrot.slane %v1754, %v1762
        %v1764 = vlaneseq
        %v1765 = vshrl.u32 %v1764, 7
        %v1766 = vsub.s32 2, %v1765
        %v1767 = vrot.slane %v1754, %v1766
        %v1768 = vlaneseq
        %v1769 = vshrl.u32 %v1768, 7
        %v1770 = vsub.s32 3, %v1769
        %v1771 = vrot.slane %v1754, %v1770
        %v1784 = vunpack.c.l.b16 %v1234
        %v1785 = vunpack.c.h.b16 %v1234
        %v1786 = vunpack.c.l.b16 %v1235
        %v1787 = vunpack.c.h.b16 %v1235
        %v1788 = vunpack.c.l.b16 %v1236
        %v1789 = vunpack.c.h.b16 %v1236
        %v1790 = vunpack.c.l.b16 %v1237
        %v1791 = vunpack.c.h.b16 %v1237
        %v1792 = vunpack.c.l.b16 %v1238
        %v1793 = vunpack.c.h.b16 %v1238
        %v1794 = vunpack.c.l.b16 %v1239
        %v1795 = vunpack.c.h.b16 %v1239
        %v1796 = vunpack.c.l.b16 %v1240
        %v1797 = vunpack.c.h.b16 %v1240
        %v1798 = vunpack.c.l.b16 %v1241
        %v1799 = vunpack.c.h.b16 %v1241
        %v1800 = vpack.c.b16 %v1784, %v1784
        %v1801 = vpack.c.b16 %v1785, %v1785
        %v1802 = vpack.c.b16 %v1786, %v1786
        %v1803 = vpack.c.b16 %v1787, %v1787
        %v1804 = vpack.c.b16 %v1788, %v1788
        %v1805 = vpack.c.b16 %v1789, %v1789
        %v1806 = vpack.c.b16 %v1790, %v1790
        %v1807 = vpack.c.b16 %v1791, %v1791
        %v1808 = vpack.c.b16 %v1792, %v1792
        %v1809 = vpack.c.b16 %v1793, %v1793
        %v1810 = vpack.c.b16 %v1794, %v1794
        %v1811 = vpack.c.b16 %v1795, %v1795
        %v1812 = vpack.c.b16 %v1796, %v1796
        %v1813 = vpack.c.b16 %v1797, %v1797
        %v1814 = vpack.c.b16 %v1798, %v1798
        %v1815 = vpack.c.b16 %v1799, %v1799
        %v2344 = vunpack.c.l.b16 %v1242
        %v2345 = vunpack.c.h.b16 %v1242
        %v2346 = vunpack.c.l.b16 %v1243
        %v2347 = vunpack.c.h.b16 %v1243
        %v2348 = vunpack.c.l.b16 %v1244
        %v2349 = vunpack.c.h.b16 %v1244
        %v2350 = vunpack.c.l.b16 %v1245
        %v2351 = vunpack.c.h.b16 %v1245
        %v2352 = vunpack.c.l.b16 %v1246
        %v2353 = vunpack.c.h.b16 %v1246
        %v2354 = vunpack.c.l.b16 %v1247
        %v2355 = vunpack.c.h.b16 %v1247
        %v2356 = vunpack.c.l.b16 %v1248
        %v2357 = vunpack.c.h.b16 %v1248
        %v2358 = vunpack.c.l.b16 %v1249
        %v2359 = vunpack.c.h.b16 %v1249
        %v2360 = vunpack.c.l.b16 %v1250
        %v2361 = vunpack.c.h.b16 %v1250
        %v2362 = vunpack.c.l.b16 %v1251
        %v2363 = vunpack.c.h.b16 %v1251
        %v2364 = vunpack.c.l.b16 %v1252
        %v2365 = vunpack.c.h.b16 %v1252
        %v2366 = vunpack.c.l.b16 %v1253
        %v2367 = vunpack.c.h.b16 %v1253
        %v2368 = vunpack.c.l.b16 %v1254
        %v2369 = vunpack.c.h.b16 %v1254
        %v2370 = vunpack.c.l.b16 %v1255
        %v2371 = vunpack.c.h.b16 %v1255
        %v2372 = vunpack.c.l.b16 %v1256
        %v2373 = vunpack.c.h.b16 %v1256
        %v2374 = vunpack.c.l.b16 %v1257
        %v2375 = vunpack.c.h.b16 %v1257
        %v2376 = vunpack.c.l.b16 %v1258
        %v2377 = vunpack.c.h.b16 %v1258
        %v2378 = vunpack.c.l.b16 %v1259
        %v2379 = vunpack.c.h.b16 %v1259
        %v2380 = vunpack.c.l.b16 %v1260
        %v2381 = vunpack.c.h.b16 %v1260
        %v2382 = vunpack.c.l.b16 %v1261
        %v2383 = vunpack.c.h.b16 %v1261
        %v2384 = vunpack.c.l.b16 %v1262
        %v2385 = vunpack.c.h.b16 %v1262
        %v2386 = vunpack.c.l.b16 %v1263
        %v2387 = vunpack.c.h.b16 %v1263
        %v2388 = vunpack.c.l.b16 %v1264
        %v2389 = vunpack.c.h.b16 %v1264
        %v2390 = vunpack.c.l.b16 %v1265
        %v2391 = vunpack.c.h.b16 %v1265
        %v2392 = vunpack.c.l.b16 %v1266
        %v2393 = vunpack.c.h.b16 %v1266
        %v2394 = vunpack.c.l.b16 %v1267
        %v2395 = vunpack.c.h.b16 %v1267
        %v2396 = vunpack.c.l.b16 %v1268
        %v2397 = vunpack.c.h.b16 %v1268
        %v2398 = vunpack.c.l.b16 %v1269
        %v2399 = vunpack.c.h.b16 %v1269
        %v2400 = vunpack.c.l.b16 %v1270
        %v2401 = vunpack.c.h.b16 %v1270
        %v2402 = vunpack.c.l.b16 %v1271
        %v2403 = vunpack.c.h.b16 %v1271
        %v2404 = vunpack.c.l.b16 %v1272
        %v2405 = vunpack.c.h.b16 %v1272
        %v2406 = vunpack.c.l.b16 %v1273
        %v2407 = vunpack.c.h.b16 %v1273
        %v2408 = vunpack.c.l.b16 %v1274
        %v2409 = vunpack.c.h.b16 %v1274
        %v2410 = vunpack.c.l.b16 %v1275
        %v2411 = vunpack.c.h.b16 %v1275
        %v2412 = vunpack.c.l.b16 %v1276
        %v2413 = vunpack.c.h.b16 %v1276
        %v2414 = vunpack.c.l.b16 %v1277
        %v2415 = vunpack.c.h.b16 %v1277
        %v2416 = vunpack.c.l.b16 %v1278
        %v2417 = vunpack.c.h.b16 %v1278
        %v2418 = vunpack.c.l.b16 %v1279
        %v2419 = vunpack.c.h.b16 %v1279
        %v2420 = vunpack.c.l.b16 %v1280
        %v2421 = vunpack.c.h.b16 %v1280
        %v2422 = vunpack.c.l.b16 %v1281
        %v2423 = vunpack.c.h.b16 %v1281
        %v2424 = vunpack.c.l.b16 %v1282
        %v2425 = vunpack.c.h.b16 %v1282
        %v2426 = vunpack.c.l.b16 %v1283
        %v2427 = vunpack.c.h.b16 %v1283
        %v2428 = vunpack.c.l.b16 %v1284
        %v2429 = vunpack.c.h.b16 %v1284
        %v2430 = vunpack.c.l.b16 %v1285
        %v2431 = vunpack.c.h.b16 %v1285
        %v2432 = vunpack.c.l.b16 %v1286
        %v2433 = vunpack.c.h.b16 %v1286
        %v2434 = vunpack.c.l.b16 %v1287
        %v2435 = vunpack.c.h.b16 %v1287
        %v2436 = vunpack.c.l.b16 %v1288
        %v2437 = vunpack.c.h.b16 %v1288
        %v2438 = vunpack.c.l.b16 %v1289
        %v2439 = vunpack.c.h.b16 %v1289
        %v2440 = vunpack.c.l.b16 %v1290
        %v2441 = vunpack.c.h.b16 %v1290
        %v2442 = vunpack.c.l.b16 %v1291
        %v2443 = vunpack.c.h.b16 %v1291
        %v2444 = vunpack.c.l.b16 %v1292
        %v2445 = vunpack.c.h.b16 %v1292
        %v2446 = vunpack.c.l.b16 %v1293
        %v2447 = vunpack.c.h.b16 %v1293
        %v2448 = vunpack.c.l.b16 %v1294
        %v2449 = vunpack.c.h.b16 %v1294
        %v2450 = vunpack.c.l.b16 %v1295
        %v2451 = vunpack.c.h.b16 %v1295
        %v2452 = vunpack.c.l.b16 %v1296
        %v2453 = vunpack.c.h.b16 %v1296
        %v2454 = vunpack.c.l.b16 %v1297
        %v2455 = vunpack.c.h.b16 %v1297
        %v2456 = vunpack.c.l.b16 %v1298
        %v2457 = vunpack.c.h.b16 %v1298
        %v2458 = vunpack.c.l.b16 %v1299
        %v2459 = vunpack.c.h.b16 %v1299
        %v2460 = vunpack.c.l.b16 %v1300
        %v2461 = vunpack.c.h.b16 %v1300
        %v2462 = vunpack.c.l.b16 %v1301
        %v2463 = vunpack.c.h.b16 %v1301
        %v2464 = vunpack.c.l.b16 %v1302
        %v2465 = vunpack.c.h.b16 %v1302
        %v2466 = vunpack.c.l.b16 %v1303
        %v2467 = vunpack.c.h.b16 %v1303
        %v2468 = vunpack.c.l.b16 %v1304
        %v2469 = vunpack.c.h.b16 %v1304
        %v2470 = vunpack.c.l.b16 %v1305
        %v2471 = vunpack.c.h.b16 %v1305
        %v2472 = vunpack.c.l.b16 %v1306
        %v2473 = vunpack.c.h.b16 %v1306
        %v2474 = vunpack.c.l.b16 %v1307
        %v2475 = vunpack.c.h.b16 %v1307
        %v2476 = vunpack.c.l.b16 %v1308
        %v2477 = vunpack.c.h.b16 %v1308
        %v2478 = vunpack.c.l.b16 %v1309
        %v2479 = vunpack.c.h.b16 %v1309
        %v2480 = vunpack.c.l.b16 %v1310
        %v2481 = vunpack.c.h.b16 %v1310
        %v2482 = vunpack.c.l.b16 %v1311
        %v2483 = vunpack.c.h.b16 %v1311
        %v2484 = vunpack.c.l.b16 %v1312
        %v2485 = vunpack.c.h.b16 %v1312
        %v2486 = vunpack.c.l.b16 %v1313
        %v2487 = vunpack.c.h.b16 %v1313
        %v2488 = vunpack.c.l.b16 %v1314
        %v2489 = vunpack.c.h.b16 %v1314
        %v2490 = vunpack.c.l.b16 %v1315
        %v2491 = vunpack.c.h.b16 %v1315
        %v2492 = vunpack.c.l.b16 %v1316
        %v2493 = vunpack.c.h.b16 %v1316
        %v2494 = vunpack.c.l.b16 %v1317
        %v2495 = vunpack.c.h.b16 %v1317
        %v2496 = vunpack.c.l.b16 %v1318
        %v2497 = vunpack.c.h.b16 %v1318
        %v2498 = vunpack.c.l.b16 %v1319
        %v2499 = vunpack.c.h.b16 %v1319
        %v2500 = vunpack.c.l.b16 %v1320
        %v2501 = vunpack.c.h.b16 %v1320
        %v2502 = vunpack.c.l.b16 %v1321
        %v2503 = vunpack.c.h.b16 %v1321
        %v2504 = vunpack.c.l.b16 %v1322
        %v2505 = vunpack.c.h.b16 %v1322
        %v2506 = vunpack.c.l.b16 %v1323
        %v2507 = vunpack.c.h.b16 %v1323
        %v2508 = vunpack.c.l.b16 %v1324
        %v2509 = vunpack.c.h.b16 %v1324
        %v2510 = vunpack.c.l.b16 %v1325
        %v2511 = vunpack.c.h.b16 %v1325
        %v2512 = vunpack.c.l.b16 %v1326
        %v2513 = vunpack.c.h.b16 %v1326
        %v2514 = vunpack.c.l.b16 %v1327
        %v2515 = vunpack.c.h.b16 %v1327
        %v2516 = vunpack.c.l.b16 %v1328
        %v2517 = vunpack.c.h.b16 %v1328
        %v2518 = vunpack.c.l.b16 %v1329
        %v2519 = vunpack.c.h.b16 %v1329
        %v2520 = vunpack.c.l.b16 %v1330
        %v2521 = vunpack.c.h.b16 %v1330
        %v2522 = vunpack.c.l.b16 %v1331
        %v2523 = vunpack.c.h.b16 %v1331
        %v2524 = vunpack.c.l.b16 %v1332
        %v2525 = vunpack.c.h.b16 %v1332
        %v2526 = vunpack.c.l.b16 %v1333
        %v2527 = vunpack.c.h.b16 %v1333
        %v2528 = vunpack.c.l.b16 %v1334
        %v2529 = vunpack.c.h.b16 %v1334
        %v2530 = vunpack.c.l.b16 %v1335
        %v2531 = vunpack.c.h.b16 %v1335
        %v2532 = vunpack.c.l.b16 %v1336
        %v2533 = vunpack.c.h.b16 %v1336
        %v2534 = vunpack.c.l.b16 %v1337
        %v2535 = vunpack.c.h.b16 %v1337
        %v2536 = vunpack.c.l.b16 %v1338
        %v2537 = vunpack.c.h.b16 %v1338
        %v2538 = vunpack.c.l.b16 %v1339
        %v2539 = vunpack.c.h.b16 %v1339
        %v2540 = vunpack.c.l.b16 %v1340
        %v2541 = vunpack.c.h.b16 %v1340
        %v2542 = vunpack.c.l.b16 %v1341
        %v2543 = vunpack.c.h.b16 %v1341
        %v2544 = vunpack.c.l.b16 %v1342
        %v2545 = vunpack.c.h.b16 %v1342
        %v2546 = vunpack.c.l.b16 %v1343
        %v2547 = vunpack.c.h.b16 %v1343
        %v2548 = vunpack.c.l.b16 %v1344
        %v2549 = vunpack.c.h.b16 %v1344
        %v2550 = vunpack.c.l.b16 %v1345
        %v2551 = vunpack.c.h.b16 %v1345
        %v2552 = vunpack.c.l.b16 %v1346
        %v2553 = vunpack.c.h.b16 %v1346
        %v2554 = vunpack.c.l.b16 %v1347
        %v2555 = vunpack.c.h.b16 %v1347
        %v2556 = vunpack.c.l.b16 %v1348
        %v2557 = vunpack.c.h.b16 %v1348
        %v2558 = vunpack.c.l.b16 %v1349
        %v2559 = vunpack.c.h.b16 %v1349
        %v2560 = vunpack.c.l.b16 %v1350
        %v2561 = vunpack.c.h.b16 %v1350
        %v2562 = vunpack.c.l.b16 %v1351
        %v2563 = vunpack.c.h.b16 %v1351
        %v2564 = vunpack.c.l.b16 %v1352
        %v2565 = vunpack.c.h.b16 %v1352
        %v2566 = vunpack.c.l.b16 %v1353
        %v2567 = vunpack.c.h.b16 %v1353
        %v2568 = vunpack.c.l.b16 %v1354
        %v2569 = vunpack.c.h.b16 %v1354
        %v2570 = vunpack.c.l.b16 %v1355
        %v2571 = vunpack.c.h.b16 %v1355
        %v2572 = vunpack.c.l.b16 %v1356
        %v2573 = vunpack.c.h.b16 %v1356
        %v2574 = vunpack.c.l.b16 %v1357
        %v2575 = vunpack.c.h.b16 %v1357
        %v2576 = vunpack.c.l.b16 %v1358
        %v2577 = vunpack.c.h.b16 %v1358
        %v2578 = vunpack.c.l.b16 %v1359
        %v2579 = vunpack.c.h.b16 %v1359
        %v2580 = vunpack.c.l.b16 %v1360
        %v2581 = vunpack.c.h.b16 %v1360
        %v2582 = vunpack.c.l.b16 %v1361
        %v2583 = vunpack.c.h.b16 %v1361
        %v2584 = vunpack.c.l.b16 %v1362
        %v2585 = vunpack.c.h.b16 %v1362
        %v2586 = vunpack.c.l.b16 %v1363
        %v2587 = vunpack.c.h.b16 %v1363
        %v2588 = vunpack.c.l.b16 %v1364
        %v2589 = vunpack.c.h.b16 %v1364
        %v2590 = vunpack.c.l.b16 %v1365
        %v2591 = vunpack.c.h.b16 %v1365
        %v2592 = vunpack.c.l.b16 %v1366
        %v2593 = vunpack.c.h.b16 %v1366
        %v2594 = vunpack.c.l.b16 %v1367
        %v2595 = vunpack.c.h.b16 %v1367
        %v2596 = vunpack.c.l.b16 %v1368
        %v2597 = vunpack.c.h.b16 %v1368
        %v2598 = vunpack.c.l.b16 %v1369
        %v2599 = vunpack.c.h.b16 %v1369
        %v2600 = vunpack.c.l.b16 %v1370
        %v2601 = vunpack.c.h.b16 %v1370
        %v2602 = vunpack.c.l.b16 %v1371
        %v2603 = vunpack.c.h.b16 %v1371
        %v2604 = vunpack.c.l.b16 %v1372
        %v2605 = vunpack.c.h.b16 %v1372
        %v2606 = vunpack.c.l.b16 %v1373
        %v2607 = vunpack.c.h.b16 %v1373
        %v2608 = vunpack.c.l.b16 %v1374
        %v2609 = vunpack.c.h.b16 %v1374
        %v2610 = vunpack.c.l.b16 %v1375
        %v2611 = vunpack.c.h.b16 %v1375
        %v2612 = vunpack.c.l.b16 %v1376
        %v2613 = vunpack.c.h.b16 %v1376
        %v2614 = vunpack.c.l.b16 %v1377
        %v2615 = vunpack.c.h.b16 %v1377
        %v2616 = vunpack.c.l.b16 %v1378
        %v2617 = vunpack.c.h.b16 %v1378
        %v2618 = vunpack.c.l.b16 %v1379
        %v2619 = vunpack.c.h.b16 %v1379
        %v2620 = vunpack.c.l.b16 %v1380
        %v2621 = vunpack.c.h.b16 %v1380
        %v2622 = vunpack.c.l.b16 %v1381
        %v2623 = vunpack.c.h.b16 %v1381
        %v2624 = vunpack.c.l.b16 %v1382
        %v2625 = vunpack.c.h.b16 %v1382
        %v2626 = vunpack.c.l.b16 %v1383
        %v2627 = vunpack.c.h.b16 %v1383
        %v2628 = vunpack.c.l.b16 %v1384
        %v2629 = vunpack.c.h.b16 %v1384
        %v2630 = vunpack.c.l.b16 %v1385
        %v2631 = vunpack.c.h.b16 %v1385
        %v2632 = vunpack.c.l.b16 %v1386
        %v2633 = vunpack.c.h.b16 %v1386
        %v2634 = vunpack.c.l.b16 %v1387
        %v2635 = vunpack.c.h.b16 %v1387
        %v2636 = vunpack.c.l.b16 %v1388
        %v2637 = vunpack.c.h.b16 %v1388
        %v2638 = vunpack.c.l.b16 %v1389
        %v2639 = vunpack.c.h.b16 %v1389
        %v2640 = vunpack.c.l.b16 %v1390
        %v2641 = vunpack.c.h.b16 %v1390
        %v2642 = vunpack.c.l.b16 %v1391
        %v2643 = vunpack.c.h.b16 %v1391
        %v2644 = vunpack.c.l.b16 %v1392
        %v2645 = vunpack.c.h.b16 %v1392
        %v2646 = vunpack.c.l.b16 %v1393
        %v2647 = vunpack.c.h.b16 %v1393
        %v2648 = vunpack.c.l.b16 %v1394
        %v2649 = vunpack.c.h.b16 %v1394
        %v2650 = vunpack.c.l.b16 %v1395
        %v2651 = vunpack.c.h.b16 %v1395
        %v2652 = vunpack.c.l.b16 %v1396
        %v2653 = vunpack.c.h.b16 %v1396
        %v2654 = vunpack.c.l.b16 %v1397
        %v2655 = vunpack.c.h.b16 %v1397
        %v2656 = vunpack.c.l.b16 %v1398
        %v2657 = vunpack.c.h.b16 %v1398
        %v2658 = vunpack.c.l.b16 %v1399
        %v2659 = vunpack.c.h.b16 %v1399
        %v2660 = vunpack.c.l.b16 %v1400
        %v2661 = vunpack.c.h.b16 %v1400
        %v2662 = vunpack.c.l.b16 %v1401
        %v2663 = vunpack.c.h.b16 %v1401
        %v2664 = vunpack.c.l.b16 %v1402
        %v2665 = vunpack.c.h.b16 %v1402
        %v2666 = vunpack.c.l.b16 %v1403
        %v2667 = vunpack.c.h.b16 %v1403
        %v2668 = vunpack.c.l.b16 %v1404
        %v2669 = vunpack.c.h.b16 %v1404
        %v2670 = vunpack.c.l.b16 %v1405
        %v2671 = vunpack.c.h.b16 %v1405
        %v2672 = vunpack.c.l.b16 %v1406
        %v2673 = vunpack.c.h.b16 %v1406
        %v2674 = vunpack.c.l.b16 %v1407
        %v2675 = vunpack.c.h.b16 %v1407
        %v2676 = vunpack.c.l.b16 %v1408
        %v2677 = vunpack.c.h.b16 %v1408
        %v2678 = vunpack.c.l.b16 %v1409
        %v2679 = vunpack.c.h.b16 %v1409
        %v2680 = vunpack.c.l.b16 %v1410
        %v2681 = vunpack.c.h.b16 %v1410
        %v2682 = vunpack.c.l.b16 %v1411
        %v2683 = vunpack.c.h.b16 %v1411
        %v2684 = vunpack.c.l.b16 %v1412
        %v2685 = vunpack.c.h.b16 %v1412
        %v2686 = vunpack.c.l.b16 %v1413
        %v2687 = vunpack.c.h.b16 %v1413
        %v2688 = vunpack.c.l.b16 %v1414
        %v2689 = vunpack.c.h.b16 %v1414
        %v2690 = vunpack.c.l.b16 %v1415
        %v2691 = vunpack.c.h.b16 %v1415
        %v2692 = vunpack.c.l.b16 %v1416
        %v2693 = vunpack.c.h.b16 %v1416
        %v2694 = vunpack.c.l.b16 %v1417
        %v2695 = vunpack.c.h.b16 %v1417
        %v2696 = vunpack.c.l.b16 %v1418
        %v2697 = vunpack.c.h.b16 %v1418
        %v2698 = vunpack.c.l.b16 %v1419
        %v2699 = vunpack.c.h.b16 %v1419
        %v2700 = vunpack.c.l.b16 %v1420
        %v2701 = vunpack.c.h.b16 %v1420
        %v2702 = vunpack.c.l.b16 %v1421
        %v2703 = vunpack.c.h.b16 %v1421
        %v2704 = vunpack.c.l.b16 %v1422
        %v2705 = vunpack.c.h.b16 %v1422
        %v2706 = vunpack.c.l.b16 %v1423
        %v2707 = vunpack.c.h.b16 %v1423
        %v2708 = vunpack.c.l.b16 %v1424
        %v2709 = vunpack.c.h.b16 %v1424
        %v2710 = vunpack.c.l.b16 %v1425
        %v2711 = vunpack.c.h.b16 %v1425
        %v2712 = vunpack.c.l.b16 %v1426
        %v2713 = vunpack.c.h.b16 %v1426
        %v2714 = vunpack.c.l.b16 %v1427
        %v2715 = vunpack.c.h.b16 %v1427
        %v2716 = vunpack.c.l.b16 %v1428
        %v2717 = vunpack.c.h.b16 %v1428
        %v2718 = vunpack.c.l.b16 %v1429
        %v2719 = vunpack.c.h.b16 %v1429
        %v2720 = vunpack.c.l.b16 %v1430
        %v2721 = vunpack.c.h.b16 %v1430
        %v2722 = vunpack.c.l.b16 %v1431
        %v2723 = vunpack.c.h.b16 %v1431
        %v2724 = vunpack.c.l.b16 %v1432
        %v2725 = vunpack.c.h.b16 %v1432
        %v2726 = vunpack.c.l.b16 %v1433
        %v2727 = vunpack.c.h.b16 %v1433
        %v2728 = vunpack.c.l.b16 %v1434
        %v2729 = vunpack.c.h.b16 %v1434
        %v2730 = vunpack.c.l.b16 %v1435
        %v2731 = vunpack.c.h.b16 %v1435
        %v2732 = vunpack.c.l.b16 %v1436
        %v2733 = vunpack.c.h.b16 %v1436
        %v2734 = vunpack.c.l.b16 %v1437
        %v2735 = vunpack.c.h.b16 %v1437
        %v2736 = vunpack.c.l.b16 %v1438
        %v2737 = vunpack.c.h.b16 %v1438
        %v2738 = vunpack.c.l.b16 %v1439
        %v2739 = vunpack.c.h.b16 %v1439
        %v2740 = vunpack.c.l.b16 %v1440
        %v2741 = vunpack.c.h.b16 %v1440
        %v2742 = vunpack.c.l.b16 %v1441
        %v2743 = vunpack.c.h.b16 %v1441
        %v2744 = vunpack.c.l.b16 %v1442
        %v2745 = vunpack.c.h.b16 %v1442
        %v2746 = vunpack.c.l.b16 %v1443
        %v2747 = vunpack.c.h.b16 %v1443
        %v2748 = vunpack.c.l.b16 %v1444
        %v2749 = vunpack.c.h.b16 %v1444
        %v2750 = vunpack.c.l.b16 %v1445
        %v2751 = vunpack.c.h.b16 %v1445
        %v2752 = vunpack.c.l.b16 %v1446
        %v2753 = vunpack.c.h.b16 %v1446
        %v2754 = vunpack.c.l.b16 %v1447
        %v2755 = vunpack.c.h.b16 %v1447
        %v2756 = vunpack.c.l.b16 %v1448
        %v2757 = vunpack.c.h.b16 %v1448
        %v2758 = vunpack.c.l.b16 %v1449
        %v2759 = vunpack.c.h.b16 %v1449
        %v2760 = vunpack.c.l.b16 %v1450
        %v2761 = vunpack.c.h.b16 %v1450
        %v2762 = vunpack.c.l.b16 %v1451
        %v2763 = vunpack.c.h.b16 %v1451
        %v2764 = vunpack.c.l.b16 %v1452
        %v2765 = vunpack.c.h.b16 %v1452
        %v2766 = vunpack.c.l.b16 %v1453
        %v2767 = vunpack.c.h.b16 %v1453
        %v2768 = vunpack.c.l.b16 %v1454
        %v2769 = vunpack.c.h.b16 %v1454
        %v2770 = vunpack.c.l.b16 %v1455
        %v2771 = vunpack.c.h.b16 %v1455
        %v2772 = vunpack.c.l.b16 %v1456
        %v2773 = vunpack.c.h.b16 %v1456
        %v2774 = vunpack.c.l.b16 %v1457
        %v2775 = vunpack.c.h.b16 %v1457
        %v2776 = vunpack.c.l.b16 %v1458
        %v2777 = vunpack.c.h.b16 %v1458
        %v2778 = vunpack.c.l.b16 %v1459
        %v2779 = vunpack.c.h.b16 %v1459
        %v2780 = vunpack.c.l.b16 %v1460
        %v2781 = vunpack.c.h.b16 %v1460
        %v2782 = vunpack.c.l.b16 %v1461
        %v2783 = vunpack.c.h.b16 %v1461
        %v2784 = vunpack.c.l.b16 %v1462
        %v2785 = vunpack.c.h.b16 %v1462
        %v2786 = vunpack.c.l.b16 %v1463
        %v2787 = vunpack.c.h.b16 %v1463
        %v2788 = vunpack.c.l.b16 %v1464
        %v2789 = vunpack.c.h.b16 %v1464
        %v2790 = vunpack.c.l.b16 %v1465
        %v2791 = vunpack.c.h.b16 %v1465
        %v2792 = vunpack.c.l.b16 %v1466
        %v2793 = vunpack.c.h.b16 %v1466
        %v2794 = vunpack.c.l.b16 %v1467
        %v2795 = vunpack.c.h.b16 %v1467
        %v2796 = vunpack.c.l.b16 %v1468
        %v2797 = vunpack.c.h.b16 %v1468
        %v2798 = vunpack.c.l.b16 %v1469
        %v2799 = vunpack.c.h.b16 %v1469
        %v2800 = vunpack.c.l.b16 %v1470
        %v2801 = vunpack.c.h.b16 %v1470
        %v2802 = vunpack.c.l.b16 %v1471
        %v2803 = vunpack.c.h.b16 %v1471
        %v2804 = vunpack.c.l.b16 %v1472
        %v2805 = vunpack.c.h.b16 %v1472
        %v2806 = vunpack.c.l.b16 %v1473
        %v2807 = vunpack.c.h.b16 %v1473
        %v2808 = vunpack.c.l.b16 %v1474
        %v2809 = vunpack.c.h.b16 %v1474
        %v2810 = vunpack.c.l.b16 %v1475
        %v2811 = vunpack.c.h.b16 %v1475
        %v2812 = vunpack.c.l.b16 %v1476
        %v2813 = vunpack.c.h.b16 %v1476
        %v2814 = vunpack.c.l.b16 %v1477
        %v2815 = vunpack.c.h.b16 %v1477
        %v2816 = vunpack.c.l.b16 %v1478
        %v2817 = vunpack.c.h.b16 %v1478
        %v2818 = vunpack.c.l.b16 %v1479
        %v2819 = vunpack.c.h.b16 %v1479
        %v2820 = vunpack.c.l.b16 %v1480
        %v2821 = vunpack.c.h.b16 %v1480
        %v2822 = vunpack.c.l.b16 %v1481
        %v2823 = vunpack.c.h.b16 %v1481
        %v2824 = vunpack.c.l.b16 %v1482
        %v2825 = vunpack.c.h.b16 %v1482
        %v2826 = vunpack.c.l.b16 %v1483
        %v2827 = vunpack.c.h.b16 %v1483
        %v2828 = vunpack.c.l.b16 %v1484
        %v2829 = vunpack.c.h.b16 %v1484
        %v2830 = vunpack.c.l.b16 %v1485
        %v2831 = vunpack.c.h.b16 %v1485
        %v2832 = vunpack.c.l.b16 %v1486
        %v2833 = vunpack.c.h.b16 %v1486
        %v2834 = vunpack.c.l.b16 %v1487
        %v2835 = vunpack.c.h.b16 %v1487
        %v2836 = vunpack.c.l.b16 %v1488
        %v2837 = vunpack.c.h.b16 %v1488
        %v2838 = vunpack.c.l.b16 %v1489
        %v2839 = vunpack.c.h.b16 %v1489
        %v2840 = vunpack.c.l.b16 %v1490
        %v2841 = vunpack.c.h.b16 %v1490
        %v2842 = vunpack.c.l.b16 %v1491
        %v2843 = vunpack.c.h.b16 %v1491
        %v2844 = vunpack.c.l.b16 %v1492
        %v2845 = vunpack.c.h.b16 %v1492
        %v2846 = vunpack.c.l.b16 %v1493
        %v2847 = vunpack.c.h.b16 %v1493
        %v2848 = vunpack.c.l.b16 %v1494
        %v2849 = vunpack.c.h.b16 %v1494
        %v2850 = vunpack.c.l.b16 %v1495
        %v2851 = vunpack.c.h.b16 %v1495
        %v2852 = vunpack.c.l.b16 %v1496
        %v2853 = vunpack.c.h.b16 %v1496
        %v2854 = vunpack.c.l.b16 %v1497
        %v2855 = vunpack.c.h.b16 %v1497
        %v2856 = vunpack.c.l.b16 %v1498
        %v2857 = vunpack.c.h.b16 %v1498
        %v2858 = vunpack.c.l.b16 %v1499
        %v2859 = vunpack.c.h.b16 %v1499
        %v2860 = vunpack.c.l.b16 %v1500
        %v2861 = vunpack.c.h.b16 %v1500
        %v2862 = vunpack.c.l.b16 %v1501
        %v2863 = vunpack.c.h.b16 %v1501
        %v2864 = vunpack.c.l.b16 %v1502
        %v2865 = vunpack.c.h.b16 %v1502
        %v2866 = vunpack.c.l.b16 %v1503
        %v2867 = vunpack.c.h.b16 %v1503
        %v2868 = vunpack.c.l.b16 %v1504
        %v2869 = vunpack.c.h.b16 %v1504
        %v2870 = vunpack.c.l.b16 %v1505
        %v2871 = vunpack.c.h.b16 %v1505
        %v2872 = vunpack.c.l.b16 %v1506
        %v2873 = vunpack.c.h.b16 %v1506
        %v2874 = vunpack.c.l.b16 %v1507
        %v2875 = vunpack.c.h.b16 %v1507
        %v2876 = vunpack.c.l.b16 %v1508
        %v2877 = vunpack.c.h.b16 %v1508
        %v2878 = vunpack.c.l.b16 %v1509
        %v2879 = vunpack.c.h.b16 %v1509
        %v2880 = vunpack.c.l.b16 %v1510
        %v2881 = vunpack.c.h.b16 %v1510
        %v2882 = vunpack.c.l.b16 %v1511
        %v2883 = vunpack.c.h.b16 %v1511
        %v2884 = vunpack.c.l.b16 %v1512
        %v2885 = vunpack.c.h.b16 %v1512
        %v2886 = vunpack.c.l.b16 %v1513
        %v2887 = vunpack.c.h.b16 %v1513
        %v2888 = vunpack.c.l.b16 %v1514
        %v2889 = vunpack.c.h.b16 %v1514
        %v2890 = vunpack.c.l.b16 %v1515
        %v2891 = vunpack.c.h.b16 %v1515
        %v2892 = vunpack.c.l.b16 %v1516
        %v2893 = vunpack.c.h.b16 %v1516
        %v2894 = vunpack.c.l.b16 %v1517
        %v2895 = vunpack.c.h.b16 %v1517
        %v2896 = vunpack.c.l.b16 %v1518
        %v2897 = vunpack.c.h.b16 %v1518
        %v2898 = vunpack.c.l.b16 %v1519
        %v2899 = vunpack.c.h.b16 %v1519
        %v2900 = vunpack.c.l.b16 %v1520
        %v2901 = vunpack.c.h.b16 %v1520
        %v2902 = vunpack.c.l.b16 %v1521
        %v2903 = vunpack.c.h.b16 %v1521
        %v2904 = vunpack.c.l.b16 %v1522
        %v2905 = vunpack.c.h.b16 %v1522
        %v2906 = vunpack.c.l.b16 %v1523
        %v2907 = vunpack.c.h.b16 %v1523
        %v2908 = vunpack.c.l.b16 %v1524
        %v2909 = vunpack.c.h.b16 %v1524
        %v2910 = vunpack.c.l.b16 %v1525
        %v2911 = vunpack.c.h.b16 %v1525
        %v2912 = vunpack.c.l.b16 %v1526
        %v2913 = vunpack.c.h.b16 %v1526
        %v2914 = vunpack.c.l.b16 %v1527
        %v2915 = vunpack.c.h.b16 %v1527
        %v2916 = vunpack.c.l.b16 %v1528
        %v2917 = vunpack.c.h.b16 %v1528
        %v2918 = vunpack.c.l.b16 %v1529
        %v2919 = vunpack.c.h.b16 %v1529
        %v2920 = vunpack.c.l.b16 %v1530
        %v2921 = vunpack.c.h.b16 %v1530
        %v2922 = vunpack.c.l.b16 %v1531
        %v2923 = vunpack.c.h.b16 %v1531
        %v2924 = vunpack.c.l.b16 %v1532
        %v2925 = vunpack.c.h.b16 %v1532
        %v2926 = vunpack.c.l.b16 %v1533
        %v2927 = vunpack.c.h.b16 %v1533
        %v2928 = vunpack.c.l.b16 %v1534
        %v2929 = vunpack.c.h.b16 %v1534
        %v2930 = vunpack.c.l.b16 %v1535
        %v2931 = vunpack.c.h.b16 %v1535
        %v2932 = vunpack.c.l.b16 %v1536
        %v2933 = vunpack.c.h.b16 %v1536
        %v2934 = vunpack.c.l.b16 %v1537
        %v2935 = vunpack.c.h.b16 %v1537
        %v2936 = vunpack.c.l.b16 %v1538
        %v2937 = vunpack.c.h.b16 %v1538
        %v2938 = vunpack.c.l.b16 %v1539
        %v2939 = vunpack.c.h.b16 %v1539
        %v2940 = vunpack.c.l.b16 %v1540
        %v2941 = vunpack.c.h.b16 %v1540
        %v2942 = vunpack.c.l.b16 %v1541
        %v2943 = vunpack.c.h.b16 %v1541
        %v2944 = vunpack.c.l.b16 %v1542
        %v2945 = vunpack.c.h.b16 %v1542
        %v2946 = vunpack.c.l.b16 %v1543
        %v2947 = vunpack.c.h.b16 %v1543
        %v2948 = vunpack.c.l.b16 %v1544
        %v2949 = vunpack.c.h.b16 %v1544
        %v2950 = vunpack.c.l.b16 %v1545
        %v2951 = vunpack.c.h.b16 %v1545
        %v2952 = vunpack.c.l.b16 %v1546
        %v2953 = vunpack.c.h.b16 %v1546
        %v2954 = vunpack.c.l.b16 %v1547
        %v2955 = vunpack.c.h.b16 %v1547
        %v2956 = vunpack.c.l.b16 %v1548
        %v2957 = vunpack.c.h.b16 %v1548
        %v2958 = vunpack.c.l.b16 %v1549
        %v2959 = vunpack.c.h.b16 %v1549
        %v2960 = vunpack.c.l.b16 %v1550
        %v2961 = vunpack.c.h.b16 %v1550
        %v2962 = vunpack.c.l.b16 %v1551
        %v2963 = vunpack.c.h.b16 %v1551
        %v2964 = vunpack.c.l.b16 %v1552
        %v2965 = vunpack.c.h.b16 %v1552
        %v2966 = vunpack.c.l.b16 %v1553
        %v2967 = vunpack.c.h.b16 %v1553
        %v2968 = vunpack.c.l.b16 %v1554
        %v2969 = vunpack.c.h.b16 %v1554
        %v2970 = vunpack.c.l.b16 %v1555
        %v2971 = vunpack.c.h.b16 %v1555
        %v2972 = vunpack.c.l.b16 %v1556
        %v2973 = vunpack.c.h.b16 %v1556
        %v2974 = vunpack.c.l.b16 %v1557
        %v2975 = vunpack.c.h.b16 %v1557
        %v2976 = vunpack.c.l.b16 %v1558
        %v2977 = vunpack.c.h.b16 %v1558
        %v2978 = vunpack.c.l.b16 %v1559
        %v2979 = vunpack.c.h.b16 %v1559
        %v2980 = vunpack.c.l.b16 %v1560
        %v2981 = vunpack.c.h.b16 %v1560
        %v2982 = vunpack.c.l.b16 %v1561
        %v2983 = vunpack.c.h.b16 %v1561
        %v2984 = vunpack.c.l.b16 %v1562
        %v2985 = vunpack.c.h.b16 %v1562
        %v2986 = vunpack.c.l.b16 %v1563
        %v2987 = vunpack.c.h.b16 %v1563
        %v2988 = vunpack.c.l.b16 %v1564
        %v2989 = vunpack.c.h.b16 %v1564
        %v2990 = vunpack.c.l.b16 %v1565
        %v2991 = vunpack.c.h.b16 %v1565
        %v2992 = vunpack.c.l.b16 %v1566
        %v2993 = vunpack.c.h.b16 %v1566
        %v2994 = vunpack.c.l.b16 %v1567
        %v2995 = vunpack.c.h.b16 %v1567
        %v2996 = vunpack.c.l.b16 %v1568
        %v2997 = vunpack.c.h.b16 %v1568
        %v2998 = vunpack.c.l.b16 %v1569
        %v2999 = vunpack.c.h.b16 %v1569
        %v3000 = vunpack.c.l.b16 %v1570
        %v3001 = vunpack.c.h.b16 %v1570
        %v3002 = vunpack.c.l.b16 %v1571
        %v3003 = vunpack.c.h.b16 %v1571
        %v3004 = vunpack.c.l.b16 %v1572
        %v3005 = vunpack.c.h.b16 %v1572
        %v3006 = vunpack.c.l.b16 %v1573
        %v3007 = vunpack.c.h.b16 %v1573
        %v3008 = vunpack.c.l.b16 %v1574
        %v3009 = vunpack.c.h.b16 %v1574
        %v3010 = vunpack.c.l.b16 %v1575
        %v3011 = vunpack.c.h.b16 %v1575
        %v3012 = vunpack.c.l.b16 %v1576
        %v3013 = vunpack.c.h.b16 %v1576
        %v3014 = vunpack.c.l.b16 %v1577
        %v3015 = vunpack.c.h.b16 %v1577
        %v3016 = vunpack.c.l.b16 %v1578
        %v3017 = vunpack.c.h.b16 %v1578
        %v3018 = vunpack.c.l.b16 %v1579
        %v3019 = vunpack.c.h.b16 %v1579
        %v3020 = vunpack.c.l.b16 %v1580
        %v3021 = vunpack.c.h.b16 %v1580
        %v3022 = vunpack.c.l.b16 %v1581
        %v3023 = vunpack.c.h.b16 %v1581
        %v3024 = vunpack.c.l.b16 %v1582
        %v3025 = vunpack.c.h.b16 %v1582
        %v3026 = vunpack.c.l.b16 %v1583
        %v3027 = vunpack.c.h.b16 %v1583
        %v3028 = vunpack.c.l.b16 %v1584
        %v3029 = vunpack.c.h.b16 %v1584
        %v3030 = vunpack.c.l.b16 %v1585
        %v3031 = vunpack.c.h.b16 %v1585
        %v3032 = vunpack.c.l.b16 %v1586
        %v3033 = vunpack.c.h.b16 %v1586
        %v3034 = vunpack.c.l.b16 %v1587
        %v3035 = vunpack.c.h.b16 %v1587
        %v3036 = vunpack.c.l.b16 %v1588
        %v3037 = vunpack.c.h.b16 %v1588
        %v3038 = vunpack.c.l.b16 %v1589
        %v3039 = vunpack.c.h.b16 %v1589
        %v3040 = vunpack.c.l.b16 %v1590
        %v3041 = vunpack.c.h.b16 %v1590
        %v3042 = vunpack.c.l.b16 %v1591
        %v3043 = vunpack.c.h.b16 %v1591
        %v3044 = vunpack.c.l.b16 %v1592
        %v3045 = vunpack.c.h.b16 %v1592
        %v3046 = vunpack.c.l.b16 %v1593
        %v3047 = vunpack.c.h.b16 %v1593
        %v3048 = vunpack.c.l.b16 %v1594
        %v3049 = vunpack.c.h.b16 %v1594
        %v3050 = vunpack.c.l.b16 %v1595
        %v3051 = vunpack.c.h.b16 %v1595
        %v3052 = vunpack.c.l.b16 %v1596
        %v3053 = vunpack.c.h.b16 %v1596
        %v3054 = vunpack.c.l.b16 %v1597
        %v3055 = vunpack.c.h.b16 %v1597
        %v3056 = vunpack.c.l.b16 %v1598
        %v3057 = vunpack.c.h.b16 %v1598
        %v3058 = vunpack.c.l.b16 %v1599
        %v3059 = vunpack.c.h.b16 %v1599
        %v3060 = vunpack.c.l.b16 %v1600
        %v3061 = vunpack.c.h.b16 %v1600
        %v3062 = vunpack.c.l.b16 %v1601
        %v3063 = vunpack.c.h.b16 %v1601
        %v3064 = vunpack.c.l.b16 %v1602
        %v3065 = vunpack.c.h.b16 %v1602
        %v3066 = vunpack.c.l.b16 %v1603
        %v3067 = vunpack.c.h.b16 %v1603
        %v3068 = vunpack.c.l.b16 %v1604
        %v3069 = vunpack.c.h.b16 %v1604
        %v3070 = vunpack.c.l.b16 %v1605
        %v3071 = vunpack.c.h.b16 %v1605
        %v3072 = vunpack.c.l.b16 %v1606
        %v3073 = vunpack.c.h.b16 %v1606
        %v3074 = vunpack.c.l.b16 %v1607
        %v3075 = vunpack.c.h.b16 %v1607
        %v3076 = vunpack.c.l.b16 %v1608
        %v3077 = vunpack.c.h.b16 %v1608
        %v3078 = vunpack.c.l.b16 %v1609
        %v3079 = vunpack.c.h.b16 %v1609
        %v3080 = vunpack.c.l.b16 %v1610
        %v3081 = vunpack.c.h.b16 %v1610
        %v3082 = vunpack.c.l.b16 %v1611
        %v3083 = vunpack.c.h.b16 %v1611
        %v3084 = vunpack.c.l.b16 %v1612
        %v3085 = vunpack.c.h.b16 %v1612
        %v3086 = vunpack.c.l.b16 %v1613
        %v3087 = vunpack.c.h.b16 %v1613
        %v3088 = vunpack.c.l.b16 %v1614
        %v3089 = vunpack.c.h.b16 %v1614
        %v3090 = vunpack.c.l.b16 %v1615
        %v3091 = vunpack.c.h.b16 %v1615
        %v3092 = vunpack.c.l.b16 %v1616
        %v3093 = vunpack.c.h.b16 %v1616
        %v3094 = vunpack.c.l.b16 %v1617
        %v3095 = vunpack.c.h.b16 %v1617
        %v3096 = vunpack.c.l.b16 %v1618
        %v3097 = vunpack.c.h.b16 %v1618
        %v3098 = vunpack.c.l.b16 %v1619
        %v3099 = vunpack.c.h.b16 %v1619
        %v3100 = vunpack.c.l.b16 %v1620
        %v3101 = vunpack.c.h.b16 %v1620
        %v3102 = vunpack.c.l.b16 %v1621
        %v3103 = vunpack.c.h.b16 %v1621
        %v3104 = vunpack.c.l.b16 %v1622
        %v3105 = vunpack.c.h.b16 %v1622
        %v3106 = vunpack.c.l.b16 %v1623
        %v3107 = vunpack.c.h.b16 %v1623
        %v3108 = vunpack.c.l.b16 %v1624
        %v3109 = vunpack.c.h.b16 %v1624
        %v3110 = vunpack.c.l.b16 %v1625
        %v3111 = vunpack.c.h.b16 %v1625
        %v3112 = vunpack.c.l.b16 %v1626
        %v3113 = vunpack.c.h.b16 %v1626
        %v3114 = vunpack.c.l.b16 %v1627
        %v3115 = vunpack.c.h.b16 %v1627
        %v3116 = vunpack.c.l.b16 %v1628
        %v3117 = vunpack.c.h.b16 %v1628
        %v3118 = vunpack.c.l.b16 %v1629
        %v3119 = vunpack.c.h.b16 %v1629
        %v3120 = vunpack.c.l.b16 %v1630
        %v3121 = vunpack.c.h.b16 %v1630
        %v3122 = vunpack.c.l.b16 %v1631
        %v3123 = vunpack.c.h.b16 %v1631
        %v3124 = vunpack.c.l.b16 %v1632
        %v3125 = vunpack.c.h.b16 %v1632
        %v3126 = vunpack.c.l.b16 %v1633
        %v3127 = vunpack.c.h.b16 %v1633
        %v3128 = vunpack.c.l.b16 %v1634
        %v3129 = vunpack.c.h.b16 %v1634
        %v3130 = vunpack.c.l.b16 %v1635
        %v3131 = vunpack.c.h.b16 %v1635
        %v3132 = vunpack.c.l.b16 %v1636
        %v3133 = vunpack.c.h.b16 %v1636
        %v3134 = vunpack.c.l.b16 %v1637
        %v3135 = vunpack.c.h.b16 %v1637
        %v3136 = vunpack.c.l.b16 %v1638
        %v3137 = vunpack.c.h.b16 %v1638
        %v3138 = vunpack.c.l.b16 %v1639
        %v3139 = vunpack.c.h.b16 %v1639
        %v3140 = vunpack.c.l.b16 %v1640
        %v3141 = vunpack.c.h.b16 %v1640
        %v3142 = vunpack.c.l.b16 %v1641
        %v3143 = vunpack.c.h.b16 %v1641
        %v3144 = vunpack.c.l.b16 %v1642
        %v3145 = vunpack.c.h.b16 %v1642
        %v3146 = vunpack.c.l.b16 %v1643
        %v3147 = vunpack.c.h.b16 %v1643
        %v3148 = vunpack.c.l.b16 %v1644
        %v3149 = vunpack.c.h.b16 %v1644
        %v3150 = vunpack.c.l.b16 %v1645
        %v3151 = vunpack.c.h.b16 %v1645
        %v3152 = vunpack.c.l.b16 %v1646
        %v3153 = vunpack.c.h.b16 %v1646
        %v3154 = vunpack.c.l.b16 %v1647
        %v3155 = vunpack.c.h.b16 %v1647
        %v3156 = vunpack.c.l.b16 %v1648
        %v3157 = vunpack.c.h.b16 %v1648
        %v3158 = vunpack.c.l.b16 %v1649
        %v3159 = vunpack.c.h.b16 %v1649
        %v3160 = vunpack.c.l.b16 %v1650
        %v3161 = vunpack.c.h.b16 %v1650
        %v3162 = vunpack.c.l.b16 %v1651
        %v3163 = vunpack.c.h.b16 %v1651
        %v3164 = vunpack.c.l.b16 %v1652
        %v3165 = vunpack.c.h.b16 %v1652
        %v3166 = vunpack.c.l.b16 %v1653
        %v3167 = vunpack.c.h.b16 %v1653
        %v3168 = vunpack.c.l.b16 %v1654
        %v3169 = vunpack.c.h.b16 %v1654
        %v3170 = vunpack.c.l.b16 %v1655
        %v3171 = vunpack.c.h.b16 %v1655
        %v3172 = vunpack.c.l.b16 %v1656
        %v3173 = vunpack.c.h.b16 %v1656
        %v3174 = vunpack.c.l.b16 %v1657
        %v3175 = vunpack.c.h.b16 %v1657
        %v3176 = vunpack.c.l.b16 %v1658
        %v3177 = vunpack.c.h.b16 %v1658
        %v3178 = vunpack.c.l.b16 %v1659
        %v3179 = vunpack.c.h.b16 %v1659
        %v3180 = vunpack.c.l.b16 %v1660
        %v3181 = vunpack.c.h.b16 %v1660
        %v3182 = vunpack.c.l.b16 %v1661
        %v3183 = vunpack.c.h.b16 %v1661
        %v3184 = vunpack.c.l.b16 %v1662
        %v3185 = vunpack.c.h.b16 %v1662
        %v3186 = vunpack.c.l.b16 %v1663
        %v3187 = vunpack.c.h.b16 %v1663
        %v3188 = vunpack.c.l.b16 %v1664
        %v3189 = vunpack.c.h.b16 %v1664
        %v3190 = vunpack.c.l.b16 %v1665
        %v3191 = vunpack.c.h.b16 %v1665
        %v3192 = vunpack.c.l.b16 %v1666
        %v3193 = vunpack.c.h.b16 %v1666
        %v3194 = vunpack.c.l.b16 %v1667
        %v3195 = vunpack.c.h.b16 %v1667
        %v3196 = vunpack.c.l.b16 %v1668
        %v3197 = vunpack.c.h.b16 %v1668
        %v3198 = vunpack.c.l.b16 %v1669
        %v3199 = vunpack.c.h.b16 %v1669
        %v3200 = vunpack.c.l.b16 %v1670
        %v3201 = vunpack.c.h.b16 %v1670
        %v3202 = vunpack.c.l.b16 %v1671
        %v3203 = vunpack.c.h.b16 %v1671
        %v3204 = vunpack.c.l.b16 %v1672
        %v3205 = vunpack.c.h.b16 %v1672
        %v3206 = vunpack.c.l.b16 %v1673
        %v3207 = vunpack.c.h.b16 %v1673
        %v3208 = vunpack.c.l.b16 %v1674
        %v3209 = vunpack.c.h.b16 %v1674
        %v3210 = vunpack.c.l.b16 %v1675
        %v3211 = vunpack.c.h.b16 %v1675
        %v3212 = vunpack.c.l.b16 %v1676
        %v3213 = vunpack.c.h.b16 %v1676
        %v3214 = vunpack.c.l.b16 %v1677
        %v3215 = vunpack.c.h.b16 %v1677
        %v3216 = vunpack.c.l.b16 %v1678
        %v3217 = vunpack.c.h.b16 %v1678
        %v3218 = vunpack.c.l.b16 %v1679
        %v3219 = vunpack.c.h.b16 %v1679
        %v3220 = vunpack.c.l.b16 %v1680
        %v3221 = vunpack.c.h.b16 %v1680
        %v3222 = vunpack.c.l.b16 %v1681
        %v3223 = vunpack.c.h.b16 %v1681
        %v3224 = vunpack.c.l.b16 %v1682
        %v3225 = vunpack.c.h.b16 %v1682
        %v3226 = vunpack.c.l.b16 %v1683
        %v3227 = vunpack.c.h.b16 %v1683
        %v3228 = vunpack.c.l.b16 %v1684
        %v3229 = vunpack.c.h.b16 %v1684
        %v3230 = vunpack.c.l.b16 %v1685
        %v3231 = vunpack.c.h.b16 %v1685
        %v3232 = vunpack.c.l.b16 %v1686
        %v3233 = vunpack.c.h.b16 %v1686
        %v3234 = vunpack.c.l.b16 %v1687
        %v3235 = vunpack.c.h.b16 %v1687
        %v3236 = vunpack.c.l.b16 %v1688
        %v3237 = vunpack.c.h.b16 %v1688
        %v3238 = vunpack.c.l.b16 %v1689
        %v3239 = vunpack.c.h.b16 %v1689
        %v3240 = vunpack.c.l.b16 %v1690
        %v3241 = vunpack.c.h.b16 %v1690
        %v3242 = vunpack.c.l.b16 %v1691
        %v3243 = vunpack.c.h.b16 %v1691
        %v3244 = vunpack.c.l.b16 %v1692
        %v3245 = vunpack.c.h.b16 %v1692
        %v3246 = vunpack.c.l.b16 %v1693
        %v3247 = vunpack.c.h.b16 %v1693
        %v3248 = vunpack.c.l.b16 %v1694
        %v3249 = vunpack.c.h.b16 %v1694
        %v3250 = vunpack.c.l.b16 %v1695
        %v3251 = vunpack.c.h.b16 %v1695
        %v3252 = vunpack.c.l.b16 %v1696
        %v3253 = vunpack.c.h.b16 %v1696
        %v3254 = vunpack.c.l.b16 %v1697
        %v3255 = vunpack.c.h.b16 %v1697
        %v3256 = vunpack.c.l.b16 %v1698
        %v3257 = vunpack.c.h.b16 %v1698
        %v3258 = vunpack.c.l.b16 %v1699
        %v3259 = vunpack.c.h.b16 %v1699
        %v3260 = vunpack.c.l.b16 %v1700
        %v3261 = vunpack.c.h.b16 %v1700
        %v3262 = vunpack.c.l.b16 %v1701
        %v3263 = vunpack.c.h.b16 %v1701
        %v3264 = vunpack.c.l.b16 %v1702
        %v3265 = vunpack.c.h.b16 %v1702
        %v3266 = vunpack.c.l.b16 %v1703
        %v3267 = vunpack.c.h.b16 %v1703
        %v3268 = vunpack.c.l.b16 %v1704
        %v3269 = vunpack.c.h.b16 %v1704
        %v3270 = vunpack.c.l.b16 %v1705
        %v3271 = vunpack.c.h.b16 %v1705
        %v3272 = vunpack.c.l.b16 %v1706
        %v3273 = vunpack.c.h.b16 %v1706
        %v3274 = vunpack.c.l.b16 %v1707
        %v3275 = vunpack.c.h.b16 %v1707
        %v3276 = vunpack.c.l.b16 %v1708
        %v3277 = vunpack.c.h.b16 %v1708
        %v3278 = vunpack.c.l.b16 %v1709
        %v3279 = vunpack.c.h.b16 %v1709
        %v3280 = vunpack.c.l.b16 %v1710
        %v3281 = vunpack.c.h.b16 %v1710
        %v3282 = vunpack.c.l.b16 %v1711
        %v3283 = vunpack.c.h.b16 %v1711
        %v3284 = vunpack.c.l.b16 %v1712
        %v3285 = vunpack.c.h.b16 %v1712
        %v3286 = vunpack.c.l.b16 %v1713
        %v3287 = vunpack.c.h.b16 %v1713
        %v3288 = vunpack.c.l.b16 %v1714
        %v3289 = vunpack.c.h.b16 %v1714
        %v3290 = vunpack.c.l.b16 %v1715
        %v3291 = vunpack.c.h.b16 %v1715
        %v3292 = vunpack.c.l.b16 %v1716
        %v3293 = vunpack.c.h.b16 %v1716
        %v3294 = vunpack.c.l.b16 %v1717
        %v3295 = vunpack.c.h.b16 %v1717
        %v3296 = vunpack.c.l.b16 %v1718
        %v3297 = vunpack.c.h.b16 %v1718
        %v3298 = vunpack.c.l.b16 %v1719
        %v3299 = vunpack.c.h.b16 %v1719
        %v3300 = vunpack.c.l.b16 %v1720
        %v3301 = vunpack.c.h.b16 %v1720
        %v3302 = vunpack.c.l.b16 %v1721
        %v3303 = vunpack.c.h.b16 %v1721
        %v3304 = vunpack.c.l.b16 %v1722
        %v3305 = vunpack.c.h.b16 %v1722
        %v3306 = vunpack.c.l.b16 %v1723
        %v3307 = vunpack.c.h.b16 %v1723
        %v3308 = vunpack.c.l.b16 %v1724
        %v3309 = vunpack.c.h.b16 %v1724
        %v3310 = vunpack.c.l.b16 %v1725
        %v3311 = vunpack.c.h.b16 %v1725
        %v3312 = vunpack.c.l.b16 %v1726
        %v3313 = vunpack.c.h.b16 %v1726
        %v3314 = vunpack.c.l.b16 %v1727
        %v3315 = vunpack.c.h.b16 %v1727
        %v3316 = vunpack.c.l.b16 %v1728
        %v3317 = vunpack.c.h.b16 %v1728
        %v3318 = vunpack.c.l.b16 %v1729
        %v3319 = vunpack.c.h.b16 %v1729
        %v3320 = vunpack.c.l.b16 %v1730
        %v3321 = vunpack.c.h.b16 %v1730
        %v3322 = vunpack.c.l.b16 %v1731
        %v3323 = vunpack.c.h.b16 %v1731
        %v3324 = vunpack.c.l.b16 %v1732
        %v3325 = vunpack.c.h.b16 %v1732
        %v3326 = vunpack.c.l.b16 %v1733
        %v3327 = vunpack.c.h.b16 %v1733
        %v3328 = vunpack.c.l.b16 %v1734
        %v3329 = vunpack.c.h.b16 %v1734
        %v3330 = vunpack.c.l.b16 %v1735
        %v3331 = vunpack.c.h.b16 %v1735
        %v3332 = vunpack.c.l.b16 %v1736
        %v3333 = vunpack.c.h.b16 %v1736
        %v3334 = vunpack.c.l.b16 %v1737
        %v3335 = vunpack.c.h.b16 %v1737
        %v3336 = vunpack.c.l.b16 %v1738
        %v3337 = vunpack.c.h.b16 %v1738
        %v3338 = vunpack.c.l.b16 %v1739
        %v3339 = vunpack.c.h.b16 %v1739
        %v3340 = vunpack.c.l.b16 %v1740
        %v3341 = vunpack.c.h.b16 %v1740
        %v3342 = vunpack.c.l.b16 %v1741
        %v3343 = vunpack.c.h.b16 %v1741
        %v3344 = vunpack.c.l.b16 %v1742
        %v3345 = vunpack.c.h.b16 %v1742
        %v3346 = vunpack.c.l.b16 %v1743
        %v3347 = vunpack.c.h.b16 %v1743
        %v3348 = vunpack.c.l.b16 %v1744
        %v3349 = vunpack.c.h.b16 %v1744
        %v3350 = vunpack.c.l.b16 %v1745
        %v3351 = vunpack.c.h.b16 %v1745
        %v3352 = vunpack.c.l.b16 %v1746
        %v3353 = vunpack.c.h.b16 %v1746
        %v3354 = vunpack.c.l.b16 %v1747
        %v3355 = vunpack.c.h.b16 %v1747
        %v3356 = vunpack.c.l.b16 %v1748
        %v3357 = vunpack.c.h.b16 %v1748
        %v3358 = vunpack.c.l.b16 %v1749
        %v3359 = vunpack.c.h.b16 %v1749
        %v3360 = vunpack.c.l.b16 %v1750
        %v3361 = vunpack.c.h.b16 %v1750
        %v3362 = vunpack.c.l.b16 %v1751
        %v3363 = vunpack.c.h.b16 %v1751
        %v3364 = vunpack.c.l.b16 %v1752
        %v3365 = vunpack.c.h.b16 %v1752
        %v3366 = vunpack.c.l.b16 %v1753
        %v3367 = vunpack.c.h.b16 %v1753
        %v3368 = vpack.c.b16 %v2348, %v2344
        %v3369 = vpack.c.b16 %v2349, %v2345
        %v3370 = vpack.c.b16 %v2350, %v2346
        %v3371 = vpack.c.b16 %v2351, %v2347
        %v3372 = vpack.c.b16 %v2356, %v2352
        %v3373 = vpack.c.b16 %v2357, %v2353
        %v3374 = vpack.c.b16 %v2358, %v2354
        %v3375 = vpack.c.b16 %v2359, %v2355
        %v3376 = vpack.c.b16 %v2364, %v2360
        %v3377 = vpack.c.b16 %v2365, %v2361
        %v3378 = vpack.c.b16 %v2366, %v2362
        %v3379 = vpack.c.b16 %v2367, %v2363
        %v3380 = vpack.c.b16 %v2372, %v2368
        %v3381 = vpack.c.b16 %v2373, %v2369
        %v3382 = vpack.c.b16 %v2374, %v2370
        %v3383 = vpack.c.b16 %v2375, %v2371
        %v3384 = vpack.c.b16 %v2380, %v2376
        %v3385 = vpack.c.b16 %v2381, %v2377
        %v3386 = vpack.c.b16 %v2382, %v2378
        %v3387 = vpack.c.b16 %v2383, %v2379
        %v3388 = vpack.c.b16 %v2388, %v2384
        %v3389 = vpack.c.b16 %v2389, %v2385
        %v3390 = vpack.c.b16 %v2390, %v2386
        %v3391 = vpack.c.b16 %v2391, %v2387
        %v3392 = vpack.c.b16 %v2396, %v2392
        %v3393 = vpack.c.b16 %v2397, %v2393
        %v3394 = vpack.c.b16 %v2398, %v2394
        %v3395 = vpack.c.b16 %v2399, %v2395
        %v3396 = vpack.c.b16 %v2404, %v2400
        %v3397 = vpack.c.b16 %v2405, %v2401
        %v3398 = vpack.c.b16 %v2406, %v2402
        %v3399 = vpack.c.b16 %v2407, %v2403
        %v3400 = vpack.c.b16 %v2412, %v2408
        %v3401 = vpack.c.b16 %v2413, %v2409
        %v3402 = vpack.c.b16 %v2414, %v2410
        %v3403 = vpack.c.b16 %v2415, %v2411
        %v3404 = vpack.c.b16 %v2420, %v2416
        %v3405 = vpack.c.b16 %v2421, %v2417
        %v3406 = vpack.c.b16 %v2422, %v2418
        %v3407 = vpack.c.b16 %v2423, %v2419
        %v3408 = vpack.c.b16 %v2428, %v2424
        %v3409 = vpack.c.b16 %v2429, %v2425
        %v3410 = vpack.c.b16 %v2430, %v2426
        %v3411 = vpack.c.b16 %v2431, %v2427
        %v3412 = vpack.c.b16 %v2436, %v2432
        %v3413 = vpack.c.b16 %v2437, %v2433
        %v3414 = vpack.c.b16 %v2438, %v2434
        %v3415 = vpack.c.b16 %v2439, %v2435
        %v3416 = vpack.c.b16 %v2444, %v2440
        %v3417 = vpack.c.b16 %v2445, %v2441
        %v3418 = vpack.c.b16 %v2446, %v2442
        %v3419 = vpack.c.b16 %v2447, %v2443
        %v3420 = vpack.c.b16 %v2452, %v2448
        %v3421 = vpack.c.b16 %v2453, %v2449
        %v3422 = vpack.c.b16 %v2454, %v2450
        %v3423 = vpack.c.b16 %v2455, %v2451
        %v3424 = vpack.c.b16 %v2460, %v2456
        %v3425 = vpack.c.b16 %v2461, %v2457
        %v3426 = vpack.c.b16 %v2462, %v2458
        %v3427 = vpack.c.b16 %v2463, %v2459
        %v3428 = vpack.c.b16 %v2468, %v2464
        %v3429 = vpack.c.b16 %v2469, %v2465
        %v3430 = vpack.c.b16 %v2470, %v2466
        %v3431 = vpack.c.b16 %v2471, %v2467
        %v3432 = vpack.c.b16 %v2476, %v2472
        %v3433 = vpack.c.b16 %v2477, %v2473
        %v3434 = vpack.c.b16 %v2478, %v2474
        %v3435 = vpack.c.b16 %v2479, %v2475
        %v3436 = vpack.c.b16 %v2484, %v2480
        %v3437 = vpack.c.b16 %v2485, %v2481
        %v3438 = vpack.c.b16 %v2486, %v2482
        %v3439 = vpack.c.b16 %v2487, %v2483
        %v3440 = vpack.c.b16 %v2492, %v2488
        %v3441 = vpack.c.b16 %v2493, %v2489
        %v3442 = vpack.c.b16 %v2494, %v2490
        %v3443 = vpack.c.b16 %v2495, %v2491
        %v3444 = vpack.c.b16 %v2500, %v2496
        %v3445 = vpack.c.b16 %v2501, %v2497
        %v3446 = vpack.c.b16 %v2502, %v2498
        %v3447 = vpack.c.b16 %v2503, %v2499
        %v3448 = vpack.c.b16 %v2508, %v2504
        %v3449 = vpack.c.b16 %v2509, %v2505
        %v3450 = vpack.c.b16 %v2510, %v2506
        %v3451 = vpack.c.b16 %v2511, %v2507
        %v3452 = vpack.c.b16 %v2516, %v2512
        %v3453 = vpack.c.b16 %v2517, %v2513
        %v3454 = vpack.c.b16 %v2518, %v2514
        %v3455 = vpack.c.b16 %v2519, %v2515
        %v3456 = vpack.c.b16 %v2524, %v2520
        %v3457 = vpack.c.b16 %v2525, %v2521
        %v3458 = vpack.c.b16 %v2526, %v2522
        %v3459 = vpack.c.b16 %v2527, %v2523
        %v3460 = vpack.c.b16 %v2532, %v2528
        %v3461 = vpack.c.b16 %v2533, %v2529
        %v3462 = vpack.c.b16 %v2534, %v2530
        %v3463 = vpack.c.b16 %v2535, %v2531
        %v3464 = vpack.c.b16 %v2540, %v2536
        %v3465 = vpack.c.b16 %v2541, %v2537
        %v3466 = vpack.c.b16 %v2542, %v2538
        %v3467 = vpack.c.b16 %v2543, %v2539
        %v3468 = vpack.c.b16 %v2548, %v2544
        %v3469 = vpack.c.b16 %v2549, %v2545
        %v3470 = vpack.c.b16 %v2550, %v2546
        %v3471 = vpack.c.b16 %v2551, %v2547
        %v3472 = vpack.c.b16 %v2556, %v2552
        %v3473 = vpack.c.b16 %v2557, %v2553
        %v3474 = vpack.c.b16 %v2558, %v2554
        %v3475 = vpack.c.b16 %v2559, %v2555
        %v3476 = vpack.c.b16 %v2564, %v2560
        %v3477 = vpack.c.b16 %v2565, %v2561
        %v3478 = vpack.c.b16 %v2566, %v2562
        %v3479 = vpack.c.b16 %v2567, %v2563
        %v3480 = vpack.c.b16 %v2572, %v2568
        %v3481 = vpack.c.b16 %v2573, %v2569
        %v3482 = vpack.c.b16 %v2574, %v2570
        %v3483 = vpack.c.b16 %v2575, %v2571
        %v3484 = vpack.c.b16 %v2580, %v2576
        %v3485 = vpack.c.b16 %v2581, %v2577
        %v3486 = vpack.c.b16 %v2582, %v2578
        %v3487 = vpack.c.b16 %v2583, %v2579
        %v3488 = vpack.c.b16 %v2588, %v2584
        %v3489 = vpack.c.b16 %v2589, %v2585
        %v3490 = vpack.c.b16 %v2590, %v2586
        %v3491 = vpack.c.b16 %v2591, %v2587
        %v3492 = vpack.c.b16 %v2596, %v2592
        %v3493 = vpack.c.b16 %v2597, %v2593
        %v3494 = vpack.c.b16 %v2598, %v2594
        %v3495 = vpack.c.b16 %v2599, %v2595
        %v3496 = vpack.c.b16 %v2604, %v2600
        %v3497 = vpack.c.b16 %v2605, %v2601
        %v3498 = vpack.c.b16 %v2606, %v2602
        %v3499 = vpack.c.b16 %v2607, %v2603
        %v3500 = vpack.c.b16 %v2612, %v2608
        %v3501 = vpack.c.b16 %v2613, %v2609
        %v3502 = vpack.c.b16 %v2614, %v2610
        %v3503 = vpack.c.b16 %v2615, %v2611
        %v3504 = vpack.c.b16 %v2620, %v2616
        %v3505 = vpack.c.b16 %v2621, %v2617
        %v3506 = vpack.c.b16 %v2622, %v2618
        %v3507 = vpack.c.b16 %v2623, %v2619
        %v3508 = vpack.c.b16 %v2628, %v2624
        %v3509 = vpack.c.b16 %v2629, %v2625
        %v3510 = vpack.c.b16 %v2630, %v2626
        %v3511 = vpack.c.b16 %v2631, %v2627
        %v3512 = vpack.c.b16 %v2636, %v2632
        %v3513 = vpack.c.b16 %v2637, %v2633
        %v3514 = vpack.c.b16 %v2638, %v2634
        %v3515 = vpack.c.b16 %v2639, %v2635
        %v3516 = vpack.c.b16 %v2644, %v2640
        %v3517 = vpack.c.b16 %v2645, %v2641
        %v3518 = vpack.c.b16 %v2646, %v2642
        %v3519 = vpack.c.b16 %v2647, %v2643
        %v3520 = vpack.c.b16 %v2652, %v2648
        %v3521 = vpack.c.b16 %v2653, %v2649
        %v3522 = vpack.c.b16 %v2654, %v2650
        %v3523 = vpack.c.b16 %v2655, %v2651
        %v3524 = vpack.c.b16 %v2660, %v2656
        %v3525 = vpack.c.b16 %v2661, %v2657
        %v3526 = vpack.c.b16 %v2662, %v2658
        %v3527 = vpack.c.b16 %v2663, %v2659
        %v3528 = vpack.c.b16 %v2668, %v2664
        %v3529 = vpack.c.b16 %v2669, %v2665
        %v3530 = vpack.c.b16 %v2670, %v2666
        %v3531 = vpack.c.b16 %v2671, %v2667
        %v3532 = vpack.c.b16 %v2676, %v2672
        %v3533 = vpack.c.b16 %v2677, %v2673
        %v3534 = vpack.c.b16 %v2678, %v2674
        %v3535 = vpack.c.b16 %v2679, %v2675
        %v3536 = vpack.c.b16 %v2684, %v2680
        %v3537 = vpack.c.b16 %v2685, %v2681
        %v3538 = vpack.c.b16 %v2686, %v2682
        %v3539 = vpack.c.b16 %v2687, %v2683
        %v3540 = vpack.c.b16 %v2692, %v2688
        %v3541 = vpack.c.b16 %v2693, %v2689
        %v3542 = vpack.c.b16 %v2694, %v2690
        %v3543 = vpack.c.b16 %v2695, %v2691
        %v3544 = vpack.c.b16 %v2700, %v2696
        %v3545 = vpack.c.b16 %v2701, %v2697
        %v3546 = vpack.c.b16 %v2702, %v2698
        %v3547 = vpack.c.b16 %v2703, %v2699
        %v3548 = vpack.c.b16 %v2708, %v2704
        %v3549 = vpack.c.b16 %v2709, %v2705
        %v3550 = vpack.c.b16 %v2710, %v2706
        %v3551 = vpack.c.b16 %v2711, %v2707
        %v3552 = vpack.c.b16 %v2716, %v2712
        %v3553 = vpack.c.b16 %v2717, %v2713
        %v3554 = vpack.c.b16 %v2718, %v2714
        %v3555 = vpack.c.b16 %v2719, %v2715
        %v3556 = vpack.c.b16 %v2724, %v2720
        %v3557 = vpack.c.b16 %v2725, %v2721
        %v3558 = vpack.c.b16 %v2726, %v2722
        %v3559 = vpack.c.b16 %v2727, %v2723
        %v3560 = vpack.c.b16 %v2732, %v2728
        %v3561 = vpack.c.b16 %v2733, %v2729
        %v3562 = vpack.c.b16 %v2734, %v2730
        %v3563 = vpack.c.b16 %v2735, %v2731
        %v3564 = vpack.c.b16 %v2740, %v2736
        %v3565 = vpack.c.b16 %v2741, %v2737
        %v3566 = vpack.c.b16 %v2742, %v2738
        %v3567 = vpack.c.b16 %v2743, %v2739
        %v3568 = vpack.c.b16 %v2748, %v2744
        %v3569 = vpack.c.b16 %v2749, %v2745
        %v3570 = vpack.c.b16 %v2750, %v2746
        %v3571 = vpack.c.b16 %v2751, %v2747
        %v3572 = vpack.c.b16 %v2756, %v2752
        %v3573 = vpack.c.b16 %v2757, %v2753
        %v3574 = vpack.c.b16 %v2758, %v2754
        %v3575 = vpack.c.b16 %v2759, %v2755
        %v3576 = vpack.c.b16 %v2764, %v2760
        %v3577 = vpack.c.b16 %v2765, %v2761
        %v3578 = vpack.c.b16 %v2766, %v2762
        %v3579 = vpack.c.b16 %v2767, %v2763
        %v3580 = vpack.c.b16 %v2772, %v2768
        %v3581 = vpack.c.b16 %v2773, %v2769
        %v3582 = vpack.c.b16 %v2774, %v2770
        %v3583 = vpack.c.b16 %v2775, %v2771
        %v3584 = vpack.c.b16 %v2780, %v2776
        %v3585 = vpack.c.b16 %v2781, %v2777
        %v3586 = vpack.c.b16 %v2782, %v2778
        %v3587 = vpack.c.b16 %v2783, %v2779
        %v3588 = vpack.c.b16 %v2788, %v2784
        %v3589 = vpack.c.b16 %v2789, %v2785
        %v3590 = vpack.c.b16 %v2790, %v2786
        %v3591 = vpack.c.b16 %v2791, %v2787
        %v3592 = vpack.c.b16 %v2796, %v2792
        %v3593 = vpack.c.b16 %v2797, %v2793
        %v3594 = vpack.c.b16 %v2798, %v2794
        %v3595 = vpack.c.b16 %v2799, %v2795
        %v3596 = vpack.c.b16 %v2804, %v2800
        %v3597 = vpack.c.b16 %v2805, %v2801
        %v3598 = vpack.c.b16 %v2806, %v2802
        %v3599 = vpack.c.b16 %v2807, %v2803
        %v3600 = vpack.c.b16 %v2812, %v2808
        %v3601 = vpack.c.b16 %v2813, %v2809
        %v3602 = vpack.c.b16 %v2814, %v2810
        %v3603 = vpack.c.b16 %v2815, %v2811
        %v3604 = vpack.c.b16 %v2820, %v2816
        %v3605 = vpack.c.b16 %v2821, %v2817
        %v3606 = vpack.c.b16 %v2822, %v2818
        %v3607 = vpack.c.b16 %v2823, %v2819
        %v3608 = vpack.c.b16 %v2828, %v2824
        %v3609 = vpack.c.b16 %v2829, %v2825
        %v3610 = vpack.c.b16 %v2830, %v2826
        %v3611 = vpack.c.b16 %v2831, %v2827
        %v3612 = vpack.c.b16 %v2836, %v2832
        %v3613 = vpack.c.b16 %v2837, %v2833
        %v3614 = vpack.c.b16 %v2838, %v2834
        %v3615 = vpack.c.b16 %v2839, %v2835
        %v3616 = vpack.c.b16 %v2844, %v2840
        %v3617 = vpack.c.b16 %v2845, %v2841
        %v3618 = vpack.c.b16 %v2846, %v2842
        %v3619 = vpack.c.b16 %v2847, %v2843
        %v3620 = vpack.c.b16 %v2852, %v2848
        %v3621 = vpack.c.b16 %v2853, %v2849
        %v3622 = vpack.c.b16 %v2854, %v2850
        %v3623 = vpack.c.b16 %v2855, %v2851
        %v3624 = vpack.c.b16 %v2860, %v2856
        %v3625 = vpack.c.b16 %v2861, %v2857
        %v3626 = vpack.c.b16 %v2862, %v2858
        %v3627 = vpack.c.b16 %v2863, %v2859
        %v3628 = vpack.c.b16 %v2868, %v2864
        %v3629 = vpack.c.b16 %v2869, %v2865
        %v3630 = vpack.c.b16 %v2870, %v2866
        %v3631 = vpack.c.b16 %v2871, %v2867
        %v3632 = vpack.c.b16 %v2876, %v2872
        %v3633 = vpack.c.b16 %v2877, %v2873
        %v3634 = vpack.c.b16 %v2878, %v2874
        %v3635 = vpack.c.b16 %v2879, %v2875
        %v3636 = vpack.c.b16 %v2884, %v2880
        %v3637 = vpack.c.b16 %v2885, %v2881
        %v3638 = vpack.c.b16 %v2886, %v2882
        %v3639 = vpack.c.b16 %v2887, %v2883
        %v3640 = vpack.c.b16 %v2892, %v2888
        %v3641 = vpack.c.b16 %v2893, %v2889
        %v3642 = vpack.c.b16 %v2894, %v2890
        %v3643 = vpack.c.b16 %v2895, %v2891
        %v3644 = vpack.c.b16 %v2900, %v2896
        %v3645 = vpack.c.b16 %v2901, %v2897
        %v3646 = vpack.c.b16 %v2902, %v2898
        %v3647 = vpack.c.b16 %v2903, %v2899
        %v3648 = vpack.c.b16 %v2908, %v2904
        %v3649 = vpack.c.b16 %v2909, %v2905
        %v3650 = vpack.c.b16 %v2910, %v2906
        %v3651 = vpack.c.b16 %v2911, %v2907
        %v3652 = vpack.c.b16 %v2916, %v2912
        %v3653 = vpack.c.b16 %v2917, %v2913
        %v3654 = vpack.c.b16 %v2918, %v2914
        %v3655 = vpack.c.b16 %v2919, %v2915
        %v3656 = vpack.c.b16 %v2924, %v2920
        %v3657 = vpack.c.b16 %v2925, %v2921
        %v3658 = vpack.c.b16 %v2926, %v2922
        %v3659 = vpack.c.b16 %v2927, %v2923
        %v3660 = vpack.c.b16 %v2932, %v2928
        %v3661 = vpack.c.b16 %v2933, %v2929
        %v3662 = vpack.c.b16 %v2934, %v2930
        %v3663 = vpack.c.b16 %v2935, %v2931
        %v3664 = vpack.c.b16 %v2940, %v2936
        %v3665 = vpack.c.b16 %v2941, %v2937
        %v3666 = vpack.c.b16 %v2942, %v2938
        %v3667 = vpack.c.b16 %v2943, %v2939
        %v3668 = vpack.c.b16 %v2948, %v2944
        %v3669 = vpack.c.b16 %v2949, %v2945
        %v3670 = vpack.c.b16 %v2950, %v2946
        %v3671 = vpack.c.b16 %v2951, %v2947
        %v3672 = vpack.c.b16 %v2956, %v2952
        %v3673 = vpack.c.b16 %v2957, %v2953
        %v3674 = vpack.c.b16 %v2958, %v2954
        %v3675 = vpack.c.b16 %v2959, %v2955
        %v3676 = vpack.c.b16 %v2964, %v2960
        %v3677 = vpack.c.b16 %v2965, %v2961
        %v3678 = vpack.c.b16 %v2966, %v2962
        %v3679 = vpack.c.b16 %v2967, %v2963
        %v3680 = vpack.c.b16 %v2972, %v2968
        %v3681 = vpack.c.b16 %v2973, %v2969
        %v3682 = vpack.c.b16 %v2974, %v2970
        %v3683 = vpack.c.b16 %v2975, %v2971
        %v3684 = vpack.c.b16 %v2980, %v2976
        %v3685 = vpack.c.b16 %v2981, %v2977
        %v3686 = vpack.c.b16 %v2982, %v2978
        %v3687 = vpack.c.b16 %v2983, %v2979
        %v3688 = vpack.c.b16 %v2988, %v2984
        %v3689 = vpack.c.b16 %v2989, %v2985
        %v3690 = vpack.c.b16 %v2990, %v2986
        %v3691 = vpack.c.b16 %v2991, %v2987
        %v3692 = vpack.c.b16 %v2996, %v2992
        %v3693 = vpack.c.b16 %v2997, %v2993
        %v3694 = vpack.c.b16 %v2998, %v2994
        %v3695 = vpack.c.b16 %v2999, %v2995
        %v3696 = vpack.c.b16 %v3004, %v3000
        %v3697 = vpack.c.b16 %v3005, %v3001
        %v3698 = vpack.c.b16 %v3006, %v3002
        %v3699 = vpack.c.b16 %v3007, %v3003
        %v3700 = vpack.c.b16 %v3012, %v3008
        %v3701 = vpack.c.b16 %v3013, %v3009
        %v3702 = vpack.c.b16 %v3014, %v3010
        %v3703 = vpack.c.b16 %v3015, %v3011
        %v3704 = vpack.c.b16 %v3020, %v3016
        %v3705 = vpack.c.b16 %v3021, %v3017
        %v3706 = vpack.c.b16 %v3022, %v3018
        %v3707 = vpack.c.b16 %v3023, %v3019
        %v3708 = vpack.c.b16 %v3028, %v3024
        %v3709 = vpack.c.b16 %v3029, %v3025
        %v3710 = vpack.c.b16 %v3030, %v3026
        %v3711 = vpack.c.b16 %v3031, %v3027
        %v3712 = vpack.c.b16 %v3036, %v3032
        %v3713 = vpack.c.b16 %v3037, %v3033
        %v3714 = vpack.c.b16 %v3038, %v3034
        %v3715 = vpack.c.b16 %v3039, %v3035
        %v3716 = vpack.c.b16 %v3044, %v3040
        %v3717 = vpack.c.b16 %v3045, %v3041
        %v3718 = vpack.c.b16 %v3046, %v3042
        %v3719 = vpack.c.b16 %v3047, %v3043
        %v3720 = vpack.c.b16 %v3052, %v3048
        %v3721 = vpack.c.b16 %v3053, %v3049
        %v3722 = vpack.c.b16 %v3054, %v3050
        %v3723 = vpack.c.b16 %v3055, %v3051
        %v3724 = vpack.c.b16 %v3060, %v3056
        %v3725 = vpack.c.b16 %v3061, %v3057
        %v3726 = vpack.c.b16 %v3062, %v3058
        %v3727 = vpack.c.b16 %v3063, %v3059
        %v3728 = vpack.c.b16 %v3068, %v3064
        %v3729 = vpack.c.b16 %v3069, %v3065
        %v3730 = vpack.c.b16 %v3070, %v3066
        %v3731 = vpack.c.b16 %v3071, %v3067
        %v3732 = vpack.c.b16 %v3076, %v3072
        %v3733 = vpack.c.b16 %v3077, %v3073
        %v3734 = vpack.c.b16 %v3078, %v3074
        %v3735 = vpack.c.b16 %v3079, %v3075
        %v3736 = vpack.c.b16 %v3084, %v3080
        %v3737 = vpack.c.b16 %v3085, %v3081
        %v3738 = vpack.c.b16 %v3086, %v3082
        %v3739 = vpack.c.b16 %v3087, %v3083
        %v3740 = vpack.c.b16 %v3092, %v3088
        %v3741 = vpack.c.b16 %v3093, %v3089
        %v3742 = vpack.c.b16 %v3094, %v3090
        %v3743 = vpack.c.b16 %v3095, %v3091
        %v3744 = vpack.c.b16 %v3100, %v3096
        %v3745 = vpack.c.b16 %v3101, %v3097
        %v3746 = vpack.c.b16 %v3102, %v3098
        %v3747 = vpack.c.b16 %v3103, %v3099
        %v3748 = vpack.c.b16 %v3108, %v3104
        %v3749 = vpack.c.b16 %v3109, %v3105
        %v3750 = vpack.c.b16 %v3110, %v3106
        %v3751 = vpack.c.b16 %v3111, %v3107
        %v3752 = vpack.c.b16 %v3116, %v3112
        %v3753 = vpack.c.b16 %v3117, %v3113
        %v3754 = vpack.c.b16 %v3118, %v3114
        %v3755 = vpack.c.b16 %v3119, %v3115
        %v3756 = vpack.c.b16 %v3124, %v3120
        %v3757 = vpack.c.b16 %v3125, %v3121
        %v3758 = vpack.c.b16 %v3126, %v3122
        %v3759 = vpack.c.b16 %v3127, %v3123
        %v3760 = vpack.c.b16 %v3132, %v3128
        %v3761 = vpack.c.b16 %v3133, %v3129
        %v3762 = vpack.c.b16 %v3134, %v3130
        %v3763 = vpack.c.b16 %v3135, %v3131
        %v3764 = vpack.c.b16 %v3140, %v3136
        %v3765 = vpack.c.b16 %v3141, %v3137
        %v3766 = vpack.c.b16 %v3142, %v3138
        %v3767 = vpack.c.b16 %v3143, %v3139
        %v3768 = vpack.c.b16 %v3148, %v3144
        %v3769 = vpack.c.b16 %v3149, %v3145
        %v3770 = vpack.c.b16 %v3150, %v3146
        %v3771 = vpack.c.b16 %v3151, %v3147
        %v3772 = vpack.c.b16 %v3156, %v3152
        %v3773 = vpack.c.b16 %v3157, %v3153
        %v3774 = vpack.c.b16 %v3158, %v3154
        %v3775 = vpack.c.b16 %v3159, %v3155
        %v3776 = vpack.c.b16 %v3164, %v3160
        %v3777 = vpack.c.b16 %v3165, %v3161
        %v3778 = vpack.c.b16 %v3166, %v3162
        %v3779 = vpack.c.b16 %v3167, %v3163
        %v3780 = vpack.c.b16 %v3172, %v3168
        %v3781 = vpack.c.b16 %v3173, %v3169
        %v3782 = vpack.c.b16 %v3174, %v3170
        %v3783 = vpack.c.b16 %v3175, %v3171
        %v3784 = vpack.c.b16 %v3180, %v3176
        %v3785 = vpack.c.b16 %v3181, %v3177
        %v3786 = vpack.c.b16 %v3182, %v3178
        %v3787 = vpack.c.b16 %v3183, %v3179
        %v3788 = vpack.c.b16 %v3188, %v3184
        %v3789 = vpack.c.b16 %v3189, %v3185
        %v3790 = vpack.c.b16 %v3190, %v3186
        %v3791 = vpack.c.b16 %v3191, %v3187
        %v3792 = vpack.c.b16 %v3196, %v3192
        %v3793 = vpack.c.b16 %v3197, %v3193
        %v3794 = vpack.c.b16 %v3198, %v3194
        %v3795 = vpack.c.b16 %v3199, %v3195
        %v3796 = vpack.c.b16 %v3204, %v3200
        %v3797 = vpack.c.b16 %v3205, %v3201
        %v3798 = vpack.c.b16 %v3206, %v3202
        %v3799 = vpack.c.b16 %v3207, %v3203
        %v3800 = vpack.c.b16 %v3212, %v3208
        %v3801 = vpack.c.b16 %v3213, %v3209
        %v3802 = vpack.c.b16 %v3214, %v3210
        %v3803 = vpack.c.b16 %v3215, %v3211
        %v3804 = vpack.c.b16 %v3220, %v3216
        %v3805 = vpack.c.b16 %v3221, %v3217
        %v3806 = vpack.c.b16 %v3222, %v3218
        %v3807 = vpack.c.b16 %v3223, %v3219
        %v3808 = vpack.c.b16 %v3228, %v3224
        %v3809 = vpack.c.b16 %v3229, %v3225
        %v3810 = vpack.c.b16 %v3230, %v3226
        %v3811 = vpack.c.b16 %v3231, %v3227
        %v3812 = vpack.c.b16 %v3236, %v3232
        %v3813 = vpack.c.b16 %v3237, %v3233
        %v3814 = vpack.c.b16 %v3238, %v3234
        %v3815 = vpack.c.b16 %v3239, %v3235
        %v3816 = vpack.c.b16 %v3244, %v3240
        %v3817 = vpack.c.b16 %v3245, %v3241
        %v3818 = vpack.c.b16 %v3246, %v3242
        %v3819 = vpack.c.b16 %v3247, %v3243
        %v3820 = vpack.c.b16 %v3252, %v3248
        %v3821 = vpack.c.b16 %v3253, %v3249
        %v3822 = vpack.c.b16 %v3254, %v3250
        %v3823 = vpack.c.b16 %v3255, %v3251
        %v3824 = vpack.c.b16 %v3260, %v3256
        %v3825 = vpack.c.b16 %v3261, %v3257
        %v3826 = vpack.c.b16 %v3262, %v3258
        %v3827 = vpack.c.b16 %v3263, %v3259
        %v3828 = vpack.c.b16 %v3268, %v3264
        %v3829 = vpack.c.b16 %v3269, %v3265
        %v3830 = vpack.c.b16 %v3270, %v3266
        %v3831 = vpack.c.b16 %v3271, %v3267
        %v3832 = vpack.c.b16 %v3276, %v3272
        %v3833 = vpack.c.b16 %v3277, %v3273
        %v3834 = vpack.c.b16 %v3278, %v3274
        %v3835 = vpack.c.b16 %v3279, %v3275
        %v3836 = vpack.c.b16 %v3284, %v3280
        %v3837 = vpack.c.b16 %v3285, %v3281
        %v3838 = vpack.c.b16 %v3286, %v3282
        %v3839 = vpack.c.b16 %v3287, %v3283
        %v3840 = vpack.c.b16 %v3292, %v3288
        %v3841 = vpack.c.b16 %v3293, %v3289
        %v3842 = vpack.c.b16 %v3294, %v3290
        %v3843 = vpack.c.b16 %v3295, %v3291
        %v3844 = vpack.c.b16 %v3300, %v3296
        %v3845 = vpack.c.b16 %v3301, %v3297
        %v3846 = vpack.c.b16 %v3302, %v3298
        %v3847 = vpack.c.b16 %v3303, %v3299
        %v3848 = vpack.c.b16 %v3308, %v3304
        %v3849 = vpack.c.b16 %v3309, %v3305
        %v3850 = vpack.c.b16 %v3310, %v3306
        %v3851 = vpack.c.b16 %v3311, %v3307
        %v3852 = vpack.c.b16 %v3316, %v3312
        %v3853 = vpack.c.b16 %v3317, %v3313
        %v3854 = vpack.c.b16 %v3318, %v3314
        %v3855 = vpack.c.b16 %v3319, %v3315
        %v3856 = vpack.c.b16 %v3324, %v3320
        %v3857 = vpack.c.b16 %v3325, %v3321
        %v3858 = vpack.c.b16 %v3326, %v3322
        %v3859 = vpack.c.b16 %v3327, %v3323
        %v3860 = vpack.c.b16 %v3332, %v3328
        %v3861 = vpack.c.b16 %v3333, %v3329
        %v3862 = vpack.c.b16 %v3334, %v3330
        %v3863 = vpack.c.b16 %v3335, %v3331
        %v3864 = vpack.c.b16 %v3340, %v3336
        %v3865 = vpack.c.b16 %v3341, %v3337
        %v3866 = vpack.c.b16 %v3342, %v3338
        %v3867 = vpack.c.b16 %v3343, %v3339
        %v3868 = vpack.c.b16 %v3348, %v3344
        %v3869 = vpack.c.b16 %v3349, %v3345
        %v3870 = vpack.c.b16 %v3350, %v3346
        %v3871 = vpack.c.b16 %v3351, %v3347
        %v3872 = vpack.c.b16 %v3356, %v3352
        %v3873 = vpack.c.b16 %v3357, %v3353
        %v3874 = vpack.c.b16 %v3358, %v3354
        %v3875 = vpack.c.b16 %v3359, %v3355
        %v3876 = vpack.c.b16 %v3364, %v3360
        %v3877 = vpack.c.b16 %v3365, %v3361
        %v3878 = vpack.c.b16 %v3366, %v3362
        %v3879 = vpack.c.b16 %v3367, %v3363
        %4392 = vmatprep.subr.bf16.mxu0 %v3397
        %4393 = vmatpush1.bf16.msra.mxu0 %v3396
        %4394 = vmatprep.subr.bf16.mxu0 %v3393
        %4395 = vmatpush1.bf16.msra.mxu0 %v3392
        %4396 = vmatprep.subr.bf16.mxu0 %v3389
        %4397 = vmatpush1.bf16.msra.mxu0 %v3388
        %4398 = vmatprep.subr.bf16.mxu0 %v3385
        %4399 = vmatpush1.bf16.msra.mxu0 %v3384
        %4400 = vmatprep.subr.bf16.mxu0 %v3381
        %4401 = vmatpush1.bf16.msra.mxu0 %v3380
        %4402 = vmatprep.subr.bf16.mxu0 %v3377
        %4403 = vmatpush1.bf16.msra.mxu0 %v3376
        %4404 = vmatprep.subr.bf16.mxu0 %v3373
        %4405 = vmatpush1.bf16.msra.mxu0 %v3372
        %4406 = vmatprep.subr.bf16.mxu0 %v3369
        %4407 = vmatpush1.bf16.msra.mxu0 %v3368
        %4408 = vmatprep.subr.bf16.mxu0 %v3429
        %4409 = vmatpush2.bf16.msra.mxu0 %v3428
        %4410 = vmatprep.subr.bf16.mxu0 %v3425
        %4411 = vmatpush2.bf16.msra.mxu0 %v3424
        %4412 = vmatprep.subr.bf16.mxu0 %v3421
        %4413 = vmatpush2.bf16.msra.mxu0 %v3420
        %4414 = vmatprep.subr.bf16.mxu0 %v3417
        %4415 = vmatpush2.bf16.msra.mxu0 %v3416
        %4416 = vmatprep.subr.bf16.mxu0 %v3413
        %4417 = vmatpush2.bf16.msra.mxu0 %v3412
        %4418 = vmatprep.subr.bf16.mxu0 %v3409
        %4419 = vmatpush2.bf16.msra.mxu0 %v3408
        %4420 = vmatprep.subr.bf16.mxu0 %v3405
        %4421 = vmatpush2.bf16.msra.mxu0 %v3404
        %4422 = vmatprep.subr.bf16.mxu0 %v3401
        %4423 = vmatpush2.bf16.msra.mxu0 %v3400
        %4424 = vmatprep.mubr.bf16.mxu0 %v1801
        %4425 = vmatmul.mubr.bf16.gmra.mxu0 %v1800
        %v4426 = vpop.f32.mrf.mxu0
        %v4427 = vadd.f32 %v1759, %v4426
        %v4428 = vpop.f32.mrf.mxu0
        %v4429 = vadd.f32 %v1763, %v4428
        %v4430 = vpop.f32.mrf.mxu0
        %v4431 = vpop.f32.mrf.mxu0
        %4432 = vdwg.mxu0
        %4433 = vmatprep.subr.bf16.mxu0 %v3461
        %4434 = vmatpush1.bf16.msra.mxu0 %v3460
        %4435 = vmatprep.subr.bf16.mxu0 %v3457
        %4436 = vmatpush1.bf16.msra.mxu0 %v3456
        %4437 = vmatprep.subr.bf16.mxu0 %v3453
        %4438 = vmatpush1.bf16.msra.mxu0 %v3452
        %4439 = vmatprep.subr.bf16.mxu0 %v3449
        %4440 = vmatpush1.bf16.msra.mxu0 %v3448
        %4441 = vmatprep.subr.bf16.mxu0 %v3445
        %4442 = vmatpush1.bf16.msra.mxu0 %v3444
        %4443 = vmatprep.subr.bf16.mxu0 %v3441
        %4444 = vmatpush1.bf16.msra.mxu0 %v3440
        %4445 = vmatprep.subr.bf16.mxu0 %v3437
        %4446 = vmatpush1.bf16.msra.mxu0 %v3436
        %4447 = vmatprep.subr.bf16.mxu0 %v3433
        %4448 = vmatpush1.bf16.msra.mxu0 %v3432
        %4449 = vmatprep.subr.bf16.mxu0 %v3493
        %4450 = vmatpush2.bf16.msra.mxu0 %v3492
        %4451 = vmatprep.subr.bf16.mxu0 %v3489
        %4452 = vmatpush2.bf16.msra.mxu0 %v3488
        %4453 = vmatprep.subr.bf16.mxu0 %v3485
        %4454 = vmatpush2.bf16.msra.mxu0 %v3484
        %4455 = vmatprep.subr.bf16.mxu0 %v3481
        %4456 = vmatpush2.bf16.msra.mxu0 %v3480
        %4457 = vmatprep.subr.bf16.mxu0 %v3477
        %4458 = vmatpush2.bf16.msra.mxu0 %v3476
        %4459 = vmatprep.subr.bf16.mxu0 %v3473
        %4460 = vmatpush2.bf16.msra.mxu0 %v3472
        %4461 = vmatprep.subr.bf16.mxu0 %v3469
        %4462 = vmatpush2.bf16.msra.mxu0 %v3468
        %4463 = vmatprep.subr.bf16.mxu0 %v3465
        %4464 = vmatpush2.bf16.msra.mxu0 %v3464
        %4465 = vmatprep.mubr.bf16.mxu0 %v1803
        %4466 = vmatmul.mubr.bf16.gmra.mxu0 %v1802
        %v4467 = vpop.f32.mrf.mxu0
        %v4468 = vadd.f32 %v4427, %v4467
        %v4469 = vpop.f32.mrf.mxu0
        %v4470 = vadd.f32 %v4429, %v4469
        %v4471 = vpop.f32.mrf.mxu0
        %v4472 = vpop.f32.mrf.mxu0
        %4473 = vdwg.mxu0
        %4474 = vmatprep.subr.bf16.mxu0 %v3525
        %4475 = vmatpush1.bf16.msra.mxu0 %v3524
        %4476 = vmatprep.subr.bf16.mxu0 %v3521
        %4477 = vmatpush1.bf16.msra.mxu0 %v3520
        %4478 = vmatprep.subr.bf16.mxu0 %v3517
        %4479 = vmatpush1.bf16.msra.mxu0 %v3516
        %4480 = vmatprep.subr.bf16.mxu0 %v3513
        %4481 = vmatpush1.bf16.msra.mxu0 %v3512
        %4482 = vmatprep.subr.bf16.mxu0 %v3509
        %4483 = vmatpush1.bf16.msra.mxu0 %v3508
        %4484 = vmatprep.subr.bf16.mxu0 %v3505
        %4485 = vmatpush1.bf16.msra.mxu0 %v3504
        %4486 = vmatprep.subr.bf16.mxu0 %v3501
        %4487 = vmatpush1.bf16.msra.mxu0 %v3500
        %4488 = vmatprep.subr.bf16.mxu0 %v3497
        %4489 = vmatpush1.bf16.msra.mxu0 %v3496
        %4490 = vmatprep.subr.bf16.mxu0 %v3557
        %4491 = vmatpush2.bf16.msra.mxu0 %v3556
        %4492 = vmatprep.subr.bf16.mxu0 %v3553
        %4493 = vmatpush2.bf16.msra.mxu0 %v3552
        %4494 = vmatprep.subr.bf16.mxu0 %v3549
        %4495 = vmatpush2.bf16.msra.mxu0 %v3548
        %4496 = vmatprep.subr.bf16.mxu0 %v3545
        %4497 = vmatpush2.bf16.msra.mxu0 %v3544
        %4498 = vmatprep.subr.bf16.mxu0 %v3541
        %4499 = vmatpush2.bf16.msra.mxu0 %v3540
        %4500 = vmatprep.subr.bf16.mxu0 %v3537
        %4501 = vmatpush2.bf16.msra.mxu0 %v3536
        %4502 = vmatprep.subr.bf16.mxu0 %v3533
        %4503 = vmatpush2.bf16.msra.mxu0 %v3532
        %4504 = vmatprep.subr.bf16.mxu0 %v3529
        %4505 = vmatpush2.bf16.msra.mxu0 %v3528
        %4506 = vmatprep.mubr.bf16.mxu0 %v1805
        %4507 = vmatmul.mubr.bf16.gmra.mxu0 %v1804
        %v4508 = vpop.f32.mrf.mxu0
        %v4509 = vadd.f32 %v4468, %v4508
        %v4510 = vpop.f32.mrf.mxu0
        %v4511 = vadd.f32 %v4470, %v4510
        %v4512 = vpop.f32.mrf.mxu0
        %v4513 = vpop.f32.mrf.mxu0
        %4514 = vdwg.mxu0
        %4515 = vmatprep.subr.bf16.mxu0 %v3589
        %4516 = vmatpush1.bf16.msra.mxu0 %v3588
        %4517 = vmatprep.subr.bf16.mxu0 %v3585
        %4518 = vmatpush1.bf16.msra.mxu0 %v3584
        %4519 = vmatprep.subr.bf16.mxu0 %v3581
        %4520 = vmatpush1.bf16.msra.mxu0 %v3580
        %4521 = vmatprep.subr.bf16.mxu0 %v3577
        %4522 = vmatpush1.bf16.msra.mxu0 %v3576
        %4523 = vmatprep.subr.bf16.mxu0 %v3573
        %4524 = vmatpush1.bf16.msra.mxu0 %v3572
        %4525 = vmatprep.subr.bf16.mxu0 %v3569
        %4526 = vmatpush1.bf16.msra.mxu0 %v3568
        %4527 = vmatprep.subr.bf16.mxu0 %v3565
        %4528 = vmatpush1.bf16.msra.mxu0 %v3564
        %4529 = vmatprep.subr.bf16.mxu0 %v3561
        %4530 = vmatpush1.bf16.msra.mxu0 %v3560
        %4531 = vmatprep.subr.bf16.mxu0 %v3621
        %4532 = vmatpush2.bf16.msra.mxu0 %v3620
        %4533 = vmatprep.subr.bf16.mxu0 %v3617
        %4534 = vmatpush2.bf16.msra.mxu0 %v3616
        %4535 = vmatprep.subr.bf16.mxu0 %v3613
        %4536 = vmatpush2.bf16.msra.mxu0 %v3612
        %4537 = vmatprep.subr.bf16.mxu0 %v3609
        %4538 = vmatpush2.bf16.msra.mxu0 %v3608
        %4539 = vmatprep.subr.bf16.mxu0 %v3605
        %4540 = vmatpush2.bf16.msra.mxu0 %v3604
        %4541 = vmatprep.subr.bf16.mxu0 %v3601
        %4542 = vmatpush2.bf16.msra.mxu0 %v3600
        %4543 = vmatprep.subr.bf16.mxu0 %v3597
        %4544 = vmatpush2.bf16.msra.mxu0 %v3596
        %4545 = vmatprep.subr.bf16.mxu0 %v3593
        %4546 = vmatpush2.bf16.msra.mxu0 %v3592
        %4547 = vmatprep.mubr.bf16.mxu0 %v1807
        %4548 = vmatmul.mubr.bf16.gmra.mxu0 %v1806
        %v4549 = vpop.f32.mrf.mxu0
        %v4550 = vadd.f32 %v4509, %v4549
        %v4551 = vpop.f32.mrf.mxu0
        %v4552 = vadd.f32 %v4511, %v4551
        %v4553 = vpop.f32.mrf.mxu0
        %v4554 = vpop.f32.mrf.mxu0
        %4555 = vdwg.mxu0
        %4556 = vmatprep.subr.bf16.mxu0 %v3653
        %4557 = vmatpush1.bf16.msra.mxu0 %v3652
        %4558 = vmatprep.subr.bf16.mxu0 %v3649
        %4559 = vmatpush1.bf16.msra.mxu0 %v3648
        %4560 = vmatprep.subr.bf16.mxu0 %v3645
        %4561 = vmatpush1.bf16.msra.mxu0 %v3644
        %4562 = vmatprep.subr.bf16.mxu0 %v3641
        %4563 = vmatpush1.bf16.msra.mxu0 %v3640
        %4564 = vmatprep.subr.bf16.mxu0 %v3637
        %4565 = vmatpush1.bf16.msra.mxu0 %v3636
        %4566 = vmatprep.subr.bf16.mxu0 %v3633
        %4567 = vmatpush1.bf16.msra.mxu0 %v3632
        %4568 = vmatprep.subr.bf16.mxu0 %v3629
        %4569 = vmatpush1.bf16.msra.mxu0 %v3628
        %4570 = vmatprep.subr.bf16.mxu0 %v3625
        %4571 = vmatpush1.bf16.msra.mxu0 %v3624
        %4572 = vmatprep.subr.bf16.mxu0 %v3685
        %4573 = vmatpush2.bf16.msra.mxu0 %v3684
        %4574 = vmatprep.subr.bf16.mxu0 %v3681
        %4575 = vmatpush2.bf16.msra.mxu0 %v3680
        %4576 = vmatprep.subr.bf16.mxu0 %v3677
        %4577 = vmatpush2.bf16.msra.mxu0 %v3676
        %4578 = vmatprep.subr.bf16.mxu0 %v3673
        %4579 = vmatpush2.bf16.msra.mxu0 %v3672
        %4580 = vmatprep.subr.bf16.mxu0 %v3669
        %4581 = vmatpush2.bf16.msra.mxu0 %v3668
        %4582 = vmatprep.subr.bf16.mxu0 %v3665
        %4583 = vmatpush2.bf16.msra.mxu0 %v3664
        %4584 = vmatprep.subr.bf16.mxu0 %v3661
        %4585 = vmatpush2.bf16.msra.mxu0 %v3660
        %4586 = vmatprep.subr.bf16.mxu0 %v3657
        %4587 = vmatpush2.bf16.msra.mxu0 %v3656
        %4588 = vmatprep.mubr.bf16.mxu0 %v1809
        %4589 = vmatmul.mubr.bf16.gmra.mxu0 %v1808
        %v4590 = vpop.f32.mrf.mxu0
        %v4591 = vadd.f32 %v4550, %v4590
        %v4592 = vpop.f32.mrf.mxu0
        %v4593 = vadd.f32 %v4552, %v4592
        %v4594 = vpop.f32.mrf.mxu0
        %v4595 = vpop.f32.mrf.mxu0
        %4596 = vdwg.mxu0
        %4597 = vmatprep.subr.bf16.mxu0 %v3717
        %4598 = vmatpush1.bf16.msra.mxu0 %v3716
        %4599 = vmatprep.subr.bf16.mxu0 %v3713
        %4600 = vmatpush1.bf16.msra.mxu0 %v3712
        %4601 = vmatprep.subr.bf16.mxu0 %v3709
        %4602 = vmatpush1.bf16.msra.mxu0 %v3708
        %4603 = vmatprep.subr.bf16.mxu0 %v3705
        %4604 = vmatpush1.bf16.msra.mxu0 %v3704
        %4605 = vmatprep.subr.bf16.mxu0 %v3701
        %4606 = vmatpush1.bf16.msra.mxu0 %v3700
        %4607 = vmatprep.subr.bf16.mxu0 %v3697
        %4608 = vmatpush1.bf16.msra.mxu0 %v3696
        %4609 = vmatprep.subr.bf16.mxu0 %v3693
        %4610 = vmatpush1.bf16.msra.mxu0 %v3692
        %4611 = vmatprep.subr.bf16.mxu0 %v3689
        %4612 = vmatpush1.bf16.msra.mxu0 %v3688
        %4613 = vmatprep.subr.bf16.mxu0 %v3749
        %4614 = vmatpush2.bf16.msra.mxu0 %v3748
        %4615 = vmatprep.subr.bf16.mxu0 %v3745
        %4616 = vmatpush2.bf16.msra.mxu0 %v3744
        %4617 = vmatprep.subr.bf16.mxu0 %v3741
        %4618 = vmatpush2.bf16.msra.mxu0 %v3740
        %4619 = vmatprep.subr.bf16.mxu0 %v3737
        %4620 = vmatpush2.bf16.msra.mxu0 %v3736
        %4621 = vmatprep.subr.bf16.mxu0 %v3733
        %4622 = vmatpush2.bf16.msra.mxu0 %v3732
        %4623 = vmatprep.subr.bf16.mxu0 %v3729
        %4624 = vmatpush2.bf16.msra.mxu0 %v3728
        %4625 = vmatprep.subr.bf16.mxu0 %v3725
        %4626 = vmatpush2.bf16.msra.mxu0 %v3724
        %4627 = vmatprep.subr.bf16.mxu0 %v3721
        %4628 = vmatpush2.bf16.msra.mxu0 %v3720
        %4629 = vmatprep.mubr.bf16.mxu0 %v1811
        %4630 = vmatmul.mubr.bf16.gmra.mxu0 %v1810
        %v4631 = vpop.f32.mrf.mxu0
        %v4632 = vadd.f32 %v4591, %v4631
        %v4633 = vpop.f32.mrf.mxu0
        %v4634 = vadd.f32 %v4593, %v4633
        %v4635 = vpop.f32.mrf.mxu0
        %v4636 = vpop.f32.mrf.mxu0
        %4637 = vdwg.mxu0
        %4638 = vmatprep.subr.bf16.mxu0 %v3781
        %4639 = vmatpush1.bf16.msra.mxu0 %v3780
        %4640 = vmatprep.subr.bf16.mxu0 %v3777
        %4641 = vmatpush1.bf16.msra.mxu0 %v3776
        %4642 = vmatprep.subr.bf16.mxu0 %v3773
        %4643 = vmatpush1.bf16.msra.mxu0 %v3772
        %4644 = vmatprep.subr.bf16.mxu0 %v3769
        %4645 = vmatpush1.bf16.msra.mxu0 %v3768
        %4646 = vmatprep.subr.bf16.mxu0 %v3765
        %4647 = vmatpush1.bf16.msra.mxu0 %v3764
        %4648 = vmatprep.subr.bf16.mxu0 %v3761
        %4649 = vmatpush1.bf16.msra.mxu0 %v3760
        %4650 = vmatprep.subr.bf16.mxu0 %v3757
        %4651 = vmatpush1.bf16.msra.mxu0 %v3756
        %4652 = vmatprep.subr.bf16.mxu0 %v3753
        %4653 = vmatpush1.bf16.msra.mxu0 %v3752
        %4654 = vmatprep.subr.bf16.mxu0 %v3813
        %4655 = vmatpush2.bf16.msra.mxu0 %v3812
        %4656 = vmatprep.subr.bf16.mxu0 %v3809
        %4657 = vmatpush2.bf16.msra.mxu0 %v3808
        %4658 = vmatprep.subr.bf16.mxu0 %v3805
        %4659 = vmatpush2.bf16.msra.mxu0 %v3804
        %4660 = vmatprep.subr.bf16.mxu0 %v3801
        %4661 = vmatpush2.bf16.msra.mxu0 %v3800
        %4662 = vmatprep.subr.bf16.mxu0 %v3797
        %4663 = vmatpush2.bf16.msra.mxu0 %v3796
        %4664 = vmatprep.subr.bf16.mxu0 %v3793
        %4665 = vmatpush2.bf16.msra.mxu0 %v3792
        %4666 = vmatprep.subr.bf16.mxu0 %v3789
        %4667 = vmatpush2.bf16.msra.mxu0 %v3788
        %4668 = vmatprep.subr.bf16.mxu0 %v3785
        %4669 = vmatpush2.bf16.msra.mxu0 %v3784
        %4670 = vmatprep.mubr.bf16.mxu0 %v1813
        %4671 = vmatmul.mubr.bf16.gmra.mxu0 %v1812
        %v4672 = vpop.f32.mrf.mxu0
        %v4673 = vadd.f32 %v4632, %v4672
        %v4674 = vpop.f32.mrf.mxu0
        %v4675 = vadd.f32 %v4634, %v4674
        %v4676 = vpop.f32.mrf.mxu0
        %v4677 = vpop.f32.mrf.mxu0
        %4678 = vdwg.mxu0
        %4679 = vmatprep.subr.bf16.mxu0 %v3845
        %4680 = vmatpush1.bf16.msra.mxu0 %v3844
        %4681 = vmatprep.subr.bf16.mxu0 %v3841
        %4682 = vmatpush1.bf16.msra.mxu0 %v3840
        %4683 = vmatprep.subr.bf16.mxu0 %v3837
        %4684 = vmatpush1.bf16.msra.mxu0 %v3836
        %4685 = vmatprep.subr.bf16.mxu0 %v3833
        %4686 = vmatpush1.bf16.msra.mxu0 %v3832
        %4687 = vmatprep.subr.bf16.mxu0 %v3829
        %4688 = vmatpush1.bf16.msra.mxu0 %v3828
        %4689 = vmatprep.subr.bf16.mxu0 %v3825
        %4690 = vmatpush1.bf16.msra.mxu0 %v3824
        %4691 = vmatprep.subr.bf16.mxu0 %v3821
        %4692 = vmatpush1.bf16.msra.mxu0 %v3820
        %4693 = vmatprep.subr.bf16.mxu0 %v3817
        %4694 = vmatpush1.bf16.msra.mxu0 %v3816
        %4695 = vmatprep.subr.bf16.mxu0 %v3877
        %4696 = vmatpush2.bf16.msra.mxu0 %v3876
        %4697 = vmatprep.subr.bf16.mxu0 %v3873
        %4698 = vmatpush2.bf16.msra.mxu0 %v3872
        %4699 = vmatprep.subr.bf16.mxu0 %v3869
        %4700 = vmatpush2.bf16.msra.mxu0 %v3868
        %4701 = vmatprep.subr.bf16.mxu0 %v3865
        %4702 = vmatpush2.bf16.msra.mxu0 %v3864
        %4703 = vmatprep.subr.bf16.mxu0 %v3861
        %4704 = vmatpush2.bf16.msra.mxu0 %v3860
        %4705 = vmatprep.subr.bf16.mxu0 %v3857
        %4706 = vmatpush2.bf16.msra.mxu0 %v3856
        %4707 = vmatprep.subr.bf16.mxu0 %v3853
        %4708 = vmatpush2.bf16.msra.mxu0 %v3852
        %4709 = vmatprep.subr.bf16.mxu0 %v3849
        %4710 = vmatpush2.bf16.msra.mxu0 %v3848
        %4711 = vmatprep.mubr.bf16.mxu0 %v1815
        %4712 = vmatmul.mubr.bf16.gmra.mxu0 %v1814
        %v4713 = vpop.f32.mrf.mxu0
        %v4714 = vadd.f32 %v4673, %v4713
        %v4715 = vpop.f32.mrf.mxu0
        %v4716 = vadd.f32 %v4675, %v4715
        %v4717 = vpop.f32.mrf.mxu0
        %v4718 = vpop.f32.mrf.mxu0
        %4719 = vdwg.mxu0
        %4720 = vmatprep.subr.bf16.mxu0 %v3399
        %4721 = vmatpush1.bf16.msra.mxu0 %v3398
        %4722 = vmatprep.subr.bf16.mxu0 %v3395
        %4723 = vmatpush1.bf16.msra.mxu0 %v3394
        %4724 = vmatprep.subr.bf16.mxu0 %v3391
        %4725 = vmatpush1.bf16.msra.mxu0 %v3390
        %4726 = vmatprep.subr.bf16.mxu0 %v3387
        %4727 = vmatpush1.bf16.msra.mxu0 %v3386
        %4728 = vmatprep.subr.bf16.mxu0 %v3383
        %4729 = vmatpush1.bf16.msra.mxu0 %v3382
        %4730 = vmatprep.subr.bf16.mxu0 %v3379
        %4731 = vmatpush1.bf16.msra.mxu0 %v3378
        %4732 = vmatprep.subr.bf16.mxu0 %v3375
        %4733 = vmatpush1.bf16.msra.mxu0 %v3374
        %4734 = vmatprep.subr.bf16.mxu0 %v3371
        %4735 = vmatpush1.bf16.msra.mxu0 %v3370
        %4736 = vmatprep.subr.bf16.mxu0 %v3431
        %4737 = vmatpush2.bf16.msra.mxu0 %v3430
        %4738 = vmatprep.subr.bf16.mxu0 %v3427
        %4739 = vmatpush2.bf16.msra.mxu0 %v3426
        %4740 = vmatprep.subr.bf16.mxu0 %v3423
        %4741 = vmatpush2.bf16.msra.mxu0 %v3422
        %4742 = vmatprep.subr.bf16.mxu0 %v3419
        %4743 = vmatpush2.bf16.msra.mxu0 %v3418
        %4744 = vmatprep.subr.bf16.mxu0 %v3415
        %4745 = vmatpush2.bf16.msra.mxu0 %v3414
        %4746 = vmatprep.subr.bf16.mxu0 %v3411
        %4747 = vmatpush2.bf16.msra.mxu0 %v3410
        %4748 = vmatprep.subr.bf16.mxu0 %v3407
        %4749 = vmatpush2.bf16.msra.mxu0 %v3406
        %4750 = vmatprep.subr.bf16.mxu0 %v3403
        %4751 = vmatpush2.bf16.msra.mxu0 %v3402
        %4752 = vmatprep.mubr.bf16.mxu0 %v1801
        %4753 = vmatmul.mubr.bf16.gmra.mxu0 %v1800
        %v4754 = vpop.f32.mrf.mxu0
        %v4755 = vadd.f32 %v1767, %v4754
        %v4756 = vpop.f32.mrf.mxu0
        %v4757 = vadd.f32 %v1771, %v4756
        %v4758 = vpop.f32.mrf.mxu0
        %v4759 = vpop.f32.mrf.mxu0
        %4760 = vdwg.mxu0
        %4761 = vmatprep.subr.bf16.mxu0 %v3463
        %4762 = vmatpush1.bf16.msra.mxu0 %v3462
        %4763 = vmatprep.subr.bf16.mxu0 %v3459
        %4764 = vmatpush1.bf16.msra.mxu0 %v3458
        %4765 = vmatprep.subr.bf16.mxu0 %v3455
        %4766 = vmatpush1.bf16.msra.mxu0 %v3454
        %4767 = vmatprep.subr.bf16.mxu0 %v3451
        %4768 = vmatpush1.bf16.msra.mxu0 %v3450
        %4769 = vmatprep.subr.bf16.mxu0 %v3447
        %4770 = vmatpush1.bf16.msra.mxu0 %v3446
        %4771 = vmatprep.subr.bf16.mxu0 %v3443
        %4772 = vmatpush1.bf16.msra.mxu0 %v3442
        %4773 = vmatprep.subr.bf16.mxu0 %v3439
        %4774 = vmatpush1.bf16.msra.mxu0 %v3438
        %4775 = vmatprep.subr.bf16.mxu0 %v3435
        %4776 = vmatpush1.bf16.msra.mxu0 %v3434
        %4777 = vmatprep.subr.bf16.mxu0 %v3495
        %4778 = vmatpush2.bf16.msra.mxu0 %v3494
        %4779 = vmatprep.subr.bf16.mxu0 %v3491
        %4780 = vmatpush2.bf16.msra.mxu0 %v3490
        %4781 = vmatprep.subr.bf16.mxu0 %v3487
        %4782 = vmatpush2.bf16.msra.mxu0 %v3486
        %4783 = vmatprep.subr.bf16.mxu0 %v3483
        %4784 = vmatpush2.bf16.msra.mxu0 %v3482
        %4785 = vmatprep.subr.bf16.mxu0 %v3479
        %4786 = vmatpush2.bf16.msra.mxu0 %v3478
        %4787 = vmatprep.subr.bf16.mxu0 %v3475
        %4788 = vmatpush2.bf16.msra.mxu0 %v3474
        %4789 = vmatprep.subr.bf16.mxu0 %v3471
        %4790 = vmatpush2.bf16.msra.mxu0 %v3470
        %4791 = vmatprep.subr.bf16.mxu0 %v3467
        %4792 = vmatpush2.bf16.msra.mxu0 %v3466
        %4793 = vmatprep.mubr.bf16.mxu0 %v1803
        %4794 = vmatmul.mubr.bf16.gmra.mxu0 %v1802
        %v4795 = vpop.f32.mrf.mxu0
        %v4796 = vadd.f32 %v4755, %v4795
        %v4797 = vpop.f32.mrf.mxu0
        %v4798 = vadd.f32 %v4757, %v4797
        %v4799 = vpop.f32.mrf.mxu0
        %v4800 = vpop.f32.mrf.mxu0
        %4801 = vdwg.mxu0
        %4802 = vmatprep.subr.bf16.mxu0 %v3527
        %4803 = vmatpush1.bf16.msra.mxu0 %v3526
        %4804 = vmatprep.subr.bf16.mxu0 %v3523
        %4805 = vmatpush1.bf16.msra.mxu0 %v3522
        %4806 = vmatprep.subr.bf16.mxu0 %v3519
        %4807 = vmatpush1.bf16.msra.mxu0 %v3518
        %4808 = vmatprep.subr.bf16.mxu0 %v3515
        %4809 = vmatpush1.bf16.msra.mxu0 %v3514
        %4810 = vmatprep.subr.bf16.mxu0 %v3511
        %4811 = vmatpush1.bf16.msra.mxu0 %v3510
        %4812 = vmatprep.subr.bf16.mxu0 %v3507
        %4813 = vmatpush1.bf16.msra.mxu0 %v3506
        %4814 = vmatprep.subr.bf16.mxu0 %v3503
        %4815 = vmatpush1.bf16.msra.mxu0 %v3502
        %4816 = vmatprep.subr.bf16.mxu0 %v3499
        %4817 = vmatpush1.bf16.msra.mxu0 %v3498
        %4818 = vmatprep.subr.bf16.mxu0 %v3559
        %4819 = vmatpush2.bf16.msra.mxu0 %v3558
        %4820 = vmatprep.subr.bf16.mxu0 %v3555
        %4821 = vmatpush2.bf16.msra.mxu0 %v3554
        %4822 = vmatprep.subr.bf16.mxu0 %v3551
        %4823 = vmatpush2.bf16.msra.mxu0 %v3550
        %4824 = vmatprep.subr.bf16.mxu0 %v3547
        %4825 = vmatpush2.bf16.msra.mxu0 %v3546
        %4826 = vmatprep.subr.bf16.mxu0 %v3543
        %4827 = vmatpush2.bf16.msra.mxu0 %v3542
        %4828 = vmatprep.subr.bf16.mxu0 %v3539
        %4829 = vmatpush2.bf16.msra.mxu0 %v3538
        %4830 = vmatprep.subr.bf16.mxu0 %v3535
        %4831 = vmatpush2.bf16.msra.mxu0 %v3534
        %4832 = vmatprep.subr.bf16.mxu0 %v3531
        %4833 = vmatpush2.bf16.msra.mxu0 %v3530
        %4834 = vmatprep.mubr.bf16.mxu0 %v1805
        %4835 = vmatmul.mubr.bf16.gmra.mxu0 %v1804
        %v4836 = vpop.f32.mrf.mxu0
        %v4837 = vadd.f32 %v4796, %v4836
        %v4838 = vpop.f32.mrf.mxu0
        %v4839 = vadd.f32 %v4798, %v4838
        %v4840 = vpop.f32.mrf.mxu0
        %v4841 = vpop.f32.mrf.mxu0
        %4842 = vdwg.mxu0
        %4843 = vmatprep.subr.bf16.mxu0 %v3591
        %4844 = vmatpush1.bf16.msra.mxu0 %v3590
        %4845 = vmatprep.subr.bf16.mxu0 %v3587
        %4846 = vmatpush1.bf16.msra.mxu0 %v3586
        %4847 = vmatprep.subr.bf16.mxu0 %v3583
        %4848 = vmatpush1.bf16.msra.mxu0 %v3582
        %4849 = vmatprep.subr.bf16.mxu0 %v3579
        %4850 = vmatpush1.bf16.msra.mxu0 %v3578
        %4851 = vmatprep.subr.bf16.mxu0 %v3575
        %4852 = vmatpush1.bf16.msra.mxu0 %v3574
        %4853 = vmatprep.subr.bf16.mxu0 %v3571
        %4854 = vmatpush1.bf16.msra.mxu0 %v3570
        %4855 = vmatprep.subr.bf16.mxu0 %v3567
        %4856 = vmatpush1.bf16.msra.mxu0 %v3566
        %4857 = vmatprep.subr.bf16.mxu0 %v3563
        %4858 = vmatpush1.bf16.msra.mxu0 %v3562
        %4859 = vmatprep.subr.bf16.mxu0 %v3623
        %4860 = vmatpush2.bf16.msra.mxu0 %v3622
        %4861 = vmatprep.subr.bf16.mxu0 %v3619
        %4862 = vmatpush2.bf16.msra.mxu0 %v3618
        %4863 = vmatprep.subr.bf16.mxu0 %v3615
        %4864 = vmatpush2.bf16.msra.mxu0 %v3614
        %4865 = vmatprep.subr.bf16.mxu0 %v3611
        %4866 = vmatpush2.bf16.msra.mxu0 %v3610
        %4867 = vmatprep.subr.bf16.mxu0 %v3607
        %4868 = vmatpush2.bf16.msra.mxu0 %v3606
        %4869 = vmatprep.subr.bf16.mxu0 %v3603
        %4870 = vmatpush2.bf16.msra.mxu0 %v3602
        %4871 = vmatprep.subr.bf16.mxu0 %v3599
        %4872 = vmatpush2.bf16.msra.mxu0 %v3598
        %4873 = vmatprep.subr.bf16.mxu0 %v3595
        %4874 = vmatpush2.bf16.msra.mxu0 %v3594
        %4875 = vmatprep.mubr.bf16.mxu0 %v1807
        %4876 = vmatmul.mubr.bf16.gmra.mxu0 %v1806
        %v4877 = vpop.f32.mrf.mxu0
        %v4878 = vadd.f32 %v4837, %v4877
        %v4879 = vpop.f32.mrf.mxu0
        %v4880 = vadd.f32 %v4839, %v4879
        %v4881 = vpop.f32.mrf.mxu0
        %v4882 = vpop.f32.mrf.mxu0
        %4883 = vdwg.mxu0
        %4884 = vmatprep.subr.bf16.mxu0 %v3655
        %4885 = vmatpush1.bf16.msra.mxu0 %v3654
        %4886 = vmatprep.subr.bf16.mxu0 %v3651
        %4887 = vmatpush1.bf16.msra.mxu0 %v3650
        %4888 = vmatprep.subr.bf16.mxu0 %v3647
        %4889 = vmatpush1.bf16.msra.mxu0 %v3646
        %4890 = vmatprep.subr.bf16.mxu0 %v3643
        %4891 = vmatpush1.bf16.msra.mxu0 %v3642
        %4892 = vmatprep.subr.bf16.mxu0 %v3639
        %4893 = vmatpush1.bf16.msra.mxu0 %v3638
        %4894 = vmatprep.subr.bf16.mxu0 %v3635
        %4895 = vmatpush1.bf16.msra.mxu0 %v3634
        %4896 = vmatprep.subr.bf16.mxu0 %v3631
        %4897 = vmatpush1.bf16.msra.mxu0 %v3630
        %4898 = vmatprep.subr.bf16.mxu0 %v3627
        %4899 = vmatpush1.bf16.msra.mxu0 %v3626
        %4900 = vmatprep.subr.bf16.mxu0 %v3687
        %4901 = vmatpush2.bf16.msra.mxu0 %v3686
        %4902 = vmatprep.subr.bf16.mxu0 %v3683
        %4903 = vmatpush2.bf16.msra.mxu0 %v3682
        %4904 = vmatprep.subr.bf16.mxu0 %v3679
        %4905 = vmatpush2.bf16.msra.mxu0 %v3678
        %4906 = vmatprep.subr.bf16.mxu0 %v3675
        %4907 = vmatpush2.bf16.msra.mxu0 %v3674
        %4908 = vmatprep.subr.bf16.mxu0 %v3671
        %4909 = vmatpush2.bf16.msra.mxu0 %v3670
        %4910 = vmatprep.subr.bf16.mxu0 %v3667
        %4911 = vmatpush2.bf16.msra.mxu0 %v3666
        %4912 = vmatprep.subr.bf16.mxu0 %v3663
        %4913 = vmatpush2.bf16.msra.mxu0 %v3662
        %4914 = vmatprep.subr.bf16.mxu0 %v3659
        %4915 = vmatpush2.bf16.msra.mxu0 %v3658
        %4916 = vmatprep.mubr.bf16.mxu0 %v1809
        %4917 = vmatmul.mubr.bf16.gmra.mxu0 %v1808
        %v4918 = vpop.f32.mrf.mxu0
        %v4919 = vadd.f32 %v4878, %v4918
        %v4920 = vpop.f32.mrf.mxu0
        %v4921 = vadd.f32 %v4880, %v4920
        %v4922 = vpop.f32.mrf.mxu0
        %v4923 = vpop.f32.mrf.mxu0
        %4924 = vdwg.mxu0
        %4925 = vmatprep.subr.bf16.mxu0 %v3719
        %4926 = vmatpush1.bf16.msra.mxu0 %v3718
        %4927 = vmatprep.subr.bf16.mxu0 %v3715
        %4928 = vmatpush1.bf16.msra.mxu0 %v3714
        %4929 = vmatprep.subr.bf16.mxu0 %v3711
        %4930 = vmatpush1.bf16.msra.mxu0 %v3710
        %4931 = vmatprep.subr.bf16.mxu0 %v3707
        %4932 = vmatpush1.bf16.msra.mxu0 %v3706
        %4933 = vmatprep.subr.bf16.mxu0 %v3703
        %4934 = vmatpush1.bf16.msra.mxu0 %v3702
        %4935 = vmatprep.subr.bf16.mxu0 %v3699
        %4936 = vmatpush1.bf16.msra.mxu0 %v3698
        %4937 = vmatprep.subr.bf16.mxu0 %v3695
        %4938 = vmatpush1.bf16.msra.mxu0 %v3694
        %4939 = vmatprep.subr.bf16.mxu0 %v3691
        %4940 = vmatpush1.bf16.msra.mxu0 %v3690
        %4941 = vmatprep.subr.bf16.mxu0 %v3751
        %4942 = vmatpush2.bf16.msra.mxu0 %v3750
        %4943 = vmatprep.subr.bf16.mxu0 %v3747
        %4944 = vmatpush2.bf16.msra.mxu0 %v3746
        %4945 = vmatprep.subr.bf16.mxu0 %v3743
        %4946 = vmatpush2.bf16.msra.mxu0 %v3742
        %4947 = vmatprep.subr.bf16.mxu0 %v3739
        %4948 = vmatpush2.bf16.msra.mxu0 %v3738
        %4949 = vmatprep.subr.bf16.mxu0 %v3735
        %4950 = vmatpush2.bf16.msra.mxu0 %v3734
        %4951 = vmatprep.subr.bf16.mxu0 %v3731
        %4952 = vmatpush2.bf16.msra.mxu0 %v3730
        %4953 = vmatprep.subr.bf16.mxu0 %v3727
        %4954 = vmatpush2.bf16.msra.mxu0 %v3726
        %4955 = vmatprep.subr.bf16.mxu0 %v3723
        %4956 = vmatpush2.bf16.msra.mxu0 %v3722
        %4957 = vmatprep.mubr.bf16.mxu0 %v1811
        %4958 = vmatmul.mubr.bf16.gmra.mxu0 %v1810
        %v4959 = vpop.f32.mrf.mxu0
        %v4960 = vadd.f32 %v4919, %v4959
        %v4961 = vpop.f32.mrf.mxu0
        %v4962 = vadd.f32 %v4921, %v4961
        %v4963 = vpop.f32.mrf.mxu0
        %v4964 = vpop.f32.mrf.mxu0
        %4965 = vdwg.mxu0
        %4966 = vmatprep.subr.bf16.mxu0 %v3783
        %4967 = vmatpush1.bf16.msra.mxu0 %v3782
        %4968 = vmatprep.subr.bf16.mxu0 %v3779
        %4969 = vmatpush1.bf16.msra.mxu0 %v3778
        %4970 = vmatprep.subr.bf16.mxu0 %v3775
        %4971 = vmatpush1.bf16.msra.mxu0 %v3774
        %4972 = vmatprep.subr.bf16.mxu0 %v3771
        %4973 = vmatpush1.bf16.msra.mxu0 %v3770
        %4974 = vmatprep.subr.bf16.mxu0 %v3767
        %4975 = vmatpush1.bf16.msra.mxu0 %v3766
        %4976 = vmatprep.subr.bf16.mxu0 %v3763
        %4977 = vmatpush1.bf16.msra.mxu0 %v3762
        %4978 = vmatprep.subr.bf16.mxu0 %v3759
        %4979 = vmatpush1.bf16.msra.mxu0 %v3758
        %4980 = vmatprep.subr.bf16.mxu0 %v3755
        %4981 = vmatpush1.bf16.msra.mxu0 %v3754
        %4982 = vmatprep.subr.bf16.mxu0 %v3815
        %4983 = vmatpush2.bf16.msra.mxu0 %v3814
        %4984 = vmatprep.subr.bf16.mxu0 %v3811
        %4985 = vmatpush2.bf16.msra.mxu0 %v3810
        %4986 = vmatprep.subr.bf16.mxu0 %v3807
        %4987 = vmatpush2.bf16.msra.mxu0 %v3806
        %4988 = vmatprep.subr.bf16.mxu0 %v3803
        %4989 = vmatpush2.bf16.msra.mxu0 %v3802
        %4990 = vmatprep.subr.bf16.mxu0 %v3799
        %4991 = vmatpush2.bf16.msra.mxu0 %v3798
        %4992 = vmatprep.subr.bf16.mxu0 %v3795
        %4993 = vmatpush2.bf16.msra.mxu0 %v3794
        %4994 = vmatprep.subr.bf16.mxu0 %v3791
        %4995 = vmatpush2.bf16.msra.mxu0 %v3790
        %4996 = vmatprep.subr.bf16.mxu0 %v3787
        %4997 = vmatpush2.bf16.msra.mxu0 %v3786
        %4998 = vmatprep.mubr.bf16.mxu0 %v1813
        %4999 = vmatmul.mubr.bf16.gmra.mxu0 %v1812
        %v5000 = vpop.f32.mrf.mxu0
        %v5001 = vadd.f32 %v4960, %v5000
        %v5002 = vpop.f32.mrf.mxu0
        %v5003 = vadd.f32 %v4962, %v5002
        %v5004 = vpop.f32.mrf.mxu0
        %v5005 = vpop.f32.mrf.mxu0
        %5006 = vdwg.mxu0
        %5007 = vmatprep.subr.bf16.mxu0 %v3847
        %5008 = vmatpush1.bf16.msra.mxu0 %v3846
        %5009 = vmatprep.subr.bf16.mxu0 %v3843
        %5010 = vmatpush1.bf16.msra.mxu0 %v3842
        %5011 = vmatprep.subr.bf16.mxu0 %v3839
        %5012 = vmatpush1.bf16.msra.mxu0 %v3838
        %5013 = vmatprep.subr.bf16.mxu0 %v3835
        %5014 = vmatpush1.bf16.msra.mxu0 %v3834
        %5015 = vmatprep.subr.bf16.mxu0 %v3831
        %5016 = vmatpush1.bf16.msra.mxu0 %v3830
        %5017 = vmatprep.subr.bf16.mxu0 %v3827
        %5018 = vmatpush1.bf16.msra.mxu0 %v3826
        %5019 = vmatprep.subr.bf16.mxu0 %v3823
        %5020 = vmatpush1.bf16.msra.mxu0 %v3822
        %5021 = vmatprep.subr.bf16.mxu0 %v3819
        %5022 = vmatpush1.bf16.msra.mxu0 %v3818
        %5023 = vmatprep.subr.bf16.mxu0 %v3879
        %5024 = vmatpush2.bf16.msra.mxu0 %v3878
        %5025 = vmatprep.subr.bf16.mxu0 %v3875
        %5026 = vmatpush2.bf16.msra.mxu0 %v3874
        %5027 = vmatprep.subr.bf16.mxu0 %v3871
        %5028 = vmatpush2.bf16.msra.mxu0 %v3870
        %5029 = vmatprep.subr.bf16.mxu0 %v3867
        %5030 = vmatpush2.bf16.msra.mxu0 %v3866
        %5031 = vmatprep.subr.bf16.mxu0 %v3863
        %5032 = vmatpush2.bf16.msra.mxu0 %v3862
        %5033 = vmatprep.subr.bf16.mxu0 %v3859
        %5034 = vmatpush2.bf16.msra.mxu0 %v3858
        %5035 = vmatprep.subr.bf16.mxu0 %v3855
        %5036 = vmatpush2.bf16.msra.mxu0 %v3854
        %5037 = vmatprep.subr.bf16.mxu0 %v3851
        %5038 = vmatpush2.bf16.msra.mxu0 %v3850
        %5039 = vmatprep.mubr.bf16.mxu0 %v1815
        %5040 = vmatmul.mubr.bf16.gmra.mxu0 %v1814
        %v5041 = vpop.f32.mrf.mxu0
        %v5042 = vadd.f32 %v5001, %v5041
        %v5043 = vpop.f32.mrf.mxu0
        %v5044 = vadd.f32 %v5003, %v5043
        %v5045 = vpop.f32.mrf.mxu0
        %v5046 = vpop.f32.mrf.mxu0
        %5047 = vdwg.mxu0
        %v5048 = vtanh.pop %v4714
        %v5049 = vtanh.pop %v4716
        %v5050 = vtanh.pop %v5042
        %v5051 = vtanh.pop %v5044
        %v5052 = vpack.c.bf16 %v5048, %v5048
        %v5053 = vpack.c.bf16 %v5049, %v5049
        %v5054 = vpack.c.bf16 %v5050, %v5050
        %v5055 = vpack.c.bf16 %v5051, %v5051
        %v5060 = vunpack.c.l.b16 %v5052
        %v5061 = vunpack.c.l.b16 %v5053
        %v5062 = vunpack.c.l.b16 %v5054
        %v5063 = vunpack.c.l.b16 %v5055
        %v5064 = vpack.c.b16 %v5061, %v5060
        %v5065 = vpack.c.b16 %v5063, %v5062
        %5068 = vst [vmem:[%s1232] sm:$0xff] %v5064
        %5069 = vst [vmem:[%s1232 + $0x8] sm:$0xff] %v5065
        %s5070 = smul.u32 4, %s14
        %p5071 = scmp.lt.s32.totalorder %s5070, 15
        %s5072 = scalar_select %p5071, %s5070, 15
        %s5073 = smul.addr %s5072, 4
        %s5074 = scalar_lea.vmem %s3, %s5073
        // Predicated region
        $region56: #{netlinear_forward.6} parent=50 // pred_check
          %p5075 = pneg %p105
        $region57: #{netlinear_forward.6} parent=50 // pred_check_branch
          %5077 = sbr.rel (%p5075) target = $region59
        $region58: #{netlinear_forward.6} parent=50 // pred_region
          %s5078 = smul.u32 4, %s14
        $region59: #{netlinear_forward.6} parent=50 // pred_fallthru
          _
      $region51: #{netlinear_forward.6} parent=5 // pred_fallthru
        _
      %p5079 = scmp.le.s32.totalorder 2, %s9
      // Predicated region
      $region60: #{netlinear_forward.6} parent=5 // pred_check
        %p5080 = pneg %p5079
      $region61: #{netlinear_forward.6} parent=5 // pred_check_branch
        %5082 = sbr.rel (%p5080) target = $region63
      $region62: #{netlinear_forward.6} parent=5 // pred_region
        %s5083 = ssub.s32 %s9, 2
        // Predicated region
        $region64: #{netlinear_forward.6} parent=62 // pred_check
          %p5084 = pneg %p111
        $region65: #{netlinear_forward.6} parent=62 // pred_check_branch
          %5086 = sbr.rel (%p5084) target = $region67
        $region66: #{netlinear_forward.6} parent=62 // pred_region
          %s5087 = smul.u32 4, %s15
          %p5088 = scmp.lt.s32.totalorder %s5087, 15
          %s5089 = scalar_select %p5088, %s5087, 15
          %s5090 = smul.addr %s5089, 4
          %s5091 = scalar_lea.vmem %s3, %s5090
        $region67: #{netlinear_forward.6} parent=62 // pred_fallthru
          _
      $region63: #{netlinear_forward.6} parent=5 // pred_fallthru
        _
    $region6: #{netlinear_forward.6} parent=1 // loop_footer
      %s13 = sadd.s32 1, %s9
    $region7: #{netlinear_forward.6} parent=1 // loop_footer_branch
      %8 = sbr.rel target = $region3
    $region8: #{netlinear_forward.6} parent=1 // loop_exit
      _

</llo_original>
